<compile_context>
chip_gen: v7x
topology: tpu7x:2x2x1
jax: 0.10.0
libtpu: 0.0.40
codegen_flags: <defaults>
</compile_context>

<pallas_src>
import functools
from dataclasses import dataclass

import jax
import jax.numpy as jnp
from jax.experimental import pallas as pl
from jax.experimental.pallas import tpu as pltpu

BN_EPS = 1e-5                       # nn.BatchNorm2d default eps
VMEM_LIMIT = 48 * 1024 * 1024       # fits v7x 64 MiB physical, raises v5e/v6e default


def _cparams(*sems):
    return pltpu.CompilerParams(dimension_semantics=sems,
                                vmem_limit_bytes=VMEM_LIMIT)


def _pick_tile(total, target, mult=8):
    """(tile, padded_total): tile is a multiple of `mult` unless it spans the
    whole axis (full-axis blocks are always legal)."""
    if total <= target:
        return total, total
    top = target - target % mult
    for d in range(top, mult - 1, -mult):
        if total % d == 0:
            return d, total
    return top, ((total + top - 1) // top) * top


def _pick_divisor(total, target):
    for d in range(min(total, target), 0, -1):
        if total % d == 0:
            return d
    return total


# --------------------------- Pallas kernels ---------------------------------

def _pw_kernel(x_ref, w_ref, shift_ref, o_ref, *, act):
    # (TM, K) @ (K, Cout) on the MXU (bf16 in, f32 acc), BN folded into W,
    # + shift, optional ReLU6.  Output stored bf16.
    y = jnp.dot(x_ref[...].astype(jnp.bfloat16), w_ref[...],
                preferred_element_type=jnp.float32)
    y = y + shift_ref[...]
    if act:
        y = jnp.clip(y, 0.0, 6.0)                      # ReLU6
    o_ref[...] = y.astype(o_ref.dtype)


def _pw_res_kernel(x_ref, w_ref, shift_ref, res_ref, o_ref):
    # MBConv projection: linear BN (no activation) + fused residual add.
    y = jnp.dot(x_ref[...].astype(jnp.bfloat16), w_ref[...],
                preferred_element_type=jnp.float32)
    o_ref[...] = (y + shift_ref[...] + res_ref[...].astype(jnp.float32)
                  ).astype(o_ref.dtype)


def _dw_kernel(*refs, stride):
    # Depthwise 3x3 over one output-row strip.  The padded activation (stride
    # 1) or its 4 stride-phases (stride 2) are whole-image VMEM-resident blocks
    # (DMA'd once per batch element); only a TH-row window is loaded per tap.
    # BN scale pre-folded into w; fused shift + ReLU6.  f32 VPU math, bf16 out.
    nphase = stride * stride
    phase_refs = refs[:nphase]
    w_ref, shift_ref, o_ref = refs[nphase], refs[nphase + 1], refs[nphase + 2]
    th, wo, c = o_ref.shape[1], o_ref.shape[2], o_ref.shape[3]
    row0 = pl.program_id(1) * th
    acc = jnp.zeros((th, wo, c), jnp.float32)
    for di in range(3):                                # static unroll, 9 taps
        oi = di // stride
        rows = {}
        for q in range(stride):                        # reuse row window across column taps
            p = (di % stride) * stride + q
            rows[q] = phase_refs[p][0, pl.ds(row0 + oi, th), :, :]
        for dj in range(3):
            q, oj = dj % stride, dj // stride
            tap = rows[q][:, oj:oj + wo, :].astype(jnp.float32)
            acc = acc + tap * w_ref[di * 3 + dj, :]
    o_ref[0] = jnp.clip(acc + shift_ref[...], 0.0, 6.0).astype(o_ref.dtype)


def _head_pool_kernel(x_ref, w_ref, shift_ref, o_ref, acc_ref, *, inv_hw):
    # Fused head 1x1 conv (+BN+ReLU6) and global average pool:
    # per-tile matmul, partial sums accumulated in a VMEM scratch.
    t = pl.program_id(1)

    @pl.when(t == 0)
    def _():
        acc_ref[...] = jnp.zeros_like(acc_ref)

    y = jnp.dot(x_ref[0].astype(jnp.bfloat16), w_ref[...],
                preferred_element_type=jnp.float32)
    y = jnp.clip(y + shift_ref[...], 0.0, 6.0)
    acc_ref[...] += jnp.sum(y, axis=0, keepdims=True)[None]

    @pl.when(t == pl.num_programs(1) - 1)
    def _():
        o_ref[...] = (acc_ref[...] * inv_hw).astype(o_ref.dtype)


# --------------------------- kernel wrappers ---------------------------------

def pw_conv_bn(x2d, w_bf16, shift, act=True, residual=None, tm_target=1024):
    m, k = x2d.shape
    cout = w_bf16.shape[1]
    tm, m_pad = _pick_tile(m, tm_target)
    if m_pad != m:                      # pad rows to a tile multiple (sliced off below)
        x2d = jnp.pad(x2d, ((0, m_pad - m), (0, 0)))
        if residual is not None:
            residual = jnp.pad(residual, ((0, m_pad - m), (0, 0)))
    grid = (m_pad // tm,)
    x_spec = pl.BlockSpec((tm, k), lambda i: (i, 0))
    w_spec = pl.BlockSpec((k, cout), lambda i: (0, 0))
    s_spec = pl.BlockSpec((1, cout), lambda i: (0, 0))
    o_spec = pl.BlockSpec((tm, cout), lambda i: (i, 0))
    out_shape = jax.ShapeDtypeStruct((m_pad, cout), jnp.bfloat16)
    if residual is None:
        out = pl.pallas_call(
            functools.partial(_pw_kernel, act=act),
            grid=grid,
            in_specs=[x_spec, w_spec, s_spec],
            out_specs=o_spec,
            out_shape=out_shape,
            compiler_params=_cparams("parallel"),
        )(x2d, w_bf16, shift)
    else:
        r_spec = pl.BlockSpec((tm, cout), lambda i: (i, 0))
        out = pl.pallas_call(
            _pw_res_kernel,
            grid=grid,
            in_specs=[x_spec, w_spec, s_spec, r_spec],
            out_specs=o_spec,
            out_shape=out_shape,
            compiler_params=_cparams("parallel"),
        )(x2d, w_bf16, shift, residual)
    return out if m_pad == m else out[:m]


def dw_conv_bn(x_nhwc, w9c, shift, stride, th_target=16):
    n, h, w, c = x_nhwc.shape
    xp = jnp.pad(x_nhwc, ((0, 0), (1, 1), (1, 1), (0, 0)))
    ho = (h - 1) // stride + 1
    wo = (w - 1) // stride + 1
    if stride == 1:
        phases = [xp]                                  # 1x the (padded) input
    else:
        phases = [xp[:, p::2, q::2, :] for p in range(2) for q in range(2)]
    th = _pick_divisor(ho, th_target)                  # output-row strip height
    grid = (n, ho // th)
    phase_specs = [pl.BlockSpec((1,) + tuple(ph.shape[1:]),
                                lambda i, s: (i, 0, 0, 0)) for ph in phases]
    return pl.pallas_call(
        functools.partial(_dw_kernel, stride=stride),
        grid=grid,
        in_specs=phase_specs + [
            pl.BlockSpec(w9c.shape, lambda i, s: (0, 0)),
            pl.BlockSpec(shift.shape, lambda i, s: (0, 0)),
        ],
        out_specs=pl.BlockSpec((1, th, wo, c), lambda i, s: (i, s, 0, 0)),
        out_shape=jax.ShapeDtypeStruct((n, ho, wo, c), jnp.bfloat16),
        compiler_params=_cparams("parallel", "parallel"),
    )(*phases, w9c, shift)
    # TODO(synk): handle the 1-pixel border and stride-2 phase selection fully
    # in-kernel (masked edge taps + strided in-kernel slices) to drop the
    # wrapper-side jnp.pad / phase-extraction HBM pass over the expanded
    # activation.


def _extract_taps(x_nhwc, stride):
    """9 shifted/strided views of a (pad=1) 3x3 window, flattened to (M, C)."""
    n, h, w, c = x_nhwc.shape
    xp = jnp.pad(x_nhwc, ((0, 0), (1, 1), (1, 1), (0, 0)))
    ho = (h - 1) // stride + 1
    wo = (w - 1) // stride + 1
    taps = []
    for di in range(3):
        for dj in range(3):
            t = xp[:, di:di + (ho - 1) * stride + 1:stride,
                   dj:dj + (wo - 1) * stride + 1:stride, :]
            taps.append(t.reshape(n * ho * wo, c))
    return taps, (n, ho, wo, c)


def conv3x3_s2_bn(x_nhwc, w_bf16, shift):
    # stem conv: im2col (3-channel input, cheap) + tiled Pallas matmul.
    # K is padded 27 -> 32 (sublane multiple) to avoid ragged loads.
    taps, (n, ho, wo, _) = _extract_taps(x_nhwc, stride=2)
    patches = jnp.concatenate(taps, axis=1)            # (M, 27), tap-major/cin-minor
    k_pad = w_bf16.shape[0]
    patches = jnp.pad(patches, ((0, 0), (0, k_pad - patches.shape[1])))
    out = pw_conv_bn(patches, w_bf16, shift, act=True)
    return out.reshape(n, ho, wo, -1)


def head_pool(x_nhwc, w_bf16, shift, hw_tile_target=1024):
    # Fused ConvBNAct(last_ch, 4*last_ch, k=1) + AdaptiveAvgPool2d((1,1)) + flatten.
    n, h, w, c = x_nhwc.shape
    hwin = h * w
    cout = w_bf16.shape[1]
    x3 = x_nhwc.reshape(n, hwin, c)
    thw, hw_pad = _pick_tile(hwin, hw_tile_target)
    if hw_pad != hwin:
        thw = hwin   # TODO(synk): mask padded rows instead of this full-axis fallback
    grid = (n, hwin // thw)
    out = pl.pallas_call(
        functools.partial(_head_pool_kernel, inv_hw=1.0 / hwin),
        grid=grid,
        in_specs=[pl.BlockSpec((1, thw, c), lambda i, t: (i, t, 0)),
                  pl.BlockSpec((c, cout), lambda i, t: (0, 0)),
                  pl.BlockSpec((1, cout), lambda i, t: (0, 0))],
        out_specs=pl.BlockSpec((1, 1, cout), lambda i, t: (i, 0, 0)),
        out_shape=jax.ShapeDtypeStruct((n, 1, cout), jnp.float32),
        scratch_shapes=[pltpu.VMEM((1, 1, cout), jnp.float32)],
        compiler_params=_cparams("parallel", "arbitrary"),
    )(x3, w_bf16, shift)
    return out.reshape(n, cout)


# --------------------------- model definition --------------------------------

@dataclass
class LayerInfo:
    in_ch: int
    out_ch: int
    num_layers: int
    stride: int
    expand_ratio: int


@dataclass(frozen=True)
class BlockCfg:
    in_ch: int
    out_ch: int
    stride: int
    expand_ratio: int


def expand_layer_infos(layer_infos):
    cfgs = []
    for info in layer_infos:
        in_ch, stride = info.in_ch, info.stride
        for _ in range(info.num_layers):
            cfgs.append(BlockCfg(in_ch=in_ch, out_ch=info.out_ch,
                                 stride=stride, expand_ratio=info.expand_ratio))
            in_ch, stride = info.out_ch, 1
    return tuple(cfgs)


def _bn_scale_shift(key, c):
    k1, k2, k3, k4 = jax.random.split(key, 4)
    gamma = 1.0 + 0.1 * jax.random.normal(k1, (c,), jnp.float32)
    beta = 0.1 * jax.random.normal(k2, (c,), jnp.float32)
    mean = 0.1 * jax.random.normal(k3, (c,), jnp.float32)
    var = 1.0 + 0.1 * jax.random.uniform(k4, (c,), jnp.float32)
    scale = gamma * jax.lax.rsqrt(var + BN_EPS)        # eval-mode BatchNorm folded
    shift = beta - mean * scale
    return scale, shift


def _make_pw_params(key, cin, cout, cin_pad=None):
    """Pointwise conv weight with BN scale folded in (true channel widths)."""
    cin_pad = cin if cin_pad is None else cin_pad
    kw, kb = jax.random.split(key)
    w = 0.1 * jax.random.normal(kw, (cin, cout), jnp.float32)
    scale, shift = _bn_scale_shift(kb, cout)
    wf = jnp.zeros((cin_pad, cout), jnp.float32).at[:cin, :].set(w * scale[None, :])
    return wf.astype(jnp.bfloat16), shift.reshape(1, cout)


def _make_dw_params(key, c):
    kw, kb = jax.random.split(key)
    w = 0.1 * jax.random.normal(kw, (3, 3, c), jnp.float32)
    scale, shift = _bn_scale_shift(kb, c)
    wf = (w * scale[None, None, :]).reshape(9, c)
    return wf, shift.reshape(1, c)                      # depthwise stays f32 (VPU math)


def init_params(key, cfgs, stem_out, head_out):
    params = {}
    # NOTE: stem weight is tap-major / cin-minor, i.e. a torch (Cout,Cin,3,3)
    # weight must be permuted to (3,3,Cin,Cout).reshape(27,Cout) before loading.
    key, k = jax.random.split(key)
    params["stem_w"], params["stem_shift"] = _make_pw_params(k, 27, stem_out,
                                                             cin_pad=32)
    blocks = []
    for cfg in cfgs:
        bp = {}
        hidden = cfg.in_ch * cfg.expand_ratio
        if cfg.expand_ratio != 1:
            key, k = jax.random.split(key)
            bp["expand_w"], bp["expand_shift"] = _make_pw_params(k, cfg.in_ch, hidden)
        key, k = jax.random.split(key)
        bp["dw_w"], bp["dw_shift"] = _make_dw_params(k, hidden)
        key, k = jax.random.split(key)
        bp["proj_w"], bp["proj_shift"] = _make_pw_params(k, hidden, cfg.out_ch)
        blocks.append(bp)
    params["blocks"] = blocks

    key, k = jax.random.split(key)
    params["head_w"], params["head_shift"] = _make_pw_params(k, cfgs[-1].out_ch,
                                                             head_out)
    return params


def mobilenet_v2_forward(params, x_nchw, *, cfgs):
    # NCHW -> NHWC, bf16 activations throughout (f32 accumulation inside kernels)
    x = jnp.transpose(x_nchw, (0, 2, 3, 1)).astype(jnp.bfloat16)

    # stem: ConvBNAct(3, in_channel, k=3, s=2) with ReLU6
    x = conv3x3_s2_bn(x, params["stem_w"], params["stem_shift"])

    # MBConv stages (torchvision-style inverted residual blocks)
    for cfg, bp in zip(cfgs, params["blocks"]):
        n, h, w, c = x.shape
        identity = x
        hx = x
        if cfg.expand_ratio != 1:
            hx = pw_conv_bn(hx.reshape(n * h * w, c), bp["expand_w"],
                            bp["expand_shift"], act=True).reshape(n, h, w, -1)
        hx = dw_conv_bn(hx, bp["dw_w"], bp["dw_shift"], cfg.stride)
        nb, ho, wo, ch = hx.shape
        use_res = (cfg.stride == 1) and (cfg.in_ch == cfg.out_ch)
        res = identity.reshape(n * h * w, c) if use_res else None
        hx = pw_conv_bn(hx.reshape(nb * ho * wo, ch), bp["proj_w"],
                        bp["proj_shift"], act=False, residual=res)
        x = hx.reshape(nb, ho, wo, -1)
        # TODO(synk): fully fuse expand->dw->project of a block into one
        # pallas_call keeping the hidden activation in VMEM scratch (needs
        # halo'd spatial tiling for the depthwise stage).
        # TODO(synk): stochastic depth defaults to 0.0 (identity); not modeled.

    # head ConvBNAct(last, 4*last, k=1) + avg_pool + flatten, fused; dropout is
    # identity at inference.
    return head_pool(x, params["head_w"], params["head_shift"])


if __name__ == "__main__":
    # small-but-representative MobileNetV2 config
    layer_infos = [
        LayerInfo(in_ch=8, out_ch=8, num_layers=1, stride=1, expand_ratio=1),
        LayerInfo(in_ch=8, out_ch=16, num_layers=2, stride=2, expand_ratio=4),
        LayerInfo(in_ch=16, out_ch=24, num_layers=2, stride=2, expand_ratio=4),
    ]
    cfgs = expand_layer_infos(layer_infos)
    stem_out = layer_infos[0].in_ch
    out_channels = layer_infos[-1].out_ch * 4          # == self.out_channels

    key = jax.random.PRNGKey(0)
    kp, kx = jax.random.split(key)
    params = init_params(kp, cfgs, stem_out, out_channels)

    x = jax.random.normal(kx, (2, 3, 32, 32), jnp.float32)  # NCHW, like PyTorch

    fwd = jax.jit(functools.partial(mobilenet_v2_forward, cfgs=cfgs))
    out = jax.block_until_ready(fwd(params, x))
    assert out.shape == (2, out_channels) and out.dtype == jnp.float32
    print("KERNEL_OK")
</pallas_src>

<mosaic_0001>
module attributes {stable_mosaic.version = 11 : i64} {
  func.func @_pw_kernel(%arg0: i32, %arg1: memref<512x32xbf16, #tpu.memory_space<vmem>>, %arg2: memref<32x8xbf16, #tpu.memory_space<vmem>>, %arg3: memref<1x8xf32, #tpu.memory_space<vmem>>, %arg4: memref<512x8xbf16, #tpu.memory_space<vmem>>) attributes {dimension_semantics = [#tpu.dimension_semantics<parallel>], iteration_bounds = array<i64: 1>, scalar_prefetch = 0 : i64, scratch_operands = 0 : i64, tpu.core_type = #tpu.core_type<tc>, window_params = [{transform_indices = @transform_0, window_bounds = array<i64: 512, 32>}, {pipeline_mode = #tpu.pipeline_mode<synchronous>, transform_indices = @transform_1, window_bounds = array<i64: 32, 8>}, {pipeline_mode = #tpu.pipeline_mode<synchronous>, transform_indices = @transform_2, window_bounds = array<i64: 1, 8>}, {transform_indices = @transform_3, window_bounds = array<i64: 512, 8>}]} {
    %c0 = arith.constant 0 : index
    %c0_0 = arith.constant 0 : index
    %0 = vector.load %arg1[%c0, %c0_0] : memref<512x32xbf16, #tpu.memory_space<vmem>>, vector<512x32xbf16>
    %c0_1 = arith.constant 0 : index
    %c0_2 = arith.constant 0 : index
    %1 = vector.load %arg2[%c0_1, %c0_2] : memref<32x8xbf16, #tpu.memory_space<vmem>>, vector<32x8xbf16>
    %cst = arith.constant dense<0.000000e+00> : vector<512x8xf32>
    %2 = tpu.matmul %0, %1, %cst {dimension_numbers = #tpu.dot_dimension_numbers<[1], [0], [0], [1], [0, 0, 1, 1], [], []>} : vector<512x32xbf16>, vector<32x8xbf16>, vector<512x8xf32> -> vector<512x8xf32>
    %c0_3 = arith.constant 0 : index
    %c0_4 = arith.constant 0 : index
    %3 = vector.load %arg3[%c0_3, %c0_4] : memref<1x8xf32, #tpu.memory_space<vmem>>, vector<1x8xf32>
    %4 = vector.broadcast %3 : vector<1x8xf32> to vector<512x8xf32>
    %5 = arith.addf %2, %4 : vector<512x8xf32>
    %cst_5 = arith.constant 0.000000e+00 : f32
    %cst_6 = arith.constant 6.000000e+00 : f32
    %6 = vector.broadcast %cst_5 : f32 to vector<512x8xf32>
    %7 = arith.maximumf %6, %5 : vector<512x8xf32>
    %8 = vector.broadcast %cst_6 : f32 to vector<512x8xf32>
    %9 = arith.minimumf %8, %7 : vector<512x8xf32>
    %10 = arith.truncf %9 : vector<512x8xf32> to vector<512x8xbf16>
    %c0_7 = arith.constant 0 : index
    %c0_8 = arith.constant 0 : index
    %11 = vector.load %arg4[%c0_7, %c0_8] : memref<512x8xbf16, #tpu.memory_space<vmem>>, vector<512x8xbf16>
    tpu.vector_store %arg4[%c0_7, %c0_8], %10 {strides = array<i32>} : memref<512x8xbf16, #tpu.memory_space<vmem>>, vector<512x8xbf16>,
    return
  }
  func.func @transform_0(%arg0: i32) -> (i32, i32) {
    %c0_i32 = arith.constant 0 : i32
    %c0_i32_0 = arith.constant 0 : i32
    return %arg0, %c0_i32 : i32, i32
  }
  func.func @transform_1(%arg0: i32) -> (i32, i32) {
    %c0_i32 = arith.constant 0 : i32
    %c0_i32_0 = arith.constant 0 : i32
    %c0_i32_1 = arith.constant 0 : i32
    return %c0_i32, %c0_i32_0 : i32, i32
  }
  func.func @transform_2(%arg0: i32) -> (i32, i32) {
    %c0_i32 = arith.constant 0 : i32
    %c0_i32_0 = arith.constant 0 : i32
    %c0_i32_1 = arith.constant 0 : i32
    return %c0_i32, %c0_i32_0 : i32, i32
  }
  func.func @transform_3(%arg0: i32) -> (i32, i32) {
    %c0_i32 = arith.constant 0 : i32
    %c0_i32_0 = arith.constant 0 : i32
    return %arg0, %c0_i32 : i32, i32
  }
}

module attributes {stable_mosaic.version = 11 : i64} {
  func.func @_dw_kernel(%arg0: i32, %arg1: i32, %arg2: memref<1x18x18x8xbf16, #tpu.memory_space<vmem>>, %arg3: memref<9x8xf32, #tpu.memory_space<vmem>>, %arg4: memref<1x8xf32, #tpu.memory_space<vmem>>, %arg5: memref<1x16x16x8xbf16, #tpu.memory_space<vmem>>) attributes {dimension_semantics = [#tpu.dimension_semantics<parallel>, #tpu.dimension_semantics<parallel>], iteration_bounds = array<i64: 2, 1>, scalar_prefetch = 0 : i64, scratch_operands = 0 : i64, tpu.core_type = #tpu.core_type<tc>, window_params = [{transform_indices = @transform_0, window_bounds = array<i64: 1, 18, 18, 8>}, {pipeline_mode = #tpu.pipeline_mode<synchronous>, transform_indices = @transform_1, window_bounds = array<i64: 9, 8>}, {pipeline_mode = #tpu.pipeline_mode<synchronous>, transform_indices = @transform_2, window_bounds = array<i64: 1, 8>}, {transform_indices = @transform_3, window_bounds = array<i64: 1, 16, 16, 8>}]} {
    %c16_i32 = arith.constant 16 : i32
    %0 = arith.muli %arg1, %c16_i32 : i32
    %cst = arith.constant 0.000000e+00 : f32
    %1 = vector.broadcast %cst : f32 to vector<16x16x8xf32>
    %c0_i32 = arith.constant 0 : i32
    %2 = arith.addi %0, %c0_i32 : i32
    %c0 = arith.constant 0 : index
    %3 = arith.index_cast %2 : i32 to index
    %c0_0 = arith.constant 0 : index
    %c0_1 = arith.constant 0 : index
    %4 = vector.load %arg2[%c0, %3, %c0_0, %c0_1] : memref<1x18x18x8xbf16, #tpu.memory_space<vmem>>, vector<1x16x18x8xbf16>
    %5 = vector.shape_cast %4 : vector<1x16x18x8xbf16> to vector<16x18x8xbf16>
    %6 = vector.extract_strided_slice %5 {offsets = [0, 0, 0], sizes = [16, 16, 8], strides = [1, 1, 1]} : vector<16x18x8xbf16> to vector<16x16x8xbf16>
    %7 = arith.extf %6 : vector<16x16x8xbf16> to vector<16x16x8xf32>
    %c0_2 = arith.constant 0 : index
    %c0_3 = arith.constant 0 : index
    %8 = vector.load %arg3[%c0_2, %c0_3] : memref<9x8xf32, #tpu.memory_space<vmem>>, vector<1x8xf32>
    %9 = vector.shape_cast %8 : vector<1x8xf32> to vector<8xf32>
    %10 = vector.shape_cast %9 : vector<8xf32> to vector<1x1x8xf32>
    %11 = vector.broadcast %10 : vector<1x1x8xf32> to vector<16x16x8xf32>
    %12 = arith.mulf %7, %11 : vector<16x16x8xf32>
    %13 = arith.addf %1, %12 : vector<16x16x8xf32>
    %14 = vector.extract_strided_slice %5 {offsets = [0, 1, 0], sizes = [16, 16, 8], strides = [1, 1, 1]} : vector<16x18x8xbf16> to vector<16x16x8xbf16>
    %15 = arith.extf %14 : vector<16x16x8xbf16> to vector<16x16x8xf32>
    %c1 = arith.constant 1 : index
    %c0_4 = arith.constant 0 : index
    %16 = vector.load %arg3[%c1, %c0_4] : memref<9x8xf32, #tpu.memory_space<vmem>>, vector<1x8xf32>
    %17 = vector.shape_cast %16 : vector<1x8xf32> to vector<8xf32>
    %18 = vector.shape_cast %17 : vector<8xf32> to vector<1x1x8xf32>
    %19 = vector.broadcast %18 : vector<1x1x8xf32> to vector<16x16x8xf32>
    %20 = arith.mulf %15, %19 : vector<16x16x8xf32>
    %21 = arith.addf %13, %20 : vector<16x16x8xf32>
    %22 = vector.extract_strided_slice %5 {offsets = [0, 2, 0], sizes = [16, 16, 8], strides = [1, 1, 1]} : vector<16x18x8xbf16> to vector<16x16x8xbf16>
    %23 = arith.extf %22 : vector<16x16x8xbf16> to vector<16x16x8xf32>
    %c2 = arith.constant 2 : index
    %c0_5 = arith.constant 0 : index
    %24 = vector.load %arg3[%c2, %c0_5] : memref<9x8xf32, #tpu.memory_space<vmem>>, vector<1x8xf32>
    %25 = vector.shape_cast %24 : vector<1x8xf32> to vector<8xf32>
    %26 = vector.shape_cast %25 : vector<8xf32> to vector<1x1x8xf32>
    %27 = vector.broadcast %26 : vector<1x1x8xf32> to vector<16x16x8xf32>
    %28 = arith.mulf %23, %27 : vector<16x16x8xf32>
    %29 = arith.addf %21, %28 : vector<16x16x8xf32>
    %c1_i32 = arith.constant 1 : i32
    %30 = arith.addi %0, %c1_i32 : i32
    %c0_6 = arith.constant 0 : index
    %31 = arith.index_cast %30 : i32 to index
    %c0_7 = arith.constant 0 : index
    %c0_8 = arith.constant 0 : index
    %32 = vector.load %arg2[%c0_6, %31, %c0_7, %c0_8] : memref<1x18x18x8xbf16, #tpu.memory_space<vmem>>, vector<1x16x18x8xbf16>
    %33 = vector.shape_cast %32 : vector<1x16x18x8xbf16> to vector<16x18x8xbf16>
    %34 = vector.extract_strided_slice %33 {offsets = [0, 0, 0], sizes = [16, 16, 8], strides = [1, 1, 1]} : vector<16x18x8xbf16> to vector<16x16x8xbf16>
    %35 = arith.extf %34 : vector<16x16x8xbf16> to vector<16x16x8xf32>
    %c3 = arith.constant 3 : index
    %c0_9 = arith.constant 0 : index
    %36 = vector.load %arg3[%c3, %c0_9] : memref<9x8xf32, #tpu.memory_space<vmem>>, vector<1x8xf32>
    %37 = vector.shape_cast %36 : vector<1x8xf32> to vector<8xf32>
    %38 = vector.shape_cast %37 : vector<8xf32> to vector<1x1x8xf32>
    %39 = vector.broadcast %38 : vector<1x1x8xf32> to vector<16x16x8xf32>
    %40 = arith.mulf %35, %39 : vector<16x16x8xf32>
    %41 = arith.addf %29, %40 : vector<16x16x8xf32>
    %42 = vector.extract_strided_slice %33 {offsets = [0, 1, 0], sizes = [16, 16, 8], strides = [1, 1, 1]} : vector<16x18x8xbf16> to vector<16x16x8xbf16>
    %43 = arith.extf %42 : vector<16x16x8xbf16> to vector<16x16x8xf32>
    %c4 = arith.constant 4 : index
    %c0_10 = arith.constant 0 : index
    %44 = vector.load %arg3[%c4, %c0_10] : memref<9x8xf32, #tpu.memory_space<vmem>>, vector<1x8xf32>
    %45 = vector.shape_cast %44 : vector<1x8xf32> to vector<8xf32>
    %46 = vector.shape_cast %45 : vector<8xf32> to vector<1x1x8xf32>
    %47 = vector.broadcast %46 : vector<1x1x8xf32> to vector<16x16x8xf32>
    %48 = arith.mulf %43, %47 : vector<16x16x8xf32>
    %49 = arith.addf %41, %48 : vector<16x16x8xf32>
    %50 = vector.extract_strided_slice %33 {offsets = [0, 2, 0], sizes = [16, 16, 8], strides = [1, 1, 1]} : vector<16x18x8xbf16> to vector<16x16x8xbf16>
    %51 = arith.extf %50 : vector<16x16x8xbf16> to vector<16x16x8xf32>
    %c5 = arith.constant 5 : index
    %c0_11 = arith.constant 0 : index
    %52 = vector.load %arg3[%c5, %c0_11] : memref<9x8xf32, #tpu.memory_space<vmem>>, vector<1x8xf32>
    %53 = vector.shape_cast %52 : vector<1x8xf32> to vector<8xf32>
    %54 = vector.shape_cast %53 : vector<8xf32> to vector<1x1x8xf32>
    %55 = vector.broadcast %54 : vector<1x1x8xf32> to vector<16x16x8xf32>
    %56 = arith.mulf %51, %55 : vector<16x16x8xf32>
    %57 = arith.addf %49, %56 : vector<16x16x8xf32>
    %c2_i32 = arith.constant 2 : i32
    %58 = arith.addi %0, %c2_i32 : i32
    %c0_12 = arith.constant 0 : index
    %59 = arith.index_cast %58 : i32 to index
    %c0_13 = arith.constant 0 : index
    %c0_14 = arith.constant 0 : index
    %60 = vector.load %arg2[%c0_12, %59, %c0_13, %c0_14] : memref<1x18x18x8xbf16, #tpu.memory_space<vmem>>, vector<1x16x18x8xbf16>
    %61 = vector.shape_cast %60 : vector<1x16x18x8xbf16> to vector<16x18x8xbf16>
    %62 = vector.extract_strided_slice %61 {offsets = [0, 0, 0], sizes = [16, 16, 8], strides = [1, 1, 1]} : vector<16x18x8xbf16> to vector<16x16x8xbf16>
    %63 = arith.extf %62 : vector<16x16x8xbf16> to vector<16x16x8xf32>
    %c6 = arith.constant 6 : index
    %c0_15 = arith.constant 0 : index
    %64 = vector.load %arg3[%c6, %c0_15] : memref<9x8xf32, #tpu.memory_space<vmem>>, vector<1x8xf32>
    %65 = vector.shape_cast %64 : vector<1x8xf32> to vector<8xf32>
    %66 = vector.shape_cast %65 : vector<8xf32> to vector<1x1x8xf32>
    %67 = vector.broadcast %66 : vector<1x1x8xf32> to vector<16x16x8xf32>
    %68 = arith.mulf %63, %67 : vector<16x16x8xf32>
    %69 = arith.addf %57, %68 : vector<16x16x8xf32>
    %70 = vector.extract_strided_slice %61 {offsets = [0, 1, 0], sizes = [16, 16, 8], strides = [1, 1, 1]} : vector<16x18x8xbf16> to vector<16x16x8xbf16>
    %71 = arith.extf %70 : vector<16x16x8xbf16> to vector<16x16x8xf32>
    %c7 = arith.constant 7 : index
    %c0_16 = arith.constant 0 : index
    %72 = vector.load %arg3[%c7, %c0_16] : memref<9x8xf32, #tpu.memory_space<vmem>>, vector<1x8xf32>
    %73 = vector.shape_cast %72 : vector<1x8xf32> to vector<8xf32>
    %74 = vector.shape_cast %73 : vector<8xf32> to vector<1x1x8xf32>
    %75 = vector.broadcast %74 : vector<1x1x8xf32> to vector<16x16x8xf32>
    %76 = arith.mulf %71, %75 : vector<16x16x8xf32>
    %77 = arith.addf %69, %76 : vector<16x16x8xf32>
    %78 = vector.extract_strided_slice %61 {offsets = [0, 2, 0], sizes = [16, 16, 8], strides = [1, 1, 1]} : vector<16x18x8xbf16> to vector<16x16x8xbf16>
    %79 = arith.extf %78 : vector<16x16x8xbf16> to vector<16x16x8xf32>
    %c8 = arith.constant 8 : index
    %c0_17 = arith.constant 0 : index
    %80 = vector.load %arg3[%c8, %c0_17] : memref<9x8xf32, #tpu.memory_space<vmem>>, vector<1x8xf32>
    %81 = vector.shape_cast %80 : vector<1x8xf32> to vector<8xf32>
    %82 = vector.shape_cast %81 : vector<8xf32> to vector<1x1x8xf32>
    %83 = vector.broadcast %82 : vector<1x1x8xf32> to vector<16x16x8xf32>
    %84 = arith.mulf %79, %83 : vector<16x16x8xf32>
    %85 = arith.addf %77, %84 : vector<16x16x8xf32>
    %c0_18 = arith.constant 0 : index
    %c0_19 = arith.constant 0 : index
    %86 = vector.load %arg4[%c0_18, %c0_19] : memref<1x8xf32, #tpu.memory_space<vmem>>, vector<1x8xf32>
    %87 = vector.shape_cast %86 : vector<1x8xf32> to vector<1x1x8xf32>
    %88 = vector.broadcast %87 : vector<1x1x8xf32> to vector<16x16x8xf32>
    %89 = arith.addf %85, %88 : vector<16x16x8xf32>
    %cst_20 = arith.constant 0.000000e+00 : f32
    %cst_21 = arith.constant 6.000000e+00 : f32
    %90 = vector.broadcast %cst_20 : f32 to vector<16x16x8xf32>
    %91 = arith.maximumf %90, %89 : vector<16x16x8xf32>
    %92 = vector.broadcast %cst_21 : f32 to vector<16x16x8xf32>
    %93 = arith.minimumf %92, %91 : vector<16x16x8xf32>
    %94 = arith.truncf %93 : vector<16x16x8xf32> to vector<16x16x8xbf16>
    %c0_22 = arith.constant 0 : index
    %c0_23 = arith.constant 0 : index
    %c0_24 = arith.constant 0 : index
    %c0_25 = arith.constant 0 : index
    %95 = vector.load %arg5[%c0_22, %c0_23, %c0_24, %c0_25] : memref<1x16x16x8xbf16, #tpu.memory_space<vmem>>, vector<1x16x16x8xbf16>
    %96 = vector.shape_cast %95 : vector<1x16x16x8xbf16> to vector<16x16x8xbf16>
    %97 = vector.shape_cast %94 : vector<16x16x8xbf16> to vector<1x16x16x8xbf16>
    tpu.vector_store %arg5[%c0_22, %c0_23, %c0_24, %c0_25], %97 {strides = array<i32>} : memref<1x16x16x8xbf16, #tpu.memory_space<vmem>>, vector<1x16x16x8xbf16>,
    return
  }
  func.func @transform_0(%arg0: i32, %arg1: i32) -> (i32, i32, i32, i32) {
    %c0_i32 = arith.constant 0 : i32
    %c0_i32_0 = arith.constant 0 : i32
    %c0_i32_1 = arith.constant 0 : i32
    %c0_i32_2 = arith.constant 0 : i32
    return %arg0, %c0_i32, %c0_i32_0, %c0_i32_1 : i32, i32, i32, i32
  }
  func.func @transform_1(%arg0: i32, %arg1: i32) -> (i32, i32) {
    %c0_i32 = arith.constant 0 : i32
    %c0_i32_0 = arith.constant 0 : i32
    %c0_i32_1 = arith.constant 0 : i32
    return %c0_i32, %c0_i32_0 : i32, i32
  }
  func.func @transform_2(%arg0: i32, %arg1: i32) -> (i32, i32) {
    %c0_i32 = arith.constant 0 : i32
    %c0_i32_0 = arith.constant 0 : i32
    %c0_i32_1 = arith.constant 0 : i32
    return %c0_i32, %c0_i32_0 : i32, i32
  }
  func.func @transform_3(%arg0: i32, %arg1: i32) -> (i32, i32, i32, i32) {
    %c0_i32 = arith.constant 0 : i32
    %c0_i32_0 = arith.constant 0 : i32
    %c0_i32_1 = arith.constant 0 : i32
    return %arg0, %arg1, %c0_i32, %c0_i32_0 : i32, i32, i32, i32
  }
}

module attributes {stable_mosaic.version = 11 : i64} {
  func.func @_pw_res_kernel(%arg0: i32, %arg1: memref<512x8xbf16, #tpu.memory_space<vmem>>, %arg2: memref<8x8xbf16, #tpu.memory_space<vmem>>, %arg3: memref<1x8xf32, #tpu.memory_space<vmem>>, %arg4: memref<512x8xbf16, #tpu.memory_space<vmem>>, %arg5: memref<512x8xbf16, #tpu.memory_space<vmem>>) attributes {dimension_semantics = [#tpu.dimension_semantics<parallel>], iteration_bounds = array<i64: 1>, scalar_prefetch = 0 : i64, scratch_operands = 0 : i64, tpu.core_type = #tpu.core_type<tc>, window_params = [{transform_indices = @transform_0, window_bounds = array<i64: 512, 8>}, {pipeline_mode = #tpu.pipeline_mode<synchronous>, transform_indices = @transform_1, window_bounds = array<i64: 8, 8>}, {pipeline_mode = #tpu.pipeline_mode<synchronous>, transform_indices = @transform_2, window_bounds = array<i64: 1, 8>}, {transform_indices = @transform_3, window_bounds = array<i64: 512, 8>}, {transform_indices = @transform_4, window_bounds = array<i64: 512, 8>}]} {
    %c0 = arith.constant 0 : index
    %c0_0 = arith.constant 0 : index
    %0 = vector.load %arg1[%c0, %c0_0] : memref<512x8xbf16, #tpu.memory_space<vmem>>, vector<512x8xbf16>
    %c0_1 = arith.constant 0 : index
    %c0_2 = arith.constant 0 : index
    %1 = vector.load %arg2[%c0_1, %c0_2] : memref<8x8xbf16, #tpu.memory_space<vmem>>, vector<8x8xbf16>
    %cst = arith.constant dense<0.000000e+00> : vector<512x8xf32>
    %2 = tpu.matmul %0, %1, %cst {dimension_numbers = #tpu.dot_dimension_numbers<[1], [0], [0], [1], [0, 0, 1, 1], [], []>} : vector<512x8xbf16>, vector<8x8xbf16>, vector<512x8xf32> -> vector<512x8xf32>
    %c0_3 = arith.constant 0 : index
    %c0_4 = arith.constant 0 : index
    %3 = vector.load %arg3[%c0_3, %c0_4] : memref<1x8xf32, #tpu.memory_space<vmem>>, vector<1x8xf32>
    %4 = vector.broadcast %3 : vector<1x8xf32> to vector<512x8xf32>
    %5 = arith.addf %2, %4 : vector<512x8xf32>
    %c0_5 = arith.constant 0 : index
    %c0_6 = arith.constant 0 : index
    %6 = vector.load %arg4[%c0_5, %c0_6] : memref<512x8xbf16, #tpu.memory_space<vmem>>, vector<512x8xbf16>
    %7 = arith.extf %6 : vector<512x8xbf16> to vector<512x8xf32>
    %8 = arith.addf %5, %7 : vector<512x8xf32>
    %9 = arith.truncf %8 : vector<512x8xf32> to vector<512x8xbf16>
    %c0_7 = arith.constant 0 : index
    %c0_8 = arith.constant 0 : index
    %10 = vector.load %arg5[%c0_7, %c0_8] : memref<512x8xbf16, #tpu.memory_space<vmem>>, vector<512x8xbf16>
    tpu.vector_store %arg5[%c0_7, %c0_8], %9 {strides = array<i32>} : memref<512x8xbf16, #tpu.memory_space<vmem>>, vector<512x8xbf16>,
    return
  }
  func.func @transform_0(%arg0: i32) -> (i32, i32) {
    %c0_i32 = arith.constant 0 : i32
    %c0_i32_0 = arith.constant 0 : i32
    return %arg0, %c0_i32 : i32, i32
  }
  func.func @transform_1(%arg0: i32) -> (i32, i32) {
    %c0_i32 = arith.constant 0 : i32
    %c0_i32_0 = arith.constant 0 : i32
    %c0_i32_1 = arith.constant 0 : i32
    return %c0_i32, %c0_i32_0 : i32, i32
  }
  func.func @transform_2(%arg0: i32) -> (i32, i32) {
    %c0_i32 = arith.constant 0 : i32
    %c0_i32_0 = arith.constant 0 : i32
    %c0_i32_1 = arith.constant 0 : i32
    return %c0_i32, %c0_i32_0 : i32, i32
  }
  func.func @transform_3(%arg0: i32) -> (i32, i32) {
    %c0_i32 = arith.constant 0 : i32
    %c0_i32_0 = arith.constant 0 : i32
    return %arg0, %c0_i32 : i32, i32
  }
  func.func @transform_4(%arg0: i32) -> (i32, i32) {
    %c0_i32 = arith.constant 0 : i32
    %c0_i32_0 = arith.constant 0 : i32
    return %arg0, %c0_i32 : i32, i32
  }
}

module attributes {stable_mosaic.version = 11 : i64} {
  func.func @_pw_kernel(%arg0: i32, %arg1: memref<512x8xbf16, #tpu.memory_space<vmem>>, %arg2: memref<8x32xbf16, #tpu.memory_space<vmem>>, %arg3: memref<1x32xf32, #tpu.memory_space<vmem>>, %arg4: memref<512x32xbf16, #tpu.memory_space<vmem>>) attributes {dimension_semantics = [#tpu.dimension_semantics<parallel>], iteration_bounds = array<i64: 1>, scalar_prefetch = 0 : i64, scratch_operands = 0 : i64, tpu.core_type = #tpu.core_type<tc>, window_params = [{transform_indices = @transform_0, window_bounds = array<i64: 512, 8>}, {pipeline_mode = #tpu.pipeline_mode<synchronous>, transform_indices = @transform_1, window_bounds = array<i64: 8, 32>}, {pipeline_mode = #tpu.pipeline_mode<synchronous>, transform_indices = @transform_2, window_bounds = array<i64: 1, 32>}, {transform_indices = @transform_3, window_bounds = array<i64: 512, 32>}]} {
    %c0 = arith.constant 0 : index
    %c0_0 = arith.constant 0 : index
    %0 = vector.load %arg1[%c0, %c0_0] : memref<512x8xbf16, #tpu.memory_space<vmem>>, vector<512x8xbf16>
    %c0_1 = arith.constant 0 : index
    %c0_2 = arith.constant 0 : index
    %1 = vector.load %arg2[%c0_1, %c0_2] : memref<8x32xbf16, #tpu.memory_space<vmem>>, vector<8x32xbf16>
    %cst = arith.constant dense<0.000000e+00> : vector<512x32xf32>
    %2 = tpu.matmul %0, %1, %cst {dimension_numbers = #tpu.dot_dimension_numbers<[1], [0], [0], [1], [0, 0, 1, 1], [], []>} : vector<512x8xbf16>, vector<8x32xbf16>, vector<512x32xf32> -> vector<512x32xf32>
    %c0_3 = arith.constant 0 : index
    %c0_4 = arith.constant 0 : index
    %3 = vector.load %arg3[%c0_3, %c0_4] : memref<1x32xf32, #tpu.memory_space<vmem>>, vector<1x32xf32>
    %4 = vector.broadcast %3 : vector<1x32xf32> to vector<512x32xf32>
    %5 = arith.addf %2, %4 : vector<512x32xf32>
    %cst_5 = arith.constant 0.000000e+00 : f32
    %cst_6 = arith.constant 6.000000e+00 : f32
    %6 = vector.broadcast %cst_5 : f32 to vector<512x32xf32>
    %7 = arith.maximumf %6, %5 : vector<512x32xf32>
    %8 = vector.broadcast %cst_6 : f32 to vector<512x32xf32>
    %9 = arith.minimumf %8, %7 : vector<512x32xf32>
    %10 = arith.truncf %9 : vector<512x32xf32> to vector<512x32xbf16>
    %c0_7 = arith.constant 0 : index
    %c0_8 = arith.constant 0 : index
    %11 = vector.load %arg4[%c0_7, %c0_8] : memref<512x32xbf16, #tpu.memory_space<vmem>>, vector<512x32xbf16>
    tpu.vector_store %arg4[%c0_7, %c0_8], %10 {strides = array<i32>} : memref<512x32xbf16, #tpu.memory_space<vmem>>, vector<512x32xbf16>,
    return
  }
  func.func @transform_0(%arg0: i32) -> (i32, i32) {
    %c0_i32 = arith.constant 0 : i32
    %c0_i32_0 = arith.constant 0 : i32
    return %arg0, %c0_i32 : i32, i32
  }
  func.func @transform_1(%arg0: i32) -> (i32, i32) {
    %c0_i32 = arith.constant 0 : i32
    %c0_i32_0 = arith.constant 0 : i32
    %c0_i32_1 = arith.constant 0 : i32
    return %c0_i32, %c0_i32_0 : i32, i32
  }
  func.func @transform_2(%arg0: i32) -> (i32, i32) {
    %c0_i32 = arith.constant 0 : i32
    %c0_i32_0 = arith.constant 0 : i32
    %c0_i32_1 = arith.constant 0 : i32
    return %c0_i32, %c0_i32_0 : i32, i32
  }
  func.func @transform_3(%arg0: i32) -> (i32, i32) {
    %c0_i32 = arith.constant 0 : i32
    %c0_i32_0 = arith.constant 0 : i32
    return %arg0, %c0_i32 : i32, i32
  }
}

module attributes {stable_mosaic.version = 11 : i64} {
  func.func @_dw_kernel(%arg0: i32, %arg1: i32, %arg2: memref<1x9x9x32xbf16, #tpu.memory_space<vmem>>, %arg3: memref<1x9x9x32xbf16, #tpu.memory_space<vmem>>, %arg4: memref<1x9x9x32xbf16, #tpu.memory_space<vmem>>, %arg5: memref<1x9x9x32xbf16, #tpu.memory_space<vmem>>, %arg6: memref<9x32xf32, #tpu.memory_space<vmem>>, %arg7: memref<1x32xf32, #tpu.memory_space<vmem>>, %arg8: memref<1x8x8x32xbf16, #tpu.memory_space<vmem>>) attributes {dimension_semantics = [#tpu.dimension_semantics<parallel>, #tpu.dimension_semantics<parallel>], iteration_bounds = array<i64: 2, 1>, scalar_prefetch = 0 : i64, scratch_operands = 0 : i64, tpu.core_type = #tpu.core_type<tc>, window_params = [{transform_indices = @transform_0, window_bounds = array<i64: 1, 9, 9, 32>}, {transform_indices = @transform_1, window_bounds = array<i64: 1, 9, 9, 32>}, {transform_indices = @transform_2, window_bounds = array<i64: 1, 9, 9, 32>}, {transform_indices = @transform_3, window_bounds = array<i64: 1, 9, 9, 32>}, {pipeline_mode = #tpu.pipeline_mode<synchronous>, transform_indices = @transform_4, window_bounds = array<i64: 9, 32>}, {pipeline_mode = #tpu.pipeline_mode<synchronous>, transform_indices = @transform_5, window_bounds = array<i64: 1, 32>}, {transform_indices = @transform_6, window_bounds = array<i64: 1, 8, 8, 32>}]} {
    %c8_i32 = arith.constant 8 : i32
    %0 = arith.muli %arg1, %c8_i32 : i32
    %cst = arith.constant 0.000000e+00 : f32
    %1 = vector.broadcast %cst : f32 to vector<8x8x32xf32>
    %c0_i32 = arith.constant 0 : i32
    %2 = arith.addi %0, %c0_i32 : i32
    %c0 = arith.constant 0 : index
    %3 = arith.index_cast %2 : i32 to index
    %c0_0 = arith.constant 0 : index
    %c0_1 = arith.constant 0 : index
    %4 = vector.load %arg2[%c0, %3, %c0_0, %c0_1] : memref<1x9x9x32xbf16, #tpu.memory_space<vmem>>, vector<1x8x9x32xbf16>
    %5 = vector.shape_cast %4 : vector<1x8x9x32xbf16> to vector<8x9x32xbf16>
    %c0_i32_2 = arith.constant 0 : i32
    %6 = arith.addi %0, %c0_i32_2 : i32
    %c0_3 = arith.constant 0 : index
    %7 = arith.index_cast %6 : i32 to index
    %c0_4 = arith.constant 0 : index
    %c0_5 = arith.constant 0 : index
    %8 = vector.load %arg3[%c0_3, %7, %c0_4, %c0_5] : memref<1x9x9x32xbf16, #tpu.memory_space<vmem>>, vector<1x8x9x32xbf16>
    %9 = vector.shape_cast %8 : vector<1x8x9x32xbf16> to vector<8x9x32xbf16>
    %10 = vector.extract_strided_slice %5 {offsets = [0, 0, 0], sizes = [8, 8, 32], strides = [1, 1, 1]} : vector<8x9x32xbf16> to vector<8x8x32xbf16>
    %11 = arith.extf %10 : vector<8x8x32xbf16> to vector<8x8x32xf32>
    %c0_6 = arith.constant 0 : index
    %c0_7 = arith.constant 0 : index
    %12 = vector.load %arg6[%c0_6, %c0_7] : memref<9x32xf32, #tpu.memory_space<vmem>>, vector<1x32xf32>
    %13 = vector.shape_cast %12 : vector<1x32xf32> to vector<32xf32>
    %14 = vector.shape_cast %13 : vector<32xf32> to vector<1x1x32xf32>
    %15 = vector.broadcast %14 : vector<1x1x32xf32> to vector<8x8x32xf32>
    %16 = arith.mulf %11, %15 : vector<8x8x32xf32>
    %17 = arith.addf %1, %16 : vector<8x8x32xf32>
    %18 = vector.extract_strided_slice %9 {offsets = [0, 0, 0], sizes = [8, 8, 32], strides = [1, 1, 1]} : vector<8x9x32xbf16> to vector<8x8x32xbf16>
    %19 = arith.extf %18 : vector<8x8x32xbf16> to vector<8x8x32xf32>
    %c1 = arith.constant 1 : index
    %c0_8 = arith.constant 0 : index
    %20 = vector.load %arg6[%c1, %c0_8] : memref<9x32xf32, #tpu.memory_space<vmem>>, vector<1x32xf32>
    %21 = vector.shape_cast %20 : vector<1x32xf32> to vector<32xf32>
    %22 = vector.shape_cast %21 : vector<32xf32> to vector<1x1x32xf32>
    %23 = vector.broadcast %22 : vector<1x1x32xf32> to vector<8x8x32xf32>
    %24 = arith.mulf %19, %23 : vector<8x8x32xf32>
    %25 = arith.addf %17, %24 : vector<8x8x32xf32>
    %26 = vector.extract_strided_slice %5 {offsets = [0, 1, 0], sizes = [8, 8, 32], strides = [1, 1, 1]} : vector<8x9x32xbf16> to vector<8x8x32xbf16>
    %27 = arith.extf %26 : vector<8x8x32xbf16> to vector<8x8x32xf32>
    %c2 = arith.constant 2 : index
    %c0_9 = arith.constant 0 : index
    %28 = vector.load %arg6[%c2, %c0_9] : memref<9x32xf32, #tpu.memory_space<vmem>>, vector<1x32xf32>
    %29 = vector.shape_cast %28 : vector<1x32xf32> to vector<32xf32>
    %30 = vector.shape_cast %29 : vector<32xf32> to vector<1x1x32xf32>
    %31 = vector.broadcast %30 : vector<1x1x32xf32> to vector<8x8x32xf32>
    %32 = arith.mulf %27, %31 : vector<8x8x32xf32>
    %33 = arith.addf %25, %32 : vector<8x8x32xf32>
    %c0_i32_10 = arith.constant 0 : i32
    %34 = arith.addi %0, %c0_i32_10 : i32
    %c0_11 = arith.constant 0 : index
    %35 = arith.index_cast %34 : i32 to index
    %c0_12 = arith.constant 0 : index
    %c0_13 = arith.constant 0 : index
    %36 = vector.load %arg4[%c0_11, %35, %c0_12, %c0_13] : memref<1x9x9x32xbf16, #tpu.memory_space<vmem>>, vector<1x8x9x32xbf16>
    %37 = vector.shape_cast %36 : vector<1x8x9x32xbf16> to vector<8x9x32xbf16>
    %c0_i32_14 = arith.constant 0 : i32
    %38 = arith.addi %0, %c0_i32_14 : i32
    %c0_15 = arith.constant 0 : index
    %39 = arith.index_cast %38 : i32 to index
    %c0_16 = arith.constant 0 : index
    %c0_17 = arith.constant 0 : index
    %40 = vector.load %arg5[%c0_15, %39, %c0_16, %c0_17] : memref<1x9x9x32xbf16, #tpu.memory_space<vmem>>, vector<1x8x9x32xbf16>
    %41 = vector.shape_cast %40 : vector<1x8x9x32xbf16> to vector<8x9x32xbf16>
    %42 = vector.extract_strided_slice %37 {offsets = [0, 0, 0], sizes = [8, 8, 32], strides = [1, 1, 1]} : vector<8x9x32xbf16> to vector<8x8x32xbf16>
    %43 = arith.extf %42 : vector<8x8x32xbf16> to vector<8x8x32xf32>
    %c3 = arith.constant 3 : index
    %c0_18 = arith.constant 0 : index
    %44 = vector.load %arg6[%c3, %c0_18] : memref<9x32xf32, #tpu.memory_space<vmem>>, vector<1x32xf32>
    %45 = vector.shape_cast %44 : vector<1x32xf32> to vector<32xf32>
    %46 = vector.shape_cast %45 : vector<32xf32> to vector<1x1x32xf32>
    %47 = vector.broadcast %46 : vector<1x1x32xf32> to vector<8x8x32xf32>
    %48 = arith.mulf %43, %47 : vector<8x8x32xf32>
    %49 = arith.addf %33, %48 : vector<8x8x32xf32>
    %50 = vector.extract_strided_slice %41 {offsets = [0, 0, 0], sizes = [8, 8, 32], strides = [1, 1, 1]} : vector<8x9x32xbf16> to vector<8x8x32xbf16>
    %51 = arith.extf %50 : vector<8x8x32xbf16> to vector<8x8x32xf32>
    %c4 = arith.constant 4 : index
    %c0_19 = arith.constant 0 : index
    %52 = vector.load %arg6[%c4, %c0_19] : memref<9x32xf32, #tpu.memory_space<vmem>>, vector<1x32xf32>
    %53 = vector.shape_cast %52 : vector<1x32xf32> to vector<32xf32>
    %54 = vector.shape_cast %53 : vector<32xf32> to vector<1x1x32xf32>
    %55 = vector.broadcast %54 : vector<1x1x32xf32> to vector<8x8x32xf32>
    %56 = arith.mulf %51, %55 : vector<8x8x32xf32>
    %57 = arith.addf %49, %56 : vector<8x8x32xf32>
    %58 = vector.extract_strided_slice %37 {offsets = [0, 1, 0], sizes = [8, 8, 32], strides = [1, 1, 1]} : vector<8x9x32xbf16> to vector<8x8x32xbf16>
    %59 = arith.extf %58 : vector<8x8x32xbf16> to vector<8x8x32xf32>
    %c5 = arith.constant 5 : index
    %c0_20 = arith.constant 0 : index
    %60 = vector.load %arg6[%c5, %c0_20] : memref<9x32xf32, #tpu.memory_space<vmem>>, vector<1x32xf32>
    %61 = vector.shape_cast %60 : vector<1x32xf32> to vector<32xf32>
    %62 = vector.shape_cast %61 : vector<32xf32> to vector<1x1x32xf32>
    %63 = vector.broadcast %62 : vector<1x1x32xf32> to vector<8x8x32xf32>
    %64 = arith.mulf %59, %63 : vector<8x8x32xf32>
    %65 = arith.addf %57, %64 : vector<8x8x32xf32>
    %c1_i32 = arith.constant 1 : i32
    %66 = arith.addi %0, %c1_i32 : i32
    %c0_21 = arith.constant 0 : index
    %67 = arith.index_cast %66 : i32 to index
    %c0_22 = arith.constant 0 : index
    %c0_23 = arith.constant 0 : index
    %68 = vector.load %arg2[%c0_21, %67, %c0_22, %c0_23] : memref<1x9x9x32xbf16, #tpu.memory_space<vmem>>, vector<1x8x9x32xbf16>
    %69 = vector.shape_cast %68 : vector<1x8x9x32xbf16> to vector<8x9x32xbf16>
    %c1_i32_24 = arith.constant 1 : i32
    %70 = arith.addi %0, %c1_i32_24 : i32
    %c0_25 = arith.constant 0 : index
    %71 = arith.index_cast %70 : i32 to index
    %c0_26 = arith.constant 0 : index
    %c0_27 = arith.constant 0 : index
    %72 = vector.load %arg3[%c0_25, %71, %c0_26, %c0_27] : memref<1x9x9x32xbf16, #tpu.memory_space<vmem>>, vector<1x8x9x32xbf16>
    %73 = vector.shape_cast %72 : vector<1x8x9x32xbf16> to vector<8x9x32xbf16>
    %74 = vector.extract_strided_slice %69 {offsets = [0, 0, 0], sizes = [8, 8, 32], strides = [1, 1, 1]} : vector<8x9x32xbf16> to vector<8x8x32xbf16>
    %75 = arith.extf %74 : vector<8x8x32xbf16> to vector<8x8x32xf32>
    %c6 = arith.constant 6 : index
    %c0_28 = arith.constant 0 : index
    %76 = vector.load %arg6[%c6, %c0_28] : memref<9x32xf32, #tpu.memory_space<vmem>>, vector<1x32xf32>
    %77 = vector.shape_cast %76 : vector<1x32xf32> to vector<32xf32>
    %78 = vector.shape_cast %77 : vector<32xf32> to vector<1x1x32xf32>
    %79 = vector.broadcast %78 : vector<1x1x32xf32> to vector<8x8x32xf32>
    %80 = arith.mulf %75, %79 : vector<8x8x32xf32>
    %81 = arith.addf %65, %80 : vector<8x8x32xf32>
    %82 = vector.extract_strided_slice %73 {offsets = [0, 0, 0], sizes = [8, 8, 32], strides = [1, 1, 1]} : vector<8x9x32xbf16> to vector<8x8x32xbf16>
    %83 = arith.extf %82 : vector<8x8x32xbf16> to vector<8x8x32xf32>
    %c7 = arith.constant 7 : index
    %c0_29 = arith.constant 0 : index
    %84 = vector.load %arg6[%c7, %c0_29] : memref<9x32xf32, #tpu.memory_space<vmem>>, vector<1x32xf32>
    %85 = vector.shape_cast %84 : vector<1x32xf32> to vector<32xf32>
    %86 = vector.shape_cast %85 : vector<32xf32> to vector<1x1x32xf32>
    %87 = vector.broadcast %86 : vector<1x1x32xf32> to vector<8x8x32xf32>
    %88 = arith.mulf %83, %87 : vector<8x8x32xf32>
    %89 = arith.addf %81, %88 : vector<8x8x32xf32>
    %90 = vector.extract_strided_slice %69 {offsets = [0, 1, 0], sizes = [8, 8, 32], strides = [1, 1, 1]} : vector<8x9x32xbf16> to vector<8x8x32xbf16>
    %91 = arith.extf %90 : vector<8x8x32xbf16> to vector<8x8x32xf32>
    %c8 = arith.constant 8 : index
    %c0_30 = arith.constant 0 : index
    %92 = vector.load %arg6[%c8, %c0_30] : memref<9x32xf32, #tpu.memory_space<vmem>>, vector<1x32xf32>
    %93 = vector.shape_cast %92 : vector<1x32xf32> to vector<32xf32>
    %94 = vector.shape_cast %93 : vector<32xf32> to vector<1x1x32xf32>
    %95 = vector.broadcast %94 : vector<1x1x32xf32> to vector<8x8x32xf32>
    %96 = arith.mulf %91, %95 : vector<8x8x32xf32>
    %97 = arith.addf %89, %96 : vector<8x8x32xf32>
    %c0_31 = arith.constant 0 : index
    %c0_32 = arith.constant 0 : index
    %98 = vector.load %arg7[%c0_31, %c0_32] : memref<1x32xf32, #tpu.memory_space<vmem>>, vector<1x32xf32>
    %99 = vector.shape_cast %98 : vector<1x32xf32> to vector<1x1x32xf32>
    %100 = vector.broadcast %99 : vector<1x1x32xf32> to vector<8x8x32xf32>
    %101 = arith.addf %97, %100 : vector<8x8x32xf32>
    %cst_33 = arith.constant 0.000000e+00 : f32
    %cst_34 = arith.constant 6.000000e+00 : f32
    %102 = vector.broadcast %cst_33 : f32 to vector<8x8x32xf32>
    %103 = arith.maximumf %102, %101 : vector<8x8x32xf32>
    %104 = vector.broadcast %cst_34 : f32 to vector<8x8x32xf32>
    %105 = arith.minimumf %104, %103 : vector<8x8x32xf32>
    %106 = arith.truncf %105 : vector<8x8x32xf32> to vector<8x8x32xbf16>
    %c0_35 = arith.constant 0 : index
    %c0_36 = arith.constant 0 : index
    %c0_37 = arith.constant 0 : index
    %c0_38 = arith.constant 0 : index
    %107 = vector.load %arg8[%c0_35, %c0_36, %c0_37, %c0_38] : memref<1x8x8x32xbf16, #tpu.memory_space<vmem>>, vector<1x8x8x32xbf16>
    %108 = vector.shape_cast %107 : vector<1x8x8x32xbf16> to vector<8x8x32xbf16>
    %109 = vector.shape_cast %106 : vector<8x8x32xbf16> to vector<1x8x8x32xbf16>
    tpu.vector_store %arg8[%c0_35, %c0_36, %c0_37, %c0_38], %109 {strides = array<i32>} : memref<1x8x8x32xbf16, #tpu.memory_space<vmem>>, vector<1x8x8x32xbf16>,
    return
  }
  func.func @transform_0(%arg0: i32, %arg1: i32) -> (i32, i32, i32, i32) {
    %c0_i32 = arith.constant 0 : i32
    %c0_i32_0 = arith.constant 0 : i32
    %c0_i32_1 = arith.constant 0 : i32
    %c0_i32_2 = arith.constant 0 : i32
    return %arg0, %c0_i32, %c0_i32_0, %c0_i32_1 : i32, i32, i32, i32
  }
  func.func @transform_1(%arg0: i32, %arg1: i32) -> (i32, i32, i32, i32) {
    %c0_i32 = arith.constant 0 : i32
    %c0_i32_0 = arith.constant 0 : i32
    %c0_i32_1 = arith.constant 0 : i32
    %c0_i32_2 = arith.constant 0 : i32
    return %arg0, %c0_i32, %c0_i32_0, %c0_i32_1 : i32, i32, i32, i32
  }
  func.func @transform_2(%arg0: i32, %arg1: i32) -> (i32, i32, i32, i32) {
    %c0_i32 = arith.constant 0 : i32
    %c0_i32_0 = arith.constant 0 : i32
    %c0_i32_1 = arith.constant 0 : i32
    %c0_i32_2 = arith.constant 0 : i32
    return %arg0, %c0_i32, %c0_i32_0, %c0_i32_1 : i32, i32, i32, i32
  }
  func.func @transform_3(%arg0: i32, %arg1: i32) -> (i32, i32, i32, i32) {
    %c0_i32 = arith.constant 0 : i32
    %c0_i32_0 = arith.constant 0 : i32
    %c0_i32_1 = arith.constant 0 : i32
    %c0_i32_2 = arith.constant 0 : i32
    return %arg0, %c0_i32, %c0_i32_0, %c0_i32_1 : i32, i32, i32, i32
  }
  func.func @transform_4(%arg0: i32, %arg1: i32) -> (i32, i32) {
    %c0_i32 = arith.constant 0 : i32
    %c0_i32_0 = arith.constant 0 : i32
    %c0_i32_1 = arith.constant 0 : i32
    return %c0_i32, %c0_i32_0 : i32, i32
  }
  func.func @transform_5(%arg0: i32, %arg1: i32) -> (i32, i32) {
    %c0_i32 = arith.constant 0 : i32
    %c0_i32_0 = arith.constant 0 : i32
    %c0_i32_1 = arith.constant 0 : i32
    return %c0_i32, %c0_i32_0 : i32, i32
  }
  func.func @transform_6(%arg0: i32, %arg1: i32) -> (i32, i32, i32, i32) {
    %c0_i32 = arith.constant 0 : i32
    %c0_i32_0 = arith.constant 0 : i32
    %c0_i32_1 = arith.constant 0 : i32
    return %arg0, %arg1, %c0_i32, %c0_i32_0 : i32, i32, i32, i32
  }
}

module attributes {stable_mosaic.version = 11 : i64} {
  func.func @_pw_kernel(%arg0: i32, %arg1: memref<128x32xbf16, #tpu.memory_space<vmem>>, %arg2: memref<32x16xbf16, #tpu.memory_space<vmem>>, %arg3: memref<1x16xf32, #tpu.memory_space<vmem>>, %arg4: memref<128x16xbf16, #tpu.memory_space<vmem>>) attributes {dimension_semantics = [#tpu.dimension_semantics<parallel>], iteration_bounds = array<i64: 1>, scalar_prefetch = 0 : i64, scratch_operands = 0 : i64, tpu.core_type = #tpu.core_type<tc>, window_params = [{transform_indices = @transform_0, window_bounds = array<i64: 128, 32>}, {pipeline_mode = #tpu.pipeline_mode<synchronous>, transform_indices = @transform_1, window_bounds = array<i64: 32, 16>}, {pipeline_mode = #tpu.pipeline_mode<synchronous>, transform_indices = @transform_2, window_bounds = array<i64: 1, 16>}, {transform_indices = @transform_3, window_bounds = array<i64: 128, 16>}]} {
    %c0 = arith.constant 0 : index
    %c0_0 = arith.constant 0 : index
    %0 = vector.load %arg1[%c0, %c0_0] : memref<128x32xbf16, #tpu.memory_space<vmem>>, vector<128x32xbf16>
    %c0_1 = arith.constant 0 : index
    %c0_2 = arith.constant 0 : index
    %1 = vector.load %arg2[%c0_1, %c0_2] : memref<32x16xbf16, #tpu.memory_space<vmem>>, vector<32x16xbf16>
    %cst = arith.constant dense<0.000000e+00> : vector<128x16xf32>
    %2 = tpu.matmul %0, %1, %cst {dimension_numbers = #tpu.dot_dimension_numbers<[1], [0], [0], [1], [0, 0, 1, 1], [], []>} : vector<128x32xbf16>, vector<32x16xbf16>, vector<128x16xf32> -> vector<128x16xf32>
    %c0_3 = arith.constant 0 : index
    %c0_4 = arith.constant 0 : index
    %3 = vector.load %arg3[%c0_3, %c0_4] : memref<1x16xf32, #tpu.memory_space<vmem>>, vector<1x16xf32>
    %4 = vector.broadcast %3 : vector<1x16xf32> to vector<128x16xf32>
    %5 = arith.addf %2, %4 : vector<128x16xf32>
    %6 = arith.truncf %5 : vector<128x16xf32> to vector<128x16xbf16>
    %c0_5 = arith.constant 0 : index
    %c0_6 = arith.constant 0 : index
    %7 = vector.load %arg4[%c0_5, %c0_6] : memref<128x16xbf16, #tpu.memory_space<vmem>>, vector<128x16xbf16>
    tpu.vector_store %arg4[%c0_5, %c0_6], %6 {strides = array<i32>} : memref<128x16xbf16, #tpu.memory_space<vmem>>, vector<128x16xbf16>,
    return
  }
  func.func @transform_0(%arg0: i32) -> (i32, i32) {
    %c0_i32 = arith.constant 0 : i32
    %c0_i32_0 = arith.constant 0 : i32
    return %arg0, %c0_i32 : i32, i32
  }
  func.func @transform_1(%arg0: i32) -> (i32, i32) {
    %c0_i32 = arith.constant 0 : i32
    %c0_i32_0 = arith.constant 0 : i32
    %c0_i32_1 = arith.constant 0 : i32
    return %c0_i32, %c0_i32_0 : i32, i32
  }
  func.func @transform_2(%arg0: i32) -> (i32, i32) {
    %c0_i32 = arith.constant 0 : i32
    %c0_i32_0 = arith.constant 0 : i32
    %c0_i32_1 = arith.constant 0 : i32
    return %c0_i32, %c0_i32_0 : i32, i32
  }
  func.func @transform_3(%arg0: i32) -> (i32, i32) {
    %c0_i32 = arith.constant 0 : i32
    %c0_i32_0 = arith.constant 0 : i32
    return %arg0, %c0_i32 : i32, i32
  }
}

module attributes {stable_mosaic.version = 11 : i64} {
  func.func @_pw_kernel(%arg0: i32, %arg1: memref<128x16xbf16, #tpu.memory_space<vmem>>, %arg2: memref<16x64xbf16, #tpu.memory_space<vmem>>, %arg3: memref<1x64xf32, #tpu.memory_space<vmem>>, %arg4: memref<128x64xbf16, #tpu.memory_space<vmem>>) attributes {dimension_semantics = [#tpu.dimension_semantics<parallel>], iteration_bounds = array<i64: 1>, scalar_prefetch = 0 : i64, scratch_operands = 0 : i64, tpu.core_type = #tpu.core_type<tc>, window_params = [{transform_indices = @transform_0, window_bounds = array<i64: 128, 16>}, {pipeline_mode = #tpu.pipeline_mode<synchronous>, transform_indices = @transform_1, window_bounds = array<i64: 16, 64>}, {pipeline_mode = #tpu.pipeline_mode<synchronous>, transform_indices = @transform_2, window_bounds = array<i64: 1, 64>}, {transform_indices = @transform_3, window_bounds = array<i64: 128, 64>}]} {
    %c0 = arith.constant 0 : index
    %c0_0 = arith.constant 0 : index
    %0 = vector.load %arg1[%c0, %c0_0] : memref<128x16xbf16, #tpu.memory_space<vmem>>, vector<128x16xbf16>
    %c0_1 = arith.constant 0 : index
    %c0_2 = arith.constant 0 : index
    %1 = vector.load %arg2[%c0_1, %c0_2] : memref<16x64xbf16, #tpu.memory_space<vmem>>, vector<16x64xbf16>
    %cst = arith.constant dense<0.000000e+00> : vector<128x64xf32>
    %2 = tpu.matmul %0, %1, %cst {dimension_numbers = #tpu.dot_dimension_numbers<[1], [0], [0], [1], [0, 0, 1, 1], [], []>} : vector<128x16xbf16>, vector<16x64xbf16>, vector<128x64xf32> -> vector<128x64xf32>
    %c0_3 = arith.constant 0 : index
    %c0_4 = arith.constant 0 : index
    %3 = vector.load %arg3[%c0_3, %c0_4] : memref<1x64xf32, #tpu.memory_space<vmem>>, vector<1x64xf32>
    %4 = vector.broadcast %3 : vector<1x64xf32> to vector<128x64xf32>
    %5 = arith.addf %2, %4 : vector<128x64xf32>
    %cst_5 = arith.constant 0.000000e+00 : f32
    %cst_6 = arith.constant 6.000000e+00 : f32
    %6 = vector.broadcast %cst_5 : f32 to vector<128x64xf32>
    %7 = arith.maximumf %6, %5 : vector<128x64xf32>
    %8 = vector.broadcast %cst_6 : f32 to vector<128x64xf32>
    %9 = arith.minimumf %8, %7 : vector<128x64xf32>
    %10 = arith.truncf %9 : vector<128x64xf32> to vector<128x64xbf16>
    %c0_7 = arith.constant 0 : index
    %c0_8 = arith.constant 0 : index
    %11 = vector.load %arg4[%c0_7, %c0_8] : memref<128x64xbf16, #tpu.memory_space<vmem>>, vector<128x64xbf16>
    tpu.vector_store %arg4[%c0_7, %c0_8], %10 {strides = array<i32>} : memref<128x64xbf16, #tpu.memory_space<vmem>>, vector<128x64xbf16>,
    return
  }
  func.func @transform_0(%arg0: i32) -> (i32, i32) {
    %c0_i32 = arith.constant 0 : i32
    %c0_i32_0 = arith.constant 0 : i32
    return %arg0, %c0_i32 : i32, i32
  }
  func.func @transform_1(%arg0: i32) -> (i32, i32) {
    %c0_i32 = arith.constant 0 : i32
    %c0_i32_0 = arith.constant 0 : i32
    %c0_i32_1 = arith.constant 0 : i32
    return %c0_i32, %c0_i32_0 : i32, i32
  }
  func.func @transform_2(%arg0: i32) -> (i32, i32) {
    %c0_i32 = arith.constant 0 : i32
    %c0_i32_0 = arith.constant 0 : i32
    %c0_i32_1 = arith.constant 0 : i32
    return %c0_i32, %c0_i32_0 : i32, i32
  }
  func.func @transform_3(%arg0: i32) -> (i32, i32) {
    %c0_i32 = arith.constant 0 : i32
    %c0_i32_0 = arith.constant 0 : i32
    return %arg0, %c0_i32 : i32, i32
  }
}

module attributes {stable_mosaic.version = 11 : i64} {
  func.func @_dw_kernel(%arg0: i32, %arg1: i32, %arg2: memref<1x10x10x64xbf16, #tpu.memory_space<vmem>>, %arg3: memref<9x64xf32, #tpu.memory_space<vmem>>, %arg4: memref<1x64xf32, #tpu.memory_space<vmem>>, %arg5: memref<1x8x8x64xbf16, #tpu.memory_space<vmem>>) attributes {dimension_semantics = [#tpu.dimension_semantics<parallel>, #tpu.dimension_semantics<parallel>], iteration_bounds = array<i64: 2, 1>, scalar_prefetch = 0 : i64, scratch_operands = 0 : i64, tpu.core_type = #tpu.core_type<tc>, window_params = [{transform_indices = @transform_0, window_bounds = array<i64: 1, 10, 10, 64>}, {pipeline_mode = #tpu.pipeline_mode<synchronous>, transform_indices = @transform_1, window_bounds = array<i64: 9, 64>}, {pipeline_mode = #tpu.pipeline_mode<synchronous>, transform_indices = @transform_2, window_bounds = array<i64: 1, 64>}, {transform_indices = @transform_3, window_bounds = array<i64: 1, 8, 8, 64>}]} {
    %c8_i32 = arith.constant 8 : i32
    %0 = arith.muli %arg1, %c8_i32 : i32
    %cst = arith.constant 0.000000e+00 : f32
    %1 = vector.broadcast %cst : f32 to vector<8x8x64xf32>
    %c0_i32 = arith.constant 0 : i32
    %2 = arith.addi %0, %c0_i32 : i32
    %c0 = arith.constant 0 : index
    %3 = arith.index_cast %2 : i32 to index
    %c0_0 = arith.constant 0 : index
    %c0_1 = arith.constant 0 : index
    %4 = vector.load %arg2[%c0, %3, %c0_0, %c0_1] : memref<1x10x10x64xbf16, #tpu.memory_space<vmem>>, vector<1x8x10x64xbf16>
    %5 = vector.shape_cast %4 : vector<1x8x10x64xbf16> to vector<8x10x64xbf16>
    %6 = vector.extract_strided_slice %5 {offsets = [0, 0, 0], sizes = [8, 8, 64], strides = [1, 1, 1]} : vector<8x10x64xbf16> to vector<8x8x64xbf16>
    %7 = arith.extf %6 : vector<8x8x64xbf16> to vector<8x8x64xf32>
    %c0_2 = arith.constant 0 : index
    %c0_3 = arith.constant 0 : index
    %8 = vector.load %arg3[%c0_2, %c0_3] : memref<9x64xf32, #tpu.memory_space<vmem>>, vector<1x64xf32>
    %9 = vector.shape_cast %8 : vector<1x64xf32> to vector<64xf32>
    %10 = vector.shape_cast %9 : vector<64xf32> to vector<1x1x64xf32>
    %11 = vector.broadcast %10 : vector<1x1x64xf32> to vector<8x8x64xf32>
    %12 = arith.mulf %7, %11 : vector<8x8x64xf32>
    %13 = arith.addf %1, %12 : vector<8x8x64xf32>
    %14 = vector.extract_strided_slice %5 {offsets = [0, 1, 0], sizes = [8, 8, 64], strides = [1, 1, 1]} : vector<8x10x64xbf16> to vector<8x8x64xbf16>
    %15 = arith.extf %14 : vector<8x8x64xbf16> to vector<8x8x64xf32>
    %c1 = arith.constant 1 : index
    %c0_4 = arith.constant 0 : index
    %16 = vector.load %arg3[%c1, %c0_4] : memref<9x64xf32, #tpu.memory_space<vmem>>, vector<1x64xf32>
    %17 = vector.shape_cast %16 : vector<1x64xf32> to vector<64xf32>
    %18 = vector.shape_cast %17 : vector<64xf32> to vector<1x1x64xf32>
    %19 = vector.broadcast %18 : vector<1x1x64xf32> to vector<8x8x64xf32>
    %20 = arith.mulf %15, %19 : vector<8x8x64xf32>
    %21 = arith.addf %13, %20 : vector<8x8x64xf32>
    %22 = vector.extract_strided_slice %5 {offsets = [0, 2, 0], sizes = [8, 8, 64], strides = [1, 1, 1]} : vector<8x10x64xbf16> to vector<8x8x64xbf16>
    %23 = arith.extf %22 : vector<8x8x64xbf16> to vector<8x8x64xf32>
    %c2 = arith.constant 2 : index
    %c0_5 = arith.constant 0 : index
    %24 = vector.load %arg3[%c2, %c0_5] : memref<9x64xf32, #tpu.memory_space<vmem>>, vector<1x64xf32>
    %25 = vector.shape_cast %24 : vector<1x64xf32> to vector<64xf32>
    %26 = vector.shape_cast %25 : vector<64xf32> to vector<1x1x64xf32>
    %27 = vector.broadcast %26 : vector<1x1x64xf32> to vector<8x8x64xf32>
    %28 = arith.mulf %23, %27 : vector<8x8x64xf32>
    %29 = arith.addf %21, %28 : vector<8x8x64xf32>
    %c1_i32 = arith.constant 1 : i32
    %30 = arith.addi %0, %c1_i32 : i32
    %c0_6 = arith.constant 0 : index
    %31 = arith.index_cast %30 : i32 to index
    %c0_7 = arith.constant 0 : index
    %c0_8 = arith.constant 0 : index
    %32 = vector.load %arg2[%c0_6, %31, %c0_7, %c0_8] : memref<1x10x10x64xbf16, #tpu.memory_space<vmem>>, vector<1x8x10x64xbf16>
    %33 = vector.shape_cast %32 : vector<1x8x10x64xbf16> to vector<8x10x64xbf16>
    %34 = vector.extract_strided_slice %33 {offsets = [0, 0, 0], sizes = [8, 8, 64], strides = [1, 1, 1]} : vector<8x10x64xbf16> to vector<8x8x64xbf16>
    %35 = arith.extf %34 : vector<8x8x64xbf16> to vector<8x8x64xf32>
    %c3 = arith.constant 3 : index
    %c0_9 = arith.constant 0 : index
    %36 = vector.load %arg3[%c3, %c0_9] : memref<9x64xf32, #tpu.memory_space<vmem>>, vector<1x64xf32>
    %37 = vector.shape_cast %36 : vector<1x64xf32> to vector<64xf32>
    %38 = vector.shape_cast %37 : vector<64xf32> to vector<1x1x64xf32>
    %39 = vector.broadcast %38 : vector<1x1x64xf32> to vector<8x8x64xf32>
    %40 = arith.mulf %35, %39 : vector<8x8x64xf32>
    %41 = arith.addf %29, %40 : vector<8x8x64xf32>
    %42 = vector.extract_strided_slice %33 {offsets = [0, 1, 0], sizes = [8, 8, 64], strides = [1, 1, 1]} : vector<8x10x64xbf16> to vector<8x8x64xbf16>
    %43 = arith.extf %42 : vector<8x8x64xbf16> to vector<8x8x64xf32>
    %c4 = arith.constant 4 : index
    %c0_10 = arith.constant 0 : index
    %44 = vector.load %arg3[%c4, %c0_10] : memref<9x64xf32, #tpu.memory_space<vmem>>, vector<1x64xf32>
    %45 = vector.shape_cast %44 : vector<1x64xf32> to vector<64xf32>
    %46 = vector.shape_cast %45 : vector<64xf32> to vector<1x1x64xf32>
    %47 = vector.broadcast %46 : vector<1x1x64xf32> to vector<8x8x64xf32>
    %48 = arith.mulf %43, %47 : vector<8x8x64xf32>
    %49 = arith.addf %41, %48 : vector<8x8x64xf32>
    %50 = vector.extract_strided_slice %33 {offsets = [0, 2, 0], sizes = [8, 8, 64], strides = [1, 1, 1]} : vector<8x10x64xbf16> to vector<8x8x64xbf16>
    %51 = arith.extf %50 : vector<8x8x64xbf16> to vector<8x8x64xf32>
    %c5 = arith.constant 5 : index
    %c0_11 = arith.constant 0 : index
    %52 = vector.load %arg3[%c5, %c0_11] : memref<9x64xf32, #tpu.memory_space<vmem>>, vector<1x64xf32>
    %53 = vector.shape_cast %52 : vector<1x64xf32> to vector<64xf32>
    %54 = vector.shape_cast %53 : vector<64xf32> to vector<1x1x64xf32>
    %55 = vector.broadcast %54 : vector<1x1x64xf32> to vector<8x8x64xf32>
    %56 = arith.mulf %51, %55 : vector<8x8x64xf32>
    %57 = arith.addf %49, %56 : vector<8x8x64xf32>
    %c2_i32 = arith.constant 2 : i32
    %58 = arith.addi %0, %c2_i32 : i32
    %c0_12 = arith.constant 0 : index
    %59 = arith.index_cast %58 : i32 to index
    %c0_13 = arith.constant 0 : index
    %c0_14 = arith.constant 0 : index
    %60 = vector.load %arg2[%c0_12, %59, %c0_13, %c0_14] : memref<1x10x10x64xbf16, #tpu.memory_space<vmem>>, vector<1x8x10x64xbf16>
    %61 = vector.shape_cast %60 : vector<1x8x10x64xbf16> to vector<8x10x64xbf16>
    %62 = vector.extract_strided_slice %61 {offsets = [0, 0, 0], sizes = [8, 8, 64], strides = [1, 1, 1]} : vector<8x10x64xbf16> to vector<8x8x64xbf16>
    %63 = arith.extf %62 : vector<8x8x64xbf16> to vector<8x8x64xf32>
    %c6 = arith.constant 6 : index
    %c0_15 = arith.constant 0 : index
    %64 = vector.load %arg3[%c6, %c0_15] : memref<9x64xf32, #tpu.memory_space<vmem>>, vector<1x64xf32>
    %65 = vector.shape_cast %64 : vector<1x64xf32> to vector<64xf32>
    %66 = vector.shape_cast %65 : vector<64xf32> to vector<1x1x64xf32>
    %67 = vector.broadcast %66 : vector<1x1x64xf32> to vector<8x8x64xf32>
    %68 = arith.mulf %63, %67 : vector<8x8x64xf32>
    %69 = arith.addf %57, %68 : vector<8x8x64xf32>
    %70 = vector.extract_strided_slice %61 {offsets = [0, 1, 0], sizes = [8, 8, 64], strides = [1, 1, 1]} : vector<8x10x64xbf16> to vector<8x8x64xbf16>
    %71 = arith.extf %70 : vector<8x8x64xbf16> to vector<8x8x64xf32>
    %c7 = arith.constant 7 : index
    %c0_16 = arith.constant 0 : index
    %72 = vector.load %arg3[%c7, %c0_16] : memref<9x64xf32, #tpu.memory_space<vmem>>, vector<1x64xf32>
    %73 = vector.shape_cast %72 : vector<1x64xf32> to vector<64xf32>
    %74 = vector.shape_cast %73 : vector<64xf32> to vector<1x1x64xf32>
    %75 = vector.broadcast %74 : vector<1x1x64xf32> to vector<8x8x64xf32>
    %76 = arith.mulf %71, %75 : vector<8x8x64xf32>
    %77 = arith.addf %69, %76 : vector<8x8x64xf32>
    %78 = vector.extract_strided_slice %61 {offsets = [0, 2, 0], sizes = [8, 8, 64], strides = [1, 1, 1]} : vector<8x10x64xbf16> to vector<8x8x64xbf16>
    %79 = arith.extf %78 : vector<8x8x64xbf16> to vector<8x8x64xf32>
    %c8 = arith.constant 8 : index
    %c0_17 = arith.constant 0 : index
    %80 = vector.load %arg3[%c8, %c0_17] : memref<9x64xf32, #tpu.memory_space<vmem>>, vector<1x64xf32>
    %81 = vector.shape_cast %80 : vector<1x64xf32> to vector<64xf32>
    %82 = vector.shape_cast %81 : vector<64xf32> to vector<1x1x64xf32>
    %83 = vector.broadcast %82 : vector<1x1x64xf32> to vector<8x8x64xf32>
    %84 = arith.mulf %79, %83 : vector<8x8x64xf32>
    %85 = arith.addf %77, %84 : vector<8x8x64xf32>
    %c0_18 = arith.constant 0 : index
    %c0_19 = arith.constant 0 : index
    %86 = vector.load %arg4[%c0_18, %c0_19] : memref<1x64xf32, #tpu.memory_space<vmem>>, vector<1x64xf32>
    %87 = vector.shape_cast %86 : vector<1x64xf32> to vector<1x1x64xf32>
    %88 = vector.broadcast %87 : vector<1x1x64xf32> to vector<8x8x64xf32>
    %89 = arith.addf %85, %88 : vector<8x8x64xf32>
    %cst_20 = arith.constant 0.000000e+00 : f32
    %cst_21 = arith.constant 6.000000e+00 : f32
    %90 = vector.broadcast %cst_20 : f32 to vector<8x8x64xf32>
    %91 = arith.maximumf %90, %89 : vector<8x8x64xf32>
    %92 = vector.broadcast %cst_21 : f32 to vector<8x8x64xf32>
    %93 = arith.minimumf %92, %91 : vector<8x8x64xf32>
    %94 = arith.truncf %93 : vector<8x8x64xf32> to vector<8x8x64xbf16>
    %c0_22 = arith.constant 0 : index
    %c0_23 = arith.constant 0 : index
    %c0_24 = arith.constant 0 : index
    %c0_25 = arith.constant 0 : index
    %95 = vector.load %arg5[%c0_22, %c0_23, %c0_24, %c0_25] : memref<1x8x8x64xbf16, #tpu.memory_space<vmem>>, vector<1x8x8x64xbf16>
    %96 = vector.shape_cast %95 : vector<1x8x8x64xbf16> to vector<8x8x64xbf16>
    %97 = vector.shape_cast %94 : vector<8x8x64xbf16> to vector<1x8x8x64xbf16>
    tpu.vector_store %arg5[%c0_22, %c0_23, %c0_24, %c0_25], %97 {strides = array<i32>} : memref<1x8x8x64xbf16, #tpu.memory_space<vmem>>, vector<1x8x8x64xbf16>,
    return
  }
  func.func @transform_0(%arg0: i32, %arg1: i32) -> (i32, i32, i32, i32) {
    %c0_i32 = arith.constant 0 : i32
    %c0_i32_0 = arith.constant 0 : i32
    %c0_i32_1 = arith.constant 0 : i32
    %c0_i32_2 = arith.constant 0 : i32
    return %arg0, %c0_i32, %c0_i32_0, %c0_i32_1 : i32, i32, i32, i32
  }
  func.func @transform_1(%arg0: i32, %arg1: i32) -> (i32, i32) {
    %c0_i32 = arith.constant 0 : i32
    %c0_i32_0 = arith.constant 0 : i32
    %c0_i32_1 = arith.constant 0 : i32
    return %c0_i32, %c0_i32_0 : i32, i32
  }
  func.func @transform_2(%arg0: i32, %arg1: i32) -> (i32, i32) {
    %c0_i32 = arith.constant 0 : i32
    %c0_i32_0 = arith.constant 0 : i32
    %c0_i32_1 = arith.constant 0 : i32
    return %c0_i32, %c0_i32_0 : i32, i32
  }
  func.func @transform_3(%arg0: i32, %arg1: i32) -> (i32, i32, i32, i32) {
    %c0_i32 = arith.constant 0 : i32
    %c0_i32_0 = arith.constant 0 : i32
    %c0_i32_1 = arith.constant 0 : i32
    return %arg0, %arg1, %c0_i32, %c0_i32_0 : i32, i32, i32, i32
  }
}

module attributes {stable_mosaic.version = 11 : i64} {
  func.func @_pw_res_kernel(%arg0: i32, %arg1: memref<128x64xbf16, #tpu.memory_space<vmem>>, %arg2: memref<64x16xbf16, #tpu.memory_space<vmem>>, %arg3: memref<1x16xf32, #tpu.memory_space<vmem>>, %arg4: memref<128x16xbf16, #tpu.memory_space<vmem>>, %arg5: memref<128x16xbf16, #tpu.memory_space<vmem>>) attributes {dimension_semantics = [#tpu.dimension_semantics<parallel>], iteration_bounds = array<i64: 1>, scalar_prefetch = 0 : i64, scratch_operands = 0 : i64, tpu.core_type = #tpu.core_type<tc>, window_params = [{transform_indices = @transform_0, window_bounds = array<i64: 128, 64>}, {pipeline_mode = #tpu.pipeline_mode<synchronous>, transform_indices = @transform_1, window_bounds = array<i64: 64, 16>}, {pipeline_mode = #tpu.pipeline_mode<synchronous>, transform_indices = @transform_2, window_bounds = array<i64: 1, 16>}, {transform_indices = @transform_3, window_bounds = array<i64: 128, 16>}, {transform_indices = @transform_4, window_bounds = array<i64: 128, 16>}]} {
    %c0 = arith.constant 0 : index
    %c0_0 = arith.constant 0 : index
    %0 = vector.load %arg1[%c0, %c0_0] : memref<128x64xbf16, #tpu.memory_space<vmem>>, vector<128x64xbf16>
    %c0_1 = arith.constant 0 : index
    %c0_2 = arith.constant 0 : index
    %1 = vector.load %arg2[%c0_1, %c0_2] : memref<64x16xbf16, #tpu.memory_space<vmem>>, vector<64x16xbf16>
    %cst = arith.constant dense<0.000000e+00> : vector<128x16xf32>
    %2 = tpu.matmul %0, %1, %cst {dimension_numbers = #tpu.dot_dimension_numbers<[1], [0], [0], [1], [0, 0, 1, 1], [], []>} : vector<128x64xbf16>, vector<64x16xbf16>, vector<128x16xf32> -> vector<128x16xf32>
    %c0_3 = arith.constant 0 : index
    %c0_4 = arith.constant 0 : index
    %3 = vector.load %arg3[%c0_3, %c0_4] : memref<1x16xf32, #tpu.memory_space<vmem>>, vector<1x16xf32>
    %4 = vector.broadcast %3 : vector<1x16xf32> to vector<128x16xf32>
    %5 = arith.addf %2, %4 : vector<128x16xf32>
    %c0_5 = arith.constant 0 : index
    %c0_6 = arith.constant 0 : index
    %6 = vector.load %arg4[%c0_5, %c0_6] : memref<128x16xbf16, #tpu.memory_space<vmem>>, vector<128x16xbf16>
    %7 = arith.extf %6 : vector<128x16xbf16> to vector<128x16xf32>
    %8 = arith.addf %5, %7 : vector<128x16xf32>
    %9 = arith.truncf %8 : vector<128x16xf32> to vector<128x16xbf16>
    %c0_7 = arith.constant 0 : index
    %c0_8 = arith.constant 0 : index
    %10 = vector.load %arg5[%c0_7, %c0_8] : memref<128x16xbf16, #tpu.memory_space<vmem>>, vector<128x16xbf16>
    tpu.vector_store %arg5[%c0_7, %c0_8], %9 {strides = array<i32>} : memref<128x16xbf16, #tpu.memory_space<vmem>>, vector<128x16xbf16>,
    return
  }
  func.func @transform_0(%arg0: i32) -> (i32, i32) {
    %c0_i32 = arith.constant 0 : i32
    %c0_i32_0 = arith.constant 0 : i32
    return %arg0, %c0_i32 : i32, i32
  }
  func.func @transform_1(%arg0: i32) -> (i32, i32) {
    %c0_i32 = arith.constant 0 : i32
    %c0_i32_0 = arith.constant 0 : i32
    %c0_i32_1 = arith.constant 0 : i32
    return %c0_i32, %c0_i32_0 : i32, i32
  }
  func.func @transform_2(%arg0: i32) -> (i32, i32) {
    %c0_i32 = arith.constant 0 : i32
    %c0_i32_0 = arith.constant 0 : i32
    %c0_i32_1 = arith.constant 0 : i32
    return %c0_i32, %c0_i32_0 : i32, i32
  }
  func.func @transform_3(%arg0: i32) -> (i32, i32) {
    %c0_i32 = arith.constant 0 : i32
    %c0_i32_0 = arith.constant 0 : i32
    return %arg0, %c0_i32 : i32, i32
  }
  func.func @transform_4(%arg0: i32) -> (i32, i32) {
    %c0_i32 = arith.constant 0 : i32
    %c0_i32_0 = arith.constant 0 : i32
    return %arg0, %c0_i32 : i32, i32
  }
}

module attributes {stable_mosaic.version = 11 : i64} {
  func.func @_pw_kernel(%arg0: i32, %arg1: memref<32x64xbf16, #tpu.memory_space<vmem>>, %arg2: memref<64x24xbf16, #tpu.memory_space<vmem>>, %arg3: memref<1x24xf32, #tpu.memory_space<vmem>>, %arg4: memref<32x24xbf16, #tpu.memory_space<vmem>>) attributes {dimension_semantics = [#tpu.dimension_semantics<parallel>], iteration_bounds = array<i64: 1>, scalar_prefetch = 0 : i64, scratch_operands = 0 : i64, tpu.core_type = #tpu.core_type<tc>, window_params = [{transform_indices = @transform_0, window_bounds = array<i64: 32, 64>}, {pipeline_mode = #tpu.pipeline_mode<synchronous>, transform_indices = @transform_1, window_bounds = array<i64: 64, 24>}, {pipeline_mode = #tpu.pipeline_mode<synchronous>, transform_indices = @transform_2, window_bounds = array<i64: 1, 24>}, {transform_indices = @transform_3, window_bounds = array<i64: 32, 24>}]} {
    %c0 = arith.constant 0 : index
    %c0_0 = arith.constant 0 : index
    %0 = vector.load %arg1[%c0, %c0_0] : memref<32x64xbf16, #tpu.memory_space<vmem>>, vector<32x64xbf16>
    %c0_1 = arith.constant 0 : index
    %c0_2 = arith.constant 0 : index
    %1 = vector.load %arg2[%c0_1, %c0_2] : memref<64x24xbf16, #tpu.memory_space<vmem>>, vector<64x24xbf16>
    %cst = arith.constant dense<0.000000e+00> : vector<32x24xf32>
    %2 = tpu.matmul %0, %1, %cst {dimension_numbers = #tpu.dot_dimension_numbers<[1], [0], [0], [1], [0, 0, 1, 1], [], []>} : vector<32x64xbf16>, vector<64x24xbf16>, vector<32x24xf32> -> vector<32x24xf32>
    %c0_3 = arith.constant 0 : index
    %c0_4 = arith.constant 0 : index
    %3 = vector.load %arg3[%c0_3, %c0_4] : memref<1x24xf32, #tpu.memory_space<vmem>>, vector<1x24xf32>
    %4 = vector.broadcast %3 : vector<1x24xf32> to vector<32x24xf32>
    %5 = arith.addf %2, %4 : vector<32x24xf32>
    %6 = arith.truncf %5 : vector<32x24xf32> to vector<32x24xbf16>
    %c0_5 = arith.constant 0 : index
    %c0_6 = arith.constant 0 : index
    %7 = vector.load %arg4[%c0_5, %c0_6] : memref<32x24xbf16, #tpu.memory_space<vmem>>, vector<32x24xbf16>
    tpu.vector_store %arg4[%c0_5, %c0_6], %6 {strides = array<i32>} : memref<32x24xbf16, #tpu.memory_space<vmem>>, vector<32x24xbf16>,
    return
  }
  func.func @transform_0(%arg0: i32) -> (i32, i32) {
    %c0_i32 = arith.constant 0 : i32
    %c0_i32_0 = arith.constant 0 : i32
    return %arg0, %c0_i32 : i32, i32
  }
  func.func @transform_1(%arg0: i32) -> (i32, i32) {
    %c0_i32 = arith.constant 0 : i32
    %c0_i32_0 = arith.constant 0 : i32
    %c0_i32_1 = arith.constant 0 : i32
    return %c0_i32, %c0_i32_0 : i32, i32
  }
  func.func @transform_2(%arg0: i32) -> (i32, i32) {
    %c0_i32 = arith.constant 0 : i32
    %c0_i32_0 = arith.constant 0 : i32
    %c0_i32_1 = arith.constant 0 : i32
    return %c0_i32, %c0_i32_0 : i32, i32
  }
  func.func @transform_3(%arg0: i32) -> (i32, i32) {
    %c0_i32 = arith.constant 0 : i32
    %c0_i32_0 = arith.constant 0 : i32
    return %arg0, %c0_i32 : i32, i32
  }
}

module attributes {stable_mosaic.version = 11 : i64} {
  func.func @_dw_kernel(%arg0: i32, %arg1: i32, %arg2: memref<1x5x5x64xbf16, #tpu.memory_space<vmem>>, %arg3: memref<1x5x5x64xbf16, #tpu.memory_space<vmem>>, %arg4: memref<1x5x5x64xbf16, #tpu.memory_space<vmem>>, %arg5: memref<1x5x5x64xbf16, #tpu.memory_space<vmem>>, %arg6: memref<9x64xf32, #tpu.memory_space<vmem>>, %arg7: memref<1x64xf32, #tpu.memory_space<vmem>>, %arg8: memref<1x4x4x64xbf16, #tpu.memory_space<vmem>>) attributes {dimension_semantics = [#tpu.dimension_semantics<parallel>, #tpu.dimension_semantics<parallel>], iteration_bounds = array<i64: 2, 1>, scalar_prefetch = 0 : i64, scratch_operands = 0 : i64, tpu.core_type = #tpu.core_type<tc>, window_params = [{transform_indices = @transform_0, window_bounds = array<i64: 1, 5, 5, 64>}, {transform_indices = @transform_1, window_bounds = array<i64: 1, 5, 5, 64>}, {transform_indices = @transform_2, window_bounds = array<i64: 1, 5, 5, 64>}, {transform_indices = @transform_3, window_bounds = array<i64: 1, 5, 5, 64>}, {pipeline_mode = #tpu.pipeline_mode<synchronous>, transform_indices = @transform_4, window_bounds = array<i64: 9, 64>}, {pipeline_mode = #tpu.pipeline_mode<synchronous>, transform_indices = @transform_5, window_bounds = array<i64: 1, 64>}, {transform_indices = @transform_6, window_bounds = array<i64: 1, 4, 4, 64>}]} {
    %c4_i32 = arith.constant 4 : i32
    %0 = arith.muli %arg1, %c4_i32 : i32
    %cst = arith.constant 0.000000e+00 : f32
    %1 = vector.broadcast %cst : f32 to vector<4x4x64xf32>
    %c0_i32 = arith.constant 0 : i32
    %2 = arith.addi %0, %c0_i32 : i32
    %c0 = arith.constant 0 : index
    %3 = arith.index_cast %2 : i32 to index
    %c0_0 = arith.constant 0 : index
    %c0_1 = arith.constant 0 : index
    %4 = vector.load %arg2[%c0, %3, %c0_0, %c0_1] : memref<1x5x5x64xbf16, #tpu.memory_space<vmem>>, vector<1x4x5x64xbf16>
    %5 = vector.shape_cast %4 : vector<1x4x5x64xbf16> to vector<4x5x64xbf16>
    %c0_i32_2 = arith.constant 0 : i32
    %6 = arith.addi %0, %c0_i32_2 : i32
    %c0_3 = arith.constant 0 : index
    %7 = arith.index_cast %6 : i32 to index
    %c0_4 = arith.constant 0 : index
    %c0_5 = arith.constant 0 : index
    %8 = vector.load %arg3[%c0_3, %7, %c0_4, %c0_5] : memref<1x5x5x64xbf16, #tpu.memory_space<vmem>>, vector<1x4x5x64xbf16>
    %9 = vector.shape_cast %8 : vector<1x4x5x64xbf16> to vector<4x5x64xbf16>
    %10 = vector.extract_strided_slice %5 {offsets = [0, 0, 0], sizes = [4, 4, 64], strides = [1, 1, 1]} : vector<4x5x64xbf16> to vector<4x4x64xbf16>
    %11 = arith.extf %10 : vector<4x4x64xbf16> to vector<4x4x64xf32>
    %c0_6 = arith.constant 0 : index
    %c0_7 = arith.constant 0 : index
    %12 = vector.load %arg6[%c0_6, %c0_7] : memref<9x64xf32, #tpu.memory_space<vmem>>, vector<1x64xf32>
    %13 = vector.shape_cast %12 : vector<1x64xf32> to vector<64xf32>
    %14 = vector.shape_cast %13 : vector<64xf32> to vector<1x1x64xf32>
    %15 = vector.broadcast %14 : vector<1x1x64xf32> to vector<4x4x64xf32>
    %16 = arith.mulf %11, %15 : vector<4x4x64xf32>
    %17 = arith.addf %1, %16 : vector<4x4x64xf32>
    %18 = vector.extract_strided_slice %9 {offsets = [0, 0, 0], sizes = [4, 4, 64], strides = [1, 1, 1]} : vector<4x5x64xbf16> to vector<4x4x64xbf16>
    %19 = arith.extf %18 : vector<4x4x64xbf16> to vector<4x4x64xf32>
    %c1 = arith.constant 1 : index
    %c0_8 = arith.constant 0 : index
    %20 = vector.load %arg6[%c1, %c0_8] : memref<9x64xf32, #tpu.memory_space<vmem>>, vector<1x64xf32>
    %21 = vector.shape_cast %20 : vector<1x64xf32> to vector<64xf32>
    %22 = vector.shape_cast %21 : vector<64xf32> to vector<1x1x64xf32>
    %23 = vector.broadcast %22 : vector<1x1x64xf32> to vector<4x4x64xf32>
    %24 = arith.mulf %19, %23 : vector<4x4x64xf32>
    %25 = arith.addf %17, %24 : vector<4x4x64xf32>
    %26 = vector.extract_strided_slice %5 {offsets = [0, 1, 0], sizes = [4, 4, 64], strides = [1, 1, 1]} : vector<4x5x64xbf16> to vector<4x4x64xbf16>
    %27 = arith.extf %26 : vector<4x4x64xbf16> to vector<4x4x64xf32>
    %c2 = arith.constant 2 : index
    %c0_9 = arith.constant 0 : index
    %28 = vector.load %arg6[%c2, %c0_9] : memref<9x64xf32, #tpu.memory_space<vmem>>, vector<1x64xf32>
    %29 = vector.shape_cast %28 : vector<1x64xf32> to vector<64xf32>
    %30 = vector.shape_cast %29 : vector<64xf32> to vector<1x1x64xf32>
    %31 = vector.broadcast %30 : vector<1x1x64xf32> to vector<4x4x64xf32>
    %32 = arith.mulf %27, %31 : vector<4x4x64xf32>
    %33 = arith.addf %25, %32 : vector<4x4x64xf32>
    %c0_i32_10 = arith.constant 0 : i32
    %34 = arith.addi %0, %c0_i32_10 : i32
    %c0_11 = arith.constant 0 : index
    %35 = arith.index_cast %34 : i32 to index
    %c0_12 = arith.constant 0 : index
    %c0_13 = arith.constant 0 : index
    %36 = vector.load %arg4[%c0_11, %35, %c0_12, %c0_13] : memref<1x5x5x64xbf16, #tpu.memory_space<vmem>>, vector<1x4x5x64xbf16>
    %37 = vector.shape_cast %36 : vector<1x4x5x64xbf16> to vector<4x5x64xbf16>
    %c0_i32_14 = arith.constant 0 : i32
    %38 = arith.addi %0, %c0_i32_14 : i32
    %c0_15 = arith.constant 0 : index
    %39 = arith.index_cast %38 : i32 to index
    %c0_16 = arith.constant 0 : index
    %c0_17 = arith.constant 0 : index
    %40 = vector.load %arg5[%c0_15, %39, %c0_16, %c0_17] : memref<1x5x5x64xbf16, #tpu.memory_space<vmem>>, vector<1x4x5x64xbf16>
    %41 = vector.shape_cast %40 : vector<1x4x5x64xbf16> to vector<4x5x64xbf16>
    %42 = vector.extract_strided_slice %37 {offsets = [0, 0, 0], sizes = [4, 4, 64], strides = [1, 1, 1]} : vector<4x5x64xbf16> to vector<4x4x64xbf16>
    %43 = arith.extf %42 : vector<4x4x64xbf16> to vector<4x4x64xf32>
    %c3 = arith.constant 3 : index
    %c0_18 = arith.constant 0 : index
    %44 = vector.load %arg6[%c3, %c0_18] : memref<9x64xf32, #tpu.memory_space<vmem>>, vector<1x64xf32>
    %45 = vector.shape_cast %44 : vector<1x64xf32> to vector<64xf32>
    %46 = vector.shape_cast %45 : vector<64xf32> to vector<1x1x64xf32>
    %47 = vector.broadcast %46 : vector<1x1x64xf32> to vector<4x4x64xf32>
    %48 = arith.mulf %43, %47 : vector<4x4x64xf32>
    %49 = arith.addf %33, %48 : vector<4x4x64xf32>
    %50 = vector.extract_strided_slice %41 {offsets = [0, 0, 0], sizes = [4, 4, 64], strides = [1, 1, 1]} : vector<4x5x64xbf16> to vector<4x4x64xbf16>
    %51 = arith.extf %50 : vector<4x4x64xbf16> to vector<4x4x64xf32>
    %c4 = arith.constant 4 : index
    %c0_19 = arith.constant 0 : index
    %52 = vector.load %arg6[%c4, %c0_19] : memref<9x64xf32, #tpu.memory_space<vmem>>, vector<1x64xf32>
    %53 = vector.shape_cast %52 : vector<1x64xf32> to vector<64xf32>
    %54 = vector.shape_cast %53 : vector<64xf32> to vector<1x1x64xf32>
    %55 = vector.broadcast %54 : vector<1x1x64xf32> to vector<4x4x64xf32>
    %56 = arith.mulf %51, %55 : vector<4x4x64xf32>
    %57 = arith.addf %49, %56 : vector<4x4x64xf32>
    %58 = vector.extract_strided_slice %37 {offsets = [0, 1, 0], sizes = [4, 4, 64], strides = [1, 1, 1]} : vector<4x5x64xbf16> to vector<4x4x64xbf16>
    %59 = arith.extf %58 : vector<4x4x64xbf16> to vector<4x4x64xf32>
    %c5 = arith.constant 5 : index
    %c0_20 = arith.constant 0 : index
    %60 = vector.load %arg6[%c5, %c0_20] : memref<9x64xf32, #tpu.memory_space<vmem>>, vector<1x64xf32>
    %61 = vector.shape_cast %60 : vector<1x64xf32> to vector<64xf32>
    %62 = vector.shape_cast %61 : vector<64xf32> to vector<1x1x64xf32>
    %63 = vector.broadcast %62 : vector<1x1x64xf32> to vector<4x4x64xf32>
    %64 = arith.mulf %59, %63 : vector<4x4x64xf32>
    %65 = arith.addf %57, %64 : vector<4x4x64xf32>
    %c1_i32 = arith.constant 1 : i32
    %66 = arith.addi %0, %c1_i32 : i32
    %c0_21 = arith.constant 0 : index
    %67 = arith.index_cast %66 : i32 to index
    %c0_22 = arith.constant 0 : index
    %c0_23 = arith.constant 0 : index
    %68 = vector.load %arg2[%c0_21, %67, %c0_22, %c0_23] : memref<1x5x5x64xbf16, #tpu.memory_space<vmem>>, vector<1x4x5x64xbf16>
    %69 = vector.shape_cast %68 : vector<1x4x5x64xbf16> to vector<4x5x64xbf16>
    %c1_i32_24 = arith.constant 1 : i32
    %70 = arith.addi %0, %c1_i32_24 : i32
    %c0_25 = arith.constant 0 : index
    %71 = arith.index_cast %70 : i32 to index
    %c0_26 = arith.constant 0 : index
    %c0_27 = arith.constant 0 : index
    %72 = vector.load %arg3[%c0_25, %71, %c0_26, %c0_27] : memref<1x5x5x64xbf16, #tpu.memory_space<vmem>>, vector<1x4x5x64xbf16>
    %73 = vector.shape_cast %72 : vector<1x4x5x64xbf16> to vector<4x5x64xbf16>
    %74 = vector.extract_strided_slice %69 {offsets = [0, 0, 0], sizes = [4, 4, 64], strides = [1, 1, 1]} : vector<4x5x64xbf16> to vector<4x4x64xbf16>
    %75 = arith.extf %74 : vector<4x4x64xbf16> to vector<4x4x64xf32>
    %c6 = arith.constant 6 : index
    %c0_28 = arith.constant 0 : index
    %76 = vector.load %arg6[%c6, %c0_28] : memref<9x64xf32, #tpu.memory_space<vmem>>, vector<1x64xf32>
    %77 = vector.shape_cast %76 : vector<1x64xf32> to vector<64xf32>
    %78 = vector.shape_cast %77 : vector<64xf32> to vector<1x1x64xf32>
    %79 = vector.broadcast %78 : vector<1x1x64xf32> to vector<4x4x64xf32>
    %80 = arith.mulf %75, %79 : vector<4x4x64xf32>
    %81 = arith.addf %65, %80 : vector<4x4x64xf32>
    %82 = vector.extract_strided_slice %73 {offsets = [0, 0, 0], sizes = [4, 4, 64], strides = [1, 1, 1]} : vector<4x5x64xbf16> to vector<4x4x64xbf16>
    %83 = arith.extf %82 : vector<4x4x64xbf16> to vector<4x4x64xf32>
    %c7 = arith.constant 7 : index
    %c0_29 = arith.constant 0 : index
    %84 = vector.load %arg6[%c7, %c0_29] : memref<9x64xf32, #tpu.memory_space<vmem>>, vector<1x64xf32>
    %85 = vector.shape_cast %84 : vector<1x64xf32> to vector<64xf32>
    %86 = vector.shape_cast %85 : vector<64xf32> to vector<1x1x64xf32>
    %87 = vector.broadcast %86 : vector<1x1x64xf32> to vector<4x4x64xf32>
    %88 = arith.mulf %83, %87 : vector<4x4x64xf32>
    %89 = arith.addf %81, %88 : vector<4x4x64xf32>
    %90 = vector.extract_strided_slice %69 {offsets = [0, 1, 0], sizes = [4, 4, 64], strides = [1, 1, 1]} : vector<4x5x64xbf16> to vector<4x4x64xbf16>
    %91 = arith.extf %90 : vector<4x4x64xbf16> to vector<4x4x64xf32>
    %c8 = arith.constant 8 : index
    %c0_30 = arith.constant 0 : index
    %92 = vector.load %arg6[%c8, %c0_30] : memref<9x64xf32, #tpu.memory_space<vmem>>, vector<1x64xf32>
    %93 = vector.shape_cast %92 : vector<1x64xf32> to vector<64xf32>
    %94 = vector.shape_cast %93 : vector<64xf32> to vector<1x1x64xf32>
    %95 = vector.broadcast %94 : vector<1x1x64xf32> to vector<4x4x64xf32>
    %96 = arith.mulf %91, %95 : vector<4x4x64xf32>
    %97 = arith.addf %89, %96 : vector<4x4x64xf32>
    %c0_31 = arith.constant 0 : index
    %c0_32 = arith.constant 0 : index
    %98 = vector.load %arg7[%c0_31, %c0_32] : memref<1x64xf32, #tpu.memory_space<vmem>>, vector<1x64xf32>
    %99 = vector.shape_cast %98 : vector<1x64xf32> to vector<1x1x64xf32>
    %100 = vector.broadcast %99 : vector<1x1x64xf32> to vector<4x4x64xf32>
    %101 = arith.addf %97, %100 : vector<4x4x64xf32>
    %cst_33 = arith.constant 0.000000e+00 : f32
    %cst_34 = arith.constant 6.000000e+00 : f32
    %102 = vector.broadcast %cst_33 : f32 to vector<4x4x64xf32>
    %103 = arith.maximumf %102, %101 : vector<4x4x64xf32>
    %104 = vector.broadcast %cst_34 : f32 to vector<4x4x64xf32>
    %105 = arith.minimumf %104, %103 : vector<4x4x64xf32>
    %106 = arith.truncf %105 : vector<4x4x64xf32> to vector<4x4x64xbf16>
    %c0_35 = arith.constant 0 : index
    %c0_36 = arith.constant 0 : index
    %c0_37 = arith.constant 0 : index
    %c0_38 = arith.constant 0 : index
    %107 = vector.load %arg8[%c0_35, %c0_36, %c0_37, %c0_38] : memref<1x4x4x64xbf16, #tpu.memory_space<vmem>>, vector<1x4x4x64xbf16>
    %108 = vector.shape_cast %107 : vector<1x4x4x64xbf16> to vector<4x4x64xbf16>
    %109 = vector.shape_cast %106 : vector<4x4x64xbf16> to vector<1x4x4x64xbf16>
    tpu.vector_store %arg8[%c0_35, %c0_36, %c0_37, %c0_38], %109 {strides = array<i32>} : memref<1x4x4x64xbf16, #tpu.memory_space<vmem>>, vector<1x4x4x64xbf16>,
    return
  }
  func.func @transform_0(%arg0: i32, %arg1: i32) -> (i32, i32, i32, i32) {
    %c0_i32 = arith.constant 0 : i32
    %c0_i32_0 = arith.constant 0 : i32
    %c0_i32_1 = arith.constant 0 : i32
    %c0_i32_2 = arith.constant 0 : i32
    return %arg0, %c0_i32, %c0_i32_0, %c0_i32_1 : i32, i32, i32, i32
  }
  func.func @transform_1(%arg0: i32, %arg1: i32) -> (i32, i32, i32, i32) {
    %c0_i32 = arith.constant 0 : i32
    %c0_i32_0 = arith.constant 0 : i32
    %c0_i32_1 = arith.constant 0 : i32
    %c0_i32_2 = arith.constant 0 : i32
    return %arg0, %c0_i32, %c0_i32_0, %c0_i32_1 : i32, i32, i32, i32
  }
  func.func @transform_2(%arg0: i32, %arg1: i32) -> (i32, i32, i32, i32) {
    %c0_i32 = arith.constant 0 : i32
    %c0_i32_0 = arith.constant 0 : i32
    %c0_i32_1 = arith.constant 0 : i32
    %c0_i32_2 = arith.constant 0 : i32
    return %arg0, %c0_i32, %c0_i32_0, %c0_i32_1 : i32, i32, i32, i32
  }
  func.func @transform_3(%arg0: i32, %arg1: i32) -> (i32, i32, i32, i32) {
    %c0_i32 = arith.constant 0 : i32
    %c0_i32_0 = arith.constant 0 : i32
    %c0_i32_1 = arith.constant 0 : i32
    %c0_i32_2 = arith.constant 0 : i32
    return %arg0, %c0_i32, %c0_i32_0, %c0_i32_1 : i32, i32, i32, i32
  }
  func.func @transform_4(%arg0: i32, %arg1: i32) -> (i32, i32) {
    %c0_i32 = arith.constant 0 : i32
    %c0_i32_0 = arith.constant 0 : i32
    %c0_i32_1 = arith.constant 0 : i32
    return %c0_i32, %c0_i32_0 : i32, i32
  }
  func.func @transform_5(%arg0: i32, %arg1: i32) -> (i32, i32) {
    %c0_i32 = arith.constant 0 : i32
    %c0_i32_0 = arith.constant 0 : i32
    %c0_i32_1 = arith.constant 0 : i32
    return %c0_i32, %c0_i32_0 : i32, i32
  }
  func.func @transform_6(%arg0: i32, %arg1: i32) -> (i32, i32, i32, i32) {
    %c0_i32 = arith.constant 0 : i32
    %c0_i32_0 = arith.constant 0 : i32
    %c0_i32_1 = arith.constant 0 : i32
    return %arg0, %arg1, %c0_i32, %c0_i32_0 : i32, i32, i32, i32
  }
}

module attributes {stable_mosaic.version = 11 : i64} {
  func.func @_pw_kernel(%arg0: i32, %arg1: memref<32x24xbf16, #tpu.memory_space<vmem>>, %arg2: memref<24x96xbf16, #tpu.memory_space<vmem>>, %arg3: memref<1x96xf32, #tpu.memory_space<vmem>>, %arg4: memref<32x96xbf16, #tpu.memory_space<vmem>>) attributes {dimension_semantics = [#tpu.dimension_semantics<parallel>], iteration_bounds = array<i64: 1>, scalar_prefetch = 0 : i64, scratch_operands = 0 : i64, tpu.core_type = #tpu.core_type<tc>, window_params = [{transform_indices = @transform_0, window_bounds = array<i64: 32, 24>}, {pipeline_mode = #tpu.pipeline_mode<synchronous>, transform_indices = @transform_1, window_bounds = array<i64: 24, 96>}, {pipeline_mode = #tpu.pipeline_mode<synchronous>, transform_indices = @transform_2, window_bounds = array<i64: 1, 96>}, {transform_indices = @transform_3, window_bounds = array<i64: 32, 96>}]} {
    %c0 = arith.constant 0 : index
    %c0_0 = arith.constant 0 : index
    %0 = vector.load %arg1[%c0, %c0_0] : memref<32x24xbf16, #tpu.memory_space<vmem>>, vector<32x24xbf16>
    %c0_1 = arith.constant 0 : index
    %c0_2 = arith.constant 0 : index
    %1 = vector.load %arg2[%c0_1, %c0_2] : memref<24x96xbf16, #tpu.memory_space<vmem>>, vector<24x96xbf16>
    %cst = arith.constant dense<0.000000e+00> : vector<32x96xf32>
    %2 = tpu.matmul %0, %1, %cst {dimension_numbers = #tpu.dot_dimension_numbers<[1], [0], [0], [1], [0, 0, 1, 1], [], []>} : vector<32x24xbf16>, vector<24x96xbf16>, vector<32x96xf32> -> vector<32x96xf32>
    %c0_3 = arith.constant 0 : index
    %c0_4 = arith.constant 0 : index
    %3 = vector.load %arg3[%c0_3, %c0_4] : memref<1x96xf32, #tpu.memory_space<vmem>>, vector<1x96xf32>
    %4 = vector.broadcast %3 : vector<1x96xf32> to vector<32x96xf32>
    %5 = arith.addf %2, %4 : vector<32x96xf32>
    %cst_5 = arith.constant 0.000000e+00 : f32
    %cst_6 = arith.constant 6.000000e+00 : f32
    %6 = vector.broadcast %cst_5 : f32 to vector<32x96xf32>
    %7 = arith.maximumf %6, %5 : vector<32x96xf32>
    %8 = vector.broadcast %cst_6 : f32 to vector<32x96xf32>
    %9 = arith.minimumf %8, %7 : vector<32x96xf32>
    %10 = arith.truncf %9 : vector<32x96xf32> to vector<32x96xbf16>
    %c0_7 = arith.constant 0 : index
    %c0_8 = arith.constant 0 : index
    %11 = vector.load %arg4[%c0_7, %c0_8] : memref<32x96xbf16, #tpu.memory_space<vmem>>, vector<32x96xbf16>
    tpu.vector_store %arg4[%c0_7, %c0_8], %10 {strides = array<i32>} : memref<32x96xbf16, #tpu.memory_space<vmem>>, vector<32x96xbf16>,
    return
  }
  func.func @transform_0(%arg0: i32) -> (i32, i32) {
    %c0_i32 = arith.constant 0 : i32
    %c0_i32_0 = arith.constant 0 : i32
    return %arg0, %c0_i32 : i32, i32
  }
  func.func @transform_1(%arg0: i32) -> (i32, i32) {
    %c0_i32 = arith.constant 0 : i32
    %c0_i32_0 = arith.constant 0 : i32
    %c0_i32_1 = arith.constant 0 : i32
    return %c0_i32, %c0_i32_0 : i32, i32
  }
  func.func @transform_2(%arg0: i32) -> (i32, i32) {
    %c0_i32 = arith.constant 0 : i32
    %c0_i32_0 = arith.constant 0 : i32
    %c0_i32_1 = arith.constant 0 : i32
    return %c0_i32, %c0_i32_0 : i32, i32
  }
  func.func @transform_3(%arg0: i32) -> (i32, i32) {
    %c0_i32 = arith.constant 0 : i32
    %c0_i32_0 = arith.constant 0 : i32
    return %arg0, %c0_i32 : i32, i32
  }
}

module attributes {stable_mosaic.version = 11 : i64} {
  func.func @_dw_kernel(%arg0: i32, %arg1: i32, %arg2: memref<1x6x6x96xbf16, #tpu.memory_space<vmem>>, %arg3: memref<9x96xf32, #tpu.memory_space<vmem>>, %arg4: memref<1x96xf32, #tpu.memory_space<vmem>>, %arg5: memref<1x4x4x96xbf16, #tpu.memory_space<vmem>>) attributes {dimension_semantics = [#tpu.dimension_semantics<parallel>, #tpu.dimension_semantics<parallel>], iteration_bounds = array<i64: 2, 1>, scalar_prefetch = 0 : i64, scratch_operands = 0 : i64, tpu.core_type = #tpu.core_type<tc>, window_params = [{transform_indices = @transform_0, window_bounds = array<i64: 1, 6, 6, 96>}, {pipeline_mode = #tpu.pipeline_mode<synchronous>, transform_indices = @transform_1, window_bounds = array<i64: 9, 96>}, {pipeline_mode = #tpu.pipeline_mode<synchronous>, transform_indices = @transform_2, window_bounds = array<i64: 1, 96>}, {transform_indices = @transform_3, window_bounds = array<i64: 1, 4, 4, 96>}]} {
    %c4_i32 = arith.constant 4 : i32
    %0 = arith.muli %arg1, %c4_i32 : i32
    %cst = arith.constant 0.000000e+00 : f32
    %1 = vector.broadcast %cst : f32 to vector<4x4x96xf32>
    %c0_i32 = arith.constant 0 : i32
    %2 = arith.addi %0, %c0_i32 : i32
    %c0 = arith.constant 0 : index
    %3 = arith.index_cast %2 : i32 to index
    %c0_0 = arith.constant 0 : index
    %c0_1 = arith.constant 0 : index
    %4 = vector.load %arg2[%c0, %3, %c0_0, %c0_1] : memref<1x6x6x96xbf16, #tpu.memory_space<vmem>>, vector<1x4x6x96xbf16>
    %5 = vector.shape_cast %4 : vector<1x4x6x96xbf16> to vector<4x6x96xbf16>
    %6 = vector.extract_strided_slice %5 {offsets = [0, 0, 0], sizes = [4, 4, 96], strides = [1, 1, 1]} : vector<4x6x96xbf16> to vector<4x4x96xbf16>
    %7 = arith.extf %6 : vector<4x4x96xbf16> to vector<4x4x96xf32>
    %c0_2 = arith.constant 0 : index
    %c0_3 = arith.constant 0 : index
    %8 = vector.load %arg3[%c0_2, %c0_3] : memref<9x96xf32, #tpu.memory_space<vmem>>, vector<1x96xf32>
    %9 = vector.shape_cast %8 : vector<1x96xf32> to vector<96xf32>
    %10 = vector.shape_cast %9 : vector<96xf32> to vector<1x1x96xf32>
    %11 = vector.broadcast %10 : vector<1x1x96xf32> to vector<4x4x96xf32>
    %12 = arith.mulf %7, %11 : vector<4x4x96xf32>
    %13 = arith.addf %1, %12 : vector<4x4x96xf32>
    %14 = vector.extract_strided_slice %5 {offsets = [0, 1, 0], sizes = [4, 4, 96], strides = [1, 1, 1]} : vector<4x6x96xbf16> to vector<4x4x96xbf16>
    %15 = arith.extf %14 : vector<4x4x96xbf16> to vector<4x4x96xf32>
    %c1 = arith.constant 1 : index
    %c0_4 = arith.constant 0 : index
    %16 = vector.load %arg3[%c1, %c0_4] : memref<9x96xf32, #tpu.memory_space<vmem>>, vector<1x96xf32>
    %17 = vector.shape_cast %16 : vector<1x96xf32> to vector<96xf32>
    %18 = vector.shape_cast %17 : vector<96xf32> to vector<1x1x96xf32>
    %19 = vector.broadcast %18 : vector<1x1x96xf32> to vector<4x4x96xf32>
    %20 = arith.mulf %15, %19 : vector<4x4x96xf32>
    %21 = arith.addf %13, %20 : vector<4x4x96xf32>
    %22 = vector.extract_strided_slice %5 {offsets = [0, 2, 0], sizes = [4, 4, 96], strides = [1, 1, 1]} : vector<4x6x96xbf16> to vector<4x4x96xbf16>
    %23 = arith.extf %22 : vector<4x4x96xbf16> to vector<4x4x96xf32>
    %c2 = arith.constant 2 : index
    %c0_5 = arith.constant 0 : index
    %24 = vector.load %arg3[%c2, %c0_5] : memref<9x96xf32, #tpu.memory_space<vmem>>, vector<1x96xf32>
    %25 = vector.shape_cast %24 : vector<1x96xf32> to vector<96xf32>
    %26 = vector.shape_cast %25 : vector<96xf32> to vector<1x1x96xf32>
    %27 = vector.broadcast %26 : vector<1x1x96xf32> to vector<4x4x96xf32>
    %28 = arith.mulf %23, %27 : vector<4x4x96xf32>
    %29 = arith.addf %21, %28 : vector<4x4x96xf32>
    %c1_i32 = arith.constant 1 : i32
    %30 = arith.addi %0, %c1_i32 : i32
    %c0_6 = arith.constant 0 : index
    %31 = arith.index_cast %30 : i32 to index
    %c0_7 = arith.constant 0 : index
    %c0_8 = arith.constant 0 : index
    %32 = vector.load %arg2[%c0_6, %31, %c0_7, %c0_8] : memref<1x6x6x96xbf16, #tpu.memory_space<vmem>>, vector<1x4x6x96xbf16>
    %33 = vector.shape_cast %32 : vector<1x4x6x96xbf16> to vector<4x6x96xbf16>
    %34 = vector.extract_strided_slice %33 {offsets = [0, 0, 0], sizes = [4, 4, 96], strides = [1, 1, 1]} : vector<4x6x96xbf16> to vector<4x4x96xbf16>
    %35 = arith.extf %34 : vector<4x4x96xbf16> to vector<4x4x96xf32>
    %c3 = arith.constant 3 : index
    %c0_9 = arith.constant 0 : index
    %36 = vector.load %arg3[%c3, %c0_9] : memref<9x96xf32, #tpu.memory_space<vmem>>, vector<1x96xf32>
    %37 = vector.shape_cast %36 : vector<1x96xf32> to vector<96xf32>
    %38 = vector.shape_cast %37 : vector<96xf32> to vector<1x1x96xf32>
    %39 = vector.broadcast %38 : vector<1x1x96xf32> to vector<4x4x96xf32>
    %40 = arith.mulf %35, %39 : vector<4x4x96xf32>
    %41 = arith.addf %29, %40 : vector<4x4x96xf32>
    %42 = vector.extract_strided_slice %33 {offsets = [0, 1, 0], sizes = [4, 4, 96], strides = [1, 1, 1]} : vector<4x6x96xbf16> to vector<4x4x96xbf16>
    %43 = arith.extf %42 : vector<4x4x96xbf16> to vector<4x4x96xf32>
    %c4 = arith.constant 4 : index
    %c0_10 = arith.constant 0 : index
    %44 = vector.load %arg3[%c4, %c0_10] : memref<9x96xf32, #tpu.memory_space<vmem>>, vector<1x96xf32>
    %45 = vector.shape_cast %44 : vector<1x96xf32> to vector<96xf32>
    %46 = vector.shape_cast %45 : vector<96xf32> to vector<1x1x96xf32>
    %47 = vector.broadcast %46 : vector<1x1x96xf32> to vector<4x4x96xf32>
    %48 = arith.mulf %43, %47 : vector<4x4x96xf32>
    %49 = arith.addf %41, %48 : vector<4x4x96xf32>
    %50 = vector.extract_strided_slice %33 {offsets = [0, 2, 0], sizes = [4, 4, 96], strides = [1, 1, 1]} : vector<4x6x96xbf16> to vector<4x4x96xbf16>
    %51 = arith.extf %50 : vector<4x4x96xbf16> to vector<4x4x96xf32>
    %c5 = arith.constant 5 : index
    %c0_11 = arith.constant 0 : index
    %52 = vector.load %arg3[%c5, %c0_11] : memref<9x96xf32, #tpu.memory_space<vmem>>, vector<1x96xf32>
    %53 = vector.shape_cast %52 : vector<1x96xf32> to vector<96xf32>
    %54 = vector.shape_cast %53 : vector<96xf32> to vector<1x1x96xf32>
    %55 = vector.broadcast %54 : vector<1x1x96xf32> to vector<4x4x96xf32>
    %56 = arith.mulf %51, %55 : vector<4x4x96xf32>
    %57 = arith.addf %49, %56 : vector<4x4x96xf32>
    %c2_i32 = arith.constant 2 : i32
    %58 = arith.addi %0, %c2_i32 : i32
    %c0_12 = arith.constant 0 : index
    %59 = arith.index_cast %58 : i32 to index
    %c0_13 = arith.constant 0 : index
    %c0_14 = arith.constant 0 : index
    %60 = vector.load %arg2[%c0_12, %59, %c0_13, %c0_14] : memref<1x6x6x96xbf16, #tpu.memory_space<vmem>>, vector<1x4x6x96xbf16>
    %61 = vector.shape_cast %60 : vector<1x4x6x96xbf16> to vector<4x6x96xbf16>
    %62 = vector.extract_strided_slice %61 {offsets = [0, 0, 0], sizes = [4, 4, 96], strides = [1, 1, 1]} : vector<4x6x96xbf16> to vector<4x4x96xbf16>
    %63 = arith.extf %62 : vector<4x4x96xbf16> to vector<4x4x96xf32>
    %c6 = arith.constant 6 : index
    %c0_15 = arith.constant 0 : index
    %64 = vector.load %arg3[%c6, %c0_15] : memref<9x96xf32, #tpu.memory_space<vmem>>, vector<1x96xf32>
    %65 = vector.shape_cast %64 : vector<1x96xf32> to vector<96xf32>
    %66 = vector.shape_cast %65 : vector<96xf32> to vector<1x1x96xf32>
    %67 = vector.broadcast %66 : vector<1x1x96xf32> to vector<4x4x96xf32>
    %68 = arith.mulf %63, %67 : vector<4x4x96xf32>
    %69 = arith.addf %57, %68 : vector<4x4x96xf32>
    %70 = vector.extract_strided_slice %61 {offsets = [0, 1, 0], sizes = [4, 4, 96], strides = [1, 1, 1]} : vector<4x6x96xbf16> to vector<4x4x96xbf16>
    %71 = arith.extf %70 : vector<4x4x96xbf16> to vector<4x4x96xf32>
    %c7 = arith.constant 7 : index
    %c0_16 = arith.constant 0 : index
    %72 = vector.load %arg3[%c7, %c0_16] : memref<9x96xf32, #tpu.memory_space<vmem>>, vector<1x96xf32>
    %73 = vector.shape_cast %72 : vector<1x96xf32> to vector<96xf32>
    %74 = vector.shape_cast %73 : vector<96xf32> to vector<1x1x96xf32>
    %75 = vector.broadcast %74 : vector<1x1x96xf32> to vector<4x4x96xf32>
    %76 = arith.mulf %71, %75 : vector<4x4x96xf32>
    %77 = arith.addf %69, %76 : vector<4x4x96xf32>
    %78 = vector.extract_strided_slice %61 {offsets = [0, 2, 0], sizes = [4, 4, 96], strides = [1, 1, 1]} : vector<4x6x96xbf16> to vector<4x4x96xbf16>
    %79 = arith.extf %78 : vector<4x4x96xbf16> to vector<4x4x96xf32>
    %c8 = arith.constant 8 : index
    %c0_17 = arith.constant 0 : index
    %80 = vector.load %arg3[%c8, %c0_17] : memref<9x96xf32, #tpu.memory_space<vmem>>, vector<1x96xf32>
    %81 = vector.shape_cast %80 : vector<1x96xf32> to vector<96xf32>
    %82 = vector.shape_cast %81 : vector<96xf32> to vector<1x1x96xf32>
    %83 = vector.broadcast %82 : vector<1x1x96xf32> to vector<4x4x96xf32>
    %84 = arith.mulf %79, %83 : vector<4x4x96xf32>
    %85 = arith.addf %77, %84 : vector<4x4x96xf32>
    %c0_18 = arith.constant 0 : index
    %c0_19 = arith.constant 0 : index
    %86 = vector.load %arg4[%c0_18, %c0_19] : memref<1x96xf32, #tpu.memory_space<vmem>>, vector<1x96xf32>
    %87 = vector.shape_cast %86 : vector<1x96xf32> to vector<1x1x96xf32>
    %88 = vector.broadcast %87 : vector<1x1x96xf32> to vector<4x4x96xf32>
    %89 = arith.addf %85, %88 : vector<4x4x96xf32>
    %cst_20 = arith.constant 0.000000e+00 : f32
    %cst_21 = arith.constant 6.000000e+00 : f32
    %90 = vector.broadcast %cst_20 : f32 to vector<4x4x96xf32>
    %91 = arith.maximumf %90, %89 : vector<4x4x96xf32>
    %92 = vector.broadcast %cst_21 : f32 to vector<4x4x96xf32>
    %93 = arith.minimumf %92, %91 : vector<4x4x96xf32>
    %94 = arith.truncf %93 : vector<4x4x96xf32> to vector<4x4x96xbf16>
    %c0_22 = arith.constant 0 : index
    %c0_23 = arith.constant 0 : index
    %c0_24 = arith.constant 0 : index
    %c0_25 = arith.constant 0 : index
    %95 = vector.load %arg5[%c0_22, %c0_23, %c0_24, %c0_25] : memref<1x4x4x96xbf16, #tpu.memory_space<vmem>>, vector<1x4x4x96xbf16>
    %96 = vector.shape_cast %95 : vector<1x4x4x96xbf16> to vector<4x4x96xbf16>
    %97 = vector.shape_cast %94 : vector<4x4x96xbf16> to vector<1x4x4x96xbf16>
    tpu.vector_store %arg5[%c0_22, %c0_23, %c0_24, %c0_25], %97 {strides = array<i32>} : memref<1x4x4x96xbf16, #tpu.memory_space<vmem>>, vector<1x4x4x96xbf16>,
    return
  }
  func.func @transform_0(%arg0: i32, %arg1: i32) -> (i32, i32, i32, i32) {
    %c0_i32 = arith.constant 0 : i32
    %c0_i32_0 = arith.constant 0 : i32
    %c0_i32_1 = arith.constant 0 : i32
    %c0_i32_2 = arith.constant 0 : i32
    return %arg0, %c0_i32, %c0_i32_0, %c0_i32_1 : i32, i32, i32, i32
  }
  func.func @transform_1(%arg0: i32, %arg1: i32) -> (i32, i32) {
    %c0_i32 = arith.constant 0 : i32
    %c0_i32_0 = arith.constant 0 : i32
    %c0_i32_1 = arith.constant 0 : i32
    return %c0_i32, %c0_i32_0 : i32, i32
  }
  func.func @transform_2(%arg0: i32, %arg1: i32) -> (i32, i32) {
    %c0_i32 = arith.constant 0 : i32
    %c0_i32_0 = arith.constant 0 : i32
    %c0_i32_1 = arith.constant 0 : i32
    return %c0_i32, %c0_i32_0 : i32, i32
  }
  func.func @transform_3(%arg0: i32, %arg1: i32) -> (i32, i32, i32, i32) {
    %c0_i32 = arith.constant 0 : i32
    %c0_i32_0 = arith.constant 0 : i32
    %c0_i32_1 = arith.constant 0 : i32
    return %arg0, %arg1, %c0_i32, %c0_i32_0 : i32, i32, i32, i32
  }
}

module attributes {stable_mosaic.version = 11 : i64} {
  func.func @_pw_res_kernel(%arg0: i32, %arg1: memref<32x96xbf16, #tpu.memory_space<vmem>>, %arg2: memref<96x24xbf16, #tpu.memory_space<vmem>>, %arg3: memref<1x24xf32, #tpu.memory_space<vmem>>, %arg4: memref<32x24xbf16, #tpu.memory_space<vmem>>, %arg5: memref<32x24xbf16, #tpu.memory_space<vmem>>) attributes {dimension_semantics = [#tpu.dimension_semantics<parallel>], iteration_bounds = array<i64: 1>, scalar_prefetch = 0 : i64, scratch_operands = 0 : i64, tpu.core_type = #tpu.core_type<tc>, window_params = [{transform_indices = @transform_0, window_bounds = array<i64: 32, 96>}, {pipeline_mode = #tpu.pipeline_mode<synchronous>, transform_indices = @transform_1, window_bounds = array<i64: 96, 24>}, {pipeline_mode = #tpu.pipeline_mode<synchronous>, transform_indices = @transform_2, window_bounds = array<i64: 1, 24>}, {transform_indices = @transform_3, window_bounds = array<i64: 32, 24>}, {transform_indices = @transform_4, window_bounds = array<i64: 32, 24>}]} {
    %c0 = arith.constant 0 : index
    %c0_0 = arith.constant 0 : index
    %0 = vector.load %arg1[%c0, %c0_0] : memref<32x96xbf16, #tpu.memory_space<vmem>>, vector<32x96xbf16>
    %c0_1 = arith.constant 0 : index
    %c0_2 = arith.constant 0 : index
    %1 = vector.load %arg2[%c0_1, %c0_2] : memref<96x24xbf16, #tpu.memory_space<vmem>>, vector<96x24xbf16>
    %cst = arith.constant dense<0.000000e+00> : vector<32x24xf32>
    %2 = tpu.matmul %0, %1, %cst {dimension_numbers = #tpu.dot_dimension_numbers<[1], [0], [0], [1], [0, 0, 1, 1], [], []>} : vector<32x96xbf16>, vector<96x24xbf16>, vector<32x24xf32> -> vector<32x24xf32>
    %c0_3 = arith.constant 0 : index
    %c0_4 = arith.constant 0 : index
    %3 = vector.load %arg3[%c0_3, %c0_4] : memref<1x24xf32, #tpu.memory_space<vmem>>, vector<1x24xf32>
    %4 = vector.broadcast %3 : vector<1x24xf32> to vector<32x24xf32>
    %5 = arith.addf %2, %4 : vector<32x24xf32>
    %c0_5 = arith.constant 0 : index
    %c0_6 = arith.constant 0 : index
    %6 = vector.load %arg4[%c0_5, %c0_6] : memref<32x24xbf16, #tpu.memory_space<vmem>>, vector<32x24xbf16>
    %7 = arith.extf %6 : vector<32x24xbf16> to vector<32x24xf32>
    %8 = arith.addf %5, %7 : vector<32x24xf32>
    %9 = arith.truncf %8 : vector<32x24xf32> to vector<32x24xbf16>
    %c0_7 = arith.constant 0 : index
    %c0_8 = arith.constant 0 : index
    %10 = vector.load %arg5[%c0_7, %c0_8] : memref<32x24xbf16, #tpu.memory_space<vmem>>, vector<32x24xbf16>
    tpu.vector_store %arg5[%c0_7, %c0_8], %9 {strides = array<i32>} : memref<32x24xbf16, #tpu.memory_space<vmem>>, vector<32x24xbf16>,
    return
  }
  func.func @transform_0(%arg0: i32) -> (i32, i32) {
    %c0_i32 = arith.constant 0 : i32
    %c0_i32_0 = arith.constant 0 : i32
    return %arg0, %c0_i32 : i32, i32
  }
  func.func @transform_1(%arg0: i32) -> (i32, i32) {
    %c0_i32 = arith.constant 0 : i32
    %c0_i32_0 = arith.constant 0 : i32
    %c0_i32_1 = arith.constant 0 : i32
    return %c0_i32, %c0_i32_0 : i32, i32
  }
  func.func @transform_2(%arg0: i32) -> (i32, i32) {
    %c0_i32 = arith.constant 0 : i32
    %c0_i32_0 = arith.constant 0 : i32
    %c0_i32_1 = arith.constant 0 : i32
    return %c0_i32, %c0_i32_0 : i32, i32
  }
  func.func @transform_3(%arg0: i32) -> (i32, i32) {
    %c0_i32 = arith.constant 0 : i32
    %c0_i32_0 = arith.constant 0 : i32
    return %arg0, %c0_i32 : i32, i32
  }
  func.func @transform_4(%arg0: i32) -> (i32, i32) {
    %c0_i32 = arith.constant 0 : i32
    %c0_i32_0 = arith.constant 0 : i32
    return %arg0, %c0_i32 : i32, i32
  }
}

module attributes {stable_mosaic.version = 11 : i64} {
  func.func @_head_pool_kernel(%arg0: i32, %arg1: i32, %arg2: memref<1x16x24xbf16, #tpu.memory_space<vmem>>, %arg3: memref<24x96xbf16, #tpu.memory_space<vmem>>, %arg4: memref<1x96xf32, #tpu.memory_space<vmem>>, %arg5: memref<1x1x96xf32, #tpu.memory_space<vmem>>, %arg6: memref<1x1x96xf32, #tpu.memory_space<vmem>>) attributes {dimension_semantics = [#tpu.dimension_semantics<parallel>, #tpu.dimension_semantics<arbitrary>], iteration_bounds = array<i64: 2, 1>, scalar_prefetch = 0 : i64, scratch_operands = 1 : i64, tpu.core_type = #tpu.core_type<tc>, window_params = [{transform_indices = @transform_0, window_bounds = array<i64: 1, 16, 24>}, {pipeline_mode = #tpu.pipeline_mode<synchronous>, transform_indices = @transform_1, window_bounds = array<i64: 24, 96>}, {pipeline_mode = #tpu.pipeline_mode<synchronous>, transform_indices = @transform_2, window_bounds = array<i64: 1, 96>}, {transform_indices = @transform_3, window_bounds = array<i64: 1, 1, 96>}]} {
    %c0_i32 = arith.constant 0 : i32
    %0 = arith.cmpi eq, %arg1, %c0_i32 : i32
    %1 = arith.extui %0 : i1 to i32
    %c0_i32_0 = arith.constant 0 : i32
    %2 = arith.cmpi ne, %1, %c0_i32_0 : i32
    scf.if %2 {
      %cst_18 = arith.constant 0.000000e+00 : f32
      %23 = vector.broadcast %cst_18 : f32 to vector<1x1x96xf32>
      %c0_19 = arith.constant 0 : index
      %c0_20 = arith.constant 0 : index
      %c0_21 = arith.constant 0 : index
      %24 = vector.load %arg6[%c0_19, %c0_20, %c0_21] : memref<1x1x96xf32, #tpu.memory_space<vmem>>, vector<1x1x96xf32>
      tpu.vector_store %arg6[%c0_19, %c0_20, %c0_21], %23 {strides = array<i32>} : memref<1x1x96xf32, #tpu.memory_space<vmem>>, vector<1x1x96xf32>,
    } else {
    }
    %c0 = arith.constant 0 : index
    %c0_1 = arith.constant 0 : index
    %c0_2 = arith.constant 0 : index
    %3 = vector.load %arg2[%c0, %c0_1, %c0_2] : memref<1x16x24xbf16, #tpu.memory_space<vmem>>, vector<1x16x24xbf16>
    %4 = vector.shape_cast %3 : vector<1x16x24xbf16> to vector<16x24xbf16>
    %c0_3 = arith.constant 0 : index
    %c0_4 = arith.constant 0 : index
    %5 = vector.load %arg3[%c0_3, %c0_4] : memref<24x96xbf16, #tpu.memory_space<vmem>>, vector<24x96xbf16>
    %cst = arith.constant dense<0.000000e+00> : vector<16x96xf32>
    %6 = tpu.matmul %4, %5, %cst {dimension_numbers = #tpu.dot_dimension_numbers<[1], [0], [0], [1], [0, 0, 1, 1], [], []>} : vector<16x24xbf16>, vector<24x96xbf16>, vector<16x96xf32> -> vector<16x96xf32>
    %c0_5 = arith.constant 0 : index
    %c0_6 = arith.constant 0 : index
    %7 = vector.load %arg4[%c0_5, %c0_6] : memref<1x96xf32, #tpu.memory_space<vmem>>, vector<1x96xf32>
    %8 = vector.broadcast %7 : vector<1x96xf32> to vector<16x96xf32>
    %9 = arith.addf %6, %8 : vector<16x96xf32>
    %cst_7 = arith.constant 0.000000e+00 : f32
    %cst_8 = arith.constant 6.000000e+00 : f32
    %10 = vector.broadcast %cst_7 : f32 to vector<16x96xf32>
    %11 = arith.maximumf %10, %9 : vector<16x96xf32>
    %12 = vector.broadcast %cst_8 : f32 to vector<16x96xf32>
    %13 = arith.minimumf %12, %11 : vector<16x96xf32>
    %c0_9 = arith.constant 0 : index
    %c0_10 = arith.constant 0 : index
    %c0_11 = arith.constant 0 : index
    %14 = vector.load %arg6[%c0_9, %c0_10, %c0_11] : memref<1x1x96xf32, #tpu.memory_space<vmem>>, vector<1x1x96xf32>
    %cst_12 = arith.constant dense<0.000000e+00> : vector<96xf32>
    %15 = vector.multi_reduction <add>, %13, %cst_12 [0] : vector<16x96xf32> to vector<96xf32>
    %16 = vector.shape_cast %15 : vector<96xf32> to vector<1x96xf32>
    %17 = vector.shape_cast %16 : vector<1x96xf32> to vector<1x1x96xf32>
    %18 = arith.addf %14, %17 : vector<1x1x96xf32>
    %c0_13 = arith.constant 0 : index
    %c0_14 = arith.constant 0 : index
    %c0_15 = arith.constant 0 : index
    %19 = vector.load %arg6[%c0_13, %c0_14, %c0_15] : memref<1x1x96xf32, #tpu.memory_space<vmem>>, vector<1x1x96xf32>
    tpu.vector_store %arg6[%c0_13, %c0_14, %c0_15], %18 {strides = array<i32>} : memref<1x1x96xf32, #tpu.memory_space<vmem>>, vector<1x1x96xf32>,
    %c0_i32_16 = arith.constant 0 : i32
    %20 = arith.cmpi eq, %arg1, %c0_i32_16 : i32
    %21 = arith.extui %20 : i1 to i32
    %c0_i32_17 = arith.constant 0 : i32
    %22 = arith.cmpi ne, %21, %c0_i32_17 : i32
    scf.if %22 {
      %c0_18 = arith.constant 0 : index
      %c0_19 = arith.constant 0 : index
      %c0_20 = arith.constant 0 : index
      %23 = vector.load %arg6[%c0_18, %c0_19, %c0_20] : memref<1x1x96xf32, #tpu.memory_space<vmem>>, vector<1x1x96xf32>
      %cst_21 = arith.constant 6.250000e-02 : f32
      %24 = vector.broadcast %cst_21 : f32 to vector<1x1x96xf32>
      %25 = arith.mulf %23, %24 : vector<1x1x96xf32>
      %c0_22 = arith.constant 0 : index
      %c0_23 = arith.constant 0 : index
      %c0_24 = arith.constant 0 : index
      %26 = vector.load %arg5[%c0_22, %c0_23, %c0_24] : memref<1x1x96xf32, #tpu.memory_space<vmem>>, vector<1x1x96xf32>
      tpu.vector_store %arg5[%c0_22, %c0_23, %c0_24], %25 {strides = array<i32>} : memref<1x1x96xf32, #tpu.memory_space<vmem>>, vector<1x1x96xf32>,
    } else {
    }
    return
  }
  func.func @transform_0(%arg0: i32, %arg1: i32) -> (i32, i32, i32) {
    %c0_i32 = arith.constant 0 : i32
    %c0_i32_0 = arith.constant 0 : i32
    return %arg0, %arg1, %c0_i32 : i32, i32, i32
  }
  func.func @transform_1(%arg0: i32, %arg1: i32) -> (i32, i32) {
    %c0_i32 = arith.constant 0 : i32
    %c0_i32_0 = arith.constant 0 : i32
    %c0_i32_1 = arith.constant 0 : i32
    return %c0_i32, %c0_i32_0 : i32, i32
  }
  func.func @transform_2(%arg0: i32, %arg1: i32) -> (i32, i32) {
    %c0_i32 = arith.constant 0 : i32
    %c0_i32_0 = arith.constant 0 : i32
    %c0_i32_1 = arith.constant 0 : i32
    return %c0_i32, %c0_i32_0 : i32, i32
  }
  func.func @transform_3(%arg0: i32, %arg1: i32) -> (i32, i32, i32) {
    %c0_i32 = arith.constant 0 : i32
    %c0_i32_0 = arith.constant 0 : i32
    %c0_i32_1 = arith.constant 0 : i32
    return %arg0, %c0_i32, %c0_i32_0 : i32, i32, i32
  }
}

</mosaic_0001>

<llo_original>
// kernel: mobilenet_v2_forward.16
$region0: #{mobilenet_v2_forward.16}
  #allocation0 [shape = 'u32[]', space=smem, size = 0x4, offset = 0x4, fixed_abs, tag = 'smem constant byte address 0x4 - core index']
  #allocation1 [shape = 'u32[144,128]{1,0:T(1,128)}', space=vmem, size = 0x12000, scoped, tag = 'internal scratch']
  %s0 = inlined_call_operand.vmem [shape: bf16[512,32], index: 0, kind: input, shape index: {}]
  %s1 = inlined_call_operand.vmem [shape: bf16[32,8], index: 1, kind: input, shape index: {}]
  %s2 = inlined_call_operand.vmem [shape: f32[1,8], index: 2, kind: input, shape index: {}]
  %s3 = inlined_call_operand.vmem [shape: bf16[512,8], index: 3, kind: output, shape index: {}]
  %s4 = sld [smem:[#allocation0]]
  $region22: #{mobilenet_v2_forward.16} parent=0
    _
  %s6 = ssub.s32 1, %s4
  %s7 = scalar_select 0, %s6, %s4
  // Predicated region
  $region2: #{mobilenet_v2_forward.16} parent=0 // pred_check
    _
  $region3: #{mobilenet_v2_forward.16} parent=0 // pred_check_branch
    %9 = sbr.rel (0) target = $region5
  $region4: #{mobilenet_v2_forward.16} parent=0 // pred_region
    _
  $region5: #{mobilenet_v2_forward.16} parent=0 // pred_fallthru
    _
  // Predicated region
  $region6: #{mobilenet_v2_forward.16} parent=0 // pred_check
    _
  $region7: #{mobilenet_v2_forward.16} parent=0 // pred_check_branch
    %11 = sbr.rel (0) target = $region9
  $region8: #{mobilenet_v2_forward.16} parent=0 // pred_region
    _
  $region9: #{mobilenet_v2_forward.16} parent=0 // pred_fallthru
    _
  // Predicated region
  $region10: #{mobilenet_v2_forward.16} parent=0 // pred_check
    _
  $region11: #{mobilenet_v2_forward.16} parent=0 // pred_check_branch
    %13 = sbr.rel (0) target = $region13
  $region12: #{mobilenet_v2_forward.16} parent=0 // pred_region
    _
  $region13: #{mobilenet_v2_forward.16} parent=0 // pred_fallthru
    _
  %v15 = vld [vmem:[%s0] sm:$0xf]
  %v16 = vld [vmem:[%s0 + $0x4] sm:$0xf]
  %v17 = vld [vmem:[%s0 + $0x8] sm:$0xf]
  %v18 = vld [vmem:[%s0 + $0xc] sm:$0xf]
  %v19 = vld [vmem:[%s0 + $0x10] sm:$0xf]
  %v20 = vld [vmem:[%s0 + $0x14] sm:$0xf]
  %v21 = vld [vmem:[%s0 + $0x18] sm:$0xf]
  %v22 = vld [vmem:[%s0 + $0x1c] sm:$0xf]
  %v23 = vld [vmem:[%s0 + $0x20] sm:$0xf]
  %v24 = vld [vmem:[%s0 + $0x24] sm:$0xf]
  %v25 = vld [vmem:[%s0 + $0x28] sm:$0xf]
  %v26 = vld [vmem:[%s0 + $0x2c] sm:$0xf]
  %v27 = vld [vmem:[%s0 + $0x30] sm:$0xf]
  %v28 = vld [vmem:[%s0 + $0x34] sm:$0xf]
  %v29 = vld [vmem:[%s0 + $0x38] sm:$0xf]
  %v30 = vld [vmem:[%s0 + $0x3c] sm:$0xf]
  %v31 = vld [vmem:[%s0 + $0x40] sm:$0xf]
  %v32 = vld [vmem:[%s0 + $0x44] sm:$0xf]
  %v33 = vld [vmem:[%s0 + $0x48] sm:$0xf]
  %v34 = vld [vmem:[%s0 + $0x4c] sm:$0xf]
  %v35 = vld [vmem:[%s0 + $0x50] sm:$0xf]
  %v36 = vld [vmem:[%s0 + $0x54] sm:$0xf]
  %v37 = vld [vmem:[%s0 + $0x58] sm:$0xf]
  %v38 = vld [vmem:[%s0 + $0x5c] sm:$0xf]
  %v39 = vld [vmem:[%s0 + $0x60] sm:$0xf]
  %v40 = vld [vmem:[%s0 + $0x64] sm:$0xf]
  %v41 = vld [vmem:[%s0 + $0x68] sm:$0xf]
  %v42 = vld [vmem:[%s0 + $0x6c] sm:$0xf]
  %v43 = vld [vmem:[%s0 + $0x70] sm:$0xf]
  %v44 = vld [vmem:[%s0 + $0x74] sm:$0xf]
  %v45 = vld [vmem:[%s0 + $0x78] sm:$0xf]
  %v46 = vld [vmem:[%s0 + $0x7c] sm:$0xf]
  %v47 = vld [vmem:[%s0 + $0x80] sm:$0xf]
  %v48 = vld [vmem:[%s0 + $0x84] sm:$0xf]
  %v49 = vld [vmem:[%s0 + $0x88] sm:$0xf]
  %v50 = vld [vmem:[%s0 + $0x8c] sm:$0xf]
  %v51 = vld [vmem:[%s0 + $0x90] sm:$0xf]
  %v52 = vld [vmem:[%s0 + $0x94] sm:$0xf]
  %v53 = vld [vmem:[%s0 + $0x98] sm:$0xf]
  %v54 = vld [vmem:[%s0 + $0x9c] sm:$0xf]
  %v55 = vld [vmem:[%s0 + $0xa0] sm:$0xf]
  %v56 = vld [vmem:[%s0 + $0xa4] sm:$0xf]
  %v57 = vld [vmem:[%s0 + $0xa8] sm:$0xf]
  %v58 = vld [vmem:[%s0 + $0xac] sm:$0xf]
  %v59 = vld [vmem:[%s0 + $0xb0] sm:$0xf]
  %v60 = vld [vmem:[%s0 + $0xb4] sm:$0xf]
  %v61 = vld [vmem:[%s0 + $0xb8] sm:$0xf]
  %v62 = vld [vmem:[%s0 + $0xbc] sm:$0xf]
  %v63 = vld [vmem:[%s0 + $0xc0] sm:$0xf]
  %v64 = vld [vmem:[%s0 + $0xc4] sm:$0xf]
  %v65 = vld [vmem:[%s0 + $0xc8] sm:$0xf]
  %v66 = vld [vmem:[%s0 + $0xcc] sm:$0xf]
  %v67 = vld [vmem:[%s0 + $0xd0] sm:$0xf]
  %v68 = vld [vmem:[%s0 + $0xd4] sm:$0xf]
  %v69 = vld [vmem:[%s0 + $0xd8] sm:$0xf]
  %v70 = vld [vmem:[%s0 + $0xdc] sm:$0xf]
  %v71 = vld [vmem:[%s0 + $0xe0] sm:$0xf]
  %v72 = vld [vmem:[%s0 + $0xe4] sm:$0xf]
  %v73 = vld [vmem:[%s0 + $0xe8] sm:$0xf]
  %v74 = vld [vmem:[%s0 + $0xec] sm:$0xf]
  %v75 = vld [vmem:[%s0 + $0xf0] sm:$0xf]
  %v76 = vld [vmem:[%s0 + $0xf4] sm:$0xf]
  %v77 = vld [vmem:[%s0 + $0xf8] sm:$0xf]
  %v78 = vld [vmem:[%s0 + $0xfc] sm:$0xf]
  %v79 = vld [vmem:[%s1] sm:$0xf]
  %v80 = vld [vmem:[%s1 + $0x4] sm:$0xf]
  %v81 = vld [vmem:[%s1 + $0x8] sm:$0xf]
  %v82 = vld [vmem:[%s1 + $0xc] sm:$0xf]
  %v83 = vld [vmem:[%s2] sm:$0x1]
  %v85 = vlaneseq
  %v86 = vshrl.u32 %v85, 7
  %v87 = vsub.s32 0, %v86
  %v88 = vrot.slane %v83, %v87
  %v154 = vunpack.c.l.b16 %v15
  %v155 = vunpack.c.l.b16 %v16
  %v156 = vunpack.c.l.b16 %v17
  %v157 = vunpack.c.l.b16 %v18
  %v158 = vunpack.c.l.b16 %v19
  %v159 = vunpack.c.l.b16 %v20
  %v160 = vunpack.c.l.b16 %v21
  %v161 = vunpack.c.l.b16 %v22
  %v162 = vunpack.c.l.b16 %v23
  %v163 = vunpack.c.l.b16 %v24
  %v164 = vunpack.c.l.b16 %v25
  %v165 = vunpack.c.l.b16 %v26
  %v166 = vunpack.c.l.b16 %v27
  %v167 = vunpack.c.l.b16 %v28
  %v168 = vunpack.c.l.b16 %v29
  %v169 = vunpack.c.l.b16 %v30
  %v170 = vunpack.c.l.b16 %v31
  %v171 = vunpack.c.l.b16 %v32
  %v172 = vunpack.c.l.b16 %v33
  %v173 = vunpack.c.l.b16 %v34
  %v174 = vunpack.c.l.b16 %v35
  %v175 = vunpack.c.l.b16 %v36
  %v176 = vunpack.c.l.b16 %v37
  %v177 = vunpack.c.l.b16 %v38
  %v178 = vunpack.c.l.b16 %v39
  %v179 = vunpack.c.l.b16 %v40
  %v180 = vunpack.c.l.b16 %v41
  %v181 = vunpack.c.l.b16 %v42
  %v182 = vunpack.c.l.b16 %v43
  %v183 = vunpack.c.l.b16 %v44
  %v184 = vunpack.c.l.b16 %v45
  %v185 = vunpack.c.l.b16 %v46
  %v186 = vunpack.c.l.b16 %v47
  %v187 = vunpack.c.l.b16 %v48
  %v188 = vunpack.c.l.b16 %v49
  %v189 = vunpack.c.l.b16 %v50
  %v190 = vunpack.c.l.b16 %v51
  %v191 = vunpack.c.l.b16 %v52
  %v192 = vunpack.c.l.b16 %v53
  %v193 = vunpack.c.l.b16 %v54
  %v194 = vunpack.c.l.b16 %v55
  %v195 = vunpack.c.l.b16 %v56
  %v196 = vunpack.c.l.b16 %v57
  %v197 = vunpack.c.l.b16 %v58
  %v198 = vunpack.c.l.b16 %v59
  %v199 = vunpack.c.l.b16 %v60
  %v200 = vunpack.c.l.b16 %v61
  %v201 = vunpack.c.l.b16 %v62
  %v202 = vunpack.c.l.b16 %v63
  %v203 = vunpack.c.l.b16 %v64
  %v204 = vunpack.c.l.b16 %v65
  %v205 = vunpack.c.l.b16 %v66
  %v206 = vunpack.c.l.b16 %v67
  %v207 = vunpack.c.l.b16 %v68
  %v208 = vunpack.c.l.b16 %v69
  %v209 = vunpack.c.l.b16 %v70
  %v210 = vunpack.c.l.b16 %v71
  %v211 = vunpack.c.l.b16 %v72
  %v212 = vunpack.c.l.b16 %v73
  %v213 = vunpack.c.l.b16 %v74
  %v214 = vunpack.c.l.b16 %v75
  %v215 = vunpack.c.l.b16 %v76
  %v216 = vunpack.c.l.b16 %v77
  %v217 = vunpack.c.l.b16 %v78
  %v218 = vpack.c.b16 %v155, %v154
  %v219 = vpack.c.b16 %v157, %v156
  %v220 = vpack.c.b16 %v159, %v158
  %v221 = vpack.c.b16 %v161, %v160
  %v222 = vpack.c.b16 %v163, %v162
  %v223 = vpack.c.b16 %v165, %v164
  %v224 = vpack.c.b16 %v167, %v166
  %v225 = vpack.c.b16 %v169, %v168
  %v226 = vpack.c.b16 %v171, %v170
  %v227 = vpack.c.b16 %v173, %v172
  %v228 = vpack.c.b16 %v175, %v174
  %v229 = vpack.c.b16 %v177, %v176
  %v230 = vpack.c.b16 %v179, %v178
  %v231 = vpack.c.b16 %v181, %v180
  %v232 = vpack.c.b16 %v183, %v182
  %v233 = vpack.c.b16 %v185, %v184
  %v234 = vpack.c.b16 %v187, %v186
  %v235 = vpack.c.b16 %v189, %v188
  %v236 = vpack.c.b16 %v191, %v190
  %v237 = vpack.c.b16 %v193, %v192
  %v238 = vpack.c.b16 %v195, %v194
  %v239 = vpack.c.b16 %v197, %v196
  %v240 = vpack.c.b16 %v199, %v198
  %v241 = vpack.c.b16 %v201, %v200
  %v242 = vpack.c.b16 %v203, %v202
  %v243 = vpack.c.b16 %v205, %v204
  %v244 = vpack.c.b16 %v207, %v206
  %v245 = vpack.c.b16 %v209, %v208
  %v246 = vpack.c.b16 %v211, %v210
  %v247 = vpack.c.b16 %v213, %v212
  %v248 = vpack.c.b16 %v215, %v214
  %v249 = vpack.c.b16 %v217, %v216
  %v254 = vunpack.c.l.b16 %v79
  %v255 = vunpack.c.l.b16 %v80
  %v256 = vunpack.c.l.b16 %v81
  %v257 = vunpack.c.l.b16 %v82
  %v258 = vpack.c.b16 %v255, %v254
  %v259 = vpack.c.b16 %v257, %v256
  %vm262 = vcmask 261120
  %v264 = vsel %vm262, %v218, 0
  %v267 = vsel %vm262, %v219, 0
  %v270 = vsel %vm262, %v220, 0
  %v273 = vsel %vm262, %v221, 0
  %v276 = vsel %vm262, %v222, 0
  %v279 = vsel %vm262, %v223, 0
  %v282 = vsel %vm262, %v224, 0
  %v285 = vsel %vm262, %v225, 0
  %v288 = vsel %vm262, %v226, 0
  %v291 = vsel %vm262, %v227, 0
  %v294 = vsel %vm262, %v228, 0
  %v297 = vsel %vm262, %v229, 0
  %v300 = vsel %vm262, %v230, 0
  %v303 = vsel %vm262, %v231, 0
  %v306 = vsel %vm262, %v232, 0
  %v309 = vsel %vm262, %v233, 0
  %v312 = vsel %vm262, %v234, 0
  %v315 = vsel %vm262, %v235, 0
  %v318 = vsel %vm262, %v236, 0
  %v321 = vsel %vm262, %v237, 0
  %v324 = vsel %vm262, %v238, 0
  %v327 = vsel %vm262, %v239, 0
  %v330 = vsel %vm262, %v240, 0
  %v333 = vsel %vm262, %v241, 0
  %v336 = vsel %vm262, %v242, 0
  %v339 = vsel %vm262, %v243, 0
  %v342 = vsel %vm262, %v244, 0
  %v345 = vsel %vm262, %v245, 0
  %v348 = vsel %vm262, %v246, 0
  %v351 = vsel %vm262, %v247, 0
  %v354 = vsel %vm262, %v248, 0
  %v357 = vsel %vm262, %v249, 0
  %359 = vmatprep.subr.bf16.mxu0 0
  %360 = vmatpush1.bf16.msra.mxu0 %v258
  %361 = vmatprep.subr.bf16.mxu0 0
  %362 = vmatpush1.bf16.msra.mxu0 %v259
  %363 = vmatprep.subr.bf16.mxu0 0
  %364 = vmatpush1.bf16.msra.mxu0 0
  %365 = vmatprep.subr.bf16.mxu0 0
  %366 = vmatpush1.bf16.msra.mxu0 0
  %367 = vmatprep.subr.bf16.mxu0 0
  %368 = vmatpush1.bf16.msra.mxu0 0
  %369 = vmatprep.subr.bf16.mxu0 0
  %370 = vmatpush1.bf16.msra.mxu0 0
  %371 = vmatprep.subr.bf16.mxu0 0
  %372 = vmatpush1.bf16.msra.mxu0 0
  %373 = vmatprep.subr.bf16.mxu0 0
  %374 = vmatpush1.bf16.msra.mxu0 0
  %375 = vmatprep.subr.bf16.mxu0 0
  %376 = vmatpush1.bf16.msra.mxu0 0
  %377 = vmatprep.subr.bf16.mxu0 0
  %378 = vmatpush1.bf16.msra.mxu0 0
  %379 = vmatprep.subr.bf16.mxu0 0
  %380 = vmatpush1.bf16.msra.mxu0 0
  %381 = vmatprep.subr.bf16.mxu0 0
  %382 = vmatpush1.bf16.msra.mxu0 0
  %383 = vmatprep.subr.bf16.mxu0 0
  %384 = vmatpush1.bf16.msra.mxu0 0
  %385 = vmatprep.subr.bf16.mxu0 0
  %386 = vmatpush1.bf16.msra.mxu0 0
  %387 = vmatprep.subr.bf16.mxu0 0
  %388 = vmatpush1.bf16.msra.mxu0 0
  %389 = vmatprep.subr.bf16.mxu0 0
  %390 = vmatpush1.bf16.msra.mxu0 0
  %391 = vmatprep.mubr.bf16.mxu0 0
  %392 = vmatmul.mubr.bf16.gmra.mrb[0].mxu0 %v264
  %v393 = vpop.f32.mrb[0].mxu0
  %v394 = vadd.f32 %v88, %v393
  %v395 = vpop.f32.mrb[0].mxu0
  %v396 = vpop.f32.mrb[0].mxu0
  %v397 = vadd.f32 %v88, %v396
  %v398 = vpop.f32.mrb[0].mxu0
  %399 = vmatprep.mubr.bf16.mxu0 0
  %400 = vmatmul.mubr.bf16.gmra.mrb[0].mxu0 %v267
  %v401 = vpop.f32.mrb[0].mxu0
  %v402 = vadd.f32 %v88, %v401
  %v403 = vpop.f32.mrb[0].mxu0
  %v404 = vpop.f32.mrb[0].mxu0
  %v405 = vadd.f32 %v88, %v404
  %v406 = vpop.f32.mrb[0].mxu0
  %407 = vmatprep.mubr.bf16.mxu0 0
  %408 = vmatmul.mubr.bf16.gmra.mrb[0].mxu0 %v270
  %v409 = vpop.f32.mrb[0].mxu0
  %v410 = vadd.f32 %v88, %v409
  %v411 = vpop.f32.mrb[0].mxu0
  %v412 = vpop.f32.mrb[0].mxu0
  %v413 = vadd.f32 %v88, %v412
  %v414 = vpop.f32.mrb[0].mxu0
  %415 = vmatprep.mubr.bf16.mxu0 0
  %416 = vmatmul.mubr.bf16.gmra.mrb[0].mxu0 %v273
  %v417 = vpop.f32.mrb[0].mxu0
  %v418 = vadd.f32 %v88, %v417
  %v419 = vpop.f32.mrb[0].mxu0
  %v420 = vpop.f32.mrb[0].mxu0
  %v421 = vadd.f32 %v88, %v420
  %v422 = vpop.f32.mrb[0].mxu0
  %423 = vmatprep.mubr.bf16.mxu0 0
  %424 = vmatmul.mubr.bf16.gmra.mrb[0].mxu0 %v276
  %v425 = vpop.f32.mrb[0].mxu0
  %v426 = vadd.f32 %v88, %v425
  %v427 = vpop.f32.mrb[0].mxu0
  %v428 = vpop.f32.mrb[0].mxu0
  %v429 = vadd.f32 %v88, %v428
  %v430 = vpop.f32.mrb[0].mxu0
  %431 = vmatprep.mubr.bf16.mxu0 0
  %432 = vmatmul.mubr.bf16.gmra.mrb[0].mxu0 %v279
  %v433 = vpop.f32.mrb[0].mxu0
  %v434 = vadd.f32 %v88, %v433
  %v435 = vpop.f32.mrb[0].mxu0
  %v436 = vpop.f32.mrb[0].mxu0
  %v437 = vadd.f32 %v88, %v436
  %v438 = vpop.f32.mrb[0].mxu0
  %439 = vmatprep.mubr.bf16.mxu0 0
  %440 = vmatmul.mubr.bf16.gmra.mrb[0].mxu0 %v282
  %v441 = vpop.f32.mrb[0].mxu0
  %v442 = vadd.f32 %v88, %v441
  %v443 = vpop.f32.mrb[0].mxu0
  %v444 = vpop.f32.mrb[0].mxu0
  %v445 = vadd.f32 %v88, %v444
  %v446 = vpop.f32.mrb[0].mxu0
  %447 = vmatprep.mubr.bf16.mxu0 0
  %448 = vmatmul.mubr.bf16.gmra.mrb[0].mxu0 %v285
  %v449 = vpop.f32.mrb[0].mxu0
  %v450 = vadd.f32 %v88, %v449
  %v451 = vpop.f32.mrb[0].mxu0
  %v452 = vpop.f32.mrb[0].mxu0
  %v453 = vadd.f32 %v88, %v452
  %v454 = vpop.f32.mrb[0].mxu0
  %455 = vmatprep.mubr.bf16.mxu0 0
  %456 = vmatmul.mubr.bf16.gmra.mrb[0].mxu0 %v288
  %v457 = vpop.f32.mrb[0].mxu0
  %v458 = vadd.f32 %v88, %v457
  %v459 = vpop.f32.mrb[0].mxu0
  %v460 = vpop.f32.mrb[0].mxu0
  %v461 = vadd.f32 %v88, %v460
  %v462 = vpop.f32.mrb[0].mxu0
  %463 = vmatprep.mubr.bf16.mxu0 0
  %464 = vmatmul.mubr.bf16.gmra.mrb[0].mxu0 %v291
  %v465 = vpop.f32.mrb[0].mxu0
  %v466 = vadd.f32 %v88, %v465
  %v467 = vpop.f32.mrb[0].mxu0
  %v468 = vpop.f32.mrb[0].mxu0
  %v469 = vadd.f32 %v88, %v468
  %v470 = vpop.f32.mrb[0].mxu0
  %471 = vmatprep.mubr.bf16.mxu0 0
  %472 = vmatmul.mubr.bf16.gmra.mrb[0].mxu0 %v294
  %v473 = vpop.f32.mrb[0].mxu0
  %v474 = vadd.f32 %v88, %v473
  %v475 = vpop.f32.mrb[0].mxu0
  %v476 = vpop.f32.mrb[0].mxu0
  %v477 = vadd.f32 %v88, %v476
  %v478 = vpop.f32.mrb[0].mxu0
  %479 = vmatprep.mubr.bf16.mxu0 0
  %480 = vmatmul.mubr.bf16.gmra.mrb[0].mxu0 %v297
  %v481 = vpop.f32.mrb[0].mxu0
  %v482 = vadd.f32 %v88, %v481
  %v483 = vpop.f32.mrb[0].mxu0
  %v484 = vpop.f32.mrb[0].mxu0
  %v485 = vadd.f32 %v88, %v484
  %v486 = vpop.f32.mrb[0].mxu0
  %487 = vmatprep.mubr.bf16.mxu0 0
  %488 = vmatmul.mubr.bf16.gmra.mrb[0].mxu0 %v300
  %v489 = vpop.f32.mrb[0].mxu0
  %v490 = vadd.f32 %v88, %v489
  %v491 = vpop.f32.mrb[0].mxu0
  %v492 = vpop.f32.mrb[0].mxu0
  %v493 = vadd.f32 %v88, %v492
  %v494 = vpop.f32.mrb[0].mxu0
  %495 = vmatprep.mubr.bf16.mxu0 0
  %496 = vmatmul.mubr.bf16.gmra.mrb[0].mxu0 %v303
  %v497 = vpop.f32.mrb[0].mxu0
  %v498 = vadd.f32 %v88, %v497
  %v499 = vpop.f32.mrb[0].mxu0
  %v500 = vpop.f32.mrb[0].mxu0
  %v501 = vadd.f32 %v88, %v500
  %v502 = vpop.f32.mrb[0].mxu0
  %503 = vmatprep.mubr.bf16.mxu0 0
  %504 = vmatmul.mubr.bf16.gmra.mrb[0].mxu0 %v306
  %v505 = vpop.f32.mrb[0].mxu0
  %v506 = vadd.f32 %v88, %v505
  %v507 = vpop.f32.mrb[0].mxu0
  %v508 = vpop.f32.mrb[0].mxu0
  %v509 = vadd.f32 %v88, %v508
  %v510 = vpop.f32.mrb[0].mxu0
  %511 = vmatprep.mubr.bf16.mxu0 0
  %512 = vmatmul.mubr.bf16.gmra.mrb[0].mxu0 %v309
  %v513 = vpop.f32.mrb[0].mxu0
  %v514 = vadd.f32 %v88, %v513
  %v515 = vpop.f32.mrb[0].mxu0
  %v516 = vpop.f32.mrb[0].mxu0
  %v517 = vadd.f32 %v88, %v516
  %v518 = vpop.f32.mrb[0].mxu0
  %519 = vmatprep.mubr.bf16.mxu0 0
  %520 = vmatmul.mubr.bf16.gmra.mrb[0].mxu0 %v312
  %v521 = vpop.f32.mrb[0].mxu0
  %v522 = vadd.f32 %v88, %v521
  %v523 = vpop.f32.mrb[0].mxu0
  %v524 = vpop.f32.mrb[0].mxu0
  %v525 = vadd.f32 %v88, %v524
  %v526 = vpop.f32.mrb[0].mxu0
  %527 = vmatprep.mubr.bf16.mxu0 0
  %528 = vmatmul.mubr.bf16.gmra.mrb[0].mxu0 %v315
  %v529 = vpop.f32.mrb[0].mxu0
  %v530 = vadd.f32 %v88, %v529
  %v531 = vpop.f32.mrb[0].mxu0
  %v532 = vpop.f32.mrb[0].mxu0
  %v533 = vadd.f32 %v88, %v532
  %v534 = vpop.f32.mrb[0].mxu0
  %535 = vmatprep.mubr.bf16.mxu0 0
  %536 = vmatmul.mubr.bf16.gmra.mrb[0].mxu0 %v318
  %v537 = vpop.f32.mrb[0].mxu0
  %v538 = vadd.f32 %v88, %v537
  %v539 = vpop.f32.mrb[0].mxu0
  %v540 = vpop.f32.mrb[0].mxu0
  %v541 = vadd.f32 %v88, %v540
  %v542 = vpop.f32.mrb[0].mxu0
  %543 = vmatprep.mubr.bf16.mxu0 0
  %544 = vmatmul.mubr.bf16.gmra.mrb[0].mxu0 %v321
  %v545 = vpop.f32.mrb[0].mxu0
  %v546 = vadd.f32 %v88, %v545
  %v547 = vpop.f32.mrb[0].mxu0
  %v548 = vpop.f32.mrb[0].mxu0
  %v549 = vadd.f32 %v88, %v548
  %v550 = vpop.f32.mrb[0].mxu0
  %551 = vmatprep.mubr.bf16.mxu0 0
  %552 = vmatmul.mubr.bf16.gmra.mrb[0].mxu0 %v324
  %v553 = vpop.f32.mrb[0].mxu0
  %v554 = vadd.f32 %v88, %v553
  %v555 = vpop.f32.mrb[0].mxu0
  %v556 = vpop.f32.mrb[0].mxu0
  %v557 = vadd.f32 %v88, %v556
  %v558 = vpop.f32.mrb[0].mxu0
  %559 = vmatprep.mubr.bf16.mxu0 0
  %560 = vmatmul.mubr.bf16.gmra.mrb[0].mxu0 %v327
  %v561 = vpop.f32.mrb[0].mxu0
  %v562 = vadd.f32 %v88, %v561
  %v563 = vpop.f32.mrb[0].mxu0
  %v564 = vpop.f32.mrb[0].mxu0
  %v565 = vadd.f32 %v88, %v564
  %v566 = vpop.f32.mrb[0].mxu0
  %567 = vmatprep.mubr.bf16.mxu0 0
  %568 = vmatmul.mubr.bf16.gmra.mrb[0].mxu0 %v330
  %v569 = vpop.f32.mrb[0].mxu0
  %v570 = vadd.f32 %v88, %v569
  %v571 = vpop.f32.mrb[0].mxu0
  %v572 = vpop.f32.mrb[0].mxu0
  %v573 = vadd.f32 %v88, %v572
  %v574 = vpop.f32.mrb[0].mxu0
  %575 = vmatprep.mubr.bf16.mxu0 0
  %576 = vmatmul.mubr.bf16.gmra.mrb[0].mxu0 %v333
  %v577 = vpop.f32.mrb[0].mxu0
  %v578 = vadd.f32 %v88, %v577
  %v579 = vpop.f32.mrb[0].mxu0
  %v580 = vpop.f32.mrb[0].mxu0
  %v581 = vadd.f32 %v88, %v580
  %v582 = vpop.f32.mrb[0].mxu0
  %583 = vmatprep.mubr.bf16.mxu0 0
  %584 = vmatmul.mubr.bf16.gmra.mrb[0].mxu0 %v336
  %v585 = vpop.f32.mrb[0].mxu0
  %v586 = vadd.f32 %v88, %v585
  %v587 = vpop.f32.mrb[0].mxu0
  %v588 = vpop.f32.mrb[0].mxu0
  %v589 = vadd.f32 %v88, %v588
  %v590 = vpop.f32.mrb[0].mxu0
  %591 = vmatprep.mubr.bf16.mxu0 0
  %592 = vmatmul.mubr.bf16.gmra.mrb[0].mxu0 %v339
  %v593 = vpop.f32.mrb[0].mxu0
  %v594 = vadd.f32 %v88, %v593
  %v595 = vpop.f32.mrb[0].mxu0
  %v596 = vpop.f32.mrb[0].mxu0
  %v597 = vadd.f32 %v88, %v596
  %v598 = vpop.f32.mrb[0].mxu0
  %599 = vmatprep.mubr.bf16.mxu0 0
  %600 = vmatmul.mubr.bf16.gmra.mrb[0].mxu0 %v342
  %v601 = vpop.f32.mrb[0].mxu0
  %v602 = vadd.f32 %v88, %v601
  %v603 = vpop.f32.mrb[0].mxu0
  %v604 = vpop.f32.mrb[0].mxu0
  %v605 = vadd.f32 %v88, %v604
  %v606 = vpop.f32.mrb[0].mxu0
  %607 = vmatprep.mubr.bf16.mxu0 0
  %608 = vmatmul.mubr.bf16.gmra.mrb[0].mxu0 %v345
  %v609 = vpop.f32.mrb[0].mxu0
  %v610 = vadd.f32 %v88, %v609
  %v611 = vpop.f32.mrb[0].mxu0
  %v612 = vpop.f32.mrb[0].mxu0
  %v613 = vadd.f32 %v88, %v612
  %v614 = vpop.f32.mrb[0].mxu0
  %615 = vmatprep.mubr.bf16.mxu0 0
  %616 = vmatmul.mubr.bf16.gmra.mrb[0].mxu0 %v348
  %v617 = vpop.f32.mrb[0].mxu0
  %v618 = vadd.f32 %v88, %v617
  %v619 = vpop.f32.mrb[0].mxu0
  %v620 = vpop.f32.mrb[0].mxu0
  %v621 = vadd.f32 %v88, %v620
  %v622 = vpop.f32.mrb[0].mxu0
  %623 = vmatprep.mubr.bf16.mxu0 0
  %624 = vmatmul.mubr.bf16.gmra.mrb[0].mxu0 %v351
  %v625 = vpop.f32.mrb[0].mxu0
  %v626 = vadd.f32 %v88, %v625
  %v627 = vpop.f32.mrb[0].mxu0
  %v628 = vpop.f32.mrb[0].mxu0
  %v629 = vadd.f32 %v88, %v628
  %v630 = vpop.f32.mrb[0].mxu0
  %631 = vmatprep.mubr.bf16.mxu0 0
  %632 = vmatmul.mubr.bf16.gmra.mrb[0].mxu0 %v354
  %v633 = vpop.f32.mrb[0].mxu0
  %v634 = vadd.f32 %v88, %v633
  %v635 = vpop.f32.mrb[0].mxu0
  %v636 = vpop.f32.mrb[0].mxu0
  %v637 = vadd.f32 %v88, %v636
  %v638 = vpop.f32.mrb[0].mxu0
  %639 = vmatprep.mubr.bf16.mxu0 0
  %640 = vmatmul.mubr.bf16.gmra.mrb[0].mxu0 %v357
  %v641 = vpop.f32.mrb[0].mxu0
  %v642 = vadd.f32 %v88, %v641
  %v643 = vpop.f32.mrb[0].mxu0
  %v644 = vpop.f32.mrb[0].mxu0
  %v645 = vadd.f32 %v88, %v644
  %v646 = vpop.f32.mrb[0].mxu0
  %647 = vdwg.mxu0
  %v648 = vmax.f32 %v394, 0.0
  %v649 = vmax.f32 %v397, 0.0
  %v650 = vmax.f32 %v402, 0.0
  %v651 = vmax.f32 %v405, 0.0
  %v652 = vmax.f32 %v410, 0.0
  %v653 = vmax.f32 %v413, 0.0
  %v654 = vmax.f32 %v418, 0.0
  %v655 = vmax.f32 %v421, 0.0
  %v656 = vmax.f32 %v426, 0.0
  %v657 = vmax.f32 %v429, 0.0
  %v658 = vmax.f32 %v434, 0.0
  %v659 = vmax.f32 %v437, 0.0
  %v660 = vmax.f32 %v442, 0.0
  %v661 = vmax.f32 %v445, 0.0
  %v662 = vmax.f32 %v450, 0.0
  %v663 = vmax.f32 %v453, 0.0
  %v664 = vmax.f32 %v458, 0.0
  %v665 = vmax.f32 %v461, 0.0
  %v666 = vmax.f32 %v466, 0.0
  %v667 = vmax.f32 %v469, 0.0
  %v668 = vmax.f32 %v474, 0.0
  %v669 = vmax.f32 %v477, 0.0
  %v670 = vmax.f32 %v482, 0.0
  %v671 = vmax.f32 %v485, 0.0
  %v672 = vmax.f32 %v490, 0.0
  %v673 = vmax.f32 %v493, 0.0
  %v674 = vmax.f32 %v498, 0.0
  %v675 = vmax.f32 %v501, 0.0
  %v676 = vmax.f32 %v506, 0.0
  %v677 = vmax.f32 %v509, 0.0
  %v678 = vmax.f32 %v514, 0.0
  %v679 = vmax.f32 %v517, 0.0
  %v680 = vmax.f32 %v522, 0.0
  %v681 = vmax.f32 %v525, 0.0
  %v682 = vmax.f32 %v530, 0.0
  %v683 = vmax.f32 %v533, 0.0
  %v684 = vmax.f32 %v538, 0.0
  %v685 = vmax.f32 %v541, 0.0
  %v686 = vmax.f32 %v546, 0.0
  %v687 = vmax.f32 %v549, 0.0
  %v688 = vmax.f32 %v554, 0.0
  %v689 = vmax.f32 %v557, 0.0
  %v690 = vmax.f32 %v562, 0.0
  %v691 = vmax.f32 %v565, 0.0
  %v692 = vmax.f32 %v570, 0.0
  %v693 = vmax.f32 %v573, 0.0
  %v694 = vmax.f32 %v578, 0.0
  %v695 = vmax.f32 %v581, 0.0
  %v696 = vmax.f32 %v586, 0.0
  %v697 = vmax.f32 %v589, 0.0
  %v698 = vmax.f32 %v594, 0.0
  %v699 = vmax.f32 %v597, 0.0
  %v700 = vmax.f32 %v602, 0.0
  %v701 = vmax.f32 %v605, 0.0
  %v702 = vmax.f32 %v610, 0.0
  %v703 = vmax.f32 %v613, 0.0
  %v704 = vmax.f32 %v618, 0.0
  %v705 = vmax.f32 %v621, 0.0
  %v706 = vmax.f32 %v626, 0.0
  %v707 = vmax.f32 %v629, 0.0
  %v708 = vmax.f32 %v634, 0.0
  %v709 = vmax.f32 %v637, 0.0
  %v710 = vmax.f32 %v642, 0.0
  %v711 = vmax.f32 %v645, 0.0
  %v712 = vmin.f32 %v648, 6.0
  %v713 = vmin.f32 %v649, 6.0
  %v714 = vmin.f32 %v650, 6.0
  %v715 = vmin.f32 %v651, 6.0
  %v716 = vmin.f32 %v652, 6.0
  %v717 = vmin.f32 %v653, 6.0
  %v718 = vmin.f32 %v654, 6.0
  %v719 = vmin.f32 %v655, 6.0
  %v720 = vmin.f32 %v656, 6.0
  %v721 = vmin.f32 %v657, 6.0
  %v722 = vmin.f32 %v658, 6.0
  %v723 = vmin.f32 %v659, 6.0
  %v724 = vmin.f32 %v660, 6.0
  %v725 = vmin.f32 %v661, 6.0
  %v726 = vmin.f32 %v662, 6.0
  %v727 = vmin.f32 %v663, 6.0
  %v728 = vmin.f32 %v664, 6.0
  %v729 = vmin.f32 %v665, 6.0
  %v730 = vmin.f32 %v666, 6.0
  %v731 = vmin.f32 %v667, 6.0
  %v732 = vmin.f32 %v668, 6.0
  %v733 = vmin.f32 %v669, 6.0
  %v734 = vmin.f32 %v670, 6.0
  %v735 = vmin.f32 %v671, 6.0
  %v736 = vmin.f32 %v672, 6.0
  %v737 = vmin.f32 %v673, 6.0
  %v738 = vmin.f32 %v674, 6.0
  %v739 = vmin.f32 %v675, 6.0
  %v740 = vmin.f32 %v676, 6.0
  %v741 = vmin.f32 %v677, 6.0
  %v742 = vmin.f32 %v678, 6.0
  %v743 = vmin.f32 %v679, 6.0
  %v744 = vmin.f32 %v680, 6.0
  %v745 = vmin.f32 %v681, 6.0
  %v746 = vmin.f32 %v682, 6.0
  %v747 = vmin.f32 %v683, 6.0
  %v748 = vmin.f32 %v684, 6.0
  %v749 = vmin.f32 %v685, 6.0
  %v750 = vmin.f32 %v686, 6.0
  %v751 = vmin.f32 %v687, 6.0
  %v752 = vmin.f32 %v688, 6.0
  %v753 = vmin.f32 %v689, 6.0
  %v754 = vmin.f32 %v690, 6.0
  %v755 = vmin.f32 %v691, 6.0
  %v756 = vmin.f32 %v692, 6.0
  %v757 = vmin.f32 %v693, 6.0
  %v758 = vmin.f32 %v694, 6.0
  %v759 = vmin.f32 %v695, 6.0
  %v760 = vmin.f32 %v696, 6.0
  %v761 = vmin.f32 %v697, 6.0
  %v762 = vmin.f32 %v698, 6.0
  %v763 = vmin.f32 %v699, 6.0
  %v764 = vmin.f32 %v700, 6.0
  %v765 = vmin.f32 %v701, 6.0
  %v766 = vmin.f32 %v702, 6.0
  %v767 = vmin.f32 %v703, 6.0
  %v768 = vmin.f32 %v704, 6.0
  %v769 = vmin.f32 %v705, 6.0
  %v770 = vmin.f32 %v706, 6.0
  %v771 = vmin.f32 %v707, 6.0
  %v772 = vmin.f32 %v708, 6.0
  %v773 = vmin.f32 %v709, 6.0
  %v774 = vmin.f32 %v710, 6.0
  %v775 = vmin.f32 %v711, 6.0
  %v776 = vpack.c.bf16 %v713, %v712
  %v777 = vpack.c.bf16 %v715, %v714
  %v778 = vpack.c.bf16 %v717, %v716
  %v779 = vpack.c.bf16 %v719, %v718
  %v780 = vpack.c.bf16 %v721, %v720
  %v781 = vpack.c.bf16 %v723, %v722
  %v782 = vpack.c.bf16 %v725, %v724
  %v783 = vpack.c.bf16 %v727, %v726
  %v784 = vpack.c.bf16 %v729, %v728
  %v785 = vpack.c.bf16 %v731, %v730
  %v786 = vpack.c.bf16 %v733, %v732
  %v787 = vpack.c.bf16 %v735, %v734
  %v788 = vpack.c.bf16 %v737, %v736
  %v789 = vpack.c.bf16 %v739, %v738
  %v790 = vpack.c.bf16 %v741, %v740
  %v791 = vpack.c.bf16 %v743, %v742
  %v792 = vpack.c.bf16 %v745, %v744
  %v793 = vpack.c.bf16 %v747, %v746
  %v794 = vpack.c.bf16 %v749, %v748
  %v795 = vpack.c.bf16 %v751, %v750
  %v796 = vpack.c.bf16 %v753, %v752
  %v797 = vpack.c.bf16 %v755, %v754
  %v798 = vpack.c.bf16 %v757, %v756
  %v799 = vpack.c.bf16 %v759, %v758
  %v800 = vpack.c.bf16 %v761, %v760
  %v801 = vpack.c.bf16 %v763, %v762
  %v802 = vpack.c.bf16 %v765, %v764
  %v803 = vpack.c.bf16 %v767, %v766
  %v804 = vpack.c.bf16 %v769, %v768
  %v805 = vpack.c.bf16 %v771, %v770
  %v806 = vpack.c.bf16 %v773, %v772
  %v807 = vpack.c.bf16 %v775, %v774
  %v840 = vunpack.c.l.b16 %v776
  %v841 = vunpack.c.h.b16 %v776
  %v842 = vunpack.c.l.b16 %v777
  %v843 = vunpack.c.h.b16 %v777
  %v844 = vunpack.c.l.b16 %v778
  %v845 = vunpack.c.h.b16 %v778
  %v846 = vunpack.c.l.b16 %v779
  %v847 = vunpack.c.h.b16 %v779
  %v848 = vunpack.c.l.b16 %v780
  %v849 = vunpack.c.h.b16 %v780
  %v850 = vunpack.c.l.b16 %v781
  %v851 = vunpack.c.h.b16 %v781
  %v852 = vunpack.c.l.b16 %v782
  %v853 = vunpack.c.h.b16 %v782
  %v854 = vunpack.c.l.b16 %v783
  %v855 = vunpack.c.h.b16 %v783
  %v856 = vunpack.c.l.b16 %v784
  %v857 = vunpack.c.h.b16 %v784
  %v858 = vunpack.c.l.b16 %v785
  %v859 = vunpack.c.h.b16 %v785
  %v860 = vunpack.c.l.b16 %v786
  %v861 = vunpack.c.h.b16 %v786
  %v862 = vunpack.c.l.b16 %v787
  %v863 = vunpack.c.h.b16 %v787
  %v864 = vunpack.c.l.b16 %v788
  %v865 = vunpack.c.h.b16 %v788
  %v866 = vunpack.c.l.b16 %v789
  %v867 = vunpack.c.h.b16 %v789
  %v868 = vunpack.c.l.b16 %v790
  %v869 = vunpack.c.h.b16 %v790
  %v870 = vunpack.c.l.b16 %v791
  %v871 = vunpack.c.h.b16 %v791
  %v872 = vunpack.c.l.b16 %v792
  %v873 = vunpack.c.h.b16 %v792
  %v874 = vunpack.c.l.b16 %v793
  %v875 = vunpack.c.h.b16 %v793
  %v876 = vunpack.c.l.b16 %v794
  %v877 = vunpack.c.h.b16 %v794
  %v878 = vunpack.c.l.b16 %v795
  %v879 = vunpack.c.h.b16 %v795
  %v880 = vunpack.c.l.b16 %v796
  %v881 = vunpack.c.h.b16 %v796
  %v882 = vunpack.c.l.b16 %v797
  %v883 = vunpack.c.h.b16 %v797
  %v884 = vunpack.c.l.b16 %v798
  %v885 = vunpack.c.h.b16 %v798
  %v886 = vunpack.c.l.b16 %v799
  %v887 = vunpack.c.h.b16 %v799
  %v888 = vunpack.c.l.b16 %v800
  %v889 = vunpack.c.h.b16 %v800
  %v890 = vunpack.c.l.b16 %v801
  %v891 = vunpack.c.h.b16 %v801
  %v892 = vunpack.c.l.b16 %v802
  %v893 = vunpack.c.h.b16 %v802
  %v894 = vunpack.c.l.b16 %v803
  %v895 = vunpack.c.h.b16 %v803
  %v896 = vunpack.c.l.b16 %v804
  %v897 = vunpack.c.h.b16 %v804
  %v898 = vunpack.c.l.b16 %v805
  %v899 = vunpack.c.h.b16 %v805
  %v900 = vunpack.c.l.b16 %v806
  %v901 = vunpack.c.h.b16 %v806
  %v902 = vunpack.c.l.b16 %v807
  %v903 = vunpack.c.h.b16 %v807
  %v904 = vpack.c.b16 %v840, %v840
  %v905 = vpack.c.b16 %v841, %v841
  %v906 = vpack.c.b16 %v842, %v842
  %v907 = vpack.c.b16 %v843, %v843
  %v908 = vpack.c.b16 %v844, %v844
  %v909 = vpack.c.b16 %v845, %v845
  %v910 = vpack.c.b16 %v846, %v846
  %v911 = vpack.c.b16 %v847, %v847
  %v912 = vpack.c.b16 %v848, %v848
  %v913 = vpack.c.b16 %v849, %v849
  %v914 = vpack.c.b16 %v850, %v850
  %v915 = vpack.c.b16 %v851, %v851
  %v916 = vpack.c.b16 %v852, %v852
  %v917 = vpack.c.b16 %v853, %v853
  %v918 = vpack.c.b16 %v854, %v854
  %v919 = vpack.c.b16 %v855, %v855
  %v920 = vpack.c.b16 %v856, %v856
  %v921 = vpack.c.b16 %v857, %v857
  %v922 = vpack.c.b16 %v858, %v858
  %v923 = vpack.c.b16 %v859, %v859
  %v924 = vpack.c.b16 %v860, %v860
  %v925 = vpack.c.b16 %v861, %v861
  %v926 = vpack.c.b16 %v862, %v862
  %v927 = vpack.c.b16 %v863, %v863
  %v928 = vpack.c.b16 %v864, %v864
  %v929 = vpack.c.b16 %v865, %v865
  %v930 = vpack.c.b16 %v866, %v866
  %v931 = vpack.c.b16 %v867, %v867
  %v932 = vpack.c.b16 %v868, %v868
  %v933 = vpack.c.b16 %v869, %v869
  %v934 = vpack.c.b16 %v870, %v870
  %v935 = vpack.c.b16 %v871, %v871
  %v936 = vpack.c.b16 %v872, %v872
  %v937 = vpack.c.b16 %v873, %v873
  %v938 = vpack.c.b16 %v874, %v874
  %v939 = vpack.c.b16 %v875, %v875
  %v940 = vpack.c.b16 %v876, %v876
  %v941 = vpack.c.b16 %v877, %v877
  %v942 = vpack.c.b16 %v878, %v878
  %v943 = vpack.c.b16 %v879, %v879
  %v944 = vpack.c.b16 %v880, %v880
  %v945 = vpack.c.b16 %v881, %v881
  %v946 = vpack.c.b16 %v882, %v882
  %v947 = vpack.c.b16 %v883, %v883
  %v948 = vpack.c.b16 %v884, %v884
  %v949 = vpack.c.b16 %v885, %v885
  %v950 = vpack.c.b16 %v886, %v886
  %v951 = vpack.c.b16 %v887, %v887
  %v952 = vpack.c.b16 %v888, %v888
  %v953 = vpack.c.b16 %v889, %v889
  %v954 = vpack.c.b16 %v890, %v890
  %v955 = vpack.c.b16 %v891, %v891
  %v956 = vpack.c.b16 %v892, %v892
  %v957 = vpack.c.b16 %v893, %v893
  %v958 = vpack.c.b16 %v894, %v894
  %v959 = vpack.c.b16 %v895, %v895
  %v960 = vpack.c.b16 %v896, %v896
  %v961 = vpack.c.b16 %v897, %v897
  %v962 = vpack.c.b16 %v898, %v898
  %v963 = vpack.c.b16 %v899, %v899
  %v964 = vpack.c.b16 %v900, %v900
  %v965 = vpack.c.b16 %v901, %v901
  %v966 = vpack.c.b16 %v902, %v902
  %v967 = vpack.c.b16 %v903, %v903
  %vm1032 = vcmask 60416
  %1033 = vst.msk [vmem:[%s3] sm:$0xf] %vm1032, %v904
  %1034 = vst.msk [vmem:[%s3 + $0x4] sm:$0xf] %vm1032, %v905
  %1035 = vst.msk [vmem:[%s3 + $0x8] sm:$0xf] %vm1032, %v906
  %1036 = vst.msk [vmem:[%s3 + $0xc] sm:$0xf] %vm1032, %v907
  %1037 = vst.msk [vmem:[%s3 + $0x10] sm:$0xf] %vm1032, %v908
  %1038 = vst.msk [vmem:[%s3 + $0x14] sm:$0xf] %vm1032, %v909
  %1039 = vst.msk [vmem:[%s3 + $0x18] sm:$0xf] %vm1032, %v910
  %1040 = vst.msk [vmem:[%s3 + $0x1c] sm:$0xf] %vm1032, %v911
  %1041 = vst.msk [vmem:[%s3 + $0x20] sm:$0xf] %vm1032, %v912
  %1042 = vst.msk [vmem:[%s3 + $0x24] sm:$0xf] %vm1032, %v913
  %1043 = vst.msk [vmem:[%s3 + $0x28] sm:$0xf] %vm1032, %v914
  %1044 = vst.msk [vmem:[%s3 + $0x2c] sm:$0xf] %vm1032, %v915
  %1045 = vst.msk [vmem:[%s3 + $0x30] sm:$0xf] %vm1032, %v916
  %1046 = vst.msk [vmem:[%s3 + $0x34] sm:$0xf] %vm1032, %v917
  %1047 = vst.msk [vmem:[%s3 + $0x38] sm:$0xf] %vm1032, %v918
  %1048 = vst.msk [vmem:[%s3 + $0x3c] sm:$0xf] %vm1032, %v919
  %1049 = vst.msk [vmem:[%s3 + $0x40] sm:$0xf] %vm1032, %v920
  %1050 = vst.msk [vmem:[%s3 + $0x44] sm:$0xf] %vm1032, %v921
  %1051 = vst.msk [vmem:[%s3 + $0x48] sm:$0xf] %vm1032, %v922
  %1052 = vst.msk [vmem:[%s3 + $0x4c] sm:$0xf] %vm1032, %v923
  %1053 = vst.msk [vmem:[%s3 + $0x50] sm:$0xf] %vm1032, %v924
  %1054 = vst.msk [vmem:[%s3 + $0x54] sm:$0xf] %vm1032, %v925
  %1055 = vst.msk [vmem:[%s3 + $0x58] sm:$0xf] %vm1032, %v926
  %1056 = vst.msk [vmem:[%s3 + $0x5c] sm:$0xf] %vm1032, %v927
  %1057 = vst.msk [vmem:[%s3 + $0x60] sm:$0xf] %vm1032, %v928
  %1058 = vst.msk [vmem:[%s3 + $0x64] sm:$0xf] %vm1032, %v929
  %1059 = vst.msk [vmem:[%s3 + $0x68] sm:$0xf] %vm1032, %v930
  %1060 = vst.msk [vmem:[%s3 + $0x6c] sm:$0xf] %vm1032, %v931
  %1061 = vst.msk [vmem:[%s3 + $0x70] sm:$0xf] %vm1032, %v932
  %1062 = vst.msk [vmem:[%s3 + $0x74] sm:$0xf] %vm1032, %v933
  %1063 = vst.msk [vmem:[%s3 + $0x78] sm:$0xf] %vm1032, %v934
  %1064 = vst.msk [vmem:[%s3 + $0x7c] sm:$0xf] %vm1032, %v935
  %1065 = vst.msk [vmem:[%s3 + $0x80] sm:$0xf] %vm1032, %v936
  %1066 = vst.msk [vmem:[%s3 + $0x84] sm:$0xf] %vm1032, %v937
  %1067 = vst.msk [vmem:[%s3 + $0x88] sm:$0xf] %vm1032, %v938
  %1068 = vst.msk [vmem:[%s3 + $0x8c] sm:$0xf] %vm1032, %v939
  %1069 = vst.msk [vmem:[%s3 + $0x90] sm:$0xf] %vm1032, %v940
  %1070 = vst.msk [vmem:[%s3 + $0x94] sm:$0xf] %vm1032, %v941
  %1071 = vst.msk [vmem:[%s3 + $0x98] sm:$0xf] %vm1032, %v942
  %1072 = vst.msk [vmem:[%s3 + $0x9c] sm:$0xf] %vm1032, %v943
  %1073 = vst.msk [vmem:[%s3 + $0xa0] sm:$0xf] %vm1032, %v944
  %1074 = vst.msk [vmem:[%s3 + $0xa4] sm:$0xf] %vm1032, %v945
  %1075 = vst.msk [vmem:[%s3 + $0xa8] sm:$0xf] %vm1032, %v946
  %1076 = vst.msk [vmem:[%s3 + $0xac] sm:$0xf] %vm1032, %v947
  %1077 = vst.msk [vmem:[%s3 + $0xb0] sm:$0xf] %vm1032, %v948
  %1078 = vst.msk [vmem:[%s3 + $0xb4] sm:$0xf] %vm1032, %v949
  %1079 = vst.msk [vmem:[%s3 + $0xb8] sm:$0xf] %vm1032, %v950
  %1080 = vst.msk [vmem:[%s3 + $0xbc] sm:$0xf] %vm1032, %v951
  %1081 = vst.msk [vmem:[%s3 + $0xc0] sm:$0xf] %vm1032, %v952
  %1082 = vst.msk [vmem:[%s3 + $0xc4] sm:$0xf] %vm1032, %v953
  %1083 = vst.msk [vmem:[%s3 + $0xc8] sm:$0xf] %vm1032, %v954
  %1084 = vst.msk [vmem:[%s3 + $0xcc] sm:$0xf] %vm1032, %v955
  %1085 = vst.msk [vmem:[%s3 + $0xd0] sm:$0xf] %vm1032, %v956
  %1086 = vst.msk [vmem:[%s3 + $0xd4] sm:$0xf] %vm1032, %v957
  %1087 = vst.msk [vmem:[%s3 + $0xd8] sm:$0xf] %vm1032, %v958
  %1088 = vst.msk [vmem:[%s3 + $0xdc] sm:$0xf] %vm1032, %v959
  %1089 = vst.msk [vmem:[%s3 + $0xe0] sm:$0xf] %vm1032, %v960
  %1090 = vst.msk [vmem:[%s3 + $0xe4] sm:$0xf] %vm1032, %v961
  %1091 = vst.msk [vmem:[%s3 + $0xe8] sm:$0xf] %vm1032, %v962
  %1092 = vst.msk [vmem:[%s3 + $0xec] sm:$0xf] %vm1032, %v963
  %1093 = vst.msk [vmem:[%s3 + $0xf0] sm:$0xf] %vm1032, %v964
  %1094 = vst.msk [vmem:[%s3 + $0xf4] sm:$0xf] %vm1032, %v965
  %1095 = vst.msk [vmem:[%s3 + $0xf8] sm:$0xf] %vm1032, %v966
  %1096 = vst.msk [vmem:[%s3 + $0xfc] sm:$0xf] %vm1032, %v967
  // Predicated region
  $region14: #{mobilenet_v2_forward.16} parent=0 // pred_check
    _
  $region15: #{mobilenet_v2_forward.16} parent=0 // pred_check_branch
    %1098 = sbr.rel (0) target = $region17
  $region16: #{mobilenet_v2_forward.16} parent=0 // pred_region
    _
  $region17: #{mobilenet_v2_forward.16} parent=0 // pred_fallthru
    _
  // Predicated region
  $region18: #{mobilenet_v2_forward.16} parent=0 // pred_check
    _
  $region19: #{mobilenet_v2_forward.16} parent=0 // pred_check_branch
    %1100 = sbr.rel (0) target = $region21
  $region20: #{mobilenet_v2_forward.16} parent=0 // pred_region
    _
  $region21: #{mobilenet_v2_forward.16} parent=0 // pred_fallthru
    _

// kernel: mobilenet_v2_forward.18
$region0: #{mobilenet_v2_forward.18}
  #allocation0 [shape = 'u32[]', space=smem, size = 0x4, offset = 0x4, fixed_abs, tag = 'smem constant byte address 0x4 - core index']
  #allocation1 [shape = 'u32[144,128]{1,0:T(1,128)}', space=vmem, size = 0x12000, scoped, tag = 'internal scratch']
  %s0 = inlined_call_operand.vmem [shape: bf16[512,8], index: 0, kind: input, shape index: {}]
  %s1 = inlined_call_operand.vmem [shape: bf16[8,8], index: 1, kind: input, shape index: {}]
  %s2 = inlined_call_operand.vmem [shape: f32[1,8], index: 2, kind: input, shape index: {}]
  %s3 = inlined_call_operand.vmem [shape: bf16[512,8], index: 3, kind: input, shape index: {}]
  %s4 = inlined_call_operand.vmem [shape: bf16[512,8], index: 4, kind: output, shape index: {}]
  %s5 = sld [smem:[#allocation0]]
  $region26: #{mobilenet_v2_forward.18} parent=0
    _
  %s7 = ssub.s32 1, %s5
  %s8 = scalar_select 0, %s7, %s5
  // Predicated region
  $region2: #{mobilenet_v2_forward.18} parent=0 // pred_check
    _
  $region3: #{mobilenet_v2_forward.18} parent=0 // pred_check_branch
    %10 = sbr.rel (0) target = $region5
  $region4: #{mobilenet_v2_forward.18} parent=0 // pred_region
    _
  $region5: #{mobilenet_v2_forward.18} parent=0 // pred_fallthru
    _
  // Predicated region
  $region6: #{mobilenet_v2_forward.18} parent=0 // pred_check
    _
  $region7: #{mobilenet_v2_forward.18} parent=0 // pred_check_branch
    %12 = sbr.rel (0) target = $region9
  $region8: #{mobilenet_v2_forward.18} parent=0 // pred_region
    _
  $region9: #{mobilenet_v2_forward.18} parent=0 // pred_fallthru
    _
  // Predicated region
  $region10: #{mobilenet_v2_forward.18} parent=0 // pred_check
    _
  $region11: #{mobilenet_v2_forward.18} parent=0 // pred_check_branch
    %14 = sbr.rel (0) target = $region13
  $region12: #{mobilenet_v2_forward.18} parent=0 // pred_region
    _
  $region13: #{mobilenet_v2_forward.18} parent=0 // pred_fallthru
    _
  // Predicated region
  $region14: #{mobilenet_v2_forward.18} parent=0 // pred_check
    _
  $region15: #{mobilenet_v2_forward.18} parent=0 // pred_check_branch
    %16 = sbr.rel (0) target = $region17
  $region16: #{mobilenet_v2_forward.18} parent=0 // pred_region
    _
  $region17: #{mobilenet_v2_forward.18} parent=0 // pred_fallthru
    _
  %v18 = vld [vmem:[%s0] sm:$0xf]
  %v19 = vld [vmem:[%s0 + $0x4] sm:$0xf]
  %v20 = vld [vmem:[%s0 + $0x8] sm:$0xf]
  %v21 = vld [vmem:[%s0 + $0xc] sm:$0xf]
  %v22 = vld [vmem:[%s0 + $0x10] sm:$0xf]
  %v23 = vld [vmem:[%s0 + $0x14] sm:$0xf]
  %v24 = vld [vmem:[%s0 + $0x18] sm:$0xf]
  %v25 = vld [vmem:[%s0 + $0x1c] sm:$0xf]
  %v26 = vld [vmem:[%s0 + $0x20] sm:$0xf]
  %v27 = vld [vmem:[%s0 + $0x24] sm:$0xf]
  %v28 = vld [vmem:[%s0 + $0x28] sm:$0xf]
  %v29 = vld [vmem:[%s0 + $0x2c] sm:$0xf]
  %v30 = vld [vmem:[%s0 + $0x30] sm:$0xf]
  %v31 = vld [vmem:[%s0 + $0x34] sm:$0xf]
  %v32 = vld [vmem:[%s0 + $0x38] sm:$0xf]
  %v33 = vld [vmem:[%s0 + $0x3c] sm:$0xf]
  %v34 = vld [vmem:[%s0 + $0x40] sm:$0xf]
  %v35 = vld [vmem:[%s0 + $0x44] sm:$0xf]
  %v36 = vld [vmem:[%s0 + $0x48] sm:$0xf]
  %v37 = vld [vmem:[%s0 + $0x4c] sm:$0xf]
  %v38 = vld [vmem:[%s0 + $0x50] sm:$0xf]
  %v39 = vld [vmem:[%s0 + $0x54] sm:$0xf]
  %v40 = vld [vmem:[%s0 + $0x58] sm:$0xf]
  %v41 = vld [vmem:[%s0 + $0x5c] sm:$0xf]
  %v42 = vld [vmem:[%s0 + $0x60] sm:$0xf]
  %v43 = vld [vmem:[%s0 + $0x64] sm:$0xf]
  %v44 = vld [vmem:[%s0 + $0x68] sm:$0xf]
  %v45 = vld [vmem:[%s0 + $0x6c] sm:$0xf]
  %v46 = vld [vmem:[%s0 + $0x70] sm:$0xf]
  %v47 = vld [vmem:[%s0 + $0x74] sm:$0xf]
  %v48 = vld [vmem:[%s0 + $0x78] sm:$0xf]
  %v49 = vld [vmem:[%s0 + $0x7c] sm:$0xf]
  %v50 = vld [vmem:[%s0 + $0x80] sm:$0xf]
  %v51 = vld [vmem:[%s0 + $0x84] sm:$0xf]
  %v52 = vld [vmem:[%s0 + $0x88] sm:$0xf]
  %v53 = vld [vmem:[%s0 + $0x8c] sm:$0xf]
  %v54 = vld [vmem:[%s0 + $0x90] sm:$0xf]
  %v55 = vld [vmem:[%s0 + $0x94] sm:$0xf]
  %v56 = vld [vmem:[%s0 + $0x98] sm:$0xf]
  %v57 = vld [vmem:[%s0 + $0x9c] sm:$0xf]
  %v58 = vld [vmem:[%s0 + $0xa0] sm:$0xf]
  %v59 = vld [vmem:[%s0 + $0xa4] sm:$0xf]
  %v60 = vld [vmem:[%s0 + $0xa8] sm:$0xf]
  %v61 = vld [vmem:[%s0 + $0xac] sm:$0xf]
  %v62 = vld [vmem:[%s0 + $0xb0] sm:$0xf]
  %v63 = vld [vmem:[%s0 + $0xb4] sm:$0xf]
  %v64 = vld [vmem:[%s0 + $0xb8] sm:$0xf]
  %v65 = vld [vmem:[%s0 + $0xbc] sm:$0xf]
  %v66 = vld [vmem:[%s0 + $0xc0] sm:$0xf]
  %v67 = vld [vmem:[%s0 + $0xc4] sm:$0xf]
  %v68 = vld [vmem:[%s0 + $0xc8] sm:$0xf]
  %v69 = vld [vmem:[%s0 + $0xcc] sm:$0xf]
  %v70 = vld [vmem:[%s0 + $0xd0] sm:$0xf]
  %v71 = vld [vmem:[%s0 + $0xd4] sm:$0xf]
  %v72 = vld [vmem:[%s0 + $0xd8] sm:$0xf]
  %v73 = vld [vmem:[%s0 + $0xdc] sm:$0xf]
  %v74 = vld [vmem:[%s0 + $0xe0] sm:$0xf]
  %v75 = vld [vmem:[%s0 + $0xe4] sm:$0xf]
  %v76 = vld [vmem:[%s0 + $0xe8] sm:$0xf]
  %v77 = vld [vmem:[%s0 + $0xec] sm:$0xf]
  %v78 = vld [vmem:[%s0 + $0xf0] sm:$0xf]
  %v79 = vld [vmem:[%s0 + $0xf4] sm:$0xf]
  %v80 = vld [vmem:[%s0 + $0xf8] sm:$0xf]
  %v81 = vld [vmem:[%s0 + $0xfc] sm:$0xf]
  %v82 = vld [vmem:[%s1] sm:$0xf]
  %v83 = vld [vmem:[%s2] sm:$0x1]
  %v85 = vlaneseq
  %v86 = vshrl.u32 %v85, 7
  %v87 = vsub.s32 0, %v86
  %v88 = vrot.slane %v83, %v87
  %v154 = vunpack.c.l.b16 %v18
  %v155 = vunpack.c.l.b16 %v19
  %v156 = vunpack.c.l.b16 %v20
  %v157 = vunpack.c.l.b16 %v21
  %v158 = vunpack.c.l.b16 %v22
  %v159 = vunpack.c.l.b16 %v23
  %v160 = vunpack.c.l.b16 %v24
  %v161 = vunpack.c.l.b16 %v25
  %v162 = vunpack.c.l.b16 %v26
  %v163 = vunpack.c.l.b16 %v27
  %v164 = vunpack.c.l.b16 %v28
  %v165 = vunpack.c.l.b16 %v29
  %v166 = vunpack.c.l.b16 %v30
  %v167 = vunpack.c.l.b16 %v31
  %v168 = vunpack.c.l.b16 %v32
  %v169 = vunpack.c.l.b16 %v33
  %v170 = vunpack.c.l.b16 %v34
  %v171 = vunpack.c.l.b16 %v35
  %v172 = vunpack.c.l.b16 %v36
  %v173 = vunpack.c.l.b16 %v37
  %v174 = vunpack.c.l.b16 %v38
  %v175 = vunpack.c.l.b16 %v39
  %v176 = vunpack.c.l.b16 %v40
  %v177 = vunpack.c.l.b16 %v41
  %v178 = vunpack.c.l.b16 %v42
  %v179 = vunpack.c.l.b16 %v43
  %v180 = vunpack.c.l.b16 %v44
  %v181 = vunpack.c.l.b16 %v45
  %v182 = vunpack.c.l.b16 %v46
  %v183 = vunpack.c.l.b16 %v47
  %v184 = vunpack.c.l.b16 %v48
  %v185 = vunpack.c.l.b16 %v49
  %v186 = vunpack.c.l.b16 %v50
  %v187 = vunpack.c.l.b16 %v51
  %v188 = vunpack.c.l.b16 %v52
  %v189 = vunpack.c.l.b16 %v53
  %v190 = vunpack.c.l.b16 %v54
  %v191 = vunpack.c.l.b16 %v55
  %v192 = vunpack.c.l.b16 %v56
  %v193 = vunpack.c.l.b16 %v57
  %v194 = vunpack.c.l.b16 %v58
  %v195 = vunpack.c.l.b16 %v59
  %v196 = vunpack.c.l.b16 %v60
  %v197 = vunpack.c.l.b16 %v61
  %v198 = vunpack.c.l.b16 %v62
  %v199 = vunpack.c.l.b16 %v63
  %v200 = vunpack.c.l.b16 %v64
  %v201 = vunpack.c.l.b16 %v65
  %v202 = vunpack.c.l.b16 %v66
  %v203 = vunpack.c.l.b16 %v67
  %v204 = vunpack.c.l.b16 %v68
  %v205 = vunpack.c.l.b16 %v69
  %v206 = vunpack.c.l.b16 %v70
  %v207 = vunpack.c.l.b16 %v71
  %v208 = vunpack.c.l.b16 %v72
  %v209 = vunpack.c.l.b16 %v73
  %v210 = vunpack.c.l.b16 %v74
  %v211 = vunpack.c.l.b16 %v75
  %v212 = vunpack.c.l.b16 %v76
  %v213 = vunpack.c.l.b16 %v77
  %v214 = vunpack.c.l.b16 %v78
  %v215 = vunpack.c.l.b16 %v79
  %v216 = vunpack.c.l.b16 %v80
  %v217 = vunpack.c.l.b16 %v81
  %v218 = vpack.c.b16 %v155, %v154
  %v219 = vpack.c.b16 %v157, %v156
  %v220 = vpack.c.b16 %v159, %v158
  %v221 = vpack.c.b16 %v161, %v160
  %v222 = vpack.c.b16 %v163, %v162
  %v223 = vpack.c.b16 %v165, %v164
  %v224 = vpack.c.b16 %v167, %v166
  %v225 = vpack.c.b16 %v169, %v168
  %v226 = vpack.c.b16 %v171, %v170
  %v227 = vpack.c.b16 %v173, %v172
  %v228 = vpack.c.b16 %v175, %v174
  %v229 = vpack.c.b16 %v177, %v176
  %v230 = vpack.c.b16 %v179, %v178
  %v231 = vpack.c.b16 %v181, %v180
  %v232 = vpack.c.b16 %v183, %v182
  %v233 = vpack.c.b16 %v185, %v184
  %v234 = vpack.c.b16 %v187, %v186
  %v235 = vpack.c.b16 %v189, %v188
  %v236 = vpack.c.b16 %v191, %v190
  %v237 = vpack.c.b16 %v193, %v192
  %v238 = vpack.c.b16 %v195, %v194
  %v239 = vpack.c.b16 %v197, %v196
  %v240 = vpack.c.b16 %v199, %v198
  %v241 = vpack.c.b16 %v201, %v200
  %v242 = vpack.c.b16 %v203, %v202
  %v243 = vpack.c.b16 %v205, %v204
  %v244 = vpack.c.b16 %v207, %v206
  %v245 = vpack.c.b16 %v209, %v208
  %v246 = vpack.c.b16 %v211, %v210
  %v247 = vpack.c.b16 %v213, %v212
  %v248 = vpack.c.b16 %v215, %v214
  %v249 = vpack.c.b16 %v217, %v216
  %vm250 = vcmask 64512
  %v252 = vsel %vm250, %v218, 0
  %v255 = vsel %vm250, %v219, 0
  %v258 = vsel %vm250, %v220, 0
  %v261 = vsel %vm250, %v221, 0
  %v264 = vsel %vm250, %v222, 0
  %v267 = vsel %vm250, %v223, 0
  %v270 = vsel %vm250, %v224, 0
  %v273 = vsel %vm250, %v225, 0
  %v276 = vsel %vm250, %v226, 0
  %v279 = vsel %vm250, %v227, 0
  %v282 = vsel %vm250, %v228, 0
  %v285 = vsel %vm250, %v229, 0
  %v288 = vsel %vm250, %v230, 0
  %v291 = vsel %vm250, %v231, 0
  %v294 = vsel %vm250, %v232, 0
  %v297 = vsel %vm250, %v233, 0
  %v300 = vsel %vm250, %v234, 0
  %v303 = vsel %vm250, %v235, 0
  %v306 = vsel %vm250, %v236, 0
  %v309 = vsel %vm250, %v237, 0
  %v312 = vsel %vm250, %v238, 0
  %v315 = vsel %vm250, %v239, 0
  %v318 = vsel %vm250, %v240, 0
  %v321 = vsel %vm250, %v241, 0
  %v324 = vsel %vm250, %v242, 0
  %v327 = vsel %vm250, %v243, 0
  %v330 = vsel %vm250, %v244, 0
  %v333 = vsel %vm250, %v245, 0
  %v336 = vsel %vm250, %v246, 0
  %v339 = vsel %vm250, %v247, 0
  %v342 = vsel %vm250, %v248, 0
  %v345 = vsel %vm250, %v249, 0
  %vm347 = vcmask 1043456
  %v349 = vsel %vm347, %v82, 0
  %351 = vmatprep.subr.bf16.mxu0 0
  %352 = vmatpush1.bf16.msra.mxu0 %v349
  %353 = vmatprep.subr.bf16.mxu0 0
  %354 = vmatpush1.bf16.msra.mxu0 0
  %355 = vmatprep.subr.bf16.mxu0 0
  %356 = vmatpush1.bf16.msra.mxu0 0
  %357 = vmatprep.subr.bf16.mxu0 0
  %358 = vmatpush1.bf16.msra.mxu0 0
  %359 = vmatprep.subr.bf16.mxu0 0
  %360 = vmatpush1.bf16.msra.mxu0 0
  %361 = vmatprep.subr.bf16.mxu0 0
  %362 = vmatpush1.bf16.msra.mxu0 0
  %363 = vmatprep.subr.bf16.mxu0 0
  %364 = vmatpush1.bf16.msra.mxu0 0
  %365 = vmatprep.subr.bf16.mxu0 0
  %366 = vmatpush1.bf16.msra.mxu0 0
  %367 = vmatprep.subr.bf16.mxu0 0
  %368 = vmatpush1.bf16.msra.mxu0 0
  %369 = vmatprep.subr.bf16.mxu0 0
  %370 = vmatpush1.bf16.msra.mxu0 0
  %371 = vmatprep.subr.bf16.mxu0 0
  %372 = vmatpush1.bf16.msra.mxu0 0
  %373 = vmatprep.subr.bf16.mxu0 0
  %374 = vmatpush1.bf16.msra.mxu0 0
  %375 = vmatprep.subr.bf16.mxu0 0
  %376 = vmatpush1.bf16.msra.mxu0 0
  %377 = vmatprep.subr.bf16.mxu0 0
  %378 = vmatpush1.bf16.msra.mxu0 0
  %379 = vmatprep.subr.bf16.mxu0 0
  %380 = vmatpush1.bf16.msra.mxu0 0
  %381 = vmatprep.subr.bf16.mxu0 0
  %382 = vmatpush1.bf16.msra.mxu0 0
  %383 = vmatprep.mubr.bf16.mxu0 0
  %384 = vmatmul.mubr.bf16.gmra.mrb[0].mxu0 %v252
  %v385 = vpop.f32.mrb[0].mxu0
  %v386 = vadd.f32 %v88, %v385
  %v387 = vpop.f32.mrb[0].mxu0
  %v388 = vpop.f32.mrb[0].mxu0
  %v389 = vadd.f32 %v88, %v388
  %v390 = vpop.f32.mrb[0].mxu0
  %391 = vmatprep.mubr.bf16.mxu0 0
  %392 = vmatmul.mubr.bf16.gmra.mrb[0].mxu0 %v255
  %v393 = vpop.f32.mrb[0].mxu0
  %v394 = vadd.f32 %v88, %v393
  %v395 = vpop.f32.mrb[0].mxu0
  %v396 = vpop.f32.mrb[0].mxu0
  %v397 = vadd.f32 %v88, %v396
  %v398 = vpop.f32.mrb[0].mxu0
  %399 = vmatprep.mubr.bf16.mxu0 0
  %400 = vmatmul.mubr.bf16.gmra.mrb[0].mxu0 %v258
  %v401 = vpop.f32.mrb[0].mxu0
  %v402 = vadd.f32 %v88, %v401
  %v403 = vpop.f32.mrb[0].mxu0
  %v404 = vpop.f32.mrb[0].mxu0
  %v405 = vadd.f32 %v88, %v404
  %v406 = vpop.f32.mrb[0].mxu0
  %407 = vmatprep.mubr.bf16.mxu0 0
  %408 = vmatmul.mubr.bf16.gmra.mrb[0].mxu0 %v261
  %v409 = vpop.f32.mrb[0].mxu0
  %v410 = vadd.f32 %v88, %v409
  %v411 = vpop.f32.mrb[0].mxu0
  %v412 = vpop.f32.mrb[0].mxu0
  %v413 = vadd.f32 %v88, %v412
  %v414 = vpop.f32.mrb[0].mxu0
  %415 = vmatprep.mubr.bf16.mxu0 0
  %416 = vmatmul.mubr.bf16.gmra.mrb[0].mxu0 %v264
  %v417 = vpop.f32.mrb[0].mxu0
  %v418 = vadd.f32 %v88, %v417
  %v419 = vpop.f32.mrb[0].mxu0
  %v420 = vpop.f32.mrb[0].mxu0
  %v421 = vadd.f32 %v88, %v420
  %v422 = vpop.f32.mrb[0].mxu0
  %423 = vmatprep.mubr.bf16.mxu0 0
  %424 = vmatmul.mubr.bf16.gmra.mrb[0].mxu0 %v267
  %v425 = vpop.f32.mrb[0].mxu0
  %v426 = vadd.f32 %v88, %v425
  %v427 = vpop.f32.mrb[0].mxu0
  %v428 = vpop.f32.mrb[0].mxu0
  %v429 = vadd.f32 %v88, %v428
  %v430 = vpop.f32.mrb[0].mxu0
  %431 = vmatprep.mubr.bf16.mxu0 0
  %432 = vmatmul.mubr.bf16.gmra.mrb[0].mxu0 %v270
  %v433 = vpop.f32.mrb[0].mxu0
  %v434 = vadd.f32 %v88, %v433
  %v435 = vpop.f32.mrb[0].mxu0
  %v436 = vpop.f32.mrb[0].mxu0
  %v437 = vadd.f32 %v88, %v436
  %v438 = vpop.f32.mrb[0].mxu0
  %439 = vmatprep.mubr.bf16.mxu0 0
  %440 = vmatmul.mubr.bf16.gmra.mrb[0].mxu0 %v273
  %v441 = vpop.f32.mrb[0].mxu0
  %v442 = vadd.f32 %v88, %v441
  %v443 = vpop.f32.mrb[0].mxu0
  %v444 = vpop.f32.mrb[0].mxu0
  %v445 = vadd.f32 %v88, %v444
  %v446 = vpop.f32.mrb[0].mxu0
  %447 = vmatprep.mubr.bf16.mxu0 0
  %448 = vmatmul.mubr.bf16.gmra.mrb[0].mxu0 %v276
  %v449 = vpop.f32.mrb[0].mxu0
  %v450 = vadd.f32 %v88, %v449
  %v451 = vpop.f32.mrb[0].mxu0
  %v452 = vpop.f32.mrb[0].mxu0
  %v453 = vadd.f32 %v88, %v452
  %v454 = vpop.f32.mrb[0].mxu0
  %455 = vmatprep.mubr.bf16.mxu0 0
  %456 = vmatmul.mubr.bf16.gmra.mrb[0].mxu0 %v279
  %v457 = vpop.f32.mrb[0].mxu0
  %v458 = vadd.f32 %v88, %v457
  %v459 = vpop.f32.mrb[0].mxu0
  %v460 = vpop.f32.mrb[0].mxu0
  %v461 = vadd.f32 %v88, %v460
  %v462 = vpop.f32.mrb[0].mxu0
  %463 = vmatprep.mubr.bf16.mxu0 0
  %464 = vmatmul.mubr.bf16.gmra.mrb[0].mxu0 %v282
  %v465 = vpop.f32.mrb[0].mxu0
  %v466 = vadd.f32 %v88, %v465
  %v467 = vpop.f32.mrb[0].mxu0
  %v468 = vpop.f32.mrb[0].mxu0
  %v469 = vadd.f32 %v88, %v468
  %v470 = vpop.f32.mrb[0].mxu0
  %471 = vmatprep.mubr.bf16.mxu0 0
  %472 = vmatmul.mubr.bf16.gmra.mrb[0].mxu0 %v285
  %v473 = vpop.f32.mrb[0].mxu0
  %v474 = vadd.f32 %v88, %v473
  %v475 = vpop.f32.mrb[0].mxu0
  %v476 = vpop.f32.mrb[0].mxu0
  %v477 = vadd.f32 %v88, %v476
  %v478 = vpop.f32.mrb[0].mxu0
  %479 = vmatprep.mubr.bf16.mxu0 0
  %480 = vmatmul.mubr.bf16.gmra.mrb[0].mxu0 %v288
  %v481 = vpop.f32.mrb[0].mxu0
  %v482 = vadd.f32 %v88, %v481
  %v483 = vpop.f32.mrb[0].mxu0
  %v484 = vpop.f32.mrb[0].mxu0
  %v485 = vadd.f32 %v88, %v484
  %v486 = vpop.f32.mrb[0].mxu0
  %487 = vmatprep.mubr.bf16.mxu0 0
  %488 = vmatmul.mubr.bf16.gmra.mrb[0].mxu0 %v291
  %v489 = vpop.f32.mrb[0].mxu0
  %v490 = vadd.f32 %v88, %v489
  %v491 = vpop.f32.mrb[0].mxu0
  %v492 = vpop.f32.mrb[0].mxu0
  %v493 = vadd.f32 %v88, %v492
  %v494 = vpop.f32.mrb[0].mxu0
  %495 = vmatprep.mubr.bf16.mxu0 0
  %496 = vmatmul.mubr.bf16.gmra.mrb[0].mxu0 %v294
  %v497 = vpop.f32.mrb[0].mxu0
  %v498 = vadd.f32 %v88, %v497
  %v499 = vpop.f32.mrb[0].mxu0
  %v500 = vpop.f32.mrb[0].mxu0
  %v501 = vadd.f32 %v88, %v500
  %v502 = vpop.f32.mrb[0].mxu0
  %503 = vmatprep.mubr.bf16.mxu0 0
  %504 = vmatmul.mubr.bf16.gmra.mrb[0].mxu0 %v297
  %v505 = vpop.f32.mrb[0].mxu0
  %v506 = vadd.f32 %v88, %v505
  %v507 = vpop.f32.mrb[0].mxu0
  %v508 = vpop.f32.mrb[0].mxu0
  %v509 = vadd.f32 %v88, %v508
  %v510 = vpop.f32.mrb[0].mxu0
  %511 = vmatprep.mubr.bf16.mxu0 0
  %512 = vmatmul.mubr.bf16.gmra.mrb[0].mxu0 %v300
  %v513 = vpop.f32.mrb[0].mxu0
  %v514 = vadd.f32 %v88, %v513
  %v515 = vpop.f32.mrb[0].mxu0
  %v516 = vpop.f32.mrb[0].mxu0
  %v517 = vadd.f32 %v88, %v516
  %v518 = vpop.f32.mrb[0].mxu0
  %519 = vmatprep.mubr.bf16.mxu0 0
  %520 = vmatmul.mubr.bf16.gmra.mrb[0].mxu0 %v303
  %v521 = vpop.f32.mrb[0].mxu0
  %v522 = vadd.f32 %v88, %v521
  %v523 = vpop.f32.mrb[0].mxu0
  %v524 = vpop.f32.mrb[0].mxu0
  %v525 = vadd.f32 %v88, %v524
  %v526 = vpop.f32.mrb[0].mxu0
  %527 = vmatprep.mubr.bf16.mxu0 0
  %528 = vmatmul.mubr.bf16.gmra.mrb[0].mxu0 %v306
  %v529 = vpop.f32.mrb[0].mxu0
  %v530 = vadd.f32 %v88, %v529
  %v531 = vpop.f32.mrb[0].mxu0
  %v532 = vpop.f32.mrb[0].mxu0
  %v533 = vadd.f32 %v88, %v532
  %v534 = vpop.f32.mrb[0].mxu0
  %535 = vmatprep.mubr.bf16.mxu0 0
  %536 = vmatmul.mubr.bf16.gmra.mrb[0].mxu0 %v309
  %v537 = vpop.f32.mrb[0].mxu0
  %v538 = vadd.f32 %v88, %v537
  %v539 = vpop.f32.mrb[0].mxu0
  %v540 = vpop.f32.mrb[0].mxu0
  %v541 = vadd.f32 %v88, %v540
  %v542 = vpop.f32.mrb[0].mxu0
  %543 = vmatprep.mubr.bf16.mxu0 0
  %544 = vmatmul.mubr.bf16.gmra.mrb[0].mxu0 %v312
  %v545 = vpop.f32.mrb[0].mxu0
  %v546 = vadd.f32 %v88, %v545
  %v547 = vpop.f32.mrb[0].mxu0
  %v548 = vpop.f32.mrb[0].mxu0
  %v549 = vadd.f32 %v88, %v548
  %v550 = vpop.f32.mrb[0].mxu0
  %551 = vmatprep.mubr.bf16.mxu0 0
  %552 = vmatmul.mubr.bf16.gmra.mrb[0].mxu0 %v315
  %v553 = vpop.f32.mrb[0].mxu0
  %v554 = vadd.f32 %v88, %v553
  %v555 = vpop.f32.mrb[0].mxu0
  %v556 = vpop.f32.mrb[0].mxu0
  %v557 = vadd.f32 %v88, %v556
  %v558 = vpop.f32.mrb[0].mxu0
  %559 = vmatprep.mubr.bf16.mxu0 0
  %560 = vmatmul.mubr.bf16.gmra.mrb[0].mxu0 %v318
  %v561 = vpop.f32.mrb[0].mxu0
  %v562 = vadd.f32 %v88, %v561
  %v563 = vpop.f32.mrb[0].mxu0
  %v564 = vpop.f32.mrb[0].mxu0
  %v565 = vadd.f32 %v88, %v564
  %v566 = vpop.f32.mrb[0].mxu0
  %567 = vmatprep.mubr.bf16.mxu0 0
  %568 = vmatmul.mubr.bf16.gmra.mrb[0].mxu0 %v321
  %v569 = vpop.f32.mrb[0].mxu0
  %v570 = vadd.f32 %v88, %v569
  %v571 = vpop.f32.mrb[0].mxu0
  %v572 = vpop.f32.mrb[0].mxu0
  %v573 = vadd.f32 %v88, %v572
  %v574 = vpop.f32.mrb[0].mxu0
  %575 = vmatprep.mubr.bf16.mxu0 0
  %576 = vmatmul.mubr.bf16.gmra.mrb[0].mxu0 %v324
  %v577 = vpop.f32.mrb[0].mxu0
  %v578 = vadd.f32 %v88, %v577
  %v579 = vpop.f32.mrb[0].mxu0
  %v580 = vpop.f32.mrb[0].mxu0
  %v581 = vadd.f32 %v88, %v580
  %v582 = vpop.f32.mrb[0].mxu0
  %583 = vmatprep.mubr.bf16.mxu0 0
  %584 = vmatmul.mubr.bf16.gmra.mrb[0].mxu0 %v327
  %v585 = vpop.f32.mrb[0].mxu0
  %v586 = vadd.f32 %v88, %v585
  %v587 = vpop.f32.mrb[0].mxu0
  %v588 = vpop.f32.mrb[0].mxu0
  %v589 = vadd.f32 %v88, %v588
  %v590 = vpop.f32.mrb[0].mxu0
  %591 = vmatprep.mubr.bf16.mxu0 0
  %592 = vmatmul.mubr.bf16.gmra.mrb[0].mxu0 %v330
  %v593 = vpop.f32.mrb[0].mxu0
  %v594 = vadd.f32 %v88, %v593
  %v595 = vpop.f32.mrb[0].mxu0
  %v596 = vpop.f32.mrb[0].mxu0
  %v597 = vadd.f32 %v88, %v596
  %v598 = vpop.f32.mrb[0].mxu0
  %599 = vmatprep.mubr.bf16.mxu0 0
  %600 = vmatmul.mubr.bf16.gmra.mrb[0].mxu0 %v333
  %v601 = vpop.f32.mrb[0].mxu0
  %v602 = vadd.f32 %v88, %v601
  %v603 = vpop.f32.mrb[0].mxu0
  %v604 = vpop.f32.mrb[0].mxu0
  %v605 = vadd.f32 %v88, %v604
  %v606 = vpop.f32.mrb[0].mxu0
  %607 = vmatprep.mubr.bf16.mxu0 0
  %608 = vmatmul.mubr.bf16.gmra.mrb[0].mxu0 %v336
  %v609 = vpop.f32.mrb[0].mxu0
  %v610 = vadd.f32 %v88, %v609
  %v611 = vpop.f32.mrb[0].mxu0
  %v612 = vpop.f32.mrb[0].mxu0
  %v613 = vadd.f32 %v88, %v612
  %v614 = vpop.f32.mrb[0].mxu0
  %615 = vmatprep.mubr.bf16.mxu0 0
  %616 = vmatmul.mubr.bf16.gmra.mrb[0].mxu0 %v339
  %v617 = vpop.f32.mrb[0].mxu0
  %v618 = vadd.f32 %v88, %v617
  %v619 = vpop.f32.mrb[0].mxu0
  %v620 = vpop.f32.mrb[0].mxu0
  %v621 = vadd.f32 %v88, %v620
  %v622 = vpop.f32.mrb[0].mxu0
  %623 = vmatprep.mubr.bf16.mxu0 0
  %624 = vmatmul.mubr.bf16.gmra.mrb[0].mxu0 %v342
  %v625 = vpop.f32.mrb[0].mxu0
  %v626 = vadd.f32 %v88, %v625
  %v627 = vpop.f32.mrb[0].mxu0
  %v628 = vpop.f32.mrb[0].mxu0
  %v629 = vadd.f32 %v88, %v628
  %v630 = vpop.f32.mrb[0].mxu0
  %631 = vmatprep.mubr.bf16.mxu0 0
  %632 = vmatmul.mubr.bf16.gmra.mrb[0].mxu0 %v345
  %v633 = vpop.f32.mrb[0].mxu0
  %v634 = vadd.f32 %v88, %v633
  %v635 = vpop.f32.mrb[0].mxu0
  %v636 = vpop.f32.mrb[0].mxu0
  %v637 = vadd.f32 %v88, %v636
  %v638 = vpop.f32.mrb[0].mxu0
  %639 = vdwg.mxu0
  %v640 = vld [vmem:[%s3] sm:$0xf]
  %v641 = vld [vmem:[%s3 + $0x4] sm:$0xf]
  %v642 = vld [vmem:[%s3 + $0x8] sm:$0xf]
  %v643 = vld [vmem:[%s3 + $0xc] sm:$0xf]
  %v644 = vld [vmem:[%s3 + $0x10] sm:$0xf]
  %v645 = vld [vmem:[%s3 + $0x14] sm:$0xf]
  %v646 = vld [vmem:[%s3 + $0x18] sm:$0xf]
  %v647 = vld [vmem:[%s3 + $0x1c] sm:$0xf]
  %v648 = vld [vmem:[%s3 + $0x20] sm:$0xf]
  %v649 = vld [vmem:[%s3 + $0x24] sm:$0xf]
  %v650 = vld [vmem:[%s3 + $0x28] sm:$0xf]
  %v651 = vld [vmem:[%s3 + $0x2c] sm:$0xf]
  %v652 = vld [vmem:[%s3 + $0x30] sm:$0xf]
  %v653 = vld [vmem:[%s3 + $0x34] sm:$0xf]
  %v654 = vld [vmem:[%s3 + $0x38] sm:$0xf]
  %v655 = vld [vmem:[%s3 + $0x3c] sm:$0xf]
  %v656 = vld [vmem:[%s3 + $0x40] sm:$0xf]
  %v657 = vld [vmem:[%s3 + $0x44] sm:$0xf]
  %v658 = vld [vmem:[%s3 + $0x48] sm:$0xf]
  %v659 = vld [vmem:[%s3 + $0x4c] sm:$0xf]
  %v660 = vld [vmem:[%s3 + $0x50] sm:$0xf]
  %v661 = vld [vmem:[%s3 + $0x54] sm:$0xf]
  %v662 = vld [vmem:[%s3 + $0x58] sm:$0xf]
  %v663 = vld [vmem:[%s3 + $0x5c] sm:$0xf]
  %v664 = vld [vmem:[%s3 + $0x60] sm:$0xf]
  %v665 = vld [vmem:[%s3 + $0x64] sm:$0xf]
  %v666 = vld [vmem:[%s3 + $0x68] sm:$0xf]
  %v667 = vld [vmem:[%s3 + $0x6c] sm:$0xf]
  %v668 = vld [vmem:[%s3 + $0x70] sm:$0xf]
  %v669 = vld [vmem:[%s3 + $0x74] sm:$0xf]
  %v670 = vld [vmem:[%s3 + $0x78] sm:$0xf]
  %v671 = vld [vmem:[%s3 + $0x7c] sm:$0xf]
  %v672 = vld [vmem:[%s3 + $0x80] sm:$0xf]
  %v673 = vld [vmem:[%s3 + $0x84] sm:$0xf]
  %v674 = vld [vmem:[%s3 + $0x88] sm:$0xf]
  %v675 = vld [vmem:[%s3 + $0x8c] sm:$0xf]
  %v676 = vld [vmem:[%s3 + $0x90] sm:$0xf]
  %v677 = vld [vmem:[%s3 + $0x94] sm:$0xf]
  %v678 = vld [vmem:[%s3 + $0x98] sm:$0xf]
  %v679 = vld [vmem:[%s3 + $0x9c] sm:$0xf]
  %v680 = vld [vmem:[%s3 + $0xa0] sm:$0xf]
  %v681 = vld [vmem:[%s3 + $0xa4] sm:$0xf]
  %v682 = vld [vmem:[%s3 + $0xa8] sm:$0xf]
  %v683 = vld [vmem:[%s3 + $0xac] sm:$0xf]
  %v684 = vld [vmem:[%s3 + $0xb0] sm:$0xf]
  %v685 = vld [vmem:[%s3 + $0xb4] sm:$0xf]
  %v686 = vld [vmem:[%s3 + $0xb8] sm:$0xf]
  %v687 = vld [vmem:[%s3 + $0xbc] sm:$0xf]
  %v688 = vld [vmem:[%s3 + $0xc0] sm:$0xf]
  %v689 = vld [vmem:[%s3 + $0xc4] sm:$0xf]
  %v690 = vld [vmem:[%s3 + $0xc8] sm:$0xf]
  %v691 = vld [vmem:[%s3 + $0xcc] sm:$0xf]
  %v692 = vld [vmem:[%s3 + $0xd0] sm:$0xf]
  %v693 = vld [vmem:[%s3 + $0xd4] sm:$0xf]
  %v694 = vld [vmem:[%s3 + $0xd8] sm:$0xf]
  %v695 = vld [vmem:[%s3 + $0xdc] sm:$0xf]
  %v696 = vld [vmem:[%s3 + $0xe0] sm:$0xf]
  %v697 = vld [vmem:[%s3 + $0xe4] sm:$0xf]
  %v698 = vld [vmem:[%s3 + $0xe8] sm:$0xf]
  %v699 = vld [vmem:[%s3 + $0xec] sm:$0xf]
  %v700 = vld [vmem:[%s3 + $0xf0] sm:$0xf]
  %v701 = vld [vmem:[%s3 + $0xf4] sm:$0xf]
  %v702 = vld [vmem:[%s3 + $0xf8] sm:$0xf]
  %v703 = vld [vmem:[%s3 + $0xfc] sm:$0xf]
  %v704 = vunpack.c.l.bf16 %v640
  %v705 = vunpack.c.l.bf16 %v641
  %v706 = vunpack.c.l.bf16 %v642
  %v707 = vunpack.c.l.bf16 %v643
  %v708 = vunpack.c.l.bf16 %v644
  %v709 = vunpack.c.l.bf16 %v645
  %v710 = vunpack.c.l.bf16 %v646
  %v711 = vunpack.c.l.bf16 %v647
  %v712 = vunpack.c.l.bf16 %v648
  %v713 = vunpack.c.l.bf16 %v649
  %v714 = vunpack.c.l.bf16 %v650
  %v715 = vunpack.c.l.bf16 %v651
  %v716 = vunpack.c.l.bf16 %v652
  %v717 = vunpack.c.l.bf16 %v653
  %v718 = vunpack.c.l.bf16 %v654
  %v719 = vunpack.c.l.bf16 %v655
  %v720 = vunpack.c.l.bf16 %v656
  %v721 = vunpack.c.l.bf16 %v657
  %v722 = vunpack.c.l.bf16 %v658
  %v723 = vunpack.c.l.bf16 %v659
  %v724 = vunpack.c.l.bf16 %v660
  %v725 = vunpack.c.l.bf16 %v661
  %v726 = vunpack.c.l.bf16 %v662
  %v727 = vunpack.c.l.bf16 %v663
  %v728 = vunpack.c.l.bf16 %v664
  %v729 = vunpack.c.l.bf16 %v665
  %v730 = vunpack.c.l.bf16 %v666
  %v731 = vunpack.c.l.bf16 %v667
  %v732 = vunpack.c.l.bf16 %v668
  %v733 = vunpack.c.l.bf16 %v669
  %v734 = vunpack.c.l.bf16 %v670
  %v735 = vunpack.c.l.bf16 %v671
  %v736 = vunpack.c.l.bf16 %v672
  %v737 = vunpack.c.l.bf16 %v673
  %v738 = vunpack.c.l.bf16 %v674
  %v739 = vunpack.c.l.bf16 %v675
  %v740 = vunpack.c.l.bf16 %v676
  %v741 = vunpack.c.l.bf16 %v677
  %v742 = vunpack.c.l.bf16 %v678
  %v743 = vunpack.c.l.bf16 %v679
  %v744 = vunpack.c.l.bf16 %v680
  %v745 = vunpack.c.l.bf16 %v681
  %v746 = vunpack.c.l.bf16 %v682
  %v747 = vunpack.c.l.bf16 %v683
  %v748 = vunpack.c.l.bf16 %v684
  %v749 = vunpack.c.l.bf16 %v685
  %v750 = vunpack.c.l.bf16 %v686
  %v751 = vunpack.c.l.bf16 %v687
  %v752 = vunpack.c.l.bf16 %v688
  %v753 = vunpack.c.l.bf16 %v689
  %v754 = vunpack.c.l.bf16 %v690
  %v755 = vunpack.c.l.bf16 %v691
  %v756 = vunpack.c.l.bf16 %v692
  %v757 = vunpack.c.l.bf16 %v693
  %v758 = vunpack.c.l.bf16 %v694
  %v759 = vunpack.c.l.bf16 %v695
  %v760 = vunpack.c.l.bf16 %v696
  %v761 = vunpack.c.l.bf16 %v697
  %v762 = vunpack.c.l.bf16 %v698
  %v763 = vunpack.c.l.bf16 %v699
  %v764 = vunpack.c.l.bf16 %v700
  %v765 = vunpack.c.l.bf16 %v701
  %v766 = vunpack.c.l.bf16 %v702
  %v767 = vunpack.c.l.bf16 %v703
  %v768 = vadd.f32 %v386, %v704
  %v769 = vadd.f32 %v389, %v705
  %v770 = vadd.f32 %v394, %v706
  %v771 = vadd.f32 %v397, %v707
  %v772 = vadd.f32 %v402, %v708
  %v773 = vadd.f32 %v405, %v709
  %v774 = vadd.f32 %v410, %v710
  %v775 = vadd.f32 %v413, %v711
  %v776 = vadd.f32 %v418, %v712
  %v777 = vadd.f32 %v421, %v713
  %v778 = vadd.f32 %v426, %v714
  %v779 = vadd.f32 %v429, %v715
  %v780 = vadd.f32 %v434, %v716
  %v781 = vadd.f32 %v437, %v717
  %v782 = vadd.f32 %v442, %v718
  %v783 = vadd.f32 %v445, %v719
  %v784 = vadd.f32 %v450, %v720
  %v785 = vadd.f32 %v453, %v721
  %v786 = vadd.f32 %v458, %v722
  %v787 = vadd.f32 %v461, %v723
  %v788 = vadd.f32 %v466, %v724
  %v789 = vadd.f32 %v469, %v725
  %v790 = vadd.f32 %v474, %v726
  %v791 = vadd.f32 %v477, %v727
  %v792 = vadd.f32 %v482, %v728
  %v793 = vadd.f32 %v485, %v729
  %v794 = vadd.f32 %v490, %v730
  %v795 = vadd.f32 %v493, %v731
  %v796 = vadd.f32 %v498, %v732
  %v797 = vadd.f32 %v501, %v733
  %v798 = vadd.f32 %v506, %v734
  %v799 = vadd.f32 %v509, %v735
  %v800 = vadd.f32 %v514, %v736
  %v801 = vadd.f32 %v517, %v737
  %v802 = vadd.f32 %v522, %v738
  %v803 = vadd.f32 %v525, %v739
  %v804 = vadd.f32 %v530, %v740
  %v805 = vadd.f32 %v533, %v741
  %v806 = vadd.f32 %v538, %v742
  %v807 = vadd.f32 %v541, %v743
  %v808 = vadd.f32 %v546, %v744
  %v809 = vadd.f32 %v549, %v745
  %v810 = vadd.f32 %v554, %v746
  %v811 = vadd.f32 %v557, %v747
  %v812 = vadd.f32 %v562, %v748
  %v813 = vadd.f32 %v565, %v749
  %v814 = vadd.f32 %v570, %v750
  %v815 = vadd.f32 %v573, %v751
  %v816 = vadd.f32 %v578, %v752
  %v817 = vadd.f32 %v581, %v753
  %v818 = vadd.f32 %v586, %v754
  %v819 = vadd.f32 %v589, %v755
  %v820 = vadd.f32 %v594, %v756
  %v821 = vadd.f32 %v597, %v757
  %v822 = vadd.f32 %v602, %v758
  %v823 = vadd.f32 %v605, %v759
  %v824 = vadd.f32 %v610, %v760
  %v825 = vadd.f32 %v613, %v761
  %v826 = vadd.f32 %v618, %v762
  %v827 = vadd.f32 %v621, %v763
  %v828 = vadd.f32 %v626, %v764
  %v829 = vadd.f32 %v629, %v765
  %v830 = vadd.f32 %v634, %v766
  %v831 = vadd.f32 %v637, %v767
  %v832 = vpack.c.bf16 %v769, %v768
  %v833 = vpack.c.bf16 %v771, %v770
  %v834 = vpack.c.bf16 %v773, %v772
  %v835 = vpack.c.bf16 %v775, %v774
  %v836 = vpack.c.bf16 %v777, %v776
  %v837 = vpack.c.bf16 %v779, %v778
  %v838 = vpack.c.bf16 %v781, %v780
  %v839 = vpack.c.bf16 %v783, %v782
  %v840 = vpack.c.bf16 %v785, %v784
  %v841 = vpack.c.bf16 %v787, %v786
  %v842 = vpack.c.bf16 %v789, %v788
  %v843 = vpack.c.bf16 %v791, %v790
  %v844 = vpack.c.bf16 %v793, %v792
  %v845 = vpack.c.bf16 %v795, %v794
  %v846 = vpack.c.bf16 %v797, %v796
  %v847 = vpack.c.bf16 %v799, %v798
  %v848 = vpack.c.bf16 %v801, %v800
  %v849 = vpack.c.bf16 %v803, %v802
  %v850 = vpack.c.bf16 %v805, %v804
  %v851 = vpack.c.bf16 %v807, %v806
  %v852 = vpack.c.bf16 %v809, %v808
  %v853 = vpack.c.bf16 %v811, %v810
  %v854 = vpack.c.bf16 %v813, %v812
  %v855 = vpack.c.bf16 %v815, %v814
  %v856 = vpack.c.bf16 %v817, %v816
  %v857 = vpack.c.bf16 %v819, %v818
  %v858 = vpack.c.bf16 %v821, %v820
  %v859 = vpack.c.bf16 %v823, %v822
  %v860 = vpack.c.bf16 %v825, %v824
  %v861 = vpack.c.bf16 %v827, %v826
  %v862 = vpack.c.bf16 %v829, %v828
  %v863 = vpack.c.bf16 %v831, %v830
  %v896 = vunpack.c.l.b16 %v832
  %v897 = vunpack.c.h.b16 %v832
  %v898 = vunpack.c.l.b16 %v833
  %v899 = vunpack.c.h.b16 %v833
  %v900 = vunpack.c.l.b16 %v834
  %v901 = vunpack.c.h.b16 %v834
  %v902 = vunpack.c.l.b16 %v835
  %v903 = vunpack.c.h.b16 %v835
  %v904 = vunpack.c.l.b16 %v836
  %v905 = vunpack.c.h.b16 %v836
  %v906 = vunpack.c.l.b16 %v837
  %v907 = vunpack.c.h.b16 %v837
  %v908 = vunpack.c.l.b16 %v838
  %v909 = vunpack.c.h.b16 %v838
  %v910 = vunpack.c.l.b16 %v839
  %v911 = vunpack.c.h.b16 %v839
  %v912 = vunpack.c.l.b16 %v840
  %v913 = vunpack.c.h.b16 %v840
  %v914 = vunpack.c.l.b16 %v841
  %v915 = vunpack.c.h.b16 %v841
  %v916 = vunpack.c.l.b16 %v842
  %v917 = vunpack.c.h.b16 %v842
  %v918 = vunpack.c.l.b16 %v843
  %v919 = vunpack.c.h.b16 %v843
  %v920 = vunpack.c.l.b16 %v844
  %v921 = vunpack.c.h.b16 %v844
  %v922 = vunpack.c.l.b16 %v845
  %v923 = vunpack.c.h.b16 %v845
  %v924 = vunpack.c.l.b16 %v846
  %v925 = vunpack.c.h.b16 %v846
  %v926 = vunpack.c.l.b16 %v847
  %v927 = vunpack.c.h.b16 %v847
  %v928 = vunpack.c.l.b16 %v848
  %v929 = vunpack.c.h.b16 %v848
  %v930 = vunpack.c.l.b16 %v849
  %v931 = vunpack.c.h.b16 %v849
  %v932 = vunpack.c.l.b16 %v850
  %v933 = vunpack.c.h.b16 %v850
  %v934 = vunpack.c.l.b16 %v851
  %v935 = vunpack.c.h.b16 %v851
  %v936 = vunpack.c.l.b16 %v852
  %v937 = vunpack.c.h.b16 %v852
  %v938 = vunpack.c.l.b16 %v853
  %v939 = vunpack.c.h.b16 %v853
  %v940 = vunpack.c.l.b16 %v854
  %v941 = vunpack.c.h.b16 %v854
  %v942 = vunpack.c.l.b16 %v855
  %v943 = vunpack.c.h.b16 %v855
  %v944 = vunpack.c.l.b16 %v856
  %v945 = vunpack.c.h.b16 %v856
  %v946 = vunpack.c.l.b16 %v857
  %v947 = vunpack.c.h.b16 %v857
  %v948 = vunpack.c.l.b16 %v858
  %v949 = vunpack.c.h.b16 %v858
  %v950 = vunpack.c.l.b16 %v859
  %v951 = vunpack.c.h.b16 %v859
  %v952 = vunpack.c.l.b16 %v860
  %v953 = vunpack.c.h.b16 %v860
  %v954 = vunpack.c.l.b16 %v861
  %v955 = vunpack.c.h.b16 %v861
  %v956 = vunpack.c.l.b16 %v862
  %v957 = vunpack.c.h.b16 %v862
  %v958 = vunpack.c.l.b16 %v863
  %v959 = vunpack.c.h.b16 %v863
  %v960 = vpack.c.b16 %v896, %v896
  %v961 = vpack.c.b16 %v897, %v897
  %v962 = vpack.c.b16 %v898, %v898
  %v963 = vpack.c.b16 %v899, %v899
  %v964 = vpack.c.b16 %v900, %v900
  %v965 = vpack.c.b16 %v901, %v901
  %v966 = vpack.c.b16 %v902, %v902
  %v967 = vpack.c.b16 %v903, %v903
  %v968 = vpack.c.b16 %v904, %v904
  %v969 = vpack.c.b16 %v905, %v905
  %v970 = vpack.c.b16 %v906, %v906
  %v971 = vpack.c.b16 %v907, %v907
  %v972 = vpack.c.b16 %v908, %v908
  %v973 = vpack.c.b16 %v909, %v909
  %v974 = vpack.c.b16 %v910, %v910
  %v975 = vpack.c.b16 %v911, %v911
  %v976 = vpack.c.b16 %v912, %v912
  %v977 = vpack.c.b16 %v913, %v913
  %v978 = vpack.c.b16 %v914, %v914
  %v979 = vpack.c.b16 %v915, %v915
  %v980 = vpack.c.b16 %v916, %v916
  %v981 = vpack.c.b16 %v917, %v917
  %v982 = vpack.c.b16 %v918, %v918
  %v983 = vpack.c.b16 %v919, %v919
  %v984 = vpack.c.b16 %v920, %v920
  %v985 = vpack.c.b16 %v921, %v921
  %v986 = vpack.c.b16 %v922, %v922
  %v987 = vpack.c.b16 %v923, %v923
  %v988 = vpack.c.b16 %v924, %v924
  %v989 = vpack.c.b16 %v925, %v925
  %v990 = vpack.c.b16 %v926, %v926
  %v991 = vpack.c.b16 %v927, %v927
  %v992 = vpack.c.b16 %v928, %v928
  %v993 = vpack.c.b16 %v929, %v929
  %v994 = vpack.c.b16 %v930, %v930
  %v995 = vpack.c.b16 %v931, %v931
  %v996 = vpack.c.b16 %v932, %v932
  %v997 = vpack.c.b16 %v933, %v933
  %v998 = vpack.c.b16 %v934, %v934
  %v999 = vpack.c.b16 %v935, %v935
  %v1000 = vpack.c.b16 %v936, %v936
  %v1001 = vpack.c.b16 %v937, %v937
  %v1002 = vpack.c.b16 %v938, %v938
  %v1003 = vpack.c.b16 %v939, %v939
  %v1004 = vpack.c.b16 %v940, %v940
  %v1005 = vpack.c.b16 %v941, %v941
  %v1006 = vpack.c.b16 %v942, %v942
  %v1007 = vpack.c.b16 %v943, %v943
  %v1008 = vpack.c.b16 %v944, %v944
  %v1009 = vpack.c.b16 %v945, %v945
  %v1010 = vpack.c.b16 %v946, %v946
  %v1011 = vpack.c.b16 %v947, %v947
  %v1012 = vpack.c.b16 %v948, %v948
  %v1013 = vpack.c.b16 %v949, %v949
  %v1014 = vpack.c.b16 %v950, %v950
  %v1015 = vpack.c.b16 %v951, %v951
  %v1016 = vpack.c.b16 %v952, %v952
  %v1017 = vpack.c.b16 %v953, %v953
  %v1018 = vpack.c.b16 %v954, %v954
  %v1019 = vpack.c.b16 %v955, %v955
  %v1020 = vpack.c.b16 %v956, %v956
  %v1021 = vpack.c.b16 %v957, %v957
  %v1022 = vpack.c.b16 %v958, %v958
  %v1023 = vpack.c.b16 %v959, %v959
  %vm1088 = vcmask 60416
  %1089 = vst.msk [vmem:[%s4] sm:$0xf] %vm1088, %v960
  %1090 = vst.msk [vmem:[%s4 + $0x4] sm:$0xf] %vm1088, %v961
  %1091 = vst.msk [vmem:[%s4 + $0x8] sm:$0xf] %vm1088, %v962
  %1092 = vst.msk [vmem:[%s4 + $0xc] sm:$0xf] %vm1088, %v963
  %1093 = vst.msk [vmem:[%s4 + $0x10] sm:$0xf] %vm1088, %v964
  %1094 = vst.msk [vmem:[%s4 + $0x14] sm:$0xf] %vm1088, %v965
  %1095 = vst.msk [vmem:[%s4 + $0x18] sm:$0xf] %vm1088, %v966
  %1096 = vst.msk [vmem:[%s4 + $0x1c] sm:$0xf] %vm1088, %v967
  %1097 = vst.msk [vmem:[%s4 + $0x20] sm:$0xf] %vm1088, %v968
  %1098 = vst.msk [vmem:[%s4 + $0x24] sm:$0xf] %vm1088, %v969
  %1099 = vst.msk [vmem:[%s4 + $0x28] sm:$0xf] %vm1088, %v970
  %1100 = vst.msk [vmem:[%s4 + $0x2c] sm:$0xf] %vm1088, %v971
  %1101 = vst.msk [vmem:[%s4 + $0x30] sm:$0xf] %vm1088, %v972
  %1102 = vst.msk [vmem:[%s4 + $0x34] sm:$0xf] %vm1088, %v973
  %1103 = vst.msk [vmem:[%s4 + $0x38] sm:$0xf] %vm1088, %v974
  %1104 = vst.msk [vmem:[%s4 + $0x3c] sm:$0xf] %vm1088, %v975
  %1105 = vst.msk [vmem:[%s4 + $0x40] sm:$0xf] %vm1088, %v976
  %1106 = vst.msk [vmem:[%s4 + $0x44] sm:$0xf] %vm1088, %v977
  %1107 = vst.msk [vmem:[%s4 + $0x48] sm:$0xf] %vm1088, %v978
  %1108 = vst.msk [vmem:[%s4 + $0x4c] sm:$0xf] %vm1088, %v979
  %1109 = vst.msk [vmem:[%s4 + $0x50] sm:$0xf] %vm1088, %v980
  %1110 = vst.msk [vmem:[%s4 + $0x54] sm:$0xf] %vm1088, %v981
  %1111 = vst.msk [vmem:[%s4 + $0x58] sm:$0xf] %vm1088, %v982
  %1112 = vst.msk [vmem:[%s4 + $0x5c] sm:$0xf] %vm1088, %v983
  %1113 = vst.msk [vmem:[%s4 + $0x60] sm:$0xf] %vm1088, %v984
  %1114 = vst.msk [vmem:[%s4 + $0x64] sm:$0xf] %vm1088, %v985
  %1115 = vst.msk [vmem:[%s4 + $0x68] sm:$0xf] %vm1088, %v986
  %1116 = vst.msk [vmem:[%s4 + $0x6c] sm:$0xf] %vm1088, %v987
  %1117 = vst.msk [vmem:[%s4 + $0x70] sm:$0xf] %vm1088, %v988
  %1118 = vst.msk [vmem:[%s4 + $0x74] sm:$0xf] %vm1088, %v989
  %1119 = vst.msk [vmem:[%s4 + $0x78] sm:$0xf] %vm1088, %v990
  %1120 = vst.msk [vmem:[%s4 + $0x7c] sm:$0xf] %vm1088, %v991
  %1121 = vst.msk [vmem:[%s4 + $0x80] sm:$0xf] %vm1088, %v992
  %1122 = vst.msk [vmem:[%s4 + $0x84] sm:$0xf] %vm1088, %v993
  %1123 = vst.msk [vmem:[%s4 + $0x88] sm:$0xf] %vm1088, %v994
  %1124 = vst.msk [vmem:[%s4 + $0x8c] sm:$0xf] %vm1088, %v995
  %1125 = vst.msk [vmem:[%s4 + $0x90] sm:$0xf] %vm1088, %v996
  %1126 = vst.msk [vmem:[%s4 + $0x94] sm:$0xf] %vm1088, %v997
  %1127 = vst.msk [vmem:[%s4 + $0x98] sm:$0xf] %vm1088, %v998
  %1128 = vst.msk [vmem:[%s4 + $0x9c] sm:$0xf] %vm1088, %v999
  %1129 = vst.msk [vmem:[%s4 + $0xa0] sm:$0xf] %vm1088, %v1000
  %1130 = vst.msk [vmem:[%s4 + $0xa4] sm:$0xf] %vm1088, %v1001
  %1131 = vst.msk [vmem:[%s4 + $0xa8] sm:$0xf] %vm1088, %v1002
  %1132 = vst.msk [vmem:[%s4 + $0xac] sm:$0xf] %vm1088, %v1003
  %1133 = vst.msk [vmem:[%s4 + $0xb0] sm:$0xf] %vm1088, %v1004
  %1134 = vst.msk [vmem:[%s4 + $0xb4] sm:$0xf] %vm1088, %v1005
  %1135 = vst.msk [vmem:[%s4 + $0xb8] sm:$0xf] %vm1088, %v1006
  %1136 = vst.msk [vmem:[%s4 + $0xbc] sm:$0xf] %vm1088, %v1007
  %1137 = vst.msk [vmem:[%s4 + $0xc0] sm:$0xf] %vm1088, %v1008
  %1138 = vst.msk [vmem:[%s4 + $0xc4] sm:$0xf] %vm1088, %v1009
  %1139 = vst.msk [vmem:[%s4 + $0xc8] sm:$0xf] %vm1088, %v1010
  %1140 = vst.msk [vmem:[%s4 + $0xcc] sm:$0xf] %vm1088, %v1011
  %1141 = vst.msk [vmem:[%s4 + $0xd0] sm:$0xf] %vm1088, %v1012
  %1142 = vst.msk [vmem:[%s4 + $0xd4] sm:$0xf] %vm1088, %v1013
  %1143 = vst.msk [vmem:[%s4 + $0xd8] sm:$0xf] %vm1088, %v1014
  %1144 = vst.msk [vmem:[%s4 + $0xdc] sm:$0xf] %vm1088, %v1015
  %1145 = vst.msk [vmem:[%s4 + $0xe0] sm:$0xf] %vm1088, %v1016
  %1146 = vst.msk [vmem:[%s4 + $0xe4] sm:$0xf] %vm1088, %v1017
  %1147 = vst.msk [vmem:[%s4 + $0xe8] sm:$0xf] %vm1088, %v1018
  %1148 = vst.msk [vmem:[%s4 + $0xec] sm:$0xf] %vm1088, %v1019
  %1149 = vst.msk [vmem:[%s4 + $0xf0] sm:$0xf] %vm1088, %v1020
  %1150 = vst.msk [vmem:[%s4 + $0xf4] sm:$0xf] %vm1088, %v1021
  %1151 = vst.msk [vmem:[%s4 + $0xf8] sm:$0xf] %vm1088, %v1022
  %1152 = vst.msk [vmem:[%s4 + $0xfc] sm:$0xf] %vm1088, %v1023
  // Predicated region
  $region18: #{mobilenet_v2_forward.18} parent=0 // pred_check
    _
  $region19: #{mobilenet_v2_forward.18} parent=0 // pred_check_branch
    %1154 = sbr.rel (0) target = $region21
  $region20: #{mobilenet_v2_forward.18} parent=0 // pred_region
    _
  $region21: #{mobilenet_v2_forward.18} parent=0 // pred_fallthru
    _
  // Predicated region
  $region22: #{mobilenet_v2_forward.18} parent=0 // pred_check
    _
  $region23: #{mobilenet_v2_forward.18} parent=0 // pred_check_branch
    %1156 = sbr.rel (0) target = $region25
  $region24: #{mobilenet_v2_forward.18} parent=0 // pred_region
    _
  $region25: #{mobilenet_v2_forward.18} parent=0 // pred_fallthru
    _

// kernel: mobilenet_v2_forward.19
$region0: #{mobilenet_v2_forward.19}
  #allocation0 [shape = 'u32[]', space=smem, size = 0x4, offset = 0x4, fixed_abs, tag = 'smem constant byte address 0x4 - core index']
  #allocation1 [shape = 'u32[144,128]{1,0:T(1,128)}', space=vmem, size = 0x12000, scoped, tag = 'internal scratch']
  %s0 = inlined_call_operand.vmem [shape: bf16[512,8], index: 0, kind: input, shape index: {}]
  %s1 = inlined_call_operand.vmem [shape: bf16[8,32], index: 1, kind: input, shape index: {}]
  %s2 = inlined_call_operand.vmem [shape: f32[1,32], index: 2, kind: input, shape index: {}]
  %s3 = inlined_call_operand.vmem [shape: bf16[512,32], index: 3, kind: output, shape index: {}]
  %s4 = sld [smem:[#allocation0]]
  $region22: #{mobilenet_v2_forward.19} parent=0
    _
  %s6 = ssub.s32 1, %s4
  %s7 = scalar_select 0, %s6, %s4
  // Predicated region
  $region2: #{mobilenet_v2_forward.19} parent=0 // pred_check
    _
  $region3: #{mobilenet_v2_forward.19} parent=0 // pred_check_branch
    %9 = sbr.rel (0) target = $region5
  $region4: #{mobilenet_v2_forward.19} parent=0 // pred_region
    _
  $region5: #{mobilenet_v2_forward.19} parent=0 // pred_fallthru
    _
  // Predicated region
  $region6: #{mobilenet_v2_forward.19} parent=0 // pred_check
    _
  $region7: #{mobilenet_v2_forward.19} parent=0 // pred_check_branch
    %11 = sbr.rel (0) target = $region9
  $region8: #{mobilenet_v2_forward.19} parent=0 // pred_region
    _
  $region9: #{mobilenet_v2_forward.19} parent=0 // pred_fallthru
    _
  // Predicated region
  $region10: #{mobilenet_v2_forward.19} parent=0 // pred_check
    _
  $region11: #{mobilenet_v2_forward.19} parent=0 // pred_check_branch
    %13 = sbr.rel (0) target = $region13
  $region12: #{mobilenet_v2_forward.19} parent=0 // pred_region
    _
  $region13: #{mobilenet_v2_forward.19} parent=0 // pred_fallthru
    _
  %v15 = vld [vmem:[%s0] sm:$0xf]
  %v16 = vld [vmem:[%s0 + $0x4] sm:$0xf]
  %v17 = vld [vmem:[%s0 + $0x8] sm:$0xf]
  %v18 = vld [vmem:[%s0 + $0xc] sm:$0xf]
  %v19 = vld [vmem:[%s0 + $0x10] sm:$0xf]
  %v20 = vld [vmem:[%s0 + $0x14] sm:$0xf]
  %v21 = vld [vmem:[%s0 + $0x18] sm:$0xf]
  %v22 = vld [vmem:[%s0 + $0x1c] sm:$0xf]
  %v23 = vld [vmem:[%s0 + $0x20] sm:$0xf]
  %v24 = vld [vmem:[%s0 + $0x24] sm:$0xf]
  %v25 = vld [vmem:[%s0 + $0x28] sm:$0xf]
  %v26 = vld [vmem:[%s0 + $0x2c] sm:$0xf]
  %v27 = vld [vmem:[%s0 + $0x30] sm:$0xf]
  %v28 = vld [vmem:[%s0 + $0x34] sm:$0xf]
  %v29 = vld [vmem:[%s0 + $0x38] sm:$0xf]
  %v30 = vld [vmem:[%s0 + $0x3c] sm:$0xf]
  %v31 = vld [vmem:[%s0 + $0x40] sm:$0xf]
  %v32 = vld [vmem:[%s0 + $0x44] sm:$0xf]
  %v33 = vld [vmem:[%s0 + $0x48] sm:$0xf]
  %v34 = vld [vmem:[%s0 + $0x4c] sm:$0xf]
  %v35 = vld [vmem:[%s0 + $0x50] sm:$0xf]
  %v36 = vld [vmem:[%s0 + $0x54] sm:$0xf]
  %v37 = vld [vmem:[%s0 + $0x58] sm:$0xf]
  %v38 = vld [vmem:[%s0 + $0x5c] sm:$0xf]
  %v39 = vld [vmem:[%s0 + $0x60] sm:$0xf]
  %v40 = vld [vmem:[%s0 + $0x64] sm:$0xf]
  %v41 = vld [vmem:[%s0 + $0x68] sm:$0xf]
  %v42 = vld [vmem:[%s0 + $0x6c] sm:$0xf]
  %v43 = vld [vmem:[%s0 + $0x70] sm:$0xf]
  %v44 = vld [vmem:[%s0 + $0x74] sm:$0xf]
  %v45 = vld [vmem:[%s0 + $0x78] sm:$0xf]
  %v46 = vld [vmem:[%s0 + $0x7c] sm:$0xf]
  %v47 = vld [vmem:[%s0 + $0x80] sm:$0xf]
  %v48 = vld [vmem:[%s0 + $0x84] sm:$0xf]
  %v49 = vld [vmem:[%s0 + $0x88] sm:$0xf]
  %v50 = vld [vmem:[%s0 + $0x8c] sm:$0xf]
  %v51 = vld [vmem:[%s0 + $0x90] sm:$0xf]
  %v52 = vld [vmem:[%s0 + $0x94] sm:$0xf]
  %v53 = vld [vmem:[%s0 + $0x98] sm:$0xf]
  %v54 = vld [vmem:[%s0 + $0x9c] sm:$0xf]
  %v55 = vld [vmem:[%s0 + $0xa0] sm:$0xf]
  %v56 = vld [vmem:[%s0 + $0xa4] sm:$0xf]
  %v57 = vld [vmem:[%s0 + $0xa8] sm:$0xf]
  %v58 = vld [vmem:[%s0 + $0xac] sm:$0xf]
  %v59 = vld [vmem:[%s0 + $0xb0] sm:$0xf]
  %v60 = vld [vmem:[%s0 + $0xb4] sm:$0xf]
  %v61 = vld [vmem:[%s0 + $0xb8] sm:$0xf]
  %v62 = vld [vmem:[%s0 + $0xbc] sm:$0xf]
  %v63 = vld [vmem:[%s0 + $0xc0] sm:$0xf]
  %v64 = vld [vmem:[%s0 + $0xc4] sm:$0xf]
  %v65 = vld [vmem:[%s0 + $0xc8] sm:$0xf]
  %v66 = vld [vmem:[%s0 + $0xcc] sm:$0xf]
  %v67 = vld [vmem:[%s0 + $0xd0] sm:$0xf]
  %v68 = vld [vmem:[%s0 + $0xd4] sm:$0xf]
  %v69 = vld [vmem:[%s0 + $0xd8] sm:$0xf]
  %v70 = vld [vmem:[%s0 + $0xdc] sm:$0xf]
  %v71 = vld [vmem:[%s0 + $0xe0] sm:$0xf]
  %v72 = vld [vmem:[%s0 + $0xe4] sm:$0xf]
  %v73 = vld [vmem:[%s0 + $0xe8] sm:$0xf]
  %v74 = vld [vmem:[%s0 + $0xec] sm:$0xf]
  %v75 = vld [vmem:[%s0 + $0xf0] sm:$0xf]
  %v76 = vld [vmem:[%s0 + $0xf4] sm:$0xf]
  %v77 = vld [vmem:[%s0 + $0xf8] sm:$0xf]
  %v78 = vld [vmem:[%s0 + $0xfc] sm:$0xf]
  %v79 = vld [vmem:[%s1] sm:$0xf]
  %v80 = vld [vmem:[%s2] sm:$0x1]
  %v82 = vlaneseq
  %v83 = vshrl.u32 %v82, 7
  %v84 = vsub.s32 0, %v83
  %v85 = vrot.slane %v80, %v84
  %v151 = vunpack.c.l.b16 %v15
  %v152 = vunpack.c.l.b16 %v16
  %v153 = vunpack.c.l.b16 %v17
  %v154 = vunpack.c.l.b16 %v18
  %v155 = vunpack.c.l.b16 %v19
  %v156 = vunpack.c.l.b16 %v20
  %v157 = vunpack.c.l.b16 %v21
  %v158 = vunpack.c.l.b16 %v22
  %v159 = vunpack.c.l.b16 %v23
  %v160 = vunpack.c.l.b16 %v24
  %v161 = vunpack.c.l.b16 %v25
  %v162 = vunpack.c.l.b16 %v26
  %v163 = vunpack.c.l.b16 %v27
  %v164 = vunpack.c.l.b16 %v28
  %v165 = vunpack.c.l.b16 %v29
  %v166 = vunpack.c.l.b16 %v30
  %v167 = vunpack.c.l.b16 %v31
  %v168 = vunpack.c.l.b16 %v32
  %v169 = vunpack.c.l.b16 %v33
  %v170 = vunpack.c.l.b16 %v34
  %v171 = vunpack.c.l.b16 %v35
  %v172 = vunpack.c.l.b16 %v36
  %v173 = vunpack.c.l.b16 %v37
  %v174 = vunpack.c.l.b16 %v38
  %v175 = vunpack.c.l.b16 %v39
  %v176 = vunpack.c.l.b16 %v40
  %v177 = vunpack.c.l.b16 %v41
  %v178 = vunpack.c.l.b16 %v42
  %v179 = vunpack.c.l.b16 %v43
  %v180 = vunpack.c.l.b16 %v44
  %v181 = vunpack.c.l.b16 %v45
  %v182 = vunpack.c.l.b16 %v46
  %v183 = vunpack.c.l.b16 %v47
  %v184 = vunpack.c.l.b16 %v48
  %v185 = vunpack.c.l.b16 %v49
  %v186 = vunpack.c.l.b16 %v50
  %v187 = vunpack.c.l.b16 %v51
  %v188 = vunpack.c.l.b16 %v52
  %v189 = vunpack.c.l.b16 %v53
  %v190 = vunpack.c.l.b16 %v54
  %v191 = vunpack.c.l.b16 %v55
  %v192 = vunpack.c.l.b16 %v56
  %v193 = vunpack.c.l.b16 %v57
  %v194 = vunpack.c.l.b16 %v58
  %v195 = vunpack.c.l.b16 %v59
  %v196 = vunpack.c.l.b16 %v60
  %v197 = vunpack.c.l.b16 %v61
  %v198 = vunpack.c.l.b16 %v62
  %v199 = vunpack.c.l.b16 %v63
  %v200 = vunpack.c.l.b16 %v64
  %v201 = vunpack.c.l.b16 %v65
  %v202 = vunpack.c.l.b16 %v66
  %v203 = vunpack.c.l.b16 %v67
  %v204 = vunpack.c.l.b16 %v68
  %v205 = vunpack.c.l.b16 %v69
  %v206 = vunpack.c.l.b16 %v70
  %v207 = vunpack.c.l.b16 %v71
  %v208 = vunpack.c.l.b16 %v72
  %v209 = vunpack.c.l.b16 %v73
  %v210 = vunpack.c.l.b16 %v74
  %v211 = vunpack.c.l.b16 %v75
  %v212 = vunpack.c.l.b16 %v76
  %v213 = vunpack.c.l.b16 %v77
  %v214 = vunpack.c.l.b16 %v78
  %v215 = vpack.c.b16 %v152, %v151
  %v216 = vpack.c.b16 %v154, %v153
  %v217 = vpack.c.b16 %v156, %v155
  %v218 = vpack.c.b16 %v158, %v157
  %v219 = vpack.c.b16 %v160, %v159
  %v220 = vpack.c.b16 %v162, %v161
  %v221 = vpack.c.b16 %v164, %v163
  %v222 = vpack.c.b16 %v166, %v165
  %v223 = vpack.c.b16 %v168, %v167
  %v224 = vpack.c.b16 %v170, %v169
  %v225 = vpack.c.b16 %v172, %v171
  %v226 = vpack.c.b16 %v174, %v173
  %v227 = vpack.c.b16 %v176, %v175
  %v228 = vpack.c.b16 %v178, %v177
  %v229 = vpack.c.b16 %v180, %v179
  %v230 = vpack.c.b16 %v182, %v181
  %v231 = vpack.c.b16 %v184, %v183
  %v232 = vpack.c.b16 %v186, %v185
  %v233 = vpack.c.b16 %v188, %v187
  %v234 = vpack.c.b16 %v190, %v189
  %v235 = vpack.c.b16 %v192, %v191
  %v236 = vpack.c.b16 %v194, %v193
  %v237 = vpack.c.b16 %v196, %v195
  %v238 = vpack.c.b16 %v198, %v197
  %v239 = vpack.c.b16 %v200, %v199
  %v240 = vpack.c.b16 %v202, %v201
  %v241 = vpack.c.b16 %v204, %v203
  %v242 = vpack.c.b16 %v206, %v205
  %v243 = vpack.c.b16 %v208, %v207
  %v244 = vpack.c.b16 %v210, %v209
  %v245 = vpack.c.b16 %v212, %v211
  %v246 = vpack.c.b16 %v214, %v213
  %vm247 = vcmask 64512
  %v249 = vsel %vm247, %v215, 0
  %v252 = vsel %vm247, %v216, 0
  %v255 = vsel %vm247, %v217, 0
  %v258 = vsel %vm247, %v218, 0
  %v261 = vsel %vm247, %v219, 0
  %v264 = vsel %vm247, %v220, 0
  %v267 = vsel %vm247, %v221, 0
  %v270 = vsel %vm247, %v222, 0
  %v273 = vsel %vm247, %v223, 0
  %v276 = vsel %vm247, %v224, 0
  %v279 = vsel %vm247, %v225, 0
  %v282 = vsel %vm247, %v226, 0
  %v285 = vsel %vm247, %v227, 0
  %v288 = vsel %vm247, %v228, 0
  %v291 = vsel %vm247, %v229, 0
  %v294 = vsel %vm247, %v230, 0
  %v297 = vsel %vm247, %v231, 0
  %v300 = vsel %vm247, %v232, 0
  %v303 = vsel %vm247, %v233, 0
  %v306 = vsel %vm247, %v234, 0
  %v309 = vsel %vm247, %v235, 0
  %v312 = vsel %vm247, %v236, 0
  %v315 = vsel %vm247, %v237, 0
  %v318 = vsel %vm247, %v238, 0
  %v321 = vsel %vm247, %v239, 0
  %v324 = vsel %vm247, %v240, 0
  %v327 = vsel %vm247, %v241, 0
  %v330 = vsel %vm247, %v242, 0
  %v333 = vsel %vm247, %v243, 0
  %v336 = vsel %vm247, %v244, 0
  %v339 = vsel %vm247, %v245, 0
  %v342 = vsel %vm247, %v246, 0
  %vm344 = vcmask 1043456
  %v346 = vsel %vm344, %v79, 0
  %348 = vmatprep.subr.bf16.mxu0 0
  %349 = vmatpush1.bf16.msra.mxu0 %v346
  %350 = vmatprep.subr.bf16.mxu0 0
  %351 = vmatpush1.bf16.msra.mxu0 0
  %352 = vmatprep.subr.bf16.mxu0 0
  %353 = vmatpush1.bf16.msra.mxu0 0
  %354 = vmatprep.subr.bf16.mxu0 0
  %355 = vmatpush1.bf16.msra.mxu0 0
  %356 = vmatprep.subr.bf16.mxu0 0
  %357 = vmatpush1.bf16.msra.mxu0 0
  %358 = vmatprep.subr.bf16.mxu0 0
  %359 = vmatpush1.bf16.msra.mxu0 0
  %360 = vmatprep.subr.bf16.mxu0 0
  %361 = vmatpush1.bf16.msra.mxu0 0
  %362 = vmatprep.subr.bf16.mxu0 0
  %363 = vmatpush1.bf16.msra.mxu0 0
  %364 = vmatprep.subr.bf16.mxu0 0
  %365 = vmatpush1.bf16.msra.mxu0 0
  %366 = vmatprep.subr.bf16.mxu0 0
  %367 = vmatpush1.bf16.msra.mxu0 0
  %368 = vmatprep.subr.bf16.mxu0 0
  %369 = vmatpush1.bf16.msra.mxu0 0
  %370 = vmatprep.subr.bf16.mxu0 0
  %371 = vmatpush1.bf16.msra.mxu0 0
  %372 = vmatprep.subr.bf16.mxu0 0
  %373 = vmatpush1.bf16.msra.mxu0 0
  %374 = vmatprep.subr.bf16.mxu0 0
  %375 = vmatpush1.bf16.msra.mxu0 0
  %376 = vmatprep.subr.bf16.mxu0 0
  %377 = vmatpush1.bf16.msra.mxu0 0
  %378 = vmatprep.subr.bf16.mxu0 0
  %379 = vmatpush1.bf16.msra.mxu0 0
  %380 = vmatprep.mubr.bf16.mxu0 0
  %381 = vmatmul.mubr.bf16.gmra.mrb[0].mxu0 %v249
  %v382 = vpop.f32.mrb[0].mxu0
  %v383 = vadd.f32 %v85, %v382
  %v384 = vpop.f32.mrb[0].mxu0
  %v385 = vpop.f32.mrb[0].mxu0
  %v386 = vadd.f32 %v85, %v385
  %v387 = vpop.f32.mrb[0].mxu0
  %388 = vmatprep.mubr.bf16.mxu0 0
  %389 = vmatmul.mubr.bf16.gmra.mrb[0].mxu0 %v252
  %v390 = vpop.f32.mrb[0].mxu0
  %v391 = vadd.f32 %v85, %v390
  %v392 = vpop.f32.mrb[0].mxu0
  %v393 = vpop.f32.mrb[0].mxu0
  %v394 = vadd.f32 %v85, %v393
  %v395 = vpop.f32.mrb[0].mxu0
  %396 = vmatprep.mubr.bf16.mxu0 0
  %397 = vmatmul.mubr.bf16.gmra.mrb[0].mxu0 %v255
  %v398 = vpop.f32.mrb[0].mxu0
  %v399 = vadd.f32 %v85, %v398
  %v400 = vpop.f32.mrb[0].mxu0
  %v401 = vpop.f32.mrb[0].mxu0
  %v402 = vadd.f32 %v85, %v401
  %v403 = vpop.f32.mrb[0].mxu0
  %404 = vmatprep.mubr.bf16.mxu0 0
  %405 = vmatmul.mubr.bf16.gmra.mrb[0].mxu0 %v258
  %v406 = vpop.f32.mrb[0].mxu0
  %v407 = vadd.f32 %v85, %v406
  %v408 = vpop.f32.mrb[0].mxu0
  %v409 = vpop.f32.mrb[0].mxu0
  %v410 = vadd.f32 %v85, %v409
  %v411 = vpop.f32.mrb[0].mxu0
  %412 = vmatprep.mubr.bf16.mxu0 0
  %413 = vmatmul.mubr.bf16.gmra.mrb[0].mxu0 %v261
  %v414 = vpop.f32.mrb[0].mxu0
  %v415 = vadd.f32 %v85, %v414
  %v416 = vpop.f32.mrb[0].mxu0
  %v417 = vpop.f32.mrb[0].mxu0
  %v418 = vadd.f32 %v85, %v417
  %v419 = vpop.f32.mrb[0].mxu0
  %420 = vmatprep.mubr.bf16.mxu0 0
  %421 = vmatmul.mubr.bf16.gmra.mrb[0].mxu0 %v264
  %v422 = vpop.f32.mrb[0].mxu0
  %v423 = vadd.f32 %v85, %v422
  %v424 = vpop.f32.mrb[0].mxu0
  %v425 = vpop.f32.mrb[0].mxu0
  %v426 = vadd.f32 %v85, %v425
  %v427 = vpop.f32.mrb[0].mxu0
  %428 = vmatprep.mubr.bf16.mxu0 0
  %429 = vmatmul.mubr.bf16.gmra.mrb[0].mxu0 %v267
  %v430 = vpop.f32.mrb[0].mxu0
  %v431 = vadd.f32 %v85, %v430
  %v432 = vpop.f32.mrb[0].mxu0
  %v433 = vpop.f32.mrb[0].mxu0
  %v434 = vadd.f32 %v85, %v433
  %v435 = vpop.f32.mrb[0].mxu0
  %436 = vmatprep.mubr.bf16.mxu0 0
  %437 = vmatmul.mubr.bf16.gmra.mrb[0].mxu0 %v270
  %v438 = vpop.f32.mrb[0].mxu0
  %v439 = vadd.f32 %v85, %v438
  %v440 = vpop.f32.mrb[0].mxu0
  %v441 = vpop.f32.mrb[0].mxu0
  %v442 = vadd.f32 %v85, %v441
  %v443 = vpop.f32.mrb[0].mxu0
  %444 = vmatprep.mubr.bf16.mxu0 0
  %445 = vmatmul.mubr.bf16.gmra.mrb[0].mxu0 %v273
  %v446 = vpop.f32.mrb[0].mxu0
  %v447 = vadd.f32 %v85, %v446
  %v448 = vpop.f32.mrb[0].mxu0
  %v449 = vpop.f32.mrb[0].mxu0
  %v450 = vadd.f32 %v85, %v449
  %v451 = vpop.f32.mrb[0].mxu0
  %452 = vmatprep.mubr.bf16.mxu0 0
  %453 = vmatmul.mubr.bf16.gmra.mrb[0].mxu0 %v276
  %v454 = vpop.f32.mrb[0].mxu0
  %v455 = vadd.f32 %v85, %v454
  %v456 = vpop.f32.mrb[0].mxu0
  %v457 = vpop.f32.mrb[0].mxu0
  %v458 = vadd.f32 %v85, %v457
  %v459 = vpop.f32.mrb[0].mxu0
  %460 = vmatprep.mubr.bf16.mxu0 0
  %461 = vmatmul.mubr.bf16.gmra.mrb[0].mxu0 %v279
  %v462 = vpop.f32.mrb[0].mxu0
  %v463 = vadd.f32 %v85, %v462
  %v464 = vpop.f32.mrb[0].mxu0
  %v465 = vpop.f32.mrb[0].mxu0
  %v466 = vadd.f32 %v85, %v465
  %v467 = vpop.f32.mrb[0].mxu0
  %468 = vmatprep.mubr.bf16.mxu0 0
  %469 = vmatmul.mubr.bf16.gmra.mrb[0].mxu0 %v282
  %v470 = vpop.f32.mrb[0].mxu0
  %v471 = vadd.f32 %v85, %v470
  %v472 = vpop.f32.mrb[0].mxu0
  %v473 = vpop.f32.mrb[0].mxu0
  %v474 = vadd.f32 %v85, %v473
  %v475 = vpop.f32.mrb[0].mxu0
  %476 = vmatprep.mubr.bf16.mxu0 0
  %477 = vmatmul.mubr.bf16.gmra.mrb[0].mxu0 %v285
  %v478 = vpop.f32.mrb[0].mxu0
  %v479 = vadd.f32 %v85, %v478
  %v480 = vpop.f32.mrb[0].mxu0
  %v481 = vpop.f32.mrb[0].mxu0
  %v482 = vadd.f32 %v85, %v481
  %v483 = vpop.f32.mrb[0].mxu0
  %484 = vmatprep.mubr.bf16.mxu0 0
  %485 = vmatmul.mubr.bf16.gmra.mrb[0].mxu0 %v288
  %v486 = vpop.f32.mrb[0].mxu0
  %v487 = vadd.f32 %v85, %v486
  %v488 = vpop.f32.mrb[0].mxu0
  %v489 = vpop.f32.mrb[0].mxu0
  %v490 = vadd.f32 %v85, %v489
  %v491 = vpop.f32.mrb[0].mxu0
  %492 = vmatprep.mubr.bf16.mxu0 0
  %493 = vmatmul.mubr.bf16.gmra.mrb[0].mxu0 %v291
  %v494 = vpop.f32.mrb[0].mxu0
  %v495 = vadd.f32 %v85, %v494
  %v496 = vpop.f32.mrb[0].mxu0
  %v497 = vpop.f32.mrb[0].mxu0
  %v498 = vadd.f32 %v85, %v497
  %v499 = vpop.f32.mrb[0].mxu0
  %500 = vmatprep.mubr.bf16.mxu0 0
  %501 = vmatmul.mubr.bf16.gmra.mrb[0].mxu0 %v294
  %v502 = vpop.f32.mrb[0].mxu0
  %v503 = vadd.f32 %v85, %v502
  %v504 = vpop.f32.mrb[0].mxu0
  %v505 = vpop.f32.mrb[0].mxu0
  %v506 = vadd.f32 %v85, %v505
  %v507 = vpop.f32.mrb[0].mxu0
  %508 = vmatprep.mubr.bf16.mxu0 0
  %509 = vmatmul.mubr.bf16.gmra.mrb[0].mxu0 %v297
  %v510 = vpop.f32.mrb[0].mxu0
  %v511 = vadd.f32 %v85, %v510
  %v512 = vpop.f32.mrb[0].mxu0
  %v513 = vpop.f32.mrb[0].mxu0
  %v514 = vadd.f32 %v85, %v513
  %v515 = vpop.f32.mrb[0].mxu0
  %516 = vmatprep.mubr.bf16.mxu0 0
  %517 = vmatmul.mubr.bf16.gmra.mrb[0].mxu0 %v300
  %v518 = vpop.f32.mrb[0].mxu0
  %v519 = vadd.f32 %v85, %v518
  %v520 = vpop.f32.mrb[0].mxu0
  %v521 = vpop.f32.mrb[0].mxu0
  %v522 = vadd.f32 %v85, %v521
  %v523 = vpop.f32.mrb[0].mxu0
  %524 = vmatprep.mubr.bf16.mxu0 0
  %525 = vmatmul.mubr.bf16.gmra.mrb[0].mxu0 %v303
  %v526 = vpop.f32.mrb[0].mxu0
  %v527 = vadd.f32 %v85, %v526
  %v528 = vpop.f32.mrb[0].mxu0
  %v529 = vpop.f32.mrb[0].mxu0
  %v530 = vadd.f32 %v85, %v529
  %v531 = vpop.f32.mrb[0].mxu0
  %532 = vmatprep.mubr.bf16.mxu0 0
  %533 = vmatmul.mubr.bf16.gmra.mrb[0].mxu0 %v306
  %v534 = vpop.f32.mrb[0].mxu0
  %v535 = vadd.f32 %v85, %v534
  %v536 = vpop.f32.mrb[0].mxu0
  %v537 = vpop.f32.mrb[0].mxu0
  %v538 = vadd.f32 %v85, %v537
  %v539 = vpop.f32.mrb[0].mxu0
  %540 = vmatprep.mubr.bf16.mxu0 0
  %541 = vmatmul.mubr.bf16.gmra.mrb[0].mxu0 %v309
  %v542 = vpop.f32.mrb[0].mxu0
  %v543 = vadd.f32 %v85, %v542
  %v544 = vpop.f32.mrb[0].mxu0
  %v545 = vpop.f32.mrb[0].mxu0
  %v546 = vadd.f32 %v85, %v545
  %v547 = vpop.f32.mrb[0].mxu0
  %548 = vmatprep.mubr.bf16.mxu0 0
  %549 = vmatmul.mubr.bf16.gmra.mrb[0].mxu0 %v312
  %v550 = vpop.f32.mrb[0].mxu0
  %v551 = vadd.f32 %v85, %v550
  %v552 = vpop.f32.mrb[0].mxu0
  %v553 = vpop.f32.mrb[0].mxu0
  %v554 = vadd.f32 %v85, %v553
  %v555 = vpop.f32.mrb[0].mxu0
  %556 = vmatprep.mubr.bf16.mxu0 0
  %557 = vmatmul.mubr.bf16.gmra.mrb[0].mxu0 %v315
  %v558 = vpop.f32.mrb[0].mxu0
  %v559 = vadd.f32 %v85, %v558
  %v560 = vpop.f32.mrb[0].mxu0
  %v561 = vpop.f32.mrb[0].mxu0
  %v562 = vadd.f32 %v85, %v561
  %v563 = vpop.f32.mrb[0].mxu0
  %564 = vmatprep.mubr.bf16.mxu0 0
  %565 = vmatmul.mubr.bf16.gmra.mrb[0].mxu0 %v318
  %v566 = vpop.f32.mrb[0].mxu0
  %v567 = vadd.f32 %v85, %v566
  %v568 = vpop.f32.mrb[0].mxu0
  %v569 = vpop.f32.mrb[0].mxu0
  %v570 = vadd.f32 %v85, %v569
  %v571 = vpop.f32.mrb[0].mxu0
  %572 = vmatprep.mubr.bf16.mxu0 0
  %573 = vmatmul.mubr.bf16.gmra.mrb[0].mxu0 %v321
  %v574 = vpop.f32.mrb[0].mxu0
  %v575 = vadd.f32 %v85, %v574
  %v576 = vpop.f32.mrb[0].mxu0
  %v577 = vpop.f32.mrb[0].mxu0
  %v578 = vadd.f32 %v85, %v577
  %v579 = vpop.f32.mrb[0].mxu0
  %580 = vmatprep.mubr.bf16.mxu0 0
  %581 = vmatmul.mubr.bf16.gmra.mrb[0].mxu0 %v324
  %v582 = vpop.f32.mrb[0].mxu0
  %v583 = vadd.f32 %v85, %v582
  %v584 = vpop.f32.mrb[0].mxu0
  %v585 = vpop.f32.mrb[0].mxu0
  %v586 = vadd.f32 %v85, %v585
  %v587 = vpop.f32.mrb[0].mxu0
  %588 = vmatprep.mubr.bf16.mxu0 0
  %589 = vmatmul.mubr.bf16.gmra.mrb[0].mxu0 %v327
  %v590 = vpop.f32.mrb[0].mxu0
  %v591 = vadd.f32 %v85, %v590
  %v592 = vpop.f32.mrb[0].mxu0
  %v593 = vpop.f32.mrb[0].mxu0
  %v594 = vadd.f32 %v85, %v593
  %v595 = vpop.f32.mrb[0].mxu0
  %596 = vmatprep.mubr.bf16.mxu0 0
  %597 = vmatmul.mubr.bf16.gmra.mrb[0].mxu0 %v330
  %v598 = vpop.f32.mrb[0].mxu0
  %v599 = vadd.f32 %v85, %v598
  %v600 = vpop.f32.mrb[0].mxu0
  %v601 = vpop.f32.mrb[0].mxu0
  %v602 = vadd.f32 %v85, %v601
  %v603 = vpop.f32.mrb[0].mxu0
  %604 = vmatprep.mubr.bf16.mxu0 0
  %605 = vmatmul.mubr.bf16.gmra.mrb[0].mxu0 %v333
  %v606 = vpop.f32.mrb[0].mxu0
  %v607 = vadd.f32 %v85, %v606
  %v608 = vpop.f32.mrb[0].mxu0
  %v609 = vpop.f32.mrb[0].mxu0
  %v610 = vadd.f32 %v85, %v609
  %v611 = vpop.f32.mrb[0].mxu0
  %612 = vmatprep.mubr.bf16.mxu0 0
  %613 = vmatmul.mubr.bf16.gmra.mrb[0].mxu0 %v336
  %v614 = vpop.f32.mrb[0].mxu0
  %v615 = vadd.f32 %v85, %v614
  %v616 = vpop.f32.mrb[0].mxu0
  %v617 = vpop.f32.mrb[0].mxu0
  %v618 = vadd.f32 %v85, %v617
  %v619 = vpop.f32.mrb[0].mxu0
  %620 = vmatprep.mubr.bf16.mxu0 0
  %621 = vmatmul.mubr.bf16.gmra.mrb[0].mxu0 %v339
  %v622 = vpop.f32.mrb[0].mxu0
  %v623 = vadd.f32 %v85, %v622
  %v624 = vpop.f32.mrb[0].mxu0
  %v625 = vpop.f32.mrb[0].mxu0
  %v626 = vadd.f32 %v85, %v625
  %v627 = vpop.f32.mrb[0].mxu0
  %628 = vmatprep.mubr.bf16.mxu0 0
  %629 = vmatmul.mubr.bf16.gmra.mrb[0].mxu0 %v342
  %v630 = vpop.f32.mrb[0].mxu0
  %v631 = vadd.f32 %v85, %v630
  %v632 = vpop.f32.mrb[0].mxu0
  %v633 = vpop.f32.mrb[0].mxu0
  %v634 = vadd.f32 %v85, %v633
  %v635 = vpop.f32.mrb[0].mxu0
  %636 = vdwg.mxu0
  %v637 = vmax.f32 %v383, 0.0
  %v638 = vmax.f32 %v386, 0.0
  %v639 = vmax.f32 %v391, 0.0
  %v640 = vmax.f32 %v394, 0.0
  %v641 = vmax.f32 %v399, 0.0
  %v642 = vmax.f32 %v402, 0.0
  %v643 = vmax.f32 %v407, 0.0
  %v644 = vmax.f32 %v410, 0.0
  %v645 = vmax.f32 %v415, 0.0
  %v646 = vmax.f32 %v418, 0.0
  %v647 = vmax.f32 %v423, 0.0
  %v648 = vmax.f32 %v426, 0.0
  %v649 = vmax.f32 %v431, 0.0
  %v650 = vmax.f32 %v434, 0.0
  %v651 = vmax.f32 %v439, 0.0
  %v652 = vmax.f32 %v442, 0.0
  %v653 = vmax.f32 %v447, 0.0
  %v654 = vmax.f32 %v450, 0.0
  %v655 = vmax.f32 %v455, 0.0
  %v656 = vmax.f32 %v458, 0.0
  %v657 = vmax.f32 %v463, 0.0
  %v658 = vmax.f32 %v466, 0.0
  %v659 = vmax.f32 %v471, 0.0
  %v660 = vmax.f32 %v474, 0.0
  %v661 = vmax.f32 %v479, 0.0
  %v662 = vmax.f32 %v482, 0.0
  %v663 = vmax.f32 %v487, 0.0
  %v664 = vmax.f32 %v490, 0.0
  %v665 = vmax.f32 %v495, 0.0
  %v666 = vmax.f32 %v498, 0.0
  %v667 = vmax.f32 %v503, 0.0
  %v668 = vmax.f32 %v506, 0.0
  %v669 = vmax.f32 %v511, 0.0
  %v670 = vmax.f32 %v514, 0.0
  %v671 = vmax.f32 %v519, 0.0
  %v672 = vmax.f32 %v522, 0.0
  %v673 = vmax.f32 %v527, 0.0
  %v674 = vmax.f32 %v530, 0.0
  %v675 = vmax.f32 %v535, 0.0
  %v676 = vmax.f32 %v538, 0.0
  %v677 = vmax.f32 %v543, 0.0
  %v678 = vmax.f32 %v546, 0.0
  %v679 = vmax.f32 %v551, 0.0
  %v680 = vmax.f32 %v554, 0.0
  %v681 = vmax.f32 %v559, 0.0
  %v682 = vmax.f32 %v562, 0.0
  %v683 = vmax.f32 %v567, 0.0
  %v684 = vmax.f32 %v570, 0.0
  %v685 = vmax.f32 %v575, 0.0
  %v686 = vmax.f32 %v578, 0.0
  %v687 = vmax.f32 %v583, 0.0
  %v688 = vmax.f32 %v586, 0.0
  %v689 = vmax.f32 %v591, 0.0
  %v690 = vmax.f32 %v594, 0.0
  %v691 = vmax.f32 %v599, 0.0
  %v692 = vmax.f32 %v602, 0.0
  %v693 = vmax.f32 %v607, 0.0
  %v694 = vmax.f32 %v610, 0.0
  %v695 = vmax.f32 %v615, 0.0
  %v696 = vmax.f32 %v618, 0.0
  %v697 = vmax.f32 %v623, 0.0
  %v698 = vmax.f32 %v626, 0.0
  %v699 = vmax.f32 %v631, 0.0
  %v700 = vmax.f32 %v634, 0.0
  %v701 = vmin.f32 %v637, 6.0
  %v702 = vmin.f32 %v638, 6.0
  %v703 = vmin.f32 %v639, 6.0
  %v704 = vmin.f32 %v640, 6.0
  %v705 = vmin.f32 %v641, 6.0
  %v706 = vmin.f32 %v642, 6.0
  %v707 = vmin.f32 %v643, 6.0
  %v708 = vmin.f32 %v644, 6.0
  %v709 = vmin.f32 %v645, 6.0
  %v710 = vmin.f32 %v646, 6.0
  %v711 = vmin.f32 %v647, 6.0
  %v712 = vmin.f32 %v648, 6.0
  %v713 = vmin.f32 %v649, 6.0
  %v714 = vmin.f32 %v650, 6.0
  %v715 = vmin.f32 %v651, 6.0
  %v716 = vmin.f32 %v652, 6.0
  %v717 = vmin.f32 %v653, 6.0
  %v718 = vmin.f32 %v654, 6.0
  %v719 = vmin.f32 %v655, 6.0
  %v720 = vmin.f32 %v656, 6.0
  %v721 = vmin.f32 %v657, 6.0
  %v722 = vmin.f32 %v658, 6.0
  %v723 = vmin.f32 %v659, 6.0
  %v724 = vmin.f32 %v660, 6.0
  %v725 = vmin.f32 %v661, 6.0
  %v726 = vmin.f32 %v662, 6.0
  %v727 = vmin.f32 %v663, 6.0
  %v728 = vmin.f32 %v664, 6.0
  %v729 = vmin.f32 %v665, 6.0
  %v730 = vmin.f32 %v666, 6.0
  %v731 = vmin.f32 %v667, 6.0
  %v732 = vmin.f32 %v668, 6.0
  %v733 = vmin.f32 %v669, 6.0
  %v734 = vmin.f32 %v670, 6.0
  %v735 = vmin.f32 %v671, 6.0
  %v736 = vmin.f32 %v672, 6.0
  %v737 = vmin.f32 %v673, 6.0
  %v738 = vmin.f32 %v674, 6.0
  %v739 = vmin.f32 %v675, 6.0
  %v740 = vmin.f32 %v676, 6.0
  %v741 = vmin.f32 %v677, 6.0
  %v742 = vmin.f32 %v678, 6.0
  %v743 = vmin.f32 %v679, 6.0
  %v744 = vmin.f32 %v680, 6.0
  %v745 = vmin.f32 %v681, 6.0
  %v746 = vmin.f32 %v682, 6.0
  %v747 = vmin.f32 %v683, 6.0
  %v748 = vmin.f32 %v684, 6.0
  %v749 = vmin.f32 %v685, 6.0
  %v750 = vmin.f32 %v686, 6.0
  %v751 = vmin.f32 %v687, 6.0
  %v752 = vmin.f32 %v688, 6.0
  %v753 = vmin.f32 %v689, 6.0
  %v754 = vmin.f32 %v690, 6.0
  %v755 = vmin.f32 %v691, 6.0
  %v756 = vmin.f32 %v692, 6.0
  %v757 = vmin.f32 %v693, 6.0
  %v758 = vmin.f32 %v694, 6.0
  %v759 = vmin.f32 %v695, 6.0
  %v760 = vmin.f32 %v696, 6.0
  %v761 = vmin.f32 %v697, 6.0
  %v762 = vmin.f32 %v698, 6.0
  %v763 = vmin.f32 %v699, 6.0
  %v764 = vmin.f32 %v700, 6.0
  %v765 = vpack.c.bf16 %v702, %v701
  %v766 = vpack.c.bf16 %v704, %v703
  %v767 = vpack.c.bf16 %v706, %v705
  %v768 = vpack.c.bf16 %v708, %v707
  %v769 = vpack.c.bf16 %v710, %v709
  %v770 = vpack.c.bf16 %v712, %v711
  %v771 = vpack.c.bf16 %v714, %v713
  %v772 = vpack.c.bf16 %v716, %v715
  %v773 = vpack.c.bf16 %v718, %v717
  %v774 = vpack.c.bf16 %v720, %v719
  %v775 = vpack.c.bf16 %v722, %v721
  %v776 = vpack.c.bf16 %v724, %v723
  %v777 = vpack.c.bf16 %v726, %v725
  %v778 = vpack.c.bf16 %v728, %v727
  %v779 = vpack.c.bf16 %v730, %v729
  %v780 = vpack.c.bf16 %v732, %v731
  %v781 = vpack.c.bf16 %v734, %v733
  %v782 = vpack.c.bf16 %v736, %v735
  %v783 = vpack.c.bf16 %v738, %v737
  %v784 = vpack.c.bf16 %v740, %v739
  %v785 = vpack.c.bf16 %v742, %v741
  %v786 = vpack.c.bf16 %v744, %v743
  %v787 = vpack.c.bf16 %v746, %v745
  %v788 = vpack.c.bf16 %v748, %v747
  %v789 = vpack.c.bf16 %v750, %v749
  %v790 = vpack.c.bf16 %v752, %v751
  %v791 = vpack.c.bf16 %v754, %v753
  %v792 = vpack.c.bf16 %v756, %v755
  %v793 = vpack.c.bf16 %v758, %v757
  %v794 = vpack.c.bf16 %v760, %v759
  %v795 = vpack.c.bf16 %v762, %v761
  %v796 = vpack.c.bf16 %v764, %v763
  %v829 = vunpack.c.l.b16 %v765
  %v830 = vunpack.c.h.b16 %v765
  %v831 = vunpack.c.l.b16 %v766
  %v832 = vunpack.c.h.b16 %v766
  %v833 = vunpack.c.l.b16 %v767
  %v834 = vunpack.c.h.b16 %v767
  %v835 = vunpack.c.l.b16 %v768
  %v836 = vunpack.c.h.b16 %v768
  %v837 = vunpack.c.l.b16 %v769
  %v838 = vunpack.c.h.b16 %v769
  %v839 = vunpack.c.l.b16 %v770
  %v840 = vunpack.c.h.b16 %v770
  %v841 = vunpack.c.l.b16 %v771
  %v842 = vunpack.c.h.b16 %v771
  %v843 = vunpack.c.l.b16 %v772
  %v844 = vunpack.c.h.b16 %v772
  %v845 = vunpack.c.l.b16 %v773
  %v846 = vunpack.c.h.b16 %v773
  %v847 = vunpack.c.l.b16 %v774
  %v848 = vunpack.c.h.b16 %v774
  %v849 = vunpack.c.l.b16 %v775
  %v850 = vunpack.c.h.b16 %v775
  %v851 = vunpack.c.l.b16 %v776
  %v852 = vunpack.c.h.b16 %v776
  %v853 = vunpack.c.l.b16 %v777
  %v854 = vunpack.c.h.b16 %v777
  %v855 = vunpack.c.l.b16 %v778
  %v856 = vunpack.c.h.b16 %v778
  %v857 = vunpack.c.l.b16 %v779
  %v858 = vunpack.c.h.b16 %v779
  %v859 = vunpack.c.l.b16 %v780
  %v860 = vunpack.c.h.b16 %v780
  %v861 = vunpack.c.l.b16 %v781
  %v862 = vunpack.c.h.b16 %v781
  %v863 = vunpack.c.l.b16 %v782
  %v864 = vunpack.c.h.b16 %v782
  %v865 = vunpack.c.l.b16 %v783
  %v866 = vunpack.c.h.b16 %v783
  %v867 = vunpack.c.l.b16 %v784
  %v868 = vunpack.c.h.b16 %v784
  %v869 = vunpack.c.l.b16 %v785
  %v870 = vunpack.c.h.b16 %v785
  %v871 = vunpack.c.l.b16 %v786
  %v872 = vunpack.c.h.b16 %v786
  %v873 = vunpack.c.l.b16 %v787
  %v874 = vunpack.c.h.b16 %v787
  %v875 = vunpack.c.l.b16 %v788
  %v876 = vunpack.c.h.b16 %v788
  %v877 = vunpack.c.l.b16 %v789
  %v878 = vunpack.c.h.b16 %v789
  %v879 = vunpack.c.l.b16 %v790
  %v880 = vunpack.c.h.b16 %v790
  %v881 = vunpack.c.l.b16 %v791
  %v882 = vunpack.c.h.b16 %v791
  %v883 = vunpack.c.l.b16 %v792
  %v884 = vunpack.c.h.b16 %v792
  %v885 = vunpack.c.l.b16 %v793
  %v886 = vunpack.c.h.b16 %v793
  %v887 = vunpack.c.l.b16 %v794
  %v888 = vunpack.c.h.b16 %v794
  %v889 = vunpack.c.l.b16 %v795
  %v890 = vunpack.c.h.b16 %v795
  %v891 = vunpack.c.l.b16 %v796
  %v892 = vunpack.c.h.b16 %v796
  %v893 = vpack.c.b16 %v829, %v829
  %v894 = vpack.c.b16 %v830, %v830
  %v895 = vpack.c.b16 %v831, %v831
  %v896 = vpack.c.b16 %v832, %v832
  %v897 = vpack.c.b16 %v833, %v833
  %v898 = vpack.c.b16 %v834, %v834
  %v899 = vpack.c.b16 %v835, %v835
  %v900 = vpack.c.b16 %v836, %v836
  %v901 = vpack.c.b16 %v837, %v837
  %v902 = vpack.c.b16 %v838, %v838
  %v903 = vpack.c.b16 %v839, %v839
  %v904 = vpack.c.b16 %v840, %v840
  %v905 = vpack.c.b16 %v841, %v841
  %v906 = vpack.c.b16 %v842, %v842
  %v907 = vpack.c.b16 %v843, %v843
  %v908 = vpack.c.b16 %v844, %v844
  %v909 = vpack.c.b16 %v845, %v845
  %v910 = vpack.c.b16 %v846, %v846
  %v911 = vpack.c.b16 %v847, %v847
  %v912 = vpack.c.b16 %v848, %v848
  %v913 = vpack.c.b16 %v849, %v849
  %v914 = vpack.c.b16 %v850, %v850
  %v915 = vpack.c.b16 %v851, %v851
  %v916 = vpack.c.b16 %v852, %v852
  %v917 = vpack.c.b16 %v853, %v853
  %v918 = vpack.c.b16 %v854, %v854
  %v919 = vpack.c.b16 %v855, %v855
  %v920 = vpack.c.b16 %v856, %v856
  %v921 = vpack.c.b16 %v857, %v857
  %v922 = vpack.c.b16 %v858, %v858
  %v923 = vpack.c.b16 %v859, %v859
  %v924 = vpack.c.b16 %v860, %v860
  %v925 = vpack.c.b16 %v861, %v861
  %v926 = vpack.c.b16 %v862, %v862
  %v927 = vpack.c.b16 %v863, %v863
  %v928 = vpack.c.b16 %v864, %v864
  %v929 = vpack.c.b16 %v865, %v865
  %v930 = vpack.c.b16 %v866, %v866
  %v931 = vpack.c.b16 %v867, %v867
  %v932 = vpack.c.b16 %v868, %v868
  %v933 = vpack.c.b16 %v869, %v869
  %v934 = vpack.c.b16 %v870, %v870
  %v935 = vpack.c.b16 %v871, %v871
  %v936 = vpack.c.b16 %v872, %v872
  %v937 = vpack.c.b16 %v873, %v873
  %v938 = vpack.c.b16 %v874, %v874
  %v939 = vpack.c.b16 %v875, %v875
  %v940 = vpack.c.b16 %v876, %v876
  %v941 = vpack.c.b16 %v877, %v877
  %v942 = vpack.c.b16 %v878, %v878
  %v943 = vpack.c.b16 %v879, %v879
  %v944 = vpack.c.b16 %v880, %v880
  %v945 = vpack.c.b16 %v881, %v881
  %v946 = vpack.c.b16 %v882, %v882
  %v947 = vpack.c.b16 %v883, %v883
  %v948 = vpack.c.b16 %v884, %v884
  %v949 = vpack.c.b16 %v885, %v885
  %v950 = vpack.c.b16 %v886, %v886
  %v951 = vpack.c.b16 %v887, %v887
  %v952 = vpack.c.b16 %v888, %v888
  %v953 = vpack.c.b16 %v889, %v889
  %v954 = vpack.c.b16 %v890, %v890
  %v955 = vpack.c.b16 %v891, %v891
  %v956 = vpack.c.b16 %v892, %v892
  %vm1021 = vcmask 257024
  %1022 = vst.msk [vmem:[%s3] sm:$0xf] %vm1021, %v893
  %1023 = vst.msk [vmem:[%s3 + $0x4] sm:$0xf] %vm1021, %v894
  %1024 = vst.msk [vmem:[%s3 + $0x8] sm:$0xf] %vm1021, %v895
  %1025 = vst.msk [vmem:[%s3 + $0xc] sm:$0xf] %vm1021, %v896
  %1026 = vst.msk [vmem:[%s3 + $0x10] sm:$0xf] %vm1021, %v897
  %1027 = vst.msk [vmem:[%s3 + $0x14] sm:$0xf] %vm1021, %v898
  %1028 = vst.msk [vmem:[%s3 + $0x18] sm:$0xf] %vm1021, %v899
  %1029 = vst.msk [vmem:[%s3 + $0x1c] sm:$0xf] %vm1021, %v900
  %1030 = vst.msk [vmem:[%s3 + $0x20] sm:$0xf] %vm1021, %v901
  %1031 = vst.msk [vmem:[%s3 + $0x24] sm:$0xf] %vm1021, %v902
  %1032 = vst.msk [vmem:[%s3 + $0x28] sm:$0xf] %vm1021, %v903
  %1033 = vst.msk [vmem:[%s3 + $0x2c] sm:$0xf] %vm1021, %v904
  %1034 = vst.msk [vmem:[%s3 + $0x30] sm:$0xf] %vm1021, %v905
  %1035 = vst.msk [vmem:[%s3 + $0x34] sm:$0xf] %vm1021, %v906
  %1036 = vst.msk [vmem:[%s3 + $0x38] sm:$0xf] %vm1021, %v907
  %1037 = vst.msk [vmem:[%s3 + $0x3c] sm:$0xf] %vm1021, %v908
  %1038 = vst.msk [vmem:[%s3 + $0x40] sm:$0xf] %vm1021, %v909
  %1039 = vst.msk [vmem:[%s3 + $0x44] sm:$0xf] %vm1021, %v910
  %1040 = vst.msk [vmem:[%s3 + $0x48] sm:$0xf] %vm1021, %v911
  %1041 = vst.msk [vmem:[%s3 + $0x4c] sm:$0xf] %vm1021, %v912
  %1042 = vst.msk [vmem:[%s3 + $0x50] sm:$0xf] %vm1021, %v913
  %1043 = vst.msk [vmem:[%s3 + $0x54] sm:$0xf] %vm1021, %v914
  %1044 = vst.msk [vmem:[%s3 + $0x58] sm:$0xf] %vm1021, %v915
  %1045 = vst.msk [vmem:[%s3 + $0x5c] sm:$0xf] %vm1021, %v916
  %1046 = vst.msk [vmem:[%s3 + $0x60] sm:$0xf] %vm1021, %v917
  %1047 = vst.msk [vmem:[%s3 + $0x64] sm:$0xf] %vm1021, %v918
  %1048 = vst.msk [vmem:[%s3 + $0x68] sm:$0xf] %vm1021, %v919
  %1049 = vst.msk [vmem:[%s3 + $0x6c] sm:$0xf] %vm1021, %v920
  %1050 = vst.msk [vmem:[%s3 + $0x70] sm:$0xf] %vm1021, %v921
  %1051 = vst.msk [vmem:[%s3 + $0x74] sm:$0xf] %vm1021, %v922
  %1052 = vst.msk [vmem:[%s3 + $0x78] sm:$0xf] %vm1021, %v923
  %1053 = vst.msk [vmem:[%s3 + $0x7c] sm:$0xf] %vm1021, %v924
  %1054 = vst.msk [vmem:[%s3 + $0x80] sm:$0xf] %vm1021, %v925
  %1055 = vst.msk [vmem:[%s3 + $0x84] sm:$0xf] %vm1021, %v926
  %1056 = vst.msk [vmem:[%s3 + $0x88] sm:$0xf] %vm1021, %v927
  %1057 = vst.msk [vmem:[%s3 + $0x8c] sm:$0xf] %vm1021, %v928
  %1058 = vst.msk [vmem:[%s3 + $0x90] sm:$0xf] %vm1021, %v929
  %1059 = vst.msk [vmem:[%s3 + $0x94] sm:$0xf] %vm1021, %v930
  %1060 = vst.msk [vmem:[%s3 + $0x98] sm:$0xf] %vm1021, %v931
  %1061 = vst.msk [vmem:[%s3 + $0x9c] sm:$0xf] %vm1021, %v932
  %1062 = vst.msk [vmem:[%s3 + $0xa0] sm:$0xf] %vm1021, %v933
  %1063 = vst.msk [vmem:[%s3 + $0xa4] sm:$0xf] %vm1021, %v934
  %1064 = vst.msk [vmem:[%s3 + $0xa8] sm:$0xf] %vm1021, %v935
  %1065 = vst.msk [vmem:[%s3 + $0xac] sm:$0xf] %vm1021, %v936
  %1066 = vst.msk [vmem:[%s3 + $0xb0] sm:$0xf] %vm1021, %v937
  %1067 = vst.msk [vmem:[%s3 + $0xb4] sm:$0xf] %vm1021, %v938
  %1068 = vst.msk [vmem:[%s3 + $0xb8] sm:$0xf] %vm1021, %v939
  %1069 = vst.msk [vmem:[%s3 + $0xbc] sm:$0xf] %vm1021, %v940
  %1070 = vst.msk [vmem:[%s3 + $0xc0] sm:$0xf] %vm1021, %v941
  %1071 = vst.msk [vmem:[%s3 + $0xc4] sm:$0xf] %vm1021, %v942
  %1072 = vst.msk [vmem:[%s3 + $0xc8] sm:$0xf] %vm1021, %v943
  %1073 = vst.msk [vmem:[%s3 + $0xcc] sm:$0xf] %vm1021, %v944
  %1074 = vst.msk [vmem:[%s3 + $0xd0] sm:$0xf] %vm1021, %v945
  %1075 = vst.msk [vmem:[%s3 + $0xd4] sm:$0xf] %vm1021, %v946
  %1076 = vst.msk [vmem:[%s3 + $0xd8] sm:$0xf] %vm1021, %v947
  %1077 = vst.msk [vmem:[%s3 + $0xdc] sm:$0xf] %vm1021, %v948
  %1078 = vst.msk [vmem:[%s3 + $0xe0] sm:$0xf] %vm1021, %v949
  %1079 = vst.msk [vmem:[%s3 + $0xe4] sm:$0xf] %vm1021, %v950
  %1080 = vst.msk [vmem:[%s3 + $0xe8] sm:$0xf] %vm1021, %v951
  %1081 = vst.msk [vmem:[%s3 + $0xec] sm:$0xf] %vm1021, %v952
  %1082 = vst.msk [vmem:[%s3 + $0xf0] sm:$0xf] %vm1021, %v953
  %1083 = vst.msk [vmem:[%s3 + $0xf4] sm:$0xf] %vm1021, %v954
  %1084 = vst.msk [vmem:[%s3 + $0xf8] sm:$0xf] %vm1021, %v955
  %1085 = vst.msk [vmem:[%s3 + $0xfc] sm:$0xf] %vm1021, %v956
  // Predicated region
  $region14: #{mobilenet_v2_forward.19} parent=0 // pred_check
    _
  $region15: #{mobilenet_v2_forward.19} parent=0 // pred_check_branch
    %1087 = sbr.rel (0) target = $region17
  $region16: #{mobilenet_v2_forward.19} parent=0 // pred_region
    _
  $region17: #{mobilenet_v2_forward.19} parent=0 // pred_fallthru
    _
  // Predicated region
  $region18: #{mobilenet_v2_forward.19} parent=0 // pred_check
    _
  $region19: #{mobilenet_v2_forward.19} parent=0 // pred_check_branch
    %1089 = sbr.rel (0) target = $region21
  $region20: #{mobilenet_v2_forward.19} parent=0 // pred_region
    _
  $region21: #{mobilenet_v2_forward.19} parent=0 // pred_fallthru
    _

// kernel: mobilenet_v2_forward.17
$region0: #{mobilenet_v2_forward.17}
  #allocation0 [shape = 'u32[]', space=smem, size = 0x4, offset = 0x4, fixed_abs, tag = 'smem constant byte address 0x4 - core index']
  #allocation1 [shape = 'u32[144,128]{1,0:T(1,128)}', space=vmem, size = 0x12000, scoped, tag = 'internal scratch']
  %s0 = inlined_call_operand.vmem [shape: bf16[2,18,18,8], index: 0, kind: input, shape index: {}]
  %s1 = inlined_call_operand.vmem [shape: f32[9,8], index: 1, kind: input, shape index: {}]
  %s2 = inlined_call_operand.vmem [shape: f32[1,8], index: 2, kind: input, shape index: {}]
  %s3 = inlined_call_operand.vmem [shape: bf16[2,16,16,8], index: 3, kind: output, shape index: {}]
  %s4 = sld [smem:[#allocation0]]
  $region45: #{mobilenet_v2_forward.17} parent=0
    _
  %s6 = ssub.s32 1, %s4
  %s7 = scalar_select 0, %s6, %s4
  loop: start=0, step=1, limit=4
  $region2: #{mobilenet_v2_forward.17} parent=0 // loop_pre_header
    _
  $region3: #{mobilenet_v2_forward.17} parent=0 // loop_header
    %s9 = sphi 0, %s13
    %p10 = scmp.ge.s32.totalorder %s9, 4
    %s16 = sphi 0, %s28
    %s17 = sphi 0, %s24
    %s18 = sphi 0, %s16
    %s19 = sphi 0, %s17
    %s20 = sphi 0, %s18
    %s21 = sphi 0, %s19
    %s31 = sphi 0, %s33
    %s34 = sphi 0, %s31
    %s35 = sphi 0, %s34
    %s51 = sphi 0, %s35
    %s55 = sphi 0, %s55
    %s57 = sphi 0, %s55
    %s58 = sphi 0, %s57
    %s72 = sphi 0, %s58
    %s76 = sphi 0, %s76
    %s78 = sphi 0, %s76
    %s79 = sphi 0, %s78
    %s93 = sphi 0, %s79
    %s101 = sphi 0, %s103
    %s104 = sphi 0, %s101
    %s105 = sphi 0, %s104
    %s121 = sphi 0, %s105
  $region4: #{mobilenet_v2_forward.17} parent=0 // loop_header_branch
    %12 = sbr.rel (%p10) target = $region8
  $region5: #{mobilenet_v2_forward.17} parent=0 // loop_body
    %s14 = ssub.s32 %s9, 1
    %s15 = ssub.s32 %s9, 2
    %s22 = sadd.s32 1, %s17
    %p23 = scmp.ge.s32.totalorder %s22, 1
    %s24 = scalar_select %p23, 0, %s22
    %s25 = sadd.s32 1, %s16
    %s26 = scalar_select %p23, %s25, %s16
    %p27 = scmp.ge.s32.totalorder %s26, 2
    %s28 = scalar_select %p27, 0, %s26
    %s29 = ssub.s32 %s16, %s28
    %p30 = scmp.eq.s32.totalorder %s29, 0
    %s32 = sadd.s32 %s31, 1
    %s33 = scalar_select %p30, %s31, %s32
    %p36 = pneg %p30
    %p37 = scmp.eq.s32.totalorder %s9, 1
    %p38 = por %p36, %p37
    %p39 = scmp.ne.s32.totalorder %s31, %s34
    %p40 = scmp.eq.s32.totalorder %s9, 0
    %p41 = por %p39, %p40
    %p42 = scmp.ne.s32.totalorder %s31, %s34
    %p43 = scmp.eq.s32.totalorder %s14, 1
    %p44 = por %p42, %p43
    %p45 = scmp.ne.s32.totalorder %s34, %s35
    %p46 = scmp.eq.s32.totalorder %s14, 0
    %p47 = por %p45, %p46
    %p48 = scmp.ne.s32.totalorder %s34, %s35
    %p49 = scmp.eq.s32.totalorder %s15, 1
    %p50 = por %p48, %p49
    %p52 = scmp.ne.s32.totalorder %s35, %s51
    %p53 = scmp.eq.s32.totalorder %s15, 0
    %p54 = por %p52, %p53
    %s56 = sadd.s32 %s55, 1
    %p59 = scmp.eq.s32.totalorder %s9, 1
    %p60 = scmp.ne.s32.totalorder %s55, %s57
    %p61 = scmp.eq.s32.totalorder %s9, 0
    %p62 = por %p60, %p61
    %p63 = scmp.ne.s32.totalorder %s55, %s57
    %p64 = scmp.eq.s32.totalorder %s14, 1
    %p65 = por %p63, %p64
    %p66 = scmp.ne.s32.totalorder %s57, %s58
    %p67 = scmp.eq.s32.totalorder %s14, 0
    %p68 = por %p66, %p67
    %p69 = scmp.ne.s32.totalorder %s57, %s58
    %p70 = scmp.eq.s32.totalorder %s15, 1
    %p71 = por %p69, %p70
    %p73 = scmp.ne.s32.totalorder %s58, %s72
    %p74 = scmp.eq.s32.totalorder %s15, 0
    %p75 = por %p73, %p74
    %s77 = sadd.s32 %s76, 1
    %p80 = scmp.eq.s32.totalorder %s9, 1
    %p81 = scmp.ne.s32.totalorder %s76, %s78
    %p82 = scmp.eq.s32.totalorder %s9, 0
    %p83 = por %p81, %p82
    %p84 = scmp.ne.s32.totalorder %s76, %s78
    %p85 = scmp.eq.s32.totalorder %s14, 1
    %p86 = por %p84, %p85
    %p87 = scmp.ne.s32.totalorder %s78, %s79
    %p88 = scmp.eq.s32.totalorder %s14, 0
    %p89 = por %p87, %p88
    %p90 = scmp.ne.s32.totalorder %s78, %s79
    %p91 = scmp.eq.s32.totalorder %s15, 1
    %p92 = por %p90, %p91
    %p94 = scmp.ne.s32.totalorder %s79, %s93
    %p95 = scmp.eq.s32.totalorder %s15, 0
    %p96 = por %p94, %p95
    %s97 = ssub.s32 %s16, %s28
    %s98 = ssub.s32 %s17, %s24
    %s99 = sor.u32 %s97, %s98
    %p100 = scmp.eq.s32.totalorder %s99, 0
    %s102 = sadd.s32 %s101, 1
    %s103 = scalar_select %p100, %s101, %s102
    %p106 = pneg %p100
    %p107 = scmp.eq.s32.totalorder %s9, 1
    %p108 = por %p106, %p107
    %p109 = scmp.ne.s32.totalorder %s101, %s104
    %p110 = scmp.eq.s32.totalorder %s9, 0
    %p111 = por %p109, %p110
    %p112 = scmp.ne.s32.totalorder %s101, %s104
    %p113 = scmp.eq.s32.totalorder %s14, 1
    %p114 = por %p112, %p113
    %p115 = scmp.ne.s32.totalorder %s104, %s105
    %p116 = scmp.eq.s32.totalorder %s14, 0
    %p117 = por %p115, %p116
    %p118 = scmp.ne.s32.totalorder %s104, %s105
    %p119 = scmp.eq.s32.totalorder %s15, 1
    %p120 = por %p118, %p119
    %p122 = scmp.ne.s32.totalorder %s105, %s121
    %p123 = scmp.eq.s32.totalorder %s15, 0
    %p124 = por %p122, %p123
    %p125 = scmp.le.s32.totalorder 1, %s9
    %p126 = scmp.lt.s32.totalorder %s9, 3
    %p127 = pnand %p125, %p126
    %p128 = pneg %p127
    // Predicated region
    $region9: #{mobilenet_v2_forward.17} parent=5 // pred_check
      _
    $region10: #{mobilenet_v2_forward.17} parent=5 // pred_check_branch
      %130 = sbr.rel (%p127) target = $region12
    $region11: #{mobilenet_v2_forward.17} parent=5 // pred_region
      %s131 = ssub.s32 %s9, 1
      // Predicated region
      $region13: #{mobilenet_v2_forward.17} parent=11 // pred_check
        %p132 = pneg %p68
      $region14: #{mobilenet_v2_forward.17} parent=11 // pred_check_branch
        %134 = sbr.rel (%p132) target = $region16
      $region15: #{mobilenet_v2_forward.17} parent=11 // pred_region
        _
      $region16: #{mobilenet_v2_forward.17} parent=11 // pred_fallthru
        _
      // Predicated region
      $region17: #{mobilenet_v2_forward.17} parent=11 // pred_check
        %p135 = pneg %p89
      $region18: #{mobilenet_v2_forward.17} parent=11 // pred_check_branch
        %137 = sbr.rel (%p135) target = $region20
      $region19: #{mobilenet_v2_forward.17} parent=11 // pred_region
        _
      $region20: #{mobilenet_v2_forward.17} parent=11 // pred_fallthru
        _
    $region12: #{mobilenet_v2_forward.17} parent=5 // pred_fallthru
      _
    %p138 = scmp.lt.s32.totalorder %s9, 2
    // Predicated region
    $region21: #{mobilenet_v2_forward.17} parent=5 // pred_check
      %p139 = pneg %p138
    $region22: #{mobilenet_v2_forward.17} parent=5 // pred_check_branch
      %141 = sbr.rel (%p139) target = $region24
    $region23: #{mobilenet_v2_forward.17} parent=5 // pred_region
      // Predicated region
      $region25: #{mobilenet_v2_forward.17} parent=23 // pred_check
        %p142 = pneg %p41
      $region26: #{mobilenet_v2_forward.17} parent=23 // pred_check_branch
        %144 = sbr.rel (%p142) target = $region28
      $region27: #{mobilenet_v2_forward.17} parent=23 // pred_region
        %p145 = scmp.lt.s32.totalorder %s16, 1
        %s146 = scalar_select %p145, %s16, 1
        %s147 = smul.addr %s146, 54
        %s148 = smul.addr %s147, 4
        %s149 = scalar_lea.vmem %s0, %s148
      $region28: #{mobilenet_v2_forward.17} parent=23 // pred_fallthru
        _
    $region24: #{mobilenet_v2_forward.17} parent=5 // pred_fallthru
      _
    %p150 = scmp.le.s32.totalorder 1, %s9
    %p151 = scmp.lt.s32.totalorder %s9, 3
    %p152 = pnand %p150, %p151
    %p153 = pneg %p152
    // Predicated region
    $region29: #{mobilenet_v2_forward.17} parent=5 // pred_check
      _
    $region30: #{mobilenet_v2_forward.17} parent=5 // pred_check_branch
      %155 = sbr.rel (%p152) target = $region32
    $region31: #{mobilenet_v2_forward.17} parent=5 // pred_region
      %s156 = ssub.s32 %s9, 1
      %p157 = scmp.lt.s32.totalorder %s18, 1
      %s158 = scalar_select %p157, %s18, 1
      %s159 = smul.addr %s158, 54
      %s160 = smul.addr %s159, 4
      %s161 = scalar_lea.vmem %s0, %s160
      %p162 = pneg %p47
      %p163 = pneg %p44
      %p164 = pneg %p68
      %p165 = pneg %p65
      %p166 = pneg %p89
      %p167 = pneg %p86
      %p168 = pneg %p117
      %p169 = pneg %p114
      %s170 = smul.u32 16, %s19
      %p171 = scmp.lt.s32.totalorder %s18, 1
      %s172 = scalar_select %p171, %s18, 1
      %p173 = scmp.lt.s32.totalorder %s170, 15
      %s174 = scalar_select %p173, %s170, 15
      %s175 = smul.addr %s174, 2
      %s176 = smul.addr %s172, 32
      %s177 = sadd.s32 %s175, %s176
      %s178 = smul.addr %s177, 4
      %s179 = scalar_lea.vmem %s3, %s178
      %p180 = scmp.lt.s32.totalorder %s18, 1
      %s181 = scalar_select %p180, %s18, 1
      %s182 = smul.addr %s181, 54
      %s183 = smul.addr %s182, 4
      %s184 = scalar_lea.vmem %s0, %s183
      %s185 = smul.u32 16, %s19
      %p186 = scmp.lt.s32.totalorder %s18, 1
      %s187 = scalar_select %p186, %s18, 1
      %p188 = scmp.lt.s32.totalorder %s185, 15
      %s189 = scalar_select %p188, %s185, 15
      %s190 = smul.addr %s189, 2
      %s191 = smul.addr %s187, 32
      %s192 = sadd.s32 %s190, %s191
      %s193 = smul.addr %s192, 4
      %s194 = scalar_lea.vmem %s3, %s193
      %s195 = smul.u32 16, %s19
      %s196 = smul.u32 %s19, 16
      %s197 = smul.u32 %s196, 3
      %s198 = smul.addr %s197, 4
      %s199 = scalar_lea.vmem %s184, %s198
      %v200 = vld [vmem:[%s199] sm:$0xf]
      %v201 = vld [vmem:[%s199 + $0x4] sm:$0xf]
      %v202 = vld [vmem:[%s199 + $0x8] sm:$0x1]
      %v203 = vld [vmem:[%s199 + $0xc] sm:$0xf]
      %v204 = vld [vmem:[%s199 + $0x10] sm:$0xf]
      %v205 = vld [vmem:[%s199 + $0x14] sm:$0x1]
      %v206 = vld [vmem:[%s199 + $0x18] sm:$0xf]
      %v207 = vld [vmem:[%s199 + $0x1c] sm:$0xf]
      %v208 = vld [vmem:[%s199 + $0x20] sm:$0x1]
      %v209 = vld [vmem:[%s199 + $0x24] sm:$0xf]
      %v210 = vld [vmem:[%s199 + $0x28] sm:$0xf]
      %v211 = vld [vmem:[%s199 + $0x2c] sm:$0x1]
      %v212 = vld [vmem:[%s199 + $0x30] sm:$0xf]
      %v213 = vld [vmem:[%s199 + $0x34] sm:$0xf]
      %v214 = vld [vmem:[%s199 + $0x38] sm:$0x1]
      %v215 = vld [vmem:[%s199 + $0x3c] sm:$0xf]
      %v216 = vld [vmem:[%s199 + $0x40] sm:$0xf]
      %v217 = vld [vmem:[%s199 + $0x44] sm:$0x1]
      %v218 = vld [vmem:[%s199 + $0x48] sm:$0xf]
      %v219 = vld [vmem:[%s199 + $0x4c] sm:$0xf]
      %v220 = vld [vmem:[%s199 + $0x50] sm:$0x1]
      %v221 = vld [vmem:[%s199 + $0x54] sm:$0xf]
      %v222 = vld [vmem:[%s199 + $0x58] sm:$0xf]
      %v223 = vld [vmem:[%s199 + $0x5c] sm:$0x1]
      %v224 = vld [vmem:[%s199 + $0x60] sm:$0xf]
      %v225 = vld [vmem:[%s199 + $0x64] sm:$0xf]
      %v226 = vld [vmem:[%s199 + $0x68] sm:$0x1]
      %v227 = vld [vmem:[%s199 + $0x6c] sm:$0xf]
      %v228 = vld [vmem:[%s199 + $0x70] sm:$0xf]
      %v229 = vld [vmem:[%s199 + $0x74] sm:$0x1]
      %v230 = vld [vmem:[%s199 + $0x78] sm:$0xf]
      %v231 = vld [vmem:[%s199 + $0x7c] sm:$0xf]
      %v232 = vld [vmem:[%s199 + $0x80] sm:$0x1]
      %v233 = vld [vmem:[%s199 + $0x84] sm:$0xf]
      %v234 = vld [vmem:[%s199 + $0x88] sm:$0xf]
      %v235 = vld [vmem:[%s199 + $0x8c] sm:$0x1]
      %v236 = vld [vmem:[%s199 + $0x90] sm:$0xf]
      %v237 = vld [vmem:[%s199 + $0x94] sm:$0xf]
      %v238 = vld [vmem:[%s199 + $0x98] sm:$0x1]
      %v239 = vld [vmem:[%s199 + $0x9c] sm:$0xf]
      %v240 = vld [vmem:[%s199 + $0xa0] sm:$0xf]
      %v241 = vld [vmem:[%s199 + $0xa4] sm:$0x1]
      %v242 = vld [vmem:[%s199 + $0xa8] sm:$0xf]
      %v243 = vld [vmem:[%s199 + $0xac] sm:$0xf]
      %v244 = vld [vmem:[%s199 + $0xb0] sm:$0x1]
      %v245 = vld [vmem:[%s199 + $0xb4] sm:$0xf]
      %v246 = vld [vmem:[%s199 + $0xb8] sm:$0xf]
      %v247 = vld [vmem:[%s199 + $0xbc] sm:$0x1]
      %v248 = vunpack.c.l.bf16 %v200
      %v249 = vunpack.c.l.bf16 %v201
      %v250 = vunpack.c.l.bf16 %v203
      %v251 = vunpack.c.l.bf16 %v204
      %v252 = vunpack.c.l.bf16 %v206
      %v253 = vunpack.c.l.bf16 %v207
      %v254 = vunpack.c.l.bf16 %v209
      %v255 = vunpack.c.l.bf16 %v210
      %v256 = vunpack.c.l.bf16 %v212
      %v257 = vunpack.c.l.bf16 %v213
      %v258 = vunpack.c.l.bf16 %v215
      %v259 = vunpack.c.l.bf16 %v216
      %v260 = vunpack.c.l.bf16 %v218
      %v261 = vunpack.c.l.bf16 %v219
      %v262 = vunpack.c.l.bf16 %v221
      %v263 = vunpack.c.l.bf16 %v222
      %v264 = vunpack.c.l.bf16 %v224
      %v265 = vunpack.c.l.bf16 %v225
      %v266 = vunpack.c.l.bf16 %v227
      %v267 = vunpack.c.l.bf16 %v228
      %v268 = vunpack.c.l.bf16 %v230
      %v269 = vunpack.c.l.bf16 %v231
      %v270 = vunpack.c.l.bf16 %v233
      %v271 = vunpack.c.l.bf16 %v234
      %v272 = vunpack.c.l.bf16 %v236
      %v273 = vunpack.c.l.bf16 %v237
      %v274 = vunpack.c.l.bf16 %v239
      %v275 = vunpack.c.l.bf16 %v240
      %v276 = vunpack.c.l.bf16 %v242
      %v277 = vunpack.c.l.bf16 %v243
      %v278 = vunpack.c.l.bf16 %v245
      %v279 = vunpack.c.l.bf16 %v246
      %v280 = vld [vmem:[%s1] sm:$0x1]
      %v281 = vlaneseq
      %v282 = vshrl.u32 %v281, 7
      %v283 = vsub.s32 0, %v282
      %v284 = vrot.slane %v280, %v283
      %v285 = vmul.f32 %v248, %v284
      %v286 = vmul.f32 %v249, %v284
      %v287 = vmul.f32 %v250, %v284
      %v288 = vmul.f32 %v251, %v284
      %v289 = vmul.f32 %v252, %v284
      %v290 = vmul.f32 %v253, %v284
      %v291 = vmul.f32 %v254, %v284
      %v292 = vmul.f32 %v255, %v284
      %v293 = vmul.f32 %v256, %v284
      %v294 = vmul.f32 %v257, %v284
      %v295 = vmul.f32 %v258, %v284
      %v296 = vmul.f32 %v259, %v284
      %v297 = vmul.f32 %v260, %v284
      %v298 = vmul.f32 %v261, %v284
      %v299 = vmul.f32 %v262, %v284
      %v300 = vmul.f32 %v263, %v284
      %v301 = vmul.f32 %v264, %v284
      %v302 = vmul.f32 %v265, %v284
      %v303 = vmul.f32 %v266, %v284
      %v304 = vmul.f32 %v267, %v284
      %v305 = vmul.f32 %v268, %v284
      %v306 = vmul.f32 %v269, %v284
      %v307 = vmul.f32 %v270, %v284
      %v308 = vmul.f32 %v271, %v284
      %v309 = vmul.f32 %v272, %v284
      %v310 = vmul.f32 %v273, %v284
      %v311 = vmul.f32 %v274, %v284
      %v312 = vmul.f32 %v275, %v284
      %v313 = vmul.f32 %v276, %v284
      %v314 = vmul.f32 %v277, %v284
      %v315 = vmul.f32 %v278, %v284
      %v316 = vmul.f32 %v279, %v284
      %v317 = vadd.f32 %v285, 0.0
      %v318 = vadd.f32 %v286, 0.0
      %v319 = vadd.f32 %v287, 0.0
      %v320 = vadd.f32 %v288, 0.0
      %v321 = vadd.f32 %v289, 0.0
      %v322 = vadd.f32 %v290, 0.0
      %v323 = vadd.f32 %v291, 0.0
      %v324 = vadd.f32 %v292, 0.0
      %v325 = vadd.f32 %v293, 0.0
      %v326 = vadd.f32 %v294, 0.0
      %v327 = vadd.f32 %v295, 0.0
      %v328 = vadd.f32 %v296, 0.0
      %v329 = vadd.f32 %v297, 0.0
      %v330 = vadd.f32 %v298, 0.0
      %v331 = vadd.f32 %v299, 0.0
      %v332 = vadd.f32 %v300, 0.0
      %v333 = vadd.f32 %v301, 0.0
      %v334 = vadd.f32 %v302, 0.0
      %v335 = vadd.f32 %v303, 0.0
      %v336 = vadd.f32 %v304, 0.0
      %v337 = vadd.f32 %v305, 0.0
      %v338 = vadd.f32 %v306, 0.0
      %v339 = vadd.f32 %v307, 0.0
      %v340 = vadd.f32 %v308, 0.0
      %v341 = vadd.f32 %v309, 0.0
      %v342 = vadd.f32 %v310, 0.0
      %v343 = vadd.f32 %v311, 0.0
      %v344 = vadd.f32 %v312, 0.0
      %v345 = vadd.f32 %v313, 0.0
      %v346 = vadd.f32 %v314, 0.0
      %v347 = vadd.f32 %v315, 0.0
      %v348 = vadd.f32 %v316, 0.0
      %v349 = vunpack.c.l.bf16 %v202
      %v350 = vunpack.c.l.bf16 %v205
      %v351 = vunpack.c.l.bf16 %v208
      %v352 = vunpack.c.l.bf16 %v211
      %v353 = vunpack.c.l.bf16 %v214
      %v354 = vunpack.c.l.bf16 %v217
      %v355 = vunpack.c.l.bf16 %v220
      %v356 = vunpack.c.l.bf16 %v223
      %v357 = vunpack.c.l.bf16 %v226
      %v358 = vunpack.c.l.bf16 %v229
      %v359 = vunpack.c.l.bf16 %v232
      %v360 = vunpack.c.l.bf16 %v235
      %v361 = vunpack.c.l.bf16 %v238
      %v362 = vunpack.c.l.bf16 %v241
      %v363 = vunpack.c.l.bf16 %v244
      %v364 = vunpack.c.l.bf16 %v247
      %v365 = vld [vmem:[%s1 + $0x1] sm:$0x1]
      %v366 = vlaneseq
      %v367 = vshrl.u32 %v366, 7
      %v368 = vsub.s32 0, %v367
      %v369 = vrot.slane %v365, %v368
      %v370 = vmul.f32 %v248, %v369
      %v371 = vmul.f32 %v249, %v369
      %v372 = vmul.f32 %v349, %v369
      %v373 = vmul.f32 %v250, %v369
      %v374 = vmul.f32 %v251, %v369
      %v375 = vmul.f32 %v350, %v369
      %v376 = vmul.f32 %v252, %v369
      %v377 = vmul.f32 %v253, %v369
      %v378 = vmul.f32 %v351, %v369
      %v379 = vmul.f32 %v254, %v369
      %v380 = vmul.f32 %v255, %v369
      %v381 = vmul.f32 %v352, %v369
      %v382 = vmul.f32 %v256, %v369
      %v383 = vmul.f32 %v257, %v369
      %v384 = vmul.f32 %v353, %v369
      %v385 = vmul.f32 %v258, %v369
      %v386 = vmul.f32 %v259, %v369
      %v387 = vmul.f32 %v354, %v369
      %v388 = vmul.f32 %v260, %v369
      %v389 = vmul.f32 %v261, %v369
      %v390 = vmul.f32 %v355, %v369
      %v391 = vmul.f32 %v262, %v369
      %v392 = vmul.f32 %v263, %v369
      %v393 = vmul.f32 %v356, %v369
      %v394 = vmul.f32 %v264, %v369
      %v395 = vmul.f32 %v265, %v369
      %v396 = vmul.f32 %v357, %v369
      %v397 = vmul.f32 %v266, %v369
      %v398 = vmul.f32 %v267, %v369
      %v399 = vmul.f32 %v358, %v369
      %v400 = vmul.f32 %v268, %v369
      %v401 = vmul.f32 %v269, %v369
      %v402 = vmul.f32 %v359, %v369
      %v403 = vmul.f32 %v270, %v369
      %v404 = vmul.f32 %v271, %v369
      %v405 = vmul.f32 %v360, %v369
      %v406 = vmul.f32 %v272, %v369
      %v407 = vmul.f32 %v273, %v369
      %v408 = vmul.f32 %v361, %v369
      %v409 = vmul.f32 %v274, %v369
      %v410 = vmul.f32 %v275, %v369
      %v411 = vmul.f32 %v362, %v369
      %v412 = vmul.f32 %v276, %v369
      %v413 = vmul.f32 %v277, %v369
      %v414 = vmul.f32 %v363, %v369
      %v415 = vmul.f32 %v278, %v369
      %v416 = vmul.f32 %v279, %v369
      %v417 = vmul.f32 %v364, %v369
      %vm466 = vcmask 1046528
      %v467 = vrot.slane %v370, 1
      %v468 = vrot.slane %v371, 1
      %v469 = vsel %vm466, %v467, %v468
      %v470 = vrot.slane %v372, 1
      %v471 = vsel %vm466, %v468, %v470
      %v472 = vrot.slane %v373, 1
      %v473 = vrot.slane %v374, 1
      %v474 = vsel %vm466, %v472, %v473
      %v475 = vrot.slane %v375, 1
      %v476 = vsel %vm466, %v473, %v475
      %v477 = vrot.slane %v376, 1
      %v478 = vrot.slane %v377, 1
      %v479 = vsel %vm466, %v477, %v478
      %v480 = vrot.slane %v378, 1
      %v481 = vsel %vm466, %v478, %v480
      %v482 = vrot.slane %v379, 1
      %v483 = vrot.slane %v380, 1
      %v484 = vsel %vm466, %v482, %v483
      %v485 = vrot.slane %v381, 1
      %v486 = vsel %vm466, %v483, %v485
      %v487 = vrot.slane %v382, 1
      %v488 = vrot.slane %v383, 1
      %v489 = vsel %vm466, %v487, %v488
      %v490 = vrot.slane %v384, 1
      %v491 = vsel %vm466, %v488, %v490
      %v492 = vrot.slane %v385, 1
      %v493 = vrot.slane %v386, 1
      %v494 = vsel %vm466, %v492, %v493
      %v495 = vrot.slane %v387, 1
      %v496 = vsel %vm466, %v493, %v495
      %v497 = vrot.slane %v388, 1
      %v498 = vrot.slane %v389, 1
      %v499 = vsel %vm466, %v497, %v498
      %v500 = vrot.slane %v390, 1
      %v501 = vsel %vm466, %v498, %v500
      %v502 = vrot.slane %v391, 1
      %v503 = vrot.slane %v392, 1
      %v504 = vsel %vm466, %v502, %v503
      %v505 = vrot.slane %v393, 1
      %v506 = vsel %vm466, %v503, %v505
      %v507 = vrot.slane %v394, 1
      %v508 = vrot.slane %v395, 1
      %v509 = vsel %vm466, %v507, %v508
      %v510 = vrot.slane %v396, 1
      %v511 = vsel %vm466, %v508, %v510
      %v512 = vrot.slane %v397, 1
      %v513 = vrot.slane %v398, 1
      %v514 = vsel %vm466, %v512, %v513
      %v515 = vrot.slane %v399, 1
      %v516 = vsel %vm466, %v513, %v515
      %v517 = vrot.slane %v400, 1
      %v518 = vrot.slane %v401, 1
      %v519 = vsel %vm466, %v517, %v518
      %v520 = vrot.slane %v402, 1
      %v521 = vsel %vm466, %v518, %v520
      %v522 = vrot.slane %v403, 1
      %v523 = vrot.slane %v404, 1
      %v524 = vsel %vm466, %v522, %v523
      %v525 = vrot.slane %v405, 1
      %v526 = vsel %vm466, %v523, %v525
      %v527 = vrot.slane %v406, 1
      %v528 = vrot.slane %v407, 1
      %v529 = vsel %vm466, %v527, %v528
      %v530 = vrot.slane %v408, 1
      %v531 = vsel %vm466, %v528, %v530
      %v532 = vrot.slane %v409, 1
      %v533 = vrot.slane %v410, 1
      %v534 = vsel %vm466, %v532, %v533
      %v535 = vrot.slane %v411, 1
      %v536 = vsel %vm466, %v533, %v535
      %v537 = vrot.slane %v412, 1
      %v538 = vrot.slane %v413, 1
      %v539 = vsel %vm466, %v537, %v538
      %v540 = vrot.slane %v414, 1
      %v541 = vsel %vm466, %v538, %v540
      %v542 = vrot.slane %v415, 1
      %v543 = vrot.slane %v416, 1
      %v544 = vsel %vm466, %v542, %v543
      %v545 = vrot.slane %v417, 1
      %v546 = vsel %vm466, %v543, %v545
      %v579 = vadd.f32 %v317, %v469
      %v580 = vadd.f32 %v318, %v471
      %v581 = vadd.f32 %v319, %v474
      %v582 = vadd.f32 %v320, %v476
      %v583 = vadd.f32 %v321, %v479
      %v584 = vadd.f32 %v322, %v481
      %v585 = vadd.f32 %v323, %v484
      %v586 = vadd.f32 %v324, %v486
      %v587 = vadd.f32 %v325, %v489
      %v588 = vadd.f32 %v326, %v491
      %v589 = vadd.f32 %v327, %v494
      %v590 = vadd.f32 %v328, %v496
      %v591 = vadd.f32 %v329, %v499
      %v592 = vadd.f32 %v330, %v501
      %v593 = vadd.f32 %v331, %v504
      %v594 = vadd.f32 %v332, %v506
      %v595 = vadd.f32 %v333, %v509
      %v596 = vadd.f32 %v334, %v511
      %v597 = vadd.f32 %v335, %v514
      %v598 = vadd.f32 %v336, %v516
      %v599 = vadd.f32 %v337, %v519
      %v600 = vadd.f32 %v338, %v521
      %v601 = vadd.f32 %v339, %v524
      %v602 = vadd.f32 %v340, %v526
      %v603 = vadd.f32 %v341, %v529
      %v604 = vadd.f32 %v342, %v531
      %v605 = vadd.f32 %v343, %v534
      %v606 = vadd.f32 %v344, %v536
      %v607 = vadd.f32 %v345, %v539
      %v608 = vadd.f32 %v346, %v541
      %v609 = vadd.f32 %v347, %v544
      %v610 = vadd.f32 %v348, %v546
      %v611 = vld [vmem:[%s1 + $0x2] sm:$0x1]
      %v612 = vlaneseq
      %v613 = vshrl.u32 %v612, 7
      %v614 = vsub.s32 0, %v613
      %v615 = vrot.slane %v611, %v614
      %v616 = vmul.f32 %v248, %v615
      %v617 = vmul.f32 %v249, %v615
      %v618 = vmul.f32 %v349, %v615
      %v619 = vmul.f32 %v250, %v615
      %v620 = vmul.f32 %v251, %v615
      %v621 = vmul.f32 %v350, %v615
      %v622 = vmul.f32 %v252, %v615
      %v623 = vmul.f32 %v253, %v615
      %v624 = vmul.f32 %v351, %v615
      %v625 = vmul.f32 %v254, %v615
      %v626 = vmul.f32 %v255, %v615
      %v627 = vmul.f32 %v352, %v615
      %v628 = vmul.f32 %v256, %v615
      %v629 = vmul.f32 %v257, %v615
      %v630 = vmul.f32 %v353, %v615
      %v631 = vmul.f32 %v258, %v615
      %v632 = vmul.f32 %v259, %v615
      %v633 = vmul.f32 %v354, %v615
      %v634 = vmul.f32 %v260, %v615
      %v635 = vmul.f32 %v261, %v615
      %v636 = vmul.f32 %v355, %v615
      %v637 = vmul.f32 %v262, %v615
      %v638 = vmul.f32 %v263, %v615
      %v639 = vmul.f32 %v356, %v615
      %v640 = vmul.f32 %v264, %v615
      %v641 = vmul.f32 %v265, %v615
      %v642 = vmul.f32 %v357, %v615
      %v643 = vmul.f32 %v266, %v615
      %v644 = vmul.f32 %v267, %v615
      %v645 = vmul.f32 %v358, %v615
      %v646 = vmul.f32 %v268, %v615
      %v647 = vmul.f32 %v269, %v615
      %v648 = vmul.f32 %v359, %v615
      %v649 = vmul.f32 %v270, %v615
      %v650 = vmul.f32 %v271, %v615
      %v651 = vmul.f32 %v360, %v615
      %v652 = vmul.f32 %v272, %v615
      %v653 = vmul.f32 %v273, %v615
      %v654 = vmul.f32 %v361, %v615
      %v655 = vmul.f32 %v274, %v615
      %v656 = vmul.f32 %v275, %v615
      %v657 = vmul.f32 %v362, %v615
      %v658 = vmul.f32 %v276, %v615
      %v659 = vmul.f32 %v277, %v615
      %v660 = vmul.f32 %v363, %v615
      %v661 = vmul.f32 %v278, %v615
      %v662 = vmul.f32 %v279, %v615
      %v663 = vmul.f32 %v364, %v615
      %vm712 = vcmask 1045504
      %v713 = vrot.slane %v616, 2
      %v714 = vrot.slane %v617, 2
      %v715 = vsel %vm712, %v713, %v714
      %v716 = vrot.slane %v618, 2
      %v717 = vsel %vm712, %v714, %v716
      %v718 = vrot.slane %v619, 2
      %v719 = vrot.slane %v620, 2
      %v720 = vsel %vm712, %v718, %v719
      %v721 = vrot.slane %v621, 2
      %v722 = vsel %vm712, %v719, %v721
      %v723 = vrot.slane %v622, 2
      %v724 = vrot.slane %v623, 2
      %v725 = vsel %vm712, %v723, %v724
      %v726 = vrot.slane %v624, 2
      %v727 = vsel %vm712, %v724, %v726
      %v728 = vrot.slane %v625, 2
      %v729 = vrot.slane %v626, 2
      %v730 = vsel %vm712, %v728, %v729
      %v731 = vrot.slane %v627, 2
      %v732 = vsel %vm712, %v729, %v731
      %v733 = vrot.slane %v628, 2
      %v734 = vrot.slane %v629, 2
      %v735 = vsel %vm712, %v733, %v734
      %v736 = vrot.slane %v630, 2
      %v737 = vsel %vm712, %v734, %v736
      %v738 = vrot.slane %v631, 2
      %v739 = vrot.slane %v632, 2
      %v740 = vsel %vm712, %v738, %v739
      %v741 = vrot.slane %v633, 2
      %v742 = vsel %vm712, %v739, %v741
      %v743 = vrot.slane %v634, 2
      %v744 = vrot.slane %v635, 2
      %v745 = vsel %vm712, %v743, %v744
      %v746 = vrot.slane %v636, 2
      %v747 = vsel %vm712, %v744, %v746
      %v748 = vrot.slane %v637, 2
      %v749 = vrot.slane %v638, 2
      %v750 = vsel %vm712, %v748, %v749
      %v751 = vrot.slane %v639, 2
      %v752 = vsel %vm712, %v749, %v751
      %v753 = vrot.slane %v640, 2
      %v754 = vrot.slane %v641, 2
      %v755 = vsel %vm712, %v753, %v754
      %v756 = vrot.slane %v642, 2
      %v757 = vsel %vm712, %v754, %v756
      %v758 = vrot.slane %v643, 2
      %v759 = vrot.slane %v644, 2
      %v760 = vsel %vm712, %v758, %v759
      %v761 = vrot.slane %v645, 2
      %v762 = vsel %vm712, %v759, %v761
      %v763 = vrot.slane %v646, 2
      %v764 = vrot.slane %v647, 2
      %v765 = vsel %vm712, %v763, %v764
      %v766 = vrot.slane %v648, 2
      %v767 = vsel %vm712, %v764, %v766
      %v768 = vrot.slane %v649, 2
      %v769 = vrot.slane %v650, 2
      %v770 = vsel %vm712, %v768, %v769
      %v771 = vrot.slane %v651, 2
      %v772 = vsel %vm712, %v769, %v771
      %v773 = vrot.slane %v652, 2
      %v774 = vrot.slane %v653, 2
      %v775 = vsel %vm712, %v773, %v774
      %v776 = vrot.slane %v654, 2
      %v777 = vsel %vm712, %v774, %v776
      %v778 = vrot.slane %v655, 2
      %v779 = vrot.slane %v656, 2
      %v780 = vsel %vm712, %v778, %v779
      %v781 = vrot.slane %v657, 2
      %v782 = vsel %vm712, %v779, %v781
      %v783 = vrot.slane %v658, 2
      %v784 = vrot.slane %v659, 2
      %v785 = vsel %vm712, %v783, %v784
      %v786 = vrot.slane %v660, 2
      %v787 = vsel %vm712, %v784, %v786
      %v788 = vrot.slane %v661, 2
      %v789 = vrot.slane %v662, 2
      %v790 = vsel %vm712, %v788, %v789
      %v791 = vrot.slane %v663, 2
      %v792 = vsel %vm712, %v789, %v791
      %v825 = vadd.f32 %v579, %v715
      %v826 = vadd.f32 %v580, %v717
      %v827 = vadd.f32 %v581, %v720
      %v828 = vadd.f32 %v582, %v722
      %v829 = vadd.f32 %v583, %v725
      %v830 = vadd.f32 %v584, %v727
      %v831 = vadd.f32 %v585, %v730
      %v832 = vadd.f32 %v586, %v732
      %v833 = vadd.f32 %v587, %v735
      %v834 = vadd.f32 %v588, %v737
      %v835 = vadd.f32 %v589, %v740
      %v836 = vadd.f32 %v590, %v742
      %v837 = vadd.f32 %v591, %v745
      %v838 = vadd.f32 %v592, %v747
      %v839 = vadd.f32 %v593, %v750
      %v840 = vadd.f32 %v594, %v752
      %v841 = vadd.f32 %v595, %v755
      %v842 = vadd.f32 %v596, %v757
      %v843 = vadd.f32 %v597, %v760
      %v844 = vadd.f32 %v598, %v762
      %v845 = vadd.f32 %v599, %v765
      %v846 = vadd.f32 %v600, %v767
      %v847 = vadd.f32 %v601, %v770
      %v848 = vadd.f32 %v602, %v772
      %v849 = vadd.f32 %v603, %v775
      %v850 = vadd.f32 %v604, %v777
      %v851 = vadd.f32 %v605, %v780
      %v852 = vadd.f32 %v606, %v782
      %v853 = vadd.f32 %v607, %v785
      %v854 = vadd.f32 %v608, %v787
      %v855 = vadd.f32 %v609, %v790
      %v856 = vadd.f32 %v610, %v792
      %s857 = sadd.s32 %s196, 1
      %s858 = smul.u32 %s857, 3
      %s859 = smul.addr %s858, 4
      %s860 = scalar_lea.vmem %s184, %s859
      %v861 = vld [vmem:[%s860] sm:$0xf]
      %v862 = vld [vmem:[%s860 + $0x4] sm:$0xf]
      %v863 = vld [vmem:[%s860 + $0x8] sm:$0x1]
      %v864 = vld [vmem:[%s860 + $0xc] sm:$0xf]
      %v865 = vld [vmem:[%s860 + $0x10] sm:$0xf]
      %v866 = vld [vmem:[%s860 + $0x14] sm:$0x1]
      %v867 = vld [vmem:[%s860 + $0x18] sm:$0xf]
      %v868 = vld [vmem:[%s860 + $0x1c] sm:$0xf]
      %v869 = vld [vmem:[%s860 + $0x20] sm:$0x1]
      %v870 = vld [vmem:[%s860 + $0x24] sm:$0xf]
      %v871 = vld [vmem:[%s860 + $0x28] sm:$0xf]
      %v872 = vld [vmem:[%s860 + $0x2c] sm:$0x1]
      %v873 = vld [vmem:[%s860 + $0x30] sm:$0xf]
      %v874 = vld [vmem:[%s860 + $0x34] sm:$0xf]
      %v875 = vld [vmem:[%s860 + $0x38] sm:$0x1]
      %v876 = vld [vmem:[%s860 + $0x3c] sm:$0xf]
      %v877 = vld [vmem:[%s860 + $0x40] sm:$0xf]
      %v878 = vld [vmem:[%s860 + $0x44] sm:$0x1]
      %v879 = vld [vmem:[%s860 + $0x48] sm:$0xf]
      %v880 = vld [vmem:[%s860 + $0x4c] sm:$0xf]
      %v881 = vld [vmem:[%s860 + $0x50] sm:$0x1]
      %v882 = vld [vmem:[%s860 + $0x54] sm:$0xf]
      %v883 = vld [vmem:[%s860 + $0x58] sm:$0xf]
      %v884 = vld [vmem:[%s860 + $0x5c] sm:$0x1]
      %v885 = vld [vmem:[%s860 + $0x60] sm:$0xf]
      %v886 = vld [vmem:[%s860 + $0x64] sm:$0xf]
      %v887 = vld [vmem:[%s860 + $0x68] sm:$0x1]
      %v888 = vld [vmem:[%s860 + $0x6c] sm:$0xf]
      %v889 = vld [vmem:[%s860 + $0x70] sm:$0xf]
      %v890 = vld [vmem:[%s860 + $0x74] sm:$0x1]
      %v891 = vld [vmem:[%s860 + $0x78] sm:$0xf]
      %v892 = vld [vmem:[%s860 + $0x7c] sm:$0xf]
      %v893 = vld [vmem:[%s860 + $0x80] sm:$0x1]
      %v894 = vld [vmem:[%s860 + $0x84] sm:$0xf]
      %v895 = vld [vmem:[%s860 + $0x88] sm:$0xf]
      %v896 = vld [vmem:[%s860 + $0x8c] sm:$0x1]
      %v897 = vld [vmem:[%s860 + $0x90] sm:$0xf]
      %v898 = vld [vmem:[%s860 + $0x94] sm:$0xf]
      %v899 = vld [vmem:[%s860 + $0x98] sm:$0x1]
      %v900 = vld [vmem:[%s860 + $0x9c] sm:$0xf]
      %v901 = vld [vmem:[%s860 + $0xa0] sm:$0xf]
      %v902 = vld [vmem:[%s860 + $0xa4] sm:$0x1]
      %v903 = vld [vmem:[%s860 + $0xa8] sm:$0xf]
      %v904 = vld [vmem:[%s860 + $0xac] sm:$0xf]
      %v905 = vld [vmem:[%s860 + $0xb0] sm:$0x1]
      %v906 = vld [vmem:[%s860 + $0xb4] sm:$0xf]
      %v907 = vld [vmem:[%s860 + $0xb8] sm:$0xf]
      %v908 = vld [vmem:[%s860 + $0xbc] sm:$0x1]
      %v909 = vunpack.c.l.bf16 %v861
      %v910 = vunpack.c.l.bf16 %v862
      %v911 = vunpack.c.l.bf16 %v864
      %v912 = vunpack.c.l.bf16 %v865
      %v913 = vunpack.c.l.bf16 %v867
      %v914 = vunpack.c.l.bf16 %v868
      %v915 = vunpack.c.l.bf16 %v870
      %v916 = vunpack.c.l.bf16 %v871
      %v917 = vunpack.c.l.bf16 %v873
      %v918 = vunpack.c.l.bf16 %v874
      %v919 = vunpack.c.l.bf16 %v876
      %v920 = vunpack.c.l.bf16 %v877
      %v921 = vunpack.c.l.bf16 %v879
      %v922 = vunpack.c.l.bf16 %v880
      %v923 = vunpack.c.l.bf16 %v882
      %v924 = vunpack.c.l.bf16 %v883
      %v925 = vunpack.c.l.bf16 %v885
      %v926 = vunpack.c.l.bf16 %v886
      %v927 = vunpack.c.l.bf16 %v888
      %v928 = vunpack.c.l.bf16 %v889
      %v929 = vunpack.c.l.bf16 %v891
      %v930 = vunpack.c.l.bf16 %v892
      %v931 = vunpack.c.l.bf16 %v894
      %v932 = vunpack.c.l.bf16 %v895
      %v933 = vunpack.c.l.bf16 %v897
      %v934 = vunpack.c.l.bf16 %v898
      %v935 = vunpack.c.l.bf16 %v900
      %v936 = vunpack.c.l.bf16 %v901
      %v937 = vunpack.c.l.bf16 %v903
      %v938 = vunpack.c.l.bf16 %v904
      %v939 = vunpack.c.l.bf16 %v906
      %v940 = vunpack.c.l.bf16 %v907
      %v941 = vld [vmem:[%s1 + $0x3] sm:$0x1]
      %v942 = vlaneseq
      %v943 = vshrl.u32 %v942, 7
      %v944 = vsub.s32 0, %v943
      %v945 = vrot.slane %v941, %v944
      %v946 = vmul.f32 %v909, %v945
      %v947 = vmul.f32 %v910, %v945
      %v948 = vmul.f32 %v911, %v945
      %v949 = vmul.f32 %v912, %v945
      %v950 = vmul.f32 %v913, %v945
      %v951 = vmul.f32 %v914, %v945
      %v952 = vmul.f32 %v915, %v945
      %v953 = vmul.f32 %v916, %v945
      %v954 = vmul.f32 %v917, %v945
      %v955 = vmul.f32 %v918, %v945
      %v956 = vmul.f32 %v919, %v945
      %v957 = vmul.f32 %v920, %v945
      %v958 = vmul.f32 %v921, %v945
      %v959 = vmul.f32 %v922, %v945
      %v960 = vmul.f32 %v923, %v945
      %v961 = vmul.f32 %v924, %v945
      %v962 = vmul.f32 %v925, %v945
      %v963 = vmul.f32 %v926, %v945
      %v964 = vmul.f32 %v927, %v945
      %v965 = vmul.f32 %v928, %v945
      %v966 = vmul.f32 %v929, %v945
      %v967 = vmul.f32 %v930, %v945
      %v968 = vmul.f32 %v931, %v945
      %v969 = vmul.f32 %v932, %v945
      %v970 = vmul.f32 %v933, %v945
      %v971 = vmul.f32 %v934, %v945
      %v972 = vmul.f32 %v935, %v945
      %v973 = vmul.f32 %v936, %v945
      %v974 = vmul.f32 %v937, %v945
      %v975 = vmul.f32 %v938, %v945
      %v976 = vmul.f32 %v939, %v945
      %v977 = vmul.f32 %v940, %v945
      %v978 = vadd.f32 %v825, %v946
      %v979 = vadd.f32 %v826, %v947
      %v980 = vadd.f32 %v827, %v948
      %v981 = vadd.f32 %v828, %v949
      %v982 = vadd.f32 %v829, %v950
      %v983 = vadd.f32 %v830, %v951
      %v984 = vadd.f32 %v831, %v952
      %v985 = vadd.f32 %v832, %v953
      %v986 = vadd.f32 %v833, %v954
      %v987 = vadd.f32 %v834, %v955
      %v988 = vadd.f32 %v835, %v956
      %v989 = vadd.f32 %v836, %v957
      %v990 = vadd.f32 %v837, %v958
      %v991 = vadd.f32 %v838, %v959
      %v992 = vadd.f32 %v839, %v960
      %v993 = vadd.f32 %v840, %v961
      %v994 = vadd.f32 %v841, %v962
      %v995 = vadd.f32 %v842, %v963
      %v996 = vadd.f32 %v843, %v964
      %v997 = vadd.f32 %v844, %v965
      %v998 = vadd.f32 %v845, %v966
      %v999 = vadd.f32 %v846, %v967
      %v1000 = vadd.f32 %v847, %v968
      %v1001 = vadd.f32 %v848, %v969
      %v1002 = vadd.f32 %v849, %v970
      %v1003 = vadd.f32 %v850, %v971
      %v1004 = vadd.f32 %v851, %v972
      %v1005 = vadd.f32 %v852, %v973
      %v1006 = vadd.f32 %v853, %v974
      %v1007 = vadd.f32 %v854, %v975
      %v1008 = vadd.f32 %v855, %v976
      %v1009 = vadd.f32 %v856, %v977
      %v1010 = vunpack.c.l.bf16 %v863
      %v1011 = vunpack.c.l.bf16 %v866
      %v1012 = vunpack.c.l.bf16 %v869
      %v1013 = vunpack.c.l.bf16 %v872
      %v1014 = vunpack.c.l.bf16 %v875
      %v1015 = vunpack.c.l.bf16 %v878
      %v1016 = vunpack.c.l.bf16 %v881
      %v1017 = vunpack.c.l.bf16 %v884
      %v1018 = vunpack.c.l.bf16 %v887
      %v1019 = vunpack.c.l.bf16 %v890
      %v1020 = vunpack.c.l.bf16 %v893
      %v1021 = vunpack.c.l.bf16 %v896
      %v1022 = vunpack.c.l.bf16 %v899
      %v1023 = vunpack.c.l.bf16 %v902
      %v1024 = vunpack.c.l.bf16 %v905
      %v1025 = vunpack.c.l.bf16 %v908
      %v1026 = vld [vmem:[%s1 + $0x4] sm:$0x1]
      %v1027 = vlaneseq
      %v1028 = vshrl.u32 %v1027, 7
      %v1029 = vsub.s32 0, %v1028
      %v1030 = vrot.slane %v1026, %v1029
      %v1031 = vmul.f32 %v909, %v1030
      %v1032 = vmul.f32 %v910, %v1030
      %v1033 = vmul.f32 %v1010, %v1030
      %v1034 = vmul.f32 %v911, %v1030
      %v1035 = vmul.f32 %v912, %v1030
      %v1036 = vmul.f32 %v1011, %v1030
      %v1037 = vmul.f32 %v913, %v1030
      %v1038 = vmul.f32 %v914, %v1030
      %v1039 = vmul.f32 %v1012, %v1030
      %v1040 = vmul.f32 %v915, %v1030
      %v1041 = vmul.f32 %v916, %v1030
      %v1042 = vmul.f32 %v1013, %v1030
      %v1043 = vmul.f32 %v917, %v1030
      %v1044 = vmul.f32 %v918, %v1030
      %v1045 = vmul.f32 %v1014, %v1030
      %v1046 = vmul.f32 %v919, %v1030
      %v1047 = vmul.f32 %v920, %v1030
      %v1048 = vmul.f32 %v1015, %v1030
      %v1049 = vmul.f32 %v921, %v1030
      %v1050 = vmul.f32 %v922, %v1030
      %v1051 = vmul.f32 %v1016, %v1030
      %v1052 = vmul.f32 %v923, %v1030
      %v1053 = vmul.f32 %v924, %v1030
      %v1054 = vmul.f32 %v1017, %v1030
      %v1055 = vmul.f32 %v925, %v1030
      %v1056 = vmul.f32 %v926, %v1030
      %v1057 = vmul.f32 %v1018, %v1030
      %v1058 = vmul.f32 %v927, %v1030
      %v1059 = vmul.f32 %v928, %v1030
      %v1060 = vmul.f32 %v1019, %v1030
      %v1061 = vmul.f32 %v929, %v1030
      %v1062 = vmul.f32 %v930, %v1030
      %v1063 = vmul.f32 %v1020, %v1030
      %v1064 = vmul.f32 %v931, %v1030
      %v1065 = vmul.f32 %v932, %v1030
      %v1066 = vmul.f32 %v1021, %v1030
      %v1067 = vmul.f32 %v933, %v1030
      %v1068 = vmul.f32 %v934, %v1030
      %v1069 = vmul.f32 %v1022, %v1030
      %v1070 = vmul.f32 %v935, %v1030
      %v1071 = vmul.f32 %v936, %v1030
      %v1072 = vmul.f32 %v1023, %v1030
      %v1073 = vmul.f32 %v937, %v1030
      %v1074 = vmul.f32 %v938, %v1030
      %v1075 = vmul.f32 %v1024, %v1030
      %v1076 = vmul.f32 %v939, %v1030
      %v1077 = vmul.f32 %v940, %v1030
      %v1078 = vmul.f32 %v1025, %v1030
      %v1127 = vrot.slane %v1031, 1
      %v1128 = vrot.slane %v1032, 1
      %v1129 = vsel %vm466, %v1127, %v1128
      %v1130 = vrot.slane %v1033, 1
      %v1131 = vsel %vm466, %v1128, %v1130
      %v1132 = vrot.slane %v1034, 1
      %v1133 = vrot.slane %v1035, 1
      %v1134 = vsel %vm466, %v1132, %v1133
      %v1135 = vrot.slane %v1036, 1
      %v1136 = vsel %vm466, %v1133, %v1135
      %v1137 = vrot.slane %v1037, 1
      %v1138 = vrot.slane %v1038, 1
      %v1139 = vsel %vm466, %v1137, %v1138
      %v1140 = vrot.slane %v1039, 1
      %v1141 = vsel %vm466, %v1138, %v1140
      %v1142 = vrot.slane %v1040, 1
      %v1143 = vrot.slane %v1041, 1
      %v1144 = vsel %vm466, %v1142, %v1143
      %v1145 = vrot.slane %v1042, 1
      %v1146 = vsel %vm466, %v1143, %v1145
      %v1147 = vrot.slane %v1043, 1
      %v1148 = vrot.slane %v1044, 1
      %v1149 = vsel %vm466, %v1147, %v1148
      %v1150 = vrot.slane %v1045, 1
      %v1151 = vsel %vm466, %v1148, %v1150
      %v1152 = vrot.slane %v1046, 1
      %v1153 = vrot.slane %v1047, 1
      %v1154 = vsel %vm466, %v1152, %v1153
      %v1155 = vrot.slane %v1048, 1
      %v1156 = vsel %vm466, %v1153, %v1155
      %v1157 = vrot.slane %v1049, 1
      %v1158 = vrot.slane %v1050, 1
      %v1159 = vsel %vm466, %v1157, %v1158
      %v1160 = vrot.slane %v1051, 1
      %v1161 = vsel %vm466, %v1158, %v1160
      %v1162 = vrot.slane %v1052, 1
      %v1163 = vrot.slane %v1053, 1
      %v1164 = vsel %vm466, %v1162, %v1163
      %v1165 = vrot.slane %v1054, 1
      %v1166 = vsel %vm466, %v1163, %v1165
      %v1167 = vrot.slane %v1055, 1
      %v1168 = vrot.slane %v1056, 1
      %v1169 = vsel %vm466, %v1167, %v1168
      %v1170 = vrot.slane %v1057, 1
      %v1171 = vsel %vm466, %v1168, %v1170
      %v1172 = vrot.slane %v1058, 1
      %v1173 = vrot.slane %v1059, 1
      %v1174 = vsel %vm466, %v1172, %v1173
      %v1175 = vrot.slane %v1060, 1
      %v1176 = vsel %vm466, %v1173, %v1175
      %v1177 = vrot.slane %v1061, 1
      %v1178 = vrot.slane %v1062, 1
      %v1179 = vsel %vm466, %v1177, %v1178
      %v1180 = vrot.slane %v1063, 1
      %v1181 = vsel %vm466, %v1178, %v1180
      %v1182 = vrot.slane %v1064, 1
      %v1183 = vrot.slane %v1065, 1
      %v1184 = vsel %vm466, %v1182, %v1183
      %v1185 = vrot.slane %v1066, 1
      %v1186 = vsel %vm466, %v1183, %v1185
      %v1187 = vrot.slane %v1067, 1
      %v1188 = vrot.slane %v1068, 1
      %v1189 = vsel %vm466, %v1187, %v1188
      %v1190 = vrot.slane %v1069, 1
      %v1191 = vsel %vm466, %v1188, %v1190
      %v1192 = vrot.slane %v1070, 1
      %v1193 = vrot.slane %v1071, 1
      %v1194 = vsel %vm466, %v1192, %v1193
      %v1195 = vrot.slane %v1072, 1
      %v1196 = vsel %vm466, %v1193, %v1195
      %v1197 = vrot.slane %v1073, 1
      %v1198 = vrot.slane %v1074, 1
      %v1199 = vsel %vm466, %v1197, %v1198
      %v1200 = vrot.slane %v1075, 1
      %v1201 = vsel %vm466, %v1198, %v1200
      %v1202 = vrot.slane %v1076, 1
      %v1203 = vrot.slane %v1077, 1
      %v1204 = vsel %vm466, %v1202, %v1203
      %v1205 = vrot.slane %v1078, 1
      %v1206 = vsel %vm466, %v1203, %v1205
      %v1239 = vadd.f32 %v978, %v1129
      %v1240 = vadd.f32 %v979, %v1131
      %v1241 = vadd.f32 %v980, %v1134
      %v1242 = vadd.f32 %v981, %v1136
      %v1243 = vadd.f32 %v982, %v1139
      %v1244 = vadd.f32 %v983, %v1141
      %v1245 = vadd.f32 %v984, %v1144
      %v1246 = vadd.f32 %v985, %v1146
      %v1247 = vadd.f32 %v986, %v1149
      %v1248 = vadd.f32 %v987, %v1151
      %v1249 = vadd.f32 %v988, %v1154
      %v1250 = vadd.f32 %v989, %v1156
      %v1251 = vadd.f32 %v990, %v1159
      %v1252 = vadd.f32 %v991, %v1161
      %v1253 = vadd.f32 %v992, %v1164
      %v1254 = vadd.f32 %v993, %v1166
      %v1255 = vadd.f32 %v994, %v1169
      %v1256 = vadd.f32 %v995, %v1171
      %v1257 = vadd.f32 %v996, %v1174
      %v1258 = vadd.f32 %v997, %v1176
      %v1259 = vadd.f32 %v998, %v1179
      %v1260 = vadd.f32 %v999, %v1181
      %v1261 = vadd.f32 %v1000, %v1184
      %v1262 = vadd.f32 %v1001, %v1186
      %v1263 = vadd.f32 %v1002, %v1189
      %v1264 = vadd.f32 %v1003, %v1191
      %v1265 = vadd.f32 %v1004, %v1194
      %v1266 = vadd.f32 %v1005, %v1196
      %v1267 = vadd.f32 %v1006, %v1199
      %v1268 = vadd.f32 %v1007, %v1201
      %v1269 = vadd.f32 %v1008, %v1204
      %v1270 = vadd.f32 %v1009, %v1206
      %v1271 = vld [vmem:[%s1 + $0x5] sm:$0x1]
      %v1272 = vlaneseq
      %v1273 = vshrl.u32 %v1272, 7
      %v1274 = vsub.s32 0, %v1273
      %v1275 = vrot.slane %v1271, %v1274
      %v1276 = vmul.f32 %v909, %v1275
      %v1277 = vmul.f32 %v910, %v1275
      %v1278 = vmul.f32 %v1010, %v1275
      %v1279 = vmul.f32 %v911, %v1275
      %v1280 = vmul.f32 %v912, %v1275
      %v1281 = vmul.f32 %v1011, %v1275
      %v1282 = vmul.f32 %v913, %v1275
      %v1283 = vmul.f32 %v914, %v1275
      %v1284 = vmul.f32 %v1012, %v1275
      %v1285 = vmul.f32 %v915, %v1275
      %v1286 = vmul.f32 %v916, %v1275
      %v1287 = vmul.f32 %v1013, %v1275
      %v1288 = vmul.f32 %v917, %v1275
      %v1289 = vmul.f32 %v918, %v1275
      %v1290 = vmul.f32 %v1014, %v1275
      %v1291 = vmul.f32 %v919, %v1275
      %v1292 = vmul.f32 %v920, %v1275
      %v1293 = vmul.f32 %v1015, %v1275
      %v1294 = vmul.f32 %v921, %v1275
      %v1295 = vmul.f32 %v922, %v1275
      %v1296 = vmul.f32 %v1016, %v1275
      %v1297 = vmul.f32 %v923, %v1275
      %v1298 = vmul.f32 %v924, %v1275
      %v1299 = vmul.f32 %v1017, %v1275
      %v1300 = vmul.f32 %v925, %v1275
      %v1301 = vmul.f32 %v926, %v1275
      %v1302 = vmul.f32 %v1018, %v1275
      %v1303 = vmul.f32 %v927, %v1275
      %v1304 = vmul.f32 %v928, %v1275
      %v1305 = vmul.f32 %v1019, %v1275
      %v1306 = vmul.f32 %v929, %v1275
      %v1307 = vmul.f32 %v930, %v1275
      %v1308 = vmul.f32 %v1020, %v1275
      %v1309 = vmul.f32 %v931, %v1275
      %v1310 = vmul.f32 %v932, %v1275
      %v1311 = vmul.f32 %v1021, %v1275
      %v1312 = vmul.f32 %v933, %v1275
      %v1313 = vmul.f32 %v934, %v1275
      %v1314 = vmul.f32 %v1022, %v1275
      %v1315 = vmul.f32 %v935, %v1275
      %v1316 = vmul.f32 %v936, %v1275
      %v1317 = vmul.f32 %v1023, %v1275
      %v1318 = vmul.f32 %v937, %v1275
      %v1319 = vmul.f32 %v938, %v1275
      %v1320 = vmul.f32 %v1024, %v1275
      %v1321 = vmul.f32 %v939, %v1275
      %v1322 = vmul.f32 %v940, %v1275
      %v1323 = vmul.f32 %v1025, %v1275
      %v1372 = vrot.slane %v1276, 2
      %v1373 = vrot.slane %v1277, 2
      %v1374 = vsel %vm712, %v1372, %v1373
      %v1375 = vrot.slane %v1278, 2
      %v1376 = vsel %vm712, %v1373, %v1375
      %v1377 = vrot.slane %v1279, 2
      %v1378 = vrot.slane %v1280, 2
      %v1379 = vsel %vm712, %v1377, %v1378
      %v1380 = vrot.slane %v1281, 2
      %v1381 = vsel %vm712, %v1378, %v1380
      %v1382 = vrot.slane %v1282, 2
      %v1383 = vrot.slane %v1283, 2
      %v1384 = vsel %vm712, %v1382, %v1383
      %v1385 = vrot.slane %v1284, 2
      %v1386 = vsel %vm712, %v1383, %v1385
      %v1387 = vrot.slane %v1285, 2
      %v1388 = vrot.slane %v1286, 2
      %v1389 = vsel %vm712, %v1387, %v1388
      %v1390 = vrot.slane %v1287, 2
      %v1391 = vsel %vm712, %v1388, %v1390
      %v1392 = vrot.slane %v1288, 2
      %v1393 = vrot.slane %v1289, 2
      %v1394 = vsel %vm712, %v1392, %v1393
      %v1395 = vrot.slane %v1290, 2
      %v1396 = vsel %vm712, %v1393, %v1395
      %v1397 = vrot.slane %v1291, 2
      %v1398 = vrot.slane %v1292, 2
      %v1399 = vsel %vm712, %v1397, %v1398
      %v1400 = vrot.slane %v1293, 2
      %v1401 = vsel %vm712, %v1398, %v1400
      %v1402 = vrot.slane %v1294, 2
      %v1403 = vrot.slane %v1295, 2
      %v1404 = vsel %vm712, %v1402, %v1403
      %v1405 = vrot.slane %v1296, 2
      %v1406 = vsel %vm712, %v1403, %v1405
      %v1407 = vrot.slane %v1297, 2
      %v1408 = vrot.slane %v1298, 2
      %v1409 = vsel %vm712, %v1407, %v1408
      %v1410 = vrot.slane %v1299, 2
      %v1411 = vsel %vm712, %v1408, %v1410
      %v1412 = vrot.slane %v1300, 2
      %v1413 = vrot.slane %v1301, 2
      %v1414 = vsel %vm712, %v1412, %v1413
      %v1415 = vrot.slane %v1302, 2
      %v1416 = vsel %vm712, %v1413, %v1415
      %v1417 = vrot.slane %v1303, 2
      %v1418 = vrot.slane %v1304, 2
      %v1419 = vsel %vm712, %v1417, %v1418
      %v1420 = vrot.slane %v1305, 2
      %v1421 = vsel %vm712, %v1418, %v1420
      %v1422 = vrot.slane %v1306, 2
      %v1423 = vrot.slane %v1307, 2
      %v1424 = vsel %vm712, %v1422, %v1423
      %v1425 = vrot.slane %v1308, 2
      %v1426 = vsel %vm712, %v1423, %v1425
      %v1427 = vrot.slane %v1309, 2
      %v1428 = vrot.slane %v1310, 2
      %v1429 = vsel %vm712, %v1427, %v1428
      %v1430 = vrot.slane %v1311, 2
      %v1431 = vsel %vm712, %v1428, %v1430
      %v1432 = vrot.slane %v1312, 2
      %v1433 = vrot.slane %v1313, 2
      %v1434 = vsel %vm712, %v1432, %v1433
      %v1435 = vrot.slane %v1314, 2
      %v1436 = vsel %vm712, %v1433, %v1435
      %v1437 = vrot.slane %v1315, 2
      %v1438 = vrot.slane %v1316, 2
      %v1439 = vsel %vm712, %v1437, %v1438
      %v1440 = vrot.slane %v1317, 2
      %v1441 = vsel %vm712, %v1438, %v1440
      %v1442 = vrot.slane %v1318, 2
      %v1443 = vrot.slane %v1319, 2
      %v1444 = vsel %vm712, %v1442, %v1443
      %v1445 = vrot.slane %v1320, 2
      %v1446 = vsel %vm712, %v1443, %v1445
      %v1447 = vrot.slane %v1321, 2
      %v1448 = vrot.slane %v1322, 2
      %v1449 = vsel %vm712, %v1447, %v1448
      %v1450 = vrot.slane %v1323, 2
      %v1451 = vsel %vm712, %v1448, %v1450
      %v1484 = vadd.f32 %v1239, %v1374
      %v1485 = vadd.f32 %v1240, %v1376
      %v1486 = vadd.f32 %v1241, %v1379
      %v1487 = vadd.f32 %v1242, %v1381
      %v1488 = vadd.f32 %v1243, %v1384
      %v1489 = vadd.f32 %v1244, %v1386
      %v1490 = vadd.f32 %v1245, %v1389
      %v1491 = vadd.f32 %v1246, %v1391
      %v1492 = vadd.f32 %v1247, %v1394
      %v1493 = vadd.f32 %v1248, %v1396
      %v1494 = vadd.f32 %v1249, %v1399
      %v1495 = vadd.f32 %v1250, %v1401
      %v1496 = vadd.f32 %v1251, %v1404
      %v1497 = vadd.f32 %v1252, %v1406
      %v1498 = vadd.f32 %v1253, %v1409
      %v1499 = vadd.f32 %v1254, %v1411
      %v1500 = vadd.f32 %v1255, %v1414
      %v1501 = vadd.f32 %v1256, %v1416
      %v1502 = vadd.f32 %v1257, %v1419
      %v1503 = vadd.f32 %v1258, %v1421
      %v1504 = vadd.f32 %v1259, %v1424
      %v1505 = vadd.f32 %v1260, %v1426
      %v1506 = vadd.f32 %v1261, %v1429
      %v1507 = vadd.f32 %v1262, %v1431
      %v1508 = vadd.f32 %v1263, %v1434
      %v1509 = vadd.f32 %v1264, %v1436
      %v1510 = vadd.f32 %v1265, %v1439
      %v1511 = vadd.f32 %v1266, %v1441
      %v1512 = vadd.f32 %v1267, %v1444
      %v1513 = vadd.f32 %v1268, %v1446
      %v1514 = vadd.f32 %v1269, %v1449
      %v1515 = vadd.f32 %v1270, %v1451
      %s1516 = sadd.s32 %s196, 2
      %s1517 = smul.u32 %s1516, 3
      %s1518 = smul.addr %s1517, 4
      %s1519 = scalar_lea.vmem %s184, %s1518
      %v1520 = vld [vmem:[%s1519] sm:$0xf]
      %v1521 = vld [vmem:[%s1519 + $0x4] sm:$0xf]
      %v1522 = vld [vmem:[%s1519 + $0x8] sm:$0x1]
      %v1523 = vld [vmem:[%s1519 + $0xc] sm:$0xf]
      %v1524 = vld [vmem:[%s1519 + $0x10] sm:$0xf]
      %v1525 = vld [vmem:[%s1519 + $0x14] sm:$0x1]
      %v1526 = vld [vmem:[%s1519 + $0x18] sm:$0xf]
      %v1527 = vld [vmem:[%s1519 + $0x1c] sm:$0xf]
      %v1528 = vld [vmem:[%s1519 + $0x20] sm:$0x1]
      %v1529 = vld [vmem:[%s1519 + $0x24] sm:$0xf]
      %v1530 = vld [vmem:[%s1519 + $0x28] sm:$0xf]
      %v1531 = vld [vmem:[%s1519 + $0x2c] sm:$0x1]
      %v1532 = vld [vmem:[%s1519 + $0x30] sm:$0xf]
      %v1533 = vld [vmem:[%s1519 + $0x34] sm:$0xf]
      %v1534 = vld [vmem:[%s1519 + $0x38] sm:$0x1]
      %v1535 = vld [vmem:[%s1519 + $0x3c] sm:$0xf]
      %v1536 = vld [vmem:[%s1519 + $0x40] sm:$0xf]
      %v1537 = vld [vmem:[%s1519 + $0x44] sm:$0x1]
      %v1538 = vld [vmem:[%s1519 + $0x48] sm:$0xf]
      %v1539 = vld [vmem:[%s1519 + $0x4c] sm:$0xf]
      %v1540 = vld [vmem:[%s1519 + $0x50] sm:$0x1]
      %v1541 = vld [vmem:[%s1519 + $0x54] sm:$0xf]
      %v1542 = vld [vmem:[%s1519 + $0x58] sm:$0xf]
      %v1543 = vld [vmem:[%s1519 + $0x5c] sm:$0x1]
      %v1544 = vld [vmem:[%s1519 + $0x60] sm:$0xf]
      %v1545 = vld [vmem:[%s1519 + $0x64] sm:$0xf]
      %v1546 = vld [vmem:[%s1519 + $0x68] sm:$0x1]
      %v1547 = vld [vmem:[%s1519 + $0x6c] sm:$0xf]
      %v1548 = vld [vmem:[%s1519 + $0x70] sm:$0xf]
      %v1549 = vld [vmem:[%s1519 + $0x74] sm:$0x1]
      %v1550 = vld [vmem:[%s1519 + $0x78] sm:$0xf]
      %v1551 = vld [vmem:[%s1519 + $0x7c] sm:$0xf]
      %v1552 = vld [vmem:[%s1519 + $0x80] sm:$0x1]
      %v1553 = vld [vmem:[%s1519 + $0x84] sm:$0xf]
      %v1554 = vld [vmem:[%s1519 + $0x88] sm:$0xf]
      %v1555 = vld [vmem:[%s1519 + $0x8c] sm:$0x1]
      %v1556 = vld [vmem:[%s1519 + $0x90] sm:$0xf]
      %v1557 = vld [vmem:[%s1519 + $0x94] sm:$0xf]
      %v1558 = vld [vmem:[%s1519 + $0x98] sm:$0x1]
      %v1559 = vld [vmem:[%s1519 + $0x9c] sm:$0xf]
      %v1560 = vld [vmem:[%s1519 + $0xa0] sm:$0xf]
      %v1561 = vld [vmem:[%s1519 + $0xa4] sm:$0x1]
      %v1562 = vld [vmem:[%s1519 + $0xa8] sm:$0xf]
      %v1563 = vld [vmem:[%s1519 + $0xac] sm:$0xf]
      %v1564 = vld [vmem:[%s1519 + $0xb0] sm:$0x1]
      %v1565 = vld [vmem:[%s1519 + $0xb4] sm:$0xf]
      %v1566 = vld [vmem:[%s1519 + $0xb8] sm:$0xf]
      %v1567 = vld [vmem:[%s1519 + $0xbc] sm:$0x1]
      %v1568 = vunpack.c.l.bf16 %v1520
      %v1569 = vunpack.c.l.bf16 %v1521
      %v1570 = vunpack.c.l.bf16 %v1523
      %v1571 = vunpack.c.l.bf16 %v1524
      %v1572 = vunpack.c.l.bf16 %v1526
      %v1573 = vunpack.c.l.bf16 %v1527
      %v1574 = vunpack.c.l.bf16 %v1529
      %v1575 = vunpack.c.l.bf16 %v1530
      %v1576 = vunpack.c.l.bf16 %v1532
      %v1577 = vunpack.c.l.bf16 %v1533
      %v1578 = vunpack.c.l.bf16 %v1535
      %v1579 = vunpack.c.l.bf16 %v1536
      %v1580 = vunpack.c.l.bf16 %v1538
      %v1581 = vunpack.c.l.bf16 %v1539
      %v1582 = vunpack.c.l.bf16 %v1541
      %v1583 = vunpack.c.l.bf16 %v1542
      %v1584 = vunpack.c.l.bf16 %v1544
      %v1585 = vunpack.c.l.bf16 %v1545
      %v1586 = vunpack.c.l.bf16 %v1547
      %v1587 = vunpack.c.l.bf16 %v1548
      %v1588 = vunpack.c.l.bf16 %v1550
      %v1589 = vunpack.c.l.bf16 %v1551
      %v1590 = vunpack.c.l.bf16 %v1553
      %v1591 = vunpack.c.l.bf16 %v1554
      %v1592 = vunpack.c.l.bf16 %v1556
      %v1593 = vunpack.c.l.bf16 %v1557
      %v1594 = vunpack.c.l.bf16 %v1559
      %v1595 = vunpack.c.l.bf16 %v1560
      %v1596 = vunpack.c.l.bf16 %v1562
      %v1597 = vunpack.c.l.bf16 %v1563
      %v1598 = vunpack.c.l.bf16 %v1565
      %v1599 = vunpack.c.l.bf16 %v1566
      %v1600 = vld [vmem:[%s1 + $0x6] sm:$0x1]
      %v1601 = vlaneseq
      %v1602 = vshrl.u32 %v1601, 7
      %v1603 = vsub.s32 0, %v1602
      %v1604 = vrot.slane %v1600, %v1603
      %v1605 = vmul.f32 %v1568, %v1604
      %v1606 = vmul.f32 %v1569, %v1604
      %v1607 = vmul.f32 %v1570, %v1604
      %v1608 = vmul.f32 %v1571, %v1604
      %v1609 = vmul.f32 %v1572, %v1604
      %v1610 = vmul.f32 %v1573, %v1604
      %v1611 = vmul.f32 %v1574, %v1604
      %v1612 = vmul.f32 %v1575, %v1604
      %v1613 = vmul.f32 %v1576, %v1604
      %v1614 = vmul.f32 %v1577, %v1604
      %v1615 = vmul.f32 %v1578, %v1604
      %v1616 = vmul.f32 %v1579, %v1604
      %v1617 = vmul.f32 %v1580, %v1604
      %v1618 = vmul.f32 %v1581, %v1604
      %v1619 = vmul.f32 %v1582, %v1604
      %v1620 = vmul.f32 %v1583, %v1604
      %v1621 = vmul.f32 %v1584, %v1604
      %v1622 = vmul.f32 %v1585, %v1604
      %v1623 = vmul.f32 %v1586, %v1604
      %v1624 = vmul.f32 %v1587, %v1604
      %v1625 = vmul.f32 %v1588, %v1604
      %v1626 = vmul.f32 %v1589, %v1604
      %v1627 = vmul.f32 %v1590, %v1604
      %v1628 = vmul.f32 %v1591, %v1604
      %v1629 = vmul.f32 %v1592, %v1604
      %v1630 = vmul.f32 %v1593, %v1604
      %v1631 = vmul.f32 %v1594, %v1604
      %v1632 = vmul.f32 %v1595, %v1604
      %v1633 = vmul.f32 %v1596, %v1604
      %v1634 = vmul.f32 %v1597, %v1604
      %v1635 = vmul.f32 %v1598, %v1604
      %v1636 = vmul.f32 %v1599, %v1604
      %v1637 = vadd.f32 %v1484, %v1605
      %v1638 = vadd.f32 %v1485, %v1606
      %v1639 = vadd.f32 %v1486, %v1607
      %v1640 = vadd.f32 %v1487, %v1608
      %v1641 = vadd.f32 %v1488, %v1609
      %v1642 = vadd.f32 %v1489, %v1610
      %v1643 = vadd.f32 %v1490, %v1611
      %v1644 = vadd.f32 %v1491, %v1612
      %v1645 = vadd.f32 %v1492, %v1613
      %v1646 = vadd.f32 %v1493, %v1614
      %v1647 = vadd.f32 %v1494, %v1615
      %v1648 = vadd.f32 %v1495, %v1616
      %v1649 = vadd.f32 %v1496, %v1617
      %v1650 = vadd.f32 %v1497, %v1618
      %v1651 = vadd.f32 %v1498, %v1619
      %v1652 = vadd.f32 %v1499, %v1620
      %v1653 = vadd.f32 %v1500, %v1621
      %v1654 = vadd.f32 %v1501, %v1622
      %v1655 = vadd.f32 %v1502, %v1623
      %v1656 = vadd.f32 %v1503, %v1624
      %v1657 = vadd.f32 %v1504, %v1625
      %v1658 = vadd.f32 %v1505, %v1626
      %v1659 = vadd.f32 %v1506, %v1627
      %v1660 = vadd.f32 %v1507, %v1628
      %v1661 = vadd.f32 %v1508, %v1629
      %v1662 = vadd.f32 %v1509, %v1630
      %v1663 = vadd.f32 %v1510, %v1631
      %v1664 = vadd.f32 %v1511, %v1632
      %v1665 = vadd.f32 %v1512, %v1633
      %v1666 = vadd.f32 %v1513, %v1634
      %v1667 = vadd.f32 %v1514, %v1635
      %v1668 = vadd.f32 %v1515, %v1636
      %v1669 = vunpack.c.l.bf16 %v1522
      %v1670 = vunpack.c.l.bf16 %v1525
      %v1671 = vunpack.c.l.bf16 %v1528
      %v1672 = vunpack.c.l.bf16 %v1531
      %v1673 = vunpack.c.l.bf16 %v1534
      %v1674 = vunpack.c.l.bf16 %v1537
      %v1675 = vunpack.c.l.bf16 %v1540
      %v1676 = vunpack.c.l.bf16 %v1543
      %v1677 = vunpack.c.l.bf16 %v1546
      %v1678 = vunpack.c.l.bf16 %v1549
      %v1679 = vunpack.c.l.bf16 %v1552
      %v1680 = vunpack.c.l.bf16 %v1555
      %v1681 = vunpack.c.l.bf16 %v1558
      %v1682 = vunpack.c.l.bf16 %v1561
      %v1683 = vunpack.c.l.bf16 %v1564
      %v1684 = vunpack.c.l.bf16 %v1567
      %v1685 = vld [vmem:[%s1 + $0x7] sm:$0x1]
      %v1686 = vlaneseq
      %v1687 = vshrl.u32 %v1686, 7
      %v1688 = vsub.s32 0, %v1687
      %v1689 = vrot.slane %v1685, %v1688
      %v1690 = vmul.f32 %v1568, %v1689
      %v1691 = vmul.f32 %v1569, %v1689
      %v1692 = vmul.f32 %v1669, %v1689
      %v1693 = vmul.f32 %v1570, %v1689
      %v1694 = vmul.f32 %v1571, %v1689
      %v1695 = vmul.f32 %v1670, %v1689
      %v1696 = vmul.f32 %v1572, %v1689
      %v1697 = vmul.f32 %v1573, %v1689
      %v1698 = vmul.f32 %v1671, %v1689
      %v1699 = vmul.f32 %v1574, %v1689
      %v1700 = vmul.f32 %v1575, %v1689
      %v1701 = vmul.f32 %v1672, %v1689
      %v1702 = vmul.f32 %v1576, %v1689
      %v1703 = vmul.f32 %v1577, %v1689
      %v1704 = vmul.f32 %v1673, %v1689
      %v1705 = vmul.f32 %v1578, %v1689
      %v1706 = vmul.f32 %v1579, %v1689
      %v1707 = vmul.f32 %v1674, %v1689
      %v1708 = vmul.f32 %v1580, %v1689
      %v1709 = vmul.f32 %v1581, %v1689
      %v1710 = vmul.f32 %v1675, %v1689
      %v1711 = vmul.f32 %v1582, %v1689
      %v1712 = vmul.f32 %v1583, %v1689
      %v1713 = vmul.f32 %v1676, %v1689
      %v1714 = vmul.f32 %v1584, %v1689
      %v1715 = vmul.f32 %v1585, %v1689
      %v1716 = vmul.f32 %v1677, %v1689
      %v1717 = vmul.f32 %v1586, %v1689
      %v1718 = vmul.f32 %v1587, %v1689
      %v1719 = vmul.f32 %v1678, %v1689
      %v1720 = vmul.f32 %v1588, %v1689
      %v1721 = vmul.f32 %v1589, %v1689
      %v1722 = vmul.f32 %v1679, %v1689
      %v1723 = vmul.f32 %v1590, %v1689
      %v1724 = vmul.f32 %v1591, %v1689
      %v1725 = vmul.f32 %v1680, %v1689
      %v1726 = vmul.f32 %v1592, %v1689
      %v1727 = vmul.f32 %v1593, %v1689
      %v1728 = vmul.f32 %v1681, %v1689
      %v1729 = vmul.f32 %v1594, %v1689
      %v1730 = vmul.f32 %v1595, %v1689
      %v1731 = vmul.f32 %v1682, %v1689
      %v1732 = vmul.f32 %v1596, %v1689
      %v1733 = vmul.f32 %v1597, %v1689
      %v1734 = vmul.f32 %v1683, %v1689
      %v1735 = vmul.f32 %v1598, %v1689
      %v1736 = vmul.f32 %v1599, %v1689
      %v1737 = vmul.f32 %v1684, %v1689
      %v1786 = vrot.slane %v1690, 1
      %v1787 = vrot.slane %v1691, 1
      %v1788 = vsel %vm466, %v1786, %v1787
      %v1789 = vrot.slane %v1692, 1
      %v1790 = vsel %vm466, %v1787, %v1789
      %v1791 = vrot.slane %v1693, 1
      %v1792 = vrot.slane %v1694, 1
      %v1793 = vsel %vm466, %v1791, %v1792
      %v1794 = vrot.slane %v1695, 1
      %v1795 = vsel %vm466, %v1792, %v1794
      %v1796 = vrot.slane %v1696, 1
      %v1797 = vrot.slane %v1697, 1
      %v1798 = vsel %vm466, %v1796, %v1797
      %v1799 = vrot.slane %v1698, 1
      %v1800 = vsel %vm466, %v1797, %v1799
      %v1801 = vrot.slane %v1699, 1
      %v1802 = vrot.slane %v1700, 1
      %v1803 = vsel %vm466, %v1801, %v1802
      %v1804 = vrot.slane %v1701, 1
      %v1805 = vsel %vm466, %v1802, %v1804
      %v1806 = vrot.slane %v1702, 1
      %v1807 = vrot.slane %v1703, 1
      %v1808 = vsel %vm466, %v1806, %v1807
      %v1809 = vrot.slane %v1704, 1
      %v1810 = vsel %vm466, %v1807, %v1809
      %v1811 = vrot.slane %v1705, 1
      %v1812 = vrot.slane %v1706, 1
      %v1813 = vsel %vm466, %v1811, %v1812
      %v1814 = vrot.slane %v1707, 1
      %v1815 = vsel %vm466, %v1812, %v1814
      %v1816 = vrot.slane %v1708, 1
      %v1817 = vrot.slane %v1709, 1
      %v1818 = vsel %vm466, %v1816, %v1817
      %v1819 = vrot.slane %v1710, 1
      %v1820 = vsel %vm466, %v1817, %v1819
      %v1821 = vrot.slane %v1711, 1
      %v1822 = vrot.slane %v1712, 1
      %v1823 = vsel %vm466, %v1821, %v1822
      %v1824 = vrot.slane %v1713, 1
      %v1825 = vsel %vm466, %v1822, %v1824
      %v1826 = vrot.slane %v1714, 1
      %v1827 = vrot.slane %v1715, 1
      %v1828 = vsel %vm466, %v1826, %v1827
      %v1829 = vrot.slane %v1716, 1
      %v1830 = vsel %vm466, %v1827, %v1829
      %v1831 = vrot.slane %v1717, 1
      %v1832 = vrot.slane %v1718, 1
      %v1833 = vsel %vm466, %v1831, %v1832
      %v1834 = vrot.slane %v1719, 1
      %v1835 = vsel %vm466, %v1832, %v1834
      %v1836 = vrot.slane %v1720, 1
      %v1837 = vrot.slane %v1721, 1
      %v1838 = vsel %vm466, %v1836, %v1837
      %v1839 = vrot.slane %v1722, 1
      %v1840 = vsel %vm466, %v1837, %v1839
      %v1841 = vrot.slane %v1723, 1
      %v1842 = vrot.slane %v1724, 1
      %v1843 = vsel %vm466, %v1841, %v1842
      %v1844 = vrot.slane %v1725, 1
      %v1845 = vsel %vm466, %v1842, %v1844
      %v1846 = vrot.slane %v1726, 1
      %v1847 = vrot.slane %v1727, 1
      %v1848 = vsel %vm466, %v1846, %v1847
      %v1849 = vrot.slane %v1728, 1
      %v1850 = vsel %vm466, %v1847, %v1849
      %v1851 = vrot.slane %v1729, 1
      %v1852 = vrot.slane %v1730, 1
      %v1853 = vsel %vm466, %v1851, %v1852
      %v1854 = vrot.slane %v1731, 1
      %v1855 = vsel %vm466, %v1852, %v1854
      %v1856 = vrot.slane %v1732, 1
      %v1857 = vrot.slane %v1733, 1
      %v1858 = vsel %vm466, %v1856, %v1857
      %v1859 = vrot.slane %v1734, 1
      %v1860 = vsel %vm466, %v1857, %v1859
      %v1861 = vrot.slane %v1735, 1
      %v1862 = vrot.slane %v1736, 1
      %v1863 = vsel %vm466, %v1861, %v1862
      %v1864 = vrot.slane %v1737, 1
      %v1865 = vsel %vm466, %v1862, %v1864
      %v1898 = vadd.f32 %v1637, %v1788
      %v1899 = vadd.f32 %v1638, %v1790
      %v1900 = vadd.f32 %v1639, %v1793
      %v1901 = vadd.f32 %v1640, %v1795
      %v1902 = vadd.f32 %v1641, %v1798
      %v1903 = vadd.f32 %v1642, %v1800
      %v1904 = vadd.f32 %v1643, %v1803
      %v1905 = vadd.f32 %v1644, %v1805
      %v1906 = vadd.f32 %v1645, %v1808
      %v1907 = vadd.f32 %v1646, %v1810
      %v1908 = vadd.f32 %v1647, %v1813
      %v1909 = vadd.f32 %v1648, %v1815
      %v1910 = vadd.f32 %v1649, %v1818
      %v1911 = vadd.f32 %v1650, %v1820
      %v1912 = vadd.f32 %v1651, %v1823
      %v1913 = vadd.f32 %v1652, %v1825
      %v1914 = vadd.f32 %v1653, %v1828
      %v1915 = vadd.f32 %v1654, %v1830
      %v1916 = vadd.f32 %v1655, %v1833
      %v1917 = vadd.f32 %v1656, %v1835
      %v1918 = vadd.f32 %v1657, %v1838
      %v1919 = vadd.f32 %v1658, %v1840
      %v1920 = vadd.f32 %v1659, %v1843
      %v1921 = vadd.f32 %v1660, %v1845
      %v1922 = vadd.f32 %v1661, %v1848
      %v1923 = vadd.f32 %v1662, %v1850
      %v1924 = vadd.f32 %v1663, %v1853
      %v1925 = vadd.f32 %v1664, %v1855
      %v1926 = vadd.f32 %v1665, %v1858
      %v1927 = vadd.f32 %v1666, %v1860
      %v1928 = vadd.f32 %v1667, %v1863
      %v1929 = vadd.f32 %v1668, %v1865
      %v1930 = vld [vmem:[%s1 + $0x8] sm:$0x1]
      %v1931 = vlaneseq
      %v1932 = vshrl.u32 %v1931, 7
      %v1933 = vsub.s32 0, %v1932
      %v1934 = vrot.slane %v1930, %v1933
      %v1935 = vmul.f32 %v1568, %v1934
      %v1936 = vmul.f32 %v1569, %v1934
      %v1937 = vmul.f32 %v1669, %v1934
      %v1938 = vmul.f32 %v1570, %v1934
      %v1939 = vmul.f32 %v1571, %v1934
      %v1940 = vmul.f32 %v1670, %v1934
      %v1941 = vmul.f32 %v1572, %v1934
      %v1942 = vmul.f32 %v1573, %v1934
      %v1943 = vmul.f32 %v1671, %v1934
      %v1944 = vmul.f32 %v1574, %v1934
      %v1945 = vmul.f32 %v1575, %v1934
      %v1946 = vmul.f32 %v1672, %v1934
      %v1947 = vmul.f32 %v1576, %v1934
      %v1948 = vmul.f32 %v1577, %v1934
      %v1949 = vmul.f32 %v1673, %v1934
      %v1950 = vmul.f32 %v1578, %v1934
      %v1951 = vmul.f32 %v1579, %v1934
      %v1952 = vmul.f32 %v1674, %v1934
      %v1953 = vmul.f32 %v1580, %v1934
      %v1954 = vmul.f32 %v1581, %v1934
      %v1955 = vmul.f32 %v1675, %v1934
      %v1956 = vmul.f32 %v1582, %v1934
      %v1957 = vmul.f32 %v1583, %v1934
      %v1958 = vmul.f32 %v1676, %v1934
      %v1959 = vmul.f32 %v1584, %v1934
      %v1960 = vmul.f32 %v1585, %v1934
      %v1961 = vmul.f32 %v1677, %v1934
      %v1962 = vmul.f32 %v1586, %v1934
      %v1963 = vmul.f32 %v1587, %v1934
      %v1964 = vmul.f32 %v1678, %v1934
      %v1965 = vmul.f32 %v1588, %v1934
      %v1966 = vmul.f32 %v1589, %v1934
      %v1967 = vmul.f32 %v1679, %v1934
      %v1968 = vmul.f32 %v1590, %v1934
      %v1969 = vmul.f32 %v1591, %v1934
      %v1970 = vmul.f32 %v1680, %v1934
      %v1971 = vmul.f32 %v1592, %v1934
      %v1972 = vmul.f32 %v1593, %v1934
      %v1973 = vmul.f32 %v1681, %v1934
      %v1974 = vmul.f32 %v1594, %v1934
      %v1975 = vmul.f32 %v1595, %v1934
      %v1976 = vmul.f32 %v1682, %v1934
      %v1977 = vmul.f32 %v1596, %v1934
      %v1978 = vmul.f32 %v1597, %v1934
      %v1979 = vmul.f32 %v1683, %v1934
      %v1980 = vmul.f32 %v1598, %v1934
      %v1981 = vmul.f32 %v1599, %v1934
      %v1982 = vmul.f32 %v1684, %v1934
      %v2031 = vrot.slane %v1935, 2
      %v2032 = vrot.slane %v1936, 2
      %v2033 = vsel %vm712, %v2031, %v2032
      %v2034 = vrot.slane %v1937, 2
      %v2035 = vsel %vm712, %v2032, %v2034
      %v2036 = vrot.slane %v1938, 2
      %v2037 = vrot.slane %v1939, 2
      %v2038 = vsel %vm712, %v2036, %v2037
      %v2039 = vrot.slane %v1940, 2
      %v2040 = vsel %vm712, %v2037, %v2039
      %v2041 = vrot.slane %v1941, 2
      %v2042 = vrot.slane %v1942, 2
      %v2043 = vsel %vm712, %v2041, %v2042
      %v2044 = vrot.slane %v1943, 2
      %v2045 = vsel %vm712, %v2042, %v2044
      %v2046 = vrot.slane %v1944, 2
      %v2047 = vrot.slane %v1945, 2
      %v2048 = vsel %vm712, %v2046, %v2047
      %v2049 = vrot.slane %v1946, 2
      %v2050 = vsel %vm712, %v2047, %v2049
      %v2051 = vrot.slane %v1947, 2
      %v2052 = vrot.slane %v1948, 2
      %v2053 = vsel %vm712, %v2051, %v2052
      %v2054 = vrot.slane %v1949, 2
      %v2055 = vsel %vm712, %v2052, %v2054
      %v2056 = vrot.slane %v1950, 2
      %v2057 = vrot.slane %v1951, 2
      %v2058 = vsel %vm712, %v2056, %v2057
      %v2059 = vrot.slane %v1952, 2
      %v2060 = vsel %vm712, %v2057, %v2059
      %v2061 = vrot.slane %v1953, 2
      %v2062 = vrot.slane %v1954, 2
      %v2063 = vsel %vm712, %v2061, %v2062
      %v2064 = vrot.slane %v1955, 2
      %v2065 = vsel %vm712, %v2062, %v2064
      %v2066 = vrot.slane %v1956, 2
      %v2067 = vrot.slane %v1957, 2
      %v2068 = vsel %vm712, %v2066, %v2067
      %v2069 = vrot.slane %v1958, 2
      %v2070 = vsel %vm712, %v2067, %v2069
      %v2071 = vrot.slane %v1959, 2
      %v2072 = vrot.slane %v1960, 2
      %v2073 = vsel %vm712, %v2071, %v2072
      %v2074 = vrot.slane %v1961, 2
      %v2075 = vsel %vm712, %v2072, %v2074
      %v2076 = vrot.slane %v1962, 2
      %v2077 = vrot.slane %v1963, 2
      %v2078 = vsel %vm712, %v2076, %v2077
      %v2079 = vrot.slane %v1964, 2
      %v2080 = vsel %vm712, %v2077, %v2079
      %v2081 = vrot.slane %v1965, 2
      %v2082 = vrot.slane %v1966, 2
      %v2083 = vsel %vm712, %v2081, %v2082
      %v2084 = vrot.slane %v1967, 2
      %v2085 = vsel %vm712, %v2082, %v2084
      %v2086 = vrot.slane %v1968, 2
      %v2087 = vrot.slane %v1969, 2
      %v2088 = vsel %vm712, %v2086, %v2087
      %v2089 = vrot.slane %v1970, 2
      %v2090 = vsel %vm712, %v2087, %v2089
      %v2091 = vrot.slane %v1971, 2
      %v2092 = vrot.slane %v1972, 2
      %v2093 = vsel %vm712, %v2091, %v2092
      %v2094 = vrot.slane %v1973, 2
      %v2095 = vsel %vm712, %v2092, %v2094
      %v2096 = vrot.slane %v1974, 2
      %v2097 = vrot.slane %v1975, 2
      %v2098 = vsel %vm712, %v2096, %v2097
      %v2099 = vrot.slane %v1976, 2
      %v2100 = vsel %vm712, %v2097, %v2099
      %v2101 = vrot.slane %v1977, 2
      %v2102 = vrot.slane %v1978, 2
      %v2103 = vsel %vm712, %v2101, %v2102
      %v2104 = vrot.slane %v1979, 2
      %v2105 = vsel %vm712, %v2102, %v2104
      %v2106 = vrot.slane %v1980, 2
      %v2107 = vrot.slane %v1981, 2
      %v2108 = vsel %vm712, %v2106, %v2107
      %v2109 = vrot.slane %v1982, 2
      %v2110 = vsel %vm712, %v2107, %v2109
      %v2143 = vadd.f32 %v1898, %v2033
      %v2144 = vadd.f32 %v1899, %v2035
      %v2145 = vadd.f32 %v1900, %v2038
      %v2146 = vadd.f32 %v1901, %v2040
      %v2147 = vadd.f32 %v1902, %v2043
      %v2148 = vadd.f32 %v1903, %v2045
      %v2149 = vadd.f32 %v1904, %v2048
      %v2150 = vadd.f32 %v1905, %v2050
      %v2151 = vadd.f32 %v1906, %v2053
      %v2152 = vadd.f32 %v1907, %v2055
      %v2153 = vadd.f32 %v1908, %v2058
      %v2154 = vadd.f32 %v1909, %v2060
      %v2155 = vadd.f32 %v1910, %v2063
      %v2156 = vadd.f32 %v1911, %v2065
      %v2157 = vadd.f32 %v1912, %v2068
      %v2158 = vadd.f32 %v1913, %v2070
      %v2159 = vadd.f32 %v1914, %v2073
      %v2160 = vadd.f32 %v1915, %v2075
      %v2161 = vadd.f32 %v1916, %v2078
      %v2162 = vadd.f32 %v1917, %v2080
      %v2163 = vadd.f32 %v1918, %v2083
      %v2164 = vadd.f32 %v1919, %v2085
      %v2165 = vadd.f32 %v1920, %v2088
      %v2166 = vadd.f32 %v1921, %v2090
      %v2167 = vadd.f32 %v1922, %v2093
      %v2168 = vadd.f32 %v1923, %v2095
      %v2169 = vadd.f32 %v1924, %v2098
      %v2170 = vadd.f32 %v1925, %v2100
      %v2171 = vadd.f32 %v1926, %v2103
      %v2172 = vadd.f32 %v1927, %v2105
      %v2173 = vadd.f32 %v1928, %v2108
      %v2174 = vadd.f32 %v1929, %v2110
      %v2175 = vld [vmem:[%s2] sm:$0x1]
      %v2177 = vlaneseq
      %v2178 = vshrl.u32 %v2177, 7
      %v2179 = vsub.s32 0, %v2178
      %v2180 = vrot.slane %v2175, %v2179
      %v2182 = vadd.f32 %v2143, %v2180
      %v2183 = vadd.f32 %v2144, %v2180
      %v2184 = vadd.f32 %v2145, %v2180
      %v2185 = vadd.f32 %v2146, %v2180
      %v2186 = vadd.f32 %v2147, %v2180
      %v2187 = vadd.f32 %v2148, %v2180
      %v2188 = vadd.f32 %v2149, %v2180
      %v2189 = vadd.f32 %v2150, %v2180
      %v2190 = vadd.f32 %v2151, %v2180
      %v2191 = vadd.f32 %v2152, %v2180
      %v2192 = vadd.f32 %v2153, %v2180
      %v2193 = vadd.f32 %v2154, %v2180
      %v2194 = vadd.f32 %v2155, %v2180
      %v2195 = vadd.f32 %v2156, %v2180
      %v2196 = vadd.f32 %v2157, %v2180
      %v2197 = vadd.f32 %v2158, %v2180
      %v2198 = vadd.f32 %v2159, %v2180
      %v2199 = vadd.f32 %v2160, %v2180
      %v2200 = vadd.f32 %v2161, %v2180
      %v2201 = vadd.f32 %v2162, %v2180
      %v2202 = vadd.f32 %v2163, %v2180
      %v2203 = vadd.f32 %v2164, %v2180
      %v2204 = vadd.f32 %v2165, %v2180
      %v2205 = vadd.f32 %v2166, %v2180
      %v2206 = vadd.f32 %v2167, %v2180
      %v2207 = vadd.f32 %v2168, %v2180
      %v2208 = vadd.f32 %v2169, %v2180
      %v2209 = vadd.f32 %v2170, %v2180
      %v2210 = vadd.f32 %v2171, %v2180
      %v2211 = vadd.f32 %v2172, %v2180
      %v2212 = vadd.f32 %v2173, %v2180
      %v2213 = vadd.f32 %v2174, %v2180
      %v2214 = vmax.f32 %v2182, 0.0
      %v2215 = vmax.f32 %v2183, 0.0
      %v2216 = vmax.f32 %v2184, 0.0
      %v2217 = vmax.f32 %v2185, 0.0
      %v2218 = vmax.f32 %v2186, 0.0
      %v2219 = vmax.f32 %v2187, 0.0
      %v2220 = vmax.f32 %v2188, 0.0
      %v2221 = vmax.f32 %v2189, 0.0
      %v2222 = vmax.f32 %v2190, 0.0
      %v2223 = vmax.f32 %v2191, 0.0
      %v2224 = vmax.f32 %v2192, 0.0
      %v2225 = vmax.f32 %v2193, 0.0
      %v2226 = vmax.f32 %v2194, 0.0
      %v2227 = vmax.f32 %v2195, 0.0
      %v2228 = vmax.f32 %v2196, 0.0
      %v2229 = vmax.f32 %v2197, 0.0
      %v2230 = vmax.f32 %v2198, 0.0
      %v2231 = vmax.f32 %v2199, 0.0
      %v2232 = vmax.f32 %v2200, 0.0
      %v2233 = vmax.f32 %v2201, 0.0
      %v2234 = vmax.f32 %v2202, 0.0
      %v2235 = vmax.f32 %v2203, 0.0
      %v2236 = vmax.f32 %v2204, 0.0
      %v2237 = vmax.f32 %v2205, 0.0
      %v2238 = vmax.f32 %v2206, 0.0
      %v2239 = vmax.f32 %v2207, 0.0
      %v2240 = vmax.f32 %v2208, 0.0
      %v2241 = vmax.f32 %v2209, 0.0
      %v2242 = vmax.f32 %v2210, 0.0
      %v2243 = vmax.f32 %v2211, 0.0
      %v2244 = vmax.f32 %v2212, 0.0
      %v2245 = vmax.f32 %v2213, 0.0
      %v2246 = vmin.f32 %v2214, 6.0
      %v2247 = vmin.f32 %v2215, 6.0
      %v2248 = vmin.f32 %v2216, 6.0
      %v2249 = vmin.f32 %v2217, 6.0
      %v2250 = vmin.f32 %v2218, 6.0
      %v2251 = vmin.f32 %v2219, 6.0
      %v2252 = vmin.f32 %v2220, 6.0
      %v2253 = vmin.f32 %v2221, 6.0
      %v2254 = vmin.f32 %v2222, 6.0
      %v2255 = vmin.f32 %v2223, 6.0
      %v2256 = vmin.f32 %v2224, 6.0
      %v2257 = vmin.f32 %v2225, 6.0
      %v2258 = vmin.f32 %v2226, 6.0
      %v2259 = vmin.f32 %v2227, 6.0
      %v2260 = vmin.f32 %v2228, 6.0
      %v2261 = vmin.f32 %v2229, 6.0
      %v2262 = vmin.f32 %v2230, 6.0
      %v2263 = vmin.f32 %v2231, 6.0
      %v2264 = vmin.f32 %v2232, 6.0
      %v2265 = vmin.f32 %v2233, 6.0
      %v2266 = vmin.f32 %v2234, 6.0
      %v2267 = vmin.f32 %v2235, 6.0
      %v2268 = vmin.f32 %v2236, 6.0
      %v2269 = vmin.f32 %v2237, 6.0
      %v2270 = vmin.f32 %v2238, 6.0
      %v2271 = vmin.f32 %v2239, 6.0
      %v2272 = vmin.f32 %v2240, 6.0
      %v2273 = vmin.f32 %v2241, 6.0
      %v2274 = vmin.f32 %v2242, 6.0
      %v2275 = vmin.f32 %v2243, 6.0
      %v2276 = vmin.f32 %v2244, 6.0
      %v2277 = vmin.f32 %v2245, 6.0
      %v2278 = vpack.c.bf16 %v2247, %v2246
      %v2279 = vpack.c.bf16 %v2249, %v2248
      %v2280 = vpack.c.bf16 %v2251, %v2250
      %v2281 = vpack.c.bf16 %v2253, %v2252
      %v2282 = vpack.c.bf16 %v2255, %v2254
      %v2283 = vpack.c.bf16 %v2257, %v2256
      %v2284 = vpack.c.bf16 %v2259, %v2258
      %v2285 = vpack.c.bf16 %v2261, %v2260
      %v2286 = vpack.c.bf16 %v2263, %v2262
      %v2287 = vpack.c.bf16 %v2265, %v2264
      %v2288 = vpack.c.bf16 %v2267, %v2266
      %v2289 = vpack.c.bf16 %v2269, %v2268
      %v2290 = vpack.c.bf16 %v2271, %v2270
      %v2291 = vpack.c.bf16 %v2273, %v2272
      %v2292 = vpack.c.bf16 %v2275, %v2274
      %v2293 = vpack.c.bf16 %v2277, %v2276
      %v2310 = vunpack.c.l.b16 %v2278
      %v2311 = vunpack.c.h.b16 %v2278
      %v2312 = vunpack.c.l.b16 %v2279
      %v2313 = vunpack.c.h.b16 %v2279
      %v2314 = vunpack.c.l.b16 %v2280
      %v2315 = vunpack.c.h.b16 %v2280
      %v2316 = vunpack.c.l.b16 %v2281
      %v2317 = vunpack.c.h.b16 %v2281
      %v2318 = vunpack.c.l.b16 %v2282
      %v2319 = vunpack.c.h.b16 %v2282
      %v2320 = vunpack.c.l.b16 %v2283
      %v2321 = vunpack.c.h.b16 %v2283
      %v2322 = vunpack.c.l.b16 %v2284
      %v2323 = vunpack.c.h.b16 %v2284
      %v2324 = vunpack.c.l.b16 %v2285
      %v2325 = vunpack.c.h.b16 %v2285
      %v2326 = vunpack.c.l.b16 %v2286
      %v2327 = vunpack.c.h.b16 %v2286
      %v2328 = vunpack.c.l.b16 %v2287
      %v2329 = vunpack.c.h.b16 %v2287
      %v2330 = vunpack.c.l.b16 %v2288
      %v2331 = vunpack.c.h.b16 %v2288
      %v2332 = vunpack.c.l.b16 %v2289
      %v2333 = vunpack.c.h.b16 %v2289
      %v2334 = vunpack.c.l.b16 %v2290
      %v2335 = vunpack.c.h.b16 %v2290
      %v2336 = vunpack.c.l.b16 %v2291
      %v2337 = vunpack.c.h.b16 %v2291
      %v2338 = vunpack.c.l.b16 %v2292
      %v2339 = vunpack.c.h.b16 %v2292
      %v2340 = vunpack.c.l.b16 %v2293
      %v2341 = vunpack.c.h.b16 %v2293
      %v2342 = vpack.c.b16 %v2310, %v2310
      %v2343 = vpack.c.b16 %v2311, %v2311
      %v2344 = vpack.c.b16 %v2312, %v2312
      %v2345 = vpack.c.b16 %v2313, %v2313
      %v2346 = vpack.c.b16 %v2314, %v2314
      %v2347 = vpack.c.b16 %v2315, %v2315
      %v2348 = vpack.c.b16 %v2316, %v2316
      %v2349 = vpack.c.b16 %v2317, %v2317
      %v2350 = vpack.c.b16 %v2318, %v2318
      %v2351 = vpack.c.b16 %v2319, %v2319
      %v2352 = vpack.c.b16 %v2320, %v2320
      %v2353 = vpack.c.b16 %v2321, %v2321
      %v2354 = vpack.c.b16 %v2322, %v2322
      %v2355 = vpack.c.b16 %v2323, %v2323
      %v2356 = vpack.c.b16 %v2324, %v2324
      %v2357 = vpack.c.b16 %v2325, %v2325
      %v2358 = vpack.c.b16 %v2326, %v2326
      %v2359 = vpack.c.b16 %v2327, %v2327
      %v2360 = vpack.c.b16 %v2328, %v2328
      %v2361 = vpack.c.b16 %v2329, %v2329
      %v2362 = vpack.c.b16 %v2330, %v2330
      %v2363 = vpack.c.b16 %v2331, %v2331
      %v2364 = vpack.c.b16 %v2332, %v2332
      %v2365 = vpack.c.b16 %v2333, %v2333
      %v2366 = vpack.c.b16 %v2334, %v2334
      %v2367 = vpack.c.b16 %v2335, %v2335
      %v2368 = vpack.c.b16 %v2336, %v2336
      %v2369 = vpack.c.b16 %v2337, %v2337
      %v2370 = vpack.c.b16 %v2338, %v2338
      %v2371 = vpack.c.b16 %v2339, %v2339
      %v2372 = vpack.c.b16 %v2340, %v2340
      %v2373 = vpack.c.b16 %v2341, %v2341
      %vm2406 = vcmask 60416
      %2407 = vst.msk [vmem:[%s194] sm:$0xf] %vm2406, %v2342
      %2408 = vst.msk [vmem:[%s194 + $0x4] sm:$0xf] %vm2406, %v2343
      %2409 = vst.msk [vmem:[%s194 + $0x8] sm:$0xf] %vm2406, %v2344
      %2410 = vst.msk [vmem:[%s194 + $0xc] sm:$0xf] %vm2406, %v2345
      %2411 = vst.msk [vmem:[%s194 + $0x10] sm:$0xf] %vm2406, %v2346
      %2412 = vst.msk [vmem:[%s194 + $0x14] sm:$0xf] %vm2406, %v2347
      %2413 = vst.msk [vmem:[%s194 + $0x18] sm:$0xf] %vm2406, %v2348
      %2414 = vst.msk [vmem:[%s194 + $0x1c] sm:$0xf] %vm2406, %v2349
      %2415 = vst.msk [vmem:[%s194 + $0x20] sm:$0xf] %vm2406, %v2350
      %2416 = vst.msk [vmem:[%s194 + $0x24] sm:$0xf] %vm2406, %v2351
      %2417 = vst.msk [vmem:[%s194 + $0x28] sm:$0xf] %vm2406, %v2352
      %2418 = vst.msk [vmem:[%s194 + $0x2c] sm:$0xf] %vm2406, %v2353
      %2419 = vst.msk [vmem:[%s194 + $0x30] sm:$0xf] %vm2406, %v2354
      %2420 = vst.msk [vmem:[%s194 + $0x34] sm:$0xf] %vm2406, %v2355
      %2421 = vst.msk [vmem:[%s194 + $0x38] sm:$0xf] %vm2406, %v2356
      %2422 = vst.msk [vmem:[%s194 + $0x3c] sm:$0xf] %vm2406, %v2357
      %2423 = vst.msk [vmem:[%s194 + $0x40] sm:$0xf] %vm2406, %v2358
      %2424 = vst.msk [vmem:[%s194 + $0x44] sm:$0xf] %vm2406, %v2359
      %2425 = vst.msk [vmem:[%s194 + $0x48] sm:$0xf] %vm2406, %v2360
      %2426 = vst.msk [vmem:[%s194 + $0x4c] sm:$0xf] %vm2406, %v2361
      %2427 = vst.msk [vmem:[%s194 + $0x50] sm:$0xf] %vm2406, %v2362
      %2428 = vst.msk [vmem:[%s194 + $0x54] sm:$0xf] %vm2406, %v2363
      %2429 = vst.msk [vmem:[%s194 + $0x58] sm:$0xf] %vm2406, %v2364
      %2430 = vst.msk [vmem:[%s194 + $0x5c] sm:$0xf] %vm2406, %v2365
      %2431 = vst.msk [vmem:[%s194 + $0x60] sm:$0xf] %vm2406, %v2366
      %2432 = vst.msk [vmem:[%s194 + $0x64] sm:$0xf] %vm2406, %v2367
      %2433 = vst.msk [vmem:[%s194 + $0x68] sm:$0xf] %vm2406, %v2368
      %2434 = vst.msk [vmem:[%s194 + $0x6c] sm:$0xf] %vm2406, %v2369
      %2435 = vst.msk [vmem:[%s194 + $0x70] sm:$0xf] %vm2406, %v2370
      %2436 = vst.msk [vmem:[%s194 + $0x74] sm:$0xf] %vm2406, %v2371
      %2437 = vst.msk [vmem:[%s194 + $0x78] sm:$0xf] %vm2406, %v2372
      %2438 = vst.msk [vmem:[%s194 + $0x7c] sm:$0xf] %vm2406, %v2373
      %s2439 = smul.u32 16, %s19
      %p2440 = scmp.lt.s32.totalorder %s18, 1
      %s2441 = scalar_select %p2440, %s18, 1
      %p2442 = scmp.lt.s32.totalorder %s2439, 15
      %s2443 = scalar_select %p2442, %s2439, 15
      %s2444 = smul.addr %s2443, 2
      %s2445 = smul.addr %s2441, 32
      %s2446 = sadd.s32 %s2444, %s2445
      %s2447 = smul.addr %s2446, 4
      %s2448 = scalar_lea.vmem %s3, %s2447
      // Predicated region
      $region33: #{mobilenet_v2_forward.17} parent=31 // pred_check
        %p2449 = pneg %p114
      $region34: #{mobilenet_v2_forward.17} parent=31 // pred_check_branch
        %2451 = sbr.rel (%p2449) target = $region36
      $region35: #{mobilenet_v2_forward.17} parent=31 // pred_region
        %s2452 = smul.u32 16, %s19
      $region36: #{mobilenet_v2_forward.17} parent=31 // pred_fallthru
        _
    $region32: #{mobilenet_v2_forward.17} parent=5 // pred_fallthru
      _
    %p2453 = scmp.le.s32.totalorder 2, %s9
    // Predicated region
    $region37: #{mobilenet_v2_forward.17} parent=5 // pred_check
      %p2454 = pneg %p2453
    $region38: #{mobilenet_v2_forward.17} parent=5 // pred_check_branch
      %2456 = sbr.rel (%p2454) target = $region40
    $region39: #{mobilenet_v2_forward.17} parent=5 // pred_region
      %s2457 = ssub.s32 %s9, 2
      // Predicated region
      $region41: #{mobilenet_v2_forward.17} parent=39 // pred_check
        %p2458 = pneg %p120
      $region42: #{mobilenet_v2_forward.17} parent=39 // pred_check_branch
        %2460 = sbr.rel (%p2458) target = $region44
      $region43: #{mobilenet_v2_forward.17} parent=39 // pred_region
        %s2461 = smul.u32 16, %s21
        %p2462 = scmp.lt.s32.totalorder %s20, 1
        %s2463 = scalar_select %p2462, %s20, 1
        %p2464 = scmp.lt.s32.totalorder %s2461, 15
        %s2465 = scalar_select %p2464, %s2461, 15
        %s2466 = smul.addr %s2465, 2
        %s2467 = smul.addr %s2463, 32
        %s2468 = sadd.s32 %s2466, %s2467
        %s2469 = smul.addr %s2468, 4
        %s2470 = scalar_lea.vmem %s3, %s2469
      $region44: #{mobilenet_v2_forward.17} parent=39 // pred_fallthru
        _
    $region40: #{mobilenet_v2_forward.17} parent=5 // pred_fallthru
      _
  $region6: #{mobilenet_v2_forward.17} parent=0 // loop_footer
    %s13 = sadd.s32 1, %s9
  $region7: #{mobilenet_v2_forward.17} parent=0 // loop_footer_branch
    %8 = sbr.rel target = $region3
  $region8: #{mobilenet_v2_forward.17} parent=0 // loop_exit
    _

// kernel: mobilenet_v2_forward.21
$region0: #{mobilenet_v2_forward.21}
  #allocation0 [shape = 'u32[]', space=smem, size = 0x4, offset = 0x4, fixed_abs, tag = 'smem constant byte address 0x4 - core index']
  #allocation1 [shape = 'u32[144,128]{1,0:T(1,128)}', space=vmem, size = 0x12000, scoped, tag = 'internal scratch']
  %s0 = inlined_call_operand.vmem [shape: bf16[128,32], index: 0, kind: input, shape index: {}]
  %s1 = inlined_call_operand.vmem [shape: bf16[32,16], index: 1, kind: input, shape index: {}]
  %s2 = inlined_call_operand.vmem [shape: f32[1,16], index: 2, kind: input, shape index: {}]
  %s3 = inlined_call_operand.vmem [shape: bf16[128,16], index: 3, kind: output, shape index: {}]
  %s4 = sld [smem:[#allocation0]]
  $region22: #{mobilenet_v2_forward.21} parent=0
    _
  %s6 = ssub.s32 1, %s4
  %s7 = scalar_select 0, %s6, %s4
  // Predicated region
  $region2: #{mobilenet_v2_forward.21} parent=0 // pred_check
    _
  $region3: #{mobilenet_v2_forward.21} parent=0 // pred_check_branch
    %9 = sbr.rel (0) target = $region5
  $region4: #{mobilenet_v2_forward.21} parent=0 // pred_region
    _
  $region5: #{mobilenet_v2_forward.21} parent=0 // pred_fallthru
    _
  // Predicated region
  $region6: #{mobilenet_v2_forward.21} parent=0 // pred_check
    _
  $region7: #{mobilenet_v2_forward.21} parent=0 // pred_check_branch
    %11 = sbr.rel (0) target = $region9
  $region8: #{mobilenet_v2_forward.21} parent=0 // pred_region
    _
  $region9: #{mobilenet_v2_forward.21} parent=0 // pred_fallthru
    _
  // Predicated region
  $region10: #{mobilenet_v2_forward.21} parent=0 // pred_check
    _
  $region11: #{mobilenet_v2_forward.21} parent=0 // pred_check_branch
    %13 = sbr.rel (0) target = $region13
  $region12: #{mobilenet_v2_forward.21} parent=0 // pred_region
    _
  $region13: #{mobilenet_v2_forward.21} parent=0 // pred_fallthru
    _
  %v15 = vld [vmem:[%s0] sm:$0xf]
  %v16 = vld [vmem:[%s0 + $0x4] sm:$0xf]
  %v17 = vld [vmem:[%s0 + $0x8] sm:$0xf]
  %v18 = vld [vmem:[%s0 + $0xc] sm:$0xf]
  %v19 = vld [vmem:[%s0 + $0x10] sm:$0xf]
  %v20 = vld [vmem:[%s0 + $0x14] sm:$0xf]
  %v21 = vld [vmem:[%s0 + $0x18] sm:$0xf]
  %v22 = vld [vmem:[%s0 + $0x1c] sm:$0xf]
  %v23 = vld [vmem:[%s0 + $0x20] sm:$0xf]
  %v24 = vld [vmem:[%s0 + $0x24] sm:$0xf]
  %v25 = vld [vmem:[%s0 + $0x28] sm:$0xf]
  %v26 = vld [vmem:[%s0 + $0x2c] sm:$0xf]
  %v27 = vld [vmem:[%s0 + $0x30] sm:$0xf]
  %v28 = vld [vmem:[%s0 + $0x34] sm:$0xf]
  %v29 = vld [vmem:[%s0 + $0x38] sm:$0xf]
  %v30 = vld [vmem:[%s0 + $0x3c] sm:$0xf]
  %v31 = vld [vmem:[%s1] sm:$0xf]
  %v32 = vld [vmem:[%s1 + $0x4] sm:$0xf]
  %v33 = vld [vmem:[%s1 + $0x8] sm:$0xf]
  %v34 = vld [vmem:[%s1 + $0xc] sm:$0xf]
  %v35 = vld [vmem:[%s2] sm:$0x1]
  %v37 = vlaneseq
  %v38 = vshrl.u32 %v37, 7
  %v39 = vsub.s32 0, %v38
  %v40 = vrot.slane %v35, %v39
  %v58 = vunpack.c.l.b16 %v15
  %v59 = vunpack.c.l.b16 %v16
  %v60 = vunpack.c.l.b16 %v17
  %v61 = vunpack.c.l.b16 %v18
  %v62 = vunpack.c.l.b16 %v19
  %v63 = vunpack.c.l.b16 %v20
  %v64 = vunpack.c.l.b16 %v21
  %v65 = vunpack.c.l.b16 %v22
  %v66 = vunpack.c.l.b16 %v23
  %v67 = vunpack.c.l.b16 %v24
  %v68 = vunpack.c.l.b16 %v25
  %v69 = vunpack.c.l.b16 %v26
  %v70 = vunpack.c.l.b16 %v27
  %v71 = vunpack.c.l.b16 %v28
  %v72 = vunpack.c.l.b16 %v29
  %v73 = vunpack.c.l.b16 %v30
  %v74 = vpack.c.b16 %v59, %v58
  %v75 = vpack.c.b16 %v61, %v60
  %v76 = vpack.c.b16 %v63, %v62
  %v77 = vpack.c.b16 %v65, %v64
  %v78 = vpack.c.b16 %v67, %v66
  %v79 = vpack.c.b16 %v69, %v68
  %v80 = vpack.c.b16 %v71, %v70
  %v81 = vpack.c.b16 %v73, %v72
  %v86 = vunpack.c.l.b16 %v31
  %v87 = vunpack.c.l.b16 %v32
  %v88 = vunpack.c.l.b16 %v33
  %v89 = vunpack.c.l.b16 %v34
  %v90 = vpack.c.b16 %v87, %v86
  %v91 = vpack.c.b16 %v89, %v88
  %vm94 = vcmask 261120
  %v96 = vsel %vm94, %v74, 0
  %v99 = vsel %vm94, %v75, 0
  %v102 = vsel %vm94, %v76, 0
  %v105 = vsel %vm94, %v77, 0
  %v108 = vsel %vm94, %v78, 0
  %v111 = vsel %vm94, %v79, 0
  %v114 = vsel %vm94, %v80, 0
  %v117 = vsel %vm94, %v81, 0
  %119 = vmatprep.subr.bf16.mxu0 0
  %120 = vmatpush1.bf16.msra.mxu0 %v90
  %121 = vmatprep.subr.bf16.mxu0 0
  %122 = vmatpush1.bf16.msra.mxu0 %v91
  %123 = vmatprep.subr.bf16.mxu0 0
  %124 = vmatpush1.bf16.msra.mxu0 0
  %125 = vmatprep.subr.bf16.mxu0 0
  %126 = vmatpush1.bf16.msra.mxu0 0
  %127 = vmatprep.subr.bf16.mxu0 0
  %128 = vmatpush1.bf16.msra.mxu0 0
  %129 = vmatprep.subr.bf16.mxu0 0
  %130 = vmatpush1.bf16.msra.mxu0 0
  %131 = vmatprep.subr.bf16.mxu0 0
  %132 = vmatpush1.bf16.msra.mxu0 0
  %133 = vmatprep.subr.bf16.mxu0 0
  %134 = vmatpush1.bf16.msra.mxu0 0
  %135 = vmatprep.subr.bf16.mxu0 0
  %136 = vmatpush1.bf16.msra.mxu0 0
  %137 = vmatprep.subr.bf16.mxu0 0
  %138 = vmatpush1.bf16.msra.mxu0 0
  %139 = vmatprep.subr.bf16.mxu0 0
  %140 = vmatpush1.bf16.msra.mxu0 0
  %141 = vmatprep.subr.bf16.mxu0 0
  %142 = vmatpush1.bf16.msra.mxu0 0
  %143 = vmatprep.subr.bf16.mxu0 0
  %144 = vmatpush1.bf16.msra.mxu0 0
  %145 = vmatprep.subr.bf16.mxu0 0
  %146 = vmatpush1.bf16.msra.mxu0 0
  %147 = vmatprep.subr.bf16.mxu0 0
  %148 = vmatpush1.bf16.msra.mxu0 0
  %149 = vmatprep.subr.bf16.mxu0 0
  %150 = vmatpush1.bf16.msra.mxu0 0
  %151 = vmatprep.mubr.bf16.mxu0 0
  %152 = vmatmul.mubr.bf16.gmra.mrb[0].mxu0 %v96
  %v153 = vpop.f32.mrb[0].mxu0
  %v154 = vadd.f32 %v40, %v153
  %v155 = vpop.f32.mrb[0].mxu0
  %v156 = vpop.f32.mrb[0].mxu0
  %v157 = vadd.f32 %v40, %v156
  %v158 = vpop.f32.mrb[0].mxu0
  %159 = vmatprep.mubr.bf16.mxu0 0
  %160 = vmatmul.mubr.bf16.gmra.mrb[0].mxu0 %v99
  %v161 = vpop.f32.mrb[0].mxu0
  %v162 = vadd.f32 %v40, %v161
  %v163 = vpop.f32.mrb[0].mxu0
  %v164 = vpop.f32.mrb[0].mxu0
  %v165 = vadd.f32 %v40, %v164
  %v166 = vpop.f32.mrb[0].mxu0
  %167 = vmatprep.mubr.bf16.mxu0 0
  %168 = vmatmul.mubr.bf16.gmra.mrb[0].mxu0 %v102
  %v169 = vpop.f32.mrb[0].mxu0
  %v170 = vadd.f32 %v40, %v169
  %v171 = vpop.f32.mrb[0].mxu0
  %v172 = vpop.f32.mrb[0].mxu0
  %v173 = vadd.f32 %v40, %v172
  %v174 = vpop.f32.mrb[0].mxu0
  %175 = vmatprep.mubr.bf16.mxu0 0
  %176 = vmatmul.mubr.bf16.gmra.mrb[0].mxu0 %v105
  %v177 = vpop.f32.mrb[0].mxu0
  %v178 = vadd.f32 %v40, %v177
  %v179 = vpop.f32.mrb[0].mxu0
  %v180 = vpop.f32.mrb[0].mxu0
  %v181 = vadd.f32 %v40, %v180
  %v182 = vpop.f32.mrb[0].mxu0
  %183 = vmatprep.mubr.bf16.mxu0 0
  %184 = vmatmul.mubr.bf16.gmra.mrb[0].mxu0 %v108
  %v185 = vpop.f32.mrb[0].mxu0
  %v186 = vadd.f32 %v40, %v185
  %v187 = vpop.f32.mrb[0].mxu0
  %v188 = vpop.f32.mrb[0].mxu0
  %v189 = vadd.f32 %v40, %v188
  %v190 = vpop.f32.mrb[0].mxu0
  %191 = vmatprep.mubr.bf16.mxu0 0
  %192 = vmatmul.mubr.bf16.gmra.mrb[0].mxu0 %v111
  %v193 = vpop.f32.mrb[0].mxu0
  %v194 = vadd.f32 %v40, %v193
  %v195 = vpop.f32.mrb[0].mxu0
  %v196 = vpop.f32.mrb[0].mxu0
  %v197 = vadd.f32 %v40, %v196
  %v198 = vpop.f32.mrb[0].mxu0
  %199 = vmatprep.mubr.bf16.mxu0 0
  %200 = vmatmul.mubr.bf16.gmra.mrb[0].mxu0 %v114
  %v201 = vpop.f32.mrb[0].mxu0
  %v202 = vadd.f32 %v40, %v201
  %v203 = vpop.f32.mrb[0].mxu0
  %v204 = vpop.f32.mrb[0].mxu0
  %v205 = vadd.f32 %v40, %v204
  %v206 = vpop.f32.mrb[0].mxu0
  %207 = vmatprep.mubr.bf16.mxu0 0
  %208 = vmatmul.mubr.bf16.gmra.mrb[0].mxu0 %v117
  %v209 = vpop.f32.mrb[0].mxu0
  %v210 = vadd.f32 %v40, %v209
  %v211 = vpop.f32.mrb[0].mxu0
  %v212 = vpop.f32.mrb[0].mxu0
  %v213 = vadd.f32 %v40, %v212
  %v214 = vpop.f32.mrb[0].mxu0
  %215 = vdwg.mxu0
  %v216 = vpack.c.bf16 %v157, %v154
  %v217 = vpack.c.bf16 %v165, %v162
  %v218 = vpack.c.bf16 %v173, %v170
  %v219 = vpack.c.bf16 %v181, %v178
  %v220 = vpack.c.bf16 %v189, %v186
  %v221 = vpack.c.bf16 %v197, %v194
  %v222 = vpack.c.bf16 %v205, %v202
  %v223 = vpack.c.bf16 %v213, %v210
  %v232 = vunpack.c.l.b16 %v216
  %v233 = vunpack.c.h.b16 %v216
  %v234 = vunpack.c.l.b16 %v217
  %v235 = vunpack.c.h.b16 %v217
  %v236 = vunpack.c.l.b16 %v218
  %v237 = vunpack.c.h.b16 %v218
  %v238 = vunpack.c.l.b16 %v219
  %v239 = vunpack.c.h.b16 %v219
  %v240 = vunpack.c.l.b16 %v220
  %v241 = vunpack.c.h.b16 %v220
  %v242 = vunpack.c.l.b16 %v221
  %v243 = vunpack.c.h.b16 %v221
  %v244 = vunpack.c.l.b16 %v222
  %v245 = vunpack.c.h.b16 %v222
  %v246 = vunpack.c.l.b16 %v223
  %v247 = vunpack.c.h.b16 %v223
  %v248 = vpack.c.b16 %v232, %v232
  %v249 = vpack.c.b16 %v233, %v233
  %v250 = vpack.c.b16 %v234, %v234
  %v251 = vpack.c.b16 %v235, %v235
  %v252 = vpack.c.b16 %v236, %v236
  %v253 = vpack.c.b16 %v237, %v237
  %v254 = vpack.c.b16 %v238, %v238
  %v255 = vpack.c.b16 %v239, %v239
  %v256 = vpack.c.b16 %v240, %v240
  %v257 = vpack.c.b16 %v241, %v241
  %v258 = vpack.c.b16 %v242, %v242
  %v259 = vpack.c.b16 %v243, %v243
  %v260 = vpack.c.b16 %v244, %v244
  %v261 = vpack.c.b16 %v245, %v245
  %v262 = vpack.c.b16 %v246, %v246
  %v263 = vpack.c.b16 %v247, %v247
  %vm280 = vcmask 125952
  %281 = vst.msk [vmem:[%s3] sm:$0xf] %vm280, %v248
  %282 = vst.msk [vmem:[%s3 + $0x4] sm:$0xf] %vm280, %v249
  %283 = vst.msk [vmem:[%s3 + $0x8] sm:$0xf] %vm280, %v250
  %284 = vst.msk [vmem:[%s3 + $0xc] sm:$0xf] %vm280, %v251
  %285 = vst.msk [vmem:[%s3 + $0x10] sm:$0xf] %vm280, %v252
  %286 = vst.msk [vmem:[%s3 + $0x14] sm:$0xf] %vm280, %v253
  %287 = vst.msk [vmem:[%s3 + $0x18] sm:$0xf] %vm280, %v254
  %288 = vst.msk [vmem:[%s3 + $0x1c] sm:$0xf] %vm280, %v255
  %289 = vst.msk [vmem:[%s3 + $0x20] sm:$0xf] %vm280, %v256
  %290 = vst.msk [vmem:[%s3 + $0x24] sm:$0xf] %vm280, %v257
  %291 = vst.msk [vmem:[%s3 + $0x28] sm:$0xf] %vm280, %v258
  %292 = vst.msk [vmem:[%s3 + $0x2c] sm:$0xf] %vm280, %v259
  %293 = vst.msk [vmem:[%s3 + $0x30] sm:$0xf] %vm280, %v260
  %294 = vst.msk [vmem:[%s3 + $0x34] sm:$0xf] %vm280, %v261
  %295 = vst.msk [vmem:[%s3 + $0x38] sm:$0xf] %vm280, %v262
  %296 = vst.msk [vmem:[%s3 + $0x3c] sm:$0xf] %vm280, %v263
  // Predicated region
  $region14: #{mobilenet_v2_forward.21} parent=0 // pred_check
    _
  $region15: #{mobilenet_v2_forward.21} parent=0 // pred_check_branch
    %298 = sbr.rel (0) target = $region17
  $region16: #{mobilenet_v2_forward.21} parent=0 // pred_region
    _
  $region17: #{mobilenet_v2_forward.21} parent=0 // pred_fallthru
    _
  // Predicated region
  $region18: #{mobilenet_v2_forward.21} parent=0 // pred_check
    _
  $region19: #{mobilenet_v2_forward.21} parent=0 // pred_check_branch
    %300 = sbr.rel (0) target = $region21
  $region20: #{mobilenet_v2_forward.21} parent=0 // pred_region
    _
  $region21: #{mobilenet_v2_forward.21} parent=0 // pred_fallthru
    _

// kernel: mobilenet_v2_forward.20
$region0: #{mobilenet_v2_forward.20}
  #allocation0 [shape = 'u32[]', space=smem, size = 0x4, offset = 0x4, fixed_abs, tag = 'smem constant byte address 0x4 - core index']
  #allocation1 [shape = 'u32[144,128]{1,0:T(1,128)}', space=vmem, size = 0x12000, scoped, tag = 'internal scratch']
  %s0 = inlined_call_operand.vmem [shape: bf16[2,9,9,32], index: 0, kind: input, shape index: {}]
  %s1 = inlined_call_operand.vmem [shape: bf16[2,9,9,32], index: 1, kind: input, shape index: {}]
  %s2 = inlined_call_operand.vmem [shape: bf16[2,9,9,32], index: 2, kind: input, shape index: {}]
  %s3 = inlined_call_operand.vmem [shape: bf16[2,9,9,32], index: 3, kind: input, shape index: {}]
  %s4 = inlined_call_operand.vmem [shape: f32[9,32], index: 4, kind: input, shape index: {}]
  %s5 = inlined_call_operand.vmem [shape: f32[1,32], index: 5, kind: input, shape index: {}]
  %s6 = inlined_call_operand.vmem [shape: bf16[2,8,8,32], index: 6, kind: output, shape index: {}]
  %s7 = sld [smem:[#allocation0]]
  $region57: #{mobilenet_v2_forward.20} parent=0
    _
  %s9 = ssub.s32 1, %s7
  %s10 = scalar_select 0, %s9, %s7
  loop: start=0, step=1, limit=4
  $region2: #{mobilenet_v2_forward.20} parent=0 // loop_pre_header
    _
  $region3: #{mobilenet_v2_forward.20} parent=0 // loop_header
    %s12 = sphi 0, %s16
    %p13 = scmp.ge.s32.totalorder %s12, 4
    %s19 = sphi 0, %s31
    %s20 = sphi 0, %s27
    %s21 = sphi 0, %s19
    %s22 = sphi 0, %s20
    %s23 = sphi 0, %s21
    %s24 = sphi 0, %s22
    %s34 = sphi 0, %s36
    %s37 = sphi 0, %s34
    %s38 = sphi 0, %s37
    %s54 = sphi 0, %s38
    %s60 = sphi 0, %s62
    %s63 = sphi 0, %s60
    %s64 = sphi 0, %s63
    %s80 = sphi 0, %s64
    %s86 = sphi 0, %s88
    %s89 = sphi 0, %s86
    %s90 = sphi 0, %s89
    %s106 = sphi 0, %s90
    %s112 = sphi 0, %s114
    %s115 = sphi 0, %s112
    %s116 = sphi 0, %s115
    %s132 = sphi 0, %s116
    %s136 = sphi 0, %s136
    %s138 = sphi 0, %s136
    %s139 = sphi 0, %s138
    %s153 = sphi 0, %s139
    %s157 = sphi 0, %s157
    %s159 = sphi 0, %s157
    %s160 = sphi 0, %s159
    %s174 = sphi 0, %s160
    %s182 = sphi 0, %s184
    %s185 = sphi 0, %s182
    %s186 = sphi 0, %s185
    %s202 = sphi 0, %s186
  $region4: #{mobilenet_v2_forward.20} parent=0 // loop_header_branch
    %15 = sbr.rel (%p13) target = $region8
  $region5: #{mobilenet_v2_forward.20} parent=0 // loop_body
    %s17 = ssub.s32 %s12, 1
    %s18 = ssub.s32 %s12, 2
    %s25 = sadd.s32 1, %s20
    %p26 = scmp.ge.s32.totalorder %s25, 1
    %s27 = scalar_select %p26, 0, %s25
    %s28 = sadd.s32 1, %s19
    %s29 = scalar_select %p26, %s28, %s19
    %p30 = scmp.ge.s32.totalorder %s29, 2
    %s31 = scalar_select %p30, 0, %s29
    %s32 = ssub.s32 %s19, %s31
    %p33 = scmp.eq.s32.totalorder %s32, 0
    %s35 = sadd.s32 %s34, 1
    %s36 = scalar_select %p33, %s34, %s35
    %p39 = pneg %p33
    %p40 = scmp.eq.s32.totalorder %s12, 1
    %p41 = por %p39, %p40
    %p42 = scmp.ne.s32.totalorder %s34, %s37
    %p43 = scmp.eq.s32.totalorder %s12, 0
    %p44 = por %p42, %p43
    %p45 = scmp.ne.s32.totalorder %s34, %s37
    %p46 = scmp.eq.s32.totalorder %s17, 1
    %p47 = por %p45, %p46
    %p48 = scmp.ne.s32.totalorder %s37, %s38
    %p49 = scmp.eq.s32.totalorder %s17, 0
    %p50 = por %p48, %p49
    %p51 = scmp.ne.s32.totalorder %s37, %s38
    %p52 = scmp.eq.s32.totalorder %s18, 1
    %p53 = por %p51, %p52
    %p55 = scmp.ne.s32.totalorder %s38, %s54
    %p56 = scmp.eq.s32.totalorder %s18, 0
    %p57 = por %p55, %p56
    %s58 = ssub.s32 %s19, %s31
    %p59 = scmp.eq.s32.totalorder %s58, 0
    %s61 = sadd.s32 %s60, 1
    %s62 = scalar_select %p59, %s60, %s61
    %p65 = pneg %p59
    %p66 = scmp.eq.s32.totalorder %s12, 1
    %p67 = por %p65, %p66
    %p68 = scmp.ne.s32.totalorder %s60, %s63
    %p69 = scmp.eq.s32.totalorder %s12, 0
    %p70 = por %p68, %p69
    %p71 = scmp.ne.s32.totalorder %s60, %s63
    %p72 = scmp.eq.s32.totalorder %s17, 1
    %p73 = por %p71, %p72
    %p74 = scmp.ne.s32.totalorder %s63, %s64
    %p75 = scmp.eq.s32.totalorder %s17, 0
    %p76 = por %p74, %p75
    %p77 = scmp.ne.s32.totalorder %s63, %s64
    %p78 = scmp.eq.s32.totalorder %s18, 1
    %p79 = por %p77, %p78
    %p81 = scmp.ne.s32.totalorder %s64, %s80
    %p82 = scmp.eq.s32.totalorder %s18, 0
    %p83 = por %p81, %p82
    %s84 = ssub.s32 %s19, %s31
    %p85 = scmp.eq.s32.totalorder %s84, 0
    %s87 = sadd.s32 %s86, 1
    %s88 = scalar_select %p85, %s86, %s87
    %p91 = pneg %p85
    %p92 = scmp.eq.s32.totalorder %s12, 1
    %p93 = por %p91, %p92
    %p94 = scmp.ne.s32.totalorder %s86, %s89
    %p95 = scmp.eq.s32.totalorder %s12, 0
    %p96 = por %p94, %p95
    %p97 = scmp.ne.s32.totalorder %s86, %s89
    %p98 = scmp.eq.s32.totalorder %s17, 1
    %p99 = por %p97, %p98
    %p100 = scmp.ne.s32.totalorder %s89, %s90
    %p101 = scmp.eq.s32.totalorder %s17, 0
    %p102 = por %p100, %p101
    %p103 = scmp.ne.s32.totalorder %s89, %s90
    %p104 = scmp.eq.s32.totalorder %s18, 1
    %p105 = por %p103, %p104
    %p107 = scmp.ne.s32.totalorder %s90, %s106
    %p108 = scmp.eq.s32.totalorder %s18, 0
    %p109 = por %p107, %p108
    %s110 = ssub.s32 %s19, %s31
    %p111 = scmp.eq.s32.totalorder %s110, 0
    %s113 = sadd.s32 %s112, 1
    %s114 = scalar_select %p111, %s112, %s113
    %p117 = pneg %p111
    %p118 = scmp.eq.s32.totalorder %s12, 1
    %p119 = por %p117, %p118
    %p120 = scmp.ne.s32.totalorder %s112, %s115
    %p121 = scmp.eq.s32.totalorder %s12, 0
    %p122 = por %p120, %p121
    %p123 = scmp.ne.s32.totalorder %s112, %s115
    %p124 = scmp.eq.s32.totalorder %s17, 1
    %p125 = por %p123, %p124
    %p126 = scmp.ne.s32.totalorder %s115, %s116
    %p127 = scmp.eq.s32.totalorder %s17, 0
    %p128 = por %p126, %p127
    %p129 = scmp.ne.s32.totalorder %s115, %s116
    %p130 = scmp.eq.s32.totalorder %s18, 1
    %p131 = por %p129, %p130
    %p133 = scmp.ne.s32.totalorder %s116, %s132
    %p134 = scmp.eq.s32.totalorder %s18, 0
    %p135 = por %p133, %p134
    %s137 = sadd.s32 %s136, 1
    %p140 = scmp.eq.s32.totalorder %s12, 1
    %p141 = scmp.ne.s32.totalorder %s136, %s138
    %p142 = scmp.eq.s32.totalorder %s12, 0
    %p143 = por %p141, %p142
    %p144 = scmp.ne.s32.totalorder %s136, %s138
    %p145 = scmp.eq.s32.totalorder %s17, 1
    %p146 = por %p144, %p145
    %p147 = scmp.ne.s32.totalorder %s138, %s139
    %p148 = scmp.eq.s32.totalorder %s17, 0
    %p149 = por %p147, %p148
    %p150 = scmp.ne.s32.totalorder %s138, %s139
    %p151 = scmp.eq.s32.totalorder %s18, 1
    %p152 = por %p150, %p151
    %p154 = scmp.ne.s32.totalorder %s139, %s153
    %p155 = scmp.eq.s32.totalorder %s18, 0
    %p156 = por %p154, %p155
    %s158 = sadd.s32 %s157, 1
    %p161 = scmp.eq.s32.totalorder %s12, 1
    %p162 = scmp.ne.s32.totalorder %s157, %s159
    %p163 = scmp.eq.s32.totalorder %s12, 0
    %p164 = por %p162, %p163
    %p165 = scmp.ne.s32.totalorder %s157, %s159
    %p166 = scmp.eq.s32.totalorder %s17, 1
    %p167 = por %p165, %p166
    %p168 = scmp.ne.s32.totalorder %s159, %s160
    %p169 = scmp.eq.s32.totalorder %s17, 0
    %p170 = por %p168, %p169
    %p171 = scmp.ne.s32.totalorder %s159, %s160
    %p172 = scmp.eq.s32.totalorder %s18, 1
    %p173 = por %p171, %p172
    %p175 = scmp.ne.s32.totalorder %s160, %s174
    %p176 = scmp.eq.s32.totalorder %s18, 0
    %p177 = por %p175, %p176
    %s178 = ssub.s32 %s19, %s31
    %s179 = ssub.s32 %s20, %s27
    %s180 = sor.u32 %s178, %s179
    %p181 = scmp.eq.s32.totalorder %s180, 0
    %s183 = sadd.s32 %s182, 1
    %s184 = scalar_select %p181, %s182, %s183
    %p187 = pneg %p181
    %p188 = scmp.eq.s32.totalorder %s12, 1
    %p189 = por %p187, %p188
    %p190 = scmp.ne.s32.totalorder %s182, %s185
    %p191 = scmp.eq.s32.totalorder %s12, 0
    %p192 = por %p190, %p191
    %p193 = scmp.ne.s32.totalorder %s182, %s185
    %p194 = scmp.eq.s32.totalorder %s17, 1
    %p195 = por %p193, %p194
    %p196 = scmp.ne.s32.totalorder %s185, %s186
    %p197 = scmp.eq.s32.totalorder %s17, 0
    %p198 = por %p196, %p197
    %p199 = scmp.ne.s32.totalorder %s185, %s186
    %p200 = scmp.eq.s32.totalorder %s18, 1
    %p201 = por %p199, %p200
    %p203 = scmp.ne.s32.totalorder %s186, %s202
    %p204 = scmp.eq.s32.totalorder %s18, 0
    %p205 = por %p203, %p204
    %p206 = scmp.le.s32.totalorder 1, %s12
    %p207 = scmp.lt.s32.totalorder %s12, 3
    %p208 = pnand %p206, %p207
    %p209 = pneg %p208
    // Predicated region
    $region9: #{mobilenet_v2_forward.20} parent=5 // pred_check
      _
    $region10: #{mobilenet_v2_forward.20} parent=5 // pred_check_branch
      %211 = sbr.rel (%p208) target = $region12
    $region11: #{mobilenet_v2_forward.20} parent=5 // pred_region
      %s212 = ssub.s32 %s12, 1
      // Predicated region
      $region13: #{mobilenet_v2_forward.20} parent=11 // pred_check
        %p213 = pneg %p149
      $region14: #{mobilenet_v2_forward.20} parent=11 // pred_check_branch
        %215 = sbr.rel (%p213) target = $region16
      $region15: #{mobilenet_v2_forward.20} parent=11 // pred_region
        _
      $region16: #{mobilenet_v2_forward.20} parent=11 // pred_fallthru
        _
      // Predicated region
      $region17: #{mobilenet_v2_forward.20} parent=11 // pred_check
        %p216 = pneg %p170
      $region18: #{mobilenet_v2_forward.20} parent=11 // pred_check_branch
        %218 = sbr.rel (%p216) target = $region20
      $region19: #{mobilenet_v2_forward.20} parent=11 // pred_region
        _
      $region20: #{mobilenet_v2_forward.20} parent=11 // pred_fallthru
        _
    $region12: #{mobilenet_v2_forward.20} parent=5 // pred_fallthru
      _
    %p219 = scmp.lt.s32.totalorder %s12, 2
    // Predicated region
    $region21: #{mobilenet_v2_forward.20} parent=5 // pred_check
      %p220 = pneg %p219
    $region22: #{mobilenet_v2_forward.20} parent=5 // pred_check_branch
      %222 = sbr.rel (%p220) target = $region24
    $region23: #{mobilenet_v2_forward.20} parent=5 // pred_region
      // Predicated region
      $region25: #{mobilenet_v2_forward.20} parent=23 // pred_check
        %p223 = pneg %p44
      $region26: #{mobilenet_v2_forward.20} parent=23 // pred_check_branch
        %225 = sbr.rel (%p223) target = $region28
      $region27: #{mobilenet_v2_forward.20} parent=23 // pred_region
        %p226 = scmp.lt.s32.totalorder %s19, 1
        %s227 = scalar_select %p226, %s19, 1
        %s228 = smul.addr %s227, 18
        %s229 = smul.addr %s228, 4
        %s230 = scalar_lea.vmem %s0, %s229
      $region28: #{mobilenet_v2_forward.20} parent=23 // pred_fallthru
        _
      // Predicated region
      $region29: #{mobilenet_v2_forward.20} parent=23 // pred_check
        %p231 = pneg %p70
      $region30: #{mobilenet_v2_forward.20} parent=23 // pred_check_branch
        %233 = sbr.rel (%p231) target = $region32
      $region31: #{mobilenet_v2_forward.20} parent=23 // pred_region
        %p234 = scmp.lt.s32.totalorder %s19, 1
        %s235 = scalar_select %p234, %s19, 1
        %s236 = smul.addr %s235, 18
        %s237 = smul.addr %s236, 4
        %s238 = scalar_lea.vmem %s1, %s237
      $region32: #{mobilenet_v2_forward.20} parent=23 // pred_fallthru
        _
      // Predicated region
      $region33: #{mobilenet_v2_forward.20} parent=23 // pred_check
        %p239 = pneg %p96
      $region34: #{mobilenet_v2_forward.20} parent=23 // pred_check_branch
        %241 = sbr.rel (%p239) target = $region36
      $region35: #{mobilenet_v2_forward.20} parent=23 // pred_region
        %p242 = scmp.lt.s32.totalorder %s19, 1
        %s243 = scalar_select %p242, %s19, 1
        %s244 = smul.addr %s243, 18
        %s245 = smul.addr %s244, 4
        %s246 = scalar_lea.vmem %s2, %s245
      $region36: #{mobilenet_v2_forward.20} parent=23 // pred_fallthru
        _
      // Predicated region
      $region37: #{mobilenet_v2_forward.20} parent=23 // pred_check
        %p247 = pneg %p122
      $region38: #{mobilenet_v2_forward.20} parent=23 // pred_check_branch
        %249 = sbr.rel (%p247) target = $region40
      $region39: #{mobilenet_v2_forward.20} parent=23 // pred_region
        %p250 = scmp.lt.s32.totalorder %s19, 1
        %s251 = scalar_select %p250, %s19, 1
        %s252 = smul.addr %s251, 18
        %s253 = smul.addr %s252, 4
        %s254 = scalar_lea.vmem %s3, %s253
      $region40: #{mobilenet_v2_forward.20} parent=23 // pred_fallthru
        _
    $region24: #{mobilenet_v2_forward.20} parent=5 // pred_fallthru
      _
    %p255 = scmp.le.s32.totalorder 1, %s12
    %p256 = scmp.lt.s32.totalorder %s12, 3
    %p257 = pnand %p255, %p256
    %p258 = pneg %p257
    // Predicated region
    $region41: #{mobilenet_v2_forward.20} parent=5 // pred_check
      _
    $region42: #{mobilenet_v2_forward.20} parent=5 // pred_check_branch
      %260 = sbr.rel (%p257) target = $region44
    $region43: #{mobilenet_v2_forward.20} parent=5 // pred_region
      %s261 = ssub.s32 %s12, 1
      %p262 = scmp.lt.s32.totalorder %s21, 1
      %s263 = scalar_select %p262, %s21, 1
      %s264 = smul.addr %s263, 18
      %s265 = smul.addr %s264, 4
      %s266 = scalar_lea.vmem %s0, %s265
      %p267 = pneg %p50
      %p268 = pneg %p47
      %p269 = scmp.lt.s32.totalorder %s21, 1
      %s270 = scalar_select %p269, %s21, 1
      %s271 = smul.addr %s270, 18
      %s272 = smul.addr %s271, 4
      %s273 = scalar_lea.vmem %s1, %s272
      %p274 = pneg %p76
      %p275 = pneg %p73
      %p276 = scmp.lt.s32.totalorder %s21, 1
      %s277 = scalar_select %p276, %s21, 1
      %s278 = smul.addr %s277, 18
      %s279 = smul.addr %s278, 4
      %s280 = scalar_lea.vmem %s2, %s279
      %p281 = pneg %p102
      %p282 = pneg %p99
      %p283 = scmp.lt.s32.totalorder %s21, 1
      %s284 = scalar_select %p283, %s21, 1
      %s285 = smul.addr %s284, 18
      %s286 = smul.addr %s285, 4
      %s287 = scalar_lea.vmem %s3, %s286
      %p288 = pneg %p128
      %p289 = pneg %p125
      %p290 = pneg %p149
      %p291 = pneg %p146
      %p292 = pneg %p170
      %p293 = pneg %p167
      %p294 = pneg %p198
      %p295 = pneg %p195
      %s296 = smul.u32 8, %s22
      %p297 = scmp.lt.s32.totalorder %s21, 1
      %s298 = scalar_select %p297, %s21, 1
      %p299 = scmp.lt.s32.totalorder %s296, 7
      %s300 = scalar_select %p299, %s296, 7
      %s301 = smul.addr %s298, 8
      %s302 = sadd.s32 %s300, %s301
      %s303 = smul.addr %s302, 4
      %s304 = scalar_lea.vmem %s6, %s303
      %p305 = scmp.lt.s32.totalorder %s21, 1
      %s306 = scalar_select %p305, %s21, 1
      %s307 = smul.addr %s306, 18
      %s308 = smul.addr %s307, 4
      %s309 = scalar_lea.vmem %s0, %s308
      %p310 = scmp.lt.s32.totalorder %s21, 1
      %s311 = scalar_select %p310, %s21, 1
      %s312 = smul.addr %s311, 18
      %s313 = smul.addr %s312, 4
      %s314 = scalar_lea.vmem %s1, %s313
      %p315 = scmp.lt.s32.totalorder %s21, 1
      %s316 = scalar_select %p315, %s21, 1
      %s317 = smul.addr %s316, 18
      %s318 = smul.addr %s317, 4
      %s319 = scalar_lea.vmem %s2, %s318
      %p320 = scmp.lt.s32.totalorder %s21, 1
      %s321 = scalar_select %p320, %s21, 1
      %s322 = smul.addr %s321, 18
      %s323 = smul.addr %s322, 4
      %s324 = scalar_lea.vmem %s3, %s323
      %s325 = smul.u32 8, %s22
      %p326 = scmp.lt.s32.totalorder %s21, 1
      %s327 = scalar_select %p326, %s21, 1
      %p328 = scmp.lt.s32.totalorder %s325, 7
      %s329 = scalar_select %p328, %s325, 7
      %s330 = smul.addr %s327, 8
      %s331 = sadd.s32 %s329, %s330
      %s332 = smul.addr %s331, 4
      %s333 = scalar_lea.vmem %s6, %s332
      %s334 = smul.u32 8, %s22
      %s335 = smul.u32 %s22, 8
      %s336 = smul.u32 %s335, 2
      %s337 = smul.addr %s336, 4
      %s338 = scalar_lea.vmem %s309, %s337
      %v339 = vld [vmem:[%s338] sm:$0xf]
      %v340 = vld [vmem:[%s338 + $0x4] sm:$0x1]
      %v341 = vld [vmem:[%s338 + $0x8] sm:$0xf]
      %v342 = vld [vmem:[%s338 + $0xc] sm:$0x1]
      %v343 = vld [vmem:[%s338 + $0x10] sm:$0xf]
      %v344 = vld [vmem:[%s338 + $0x14] sm:$0x1]
      %v345 = vld [vmem:[%s338 + $0x18] sm:$0xf]
      %v346 = vld [vmem:[%s338 + $0x1c] sm:$0x1]
      %v347 = vld [vmem:[%s338 + $0x20] sm:$0xf]
      %v348 = vld [vmem:[%s338 + $0x24] sm:$0x1]
      %v349 = vld [vmem:[%s338 + $0x28] sm:$0xf]
      %v350 = vld [vmem:[%s338 + $0x2c] sm:$0x1]
      %v351 = vld [vmem:[%s338 + $0x30] sm:$0xf]
      %v352 = vld [vmem:[%s338 + $0x34] sm:$0x1]
      %v353 = vld [vmem:[%s338 + $0x38] sm:$0xf]
      %v354 = vld [vmem:[%s338 + $0x3c] sm:$0x1]
      %s355 = smul.addr %s336, 4
      %s356 = scalar_lea.vmem %s314, %s355
      %v357 = vld [vmem:[%s356] sm:$0xf]
      %v358 = vld [vmem:[%s356 + $0x8] sm:$0xf]
      %v359 = vld [vmem:[%s356 + $0x10] sm:$0xf]
      %v360 = vld [vmem:[%s356 + $0x18] sm:$0xf]
      %v361 = vld [vmem:[%s356 + $0x20] sm:$0xf]
      %v362 = vld [vmem:[%s356 + $0x28] sm:$0xf]
      %v363 = vld [vmem:[%s356 + $0x30] sm:$0xf]
      %v364 = vld [vmem:[%s356 + $0x38] sm:$0xf]
      %v365 = vunpack.c.l.bf16 %v339
      %v366 = vunpack.c.l.bf16 %v341
      %v367 = vunpack.c.l.bf16 %v343
      %v368 = vunpack.c.l.bf16 %v345
      %v369 = vunpack.c.l.bf16 %v347
      %v370 = vunpack.c.l.bf16 %v349
      %v371 = vunpack.c.l.bf16 %v351
      %v372 = vunpack.c.l.bf16 %v353
      %v373 = vld [vmem:[%s4] sm:$0x1]
      %v374 = vlaneseq
      %v375 = vshrl.u32 %v374, 7
      %v376 = vsub.s32 0, %v375
      %v377 = vrot.slane %v373, %v376
      %v378 = vmul.f32 %v365, %v377
      %v379 = vmul.f32 %v366, %v377
      %v380 = vmul.f32 %v367, %v377
      %v381 = vmul.f32 %v368, %v377
      %v382 = vmul.f32 %v369, %v377
      %v383 = vmul.f32 %v370, %v377
      %v384 = vmul.f32 %v371, %v377
      %v385 = vmul.f32 %v372, %v377
      %v386 = vadd.f32 %v378, 0.0
      %v387 = vadd.f32 %v379, 0.0
      %v388 = vadd.f32 %v380, 0.0
      %v389 = vadd.f32 %v381, 0.0
      %v390 = vadd.f32 %v382, 0.0
      %v391 = vadd.f32 %v383, 0.0
      %v392 = vadd.f32 %v384, 0.0
      %v393 = vadd.f32 %v385, 0.0
      %v394 = vunpack.c.l.bf16 %v357
      %v395 = vunpack.c.l.bf16 %v358
      %v396 = vunpack.c.l.bf16 %v359
      %v397 = vunpack.c.l.bf16 %v360
      %v398 = vunpack.c.l.bf16 %v361
      %v399 = vunpack.c.l.bf16 %v362
      %v400 = vunpack.c.l.bf16 %v363
      %v401 = vunpack.c.l.bf16 %v364
      %v402 = vld [vmem:[%s4 + $0x1] sm:$0x1]
      %v403 = vlaneseq
      %v404 = vshrl.u32 %v403, 7
      %v405 = vsub.s32 0, %v404
      %v406 = vrot.slane %v402, %v405
      %v407 = vmul.f32 %v394, %v406
      %v408 = vmul.f32 %v395, %v406
      %v409 = vmul.f32 %v396, %v406
      %v410 = vmul.f32 %v397, %v406
      %v411 = vmul.f32 %v398, %v406
      %v412 = vmul.f32 %v399, %v406
      %v413 = vmul.f32 %v400, %v406
      %v414 = vmul.f32 %v401, %v406
      %v415 = vadd.f32 %v386, %v407
      %v416 = vadd.f32 %v387, %v408
      %v417 = vadd.f32 %v388, %v409
      %v418 = vadd.f32 %v389, %v410
      %v419 = vadd.f32 %v390, %v411
      %v420 = vadd.f32 %v391, %v412
      %v421 = vadd.f32 %v392, %v413
      %v422 = vadd.f32 %v393, %v414
      %v423 = vunpack.c.l.bf16 %v340
      %v424 = vunpack.c.l.bf16 %v342
      %v425 = vunpack.c.l.bf16 %v344
      %v426 = vunpack.c.l.bf16 %v346
      %v427 = vunpack.c.l.bf16 %v348
      %v428 = vunpack.c.l.bf16 %v350
      %v429 = vunpack.c.l.bf16 %v352
      %v430 = vunpack.c.l.bf16 %v354
      %v431 = vld [vmem:[%s4 + $0x2] sm:$0x1]
      %v432 = vlaneseq
      %v433 = vshrl.u32 %v432, 7
      %v434 = vsub.s32 0, %v433
      %v435 = vrot.slane %v431, %v434
      %v436 = vmul.f32 %v365, %v435
      %v437 = vmul.f32 %v423, %v435
      %v438 = vmul.f32 %v366, %v435
      %v439 = vmul.f32 %v424, %v435
      %v440 = vmul.f32 %v367, %v435
      %v441 = vmul.f32 %v425, %v435
      %v442 = vmul.f32 %v368, %v435
      %v443 = vmul.f32 %v426, %v435
      %v444 = vmul.f32 %v369, %v435
      %v445 = vmul.f32 %v427, %v435
      %v446 = vmul.f32 %v370, %v435
      %v447 = vmul.f32 %v428, %v435
      %v448 = vmul.f32 %v371, %v435
      %v449 = vmul.f32 %v429, %v435
      %v450 = vmul.f32 %v372, %v435
      %v451 = vmul.f32 %v430, %v435
      %vm468 = vcmask 1046528
      %v469 = vrot.slane %v436, 1
      %v470 = vrot.slane %v437, 1
      %v471 = vsel %vm468, %v469, %v470
      %v472 = vrot.slane %v438, 1
      %v473 = vrot.slane %v439, 1
      %v474 = vsel %vm468, %v472, %v473
      %v475 = vrot.slane %v440, 1
      %v476 = vrot.slane %v441, 1
      %v477 = vsel %vm468, %v475, %v476
      %v478 = vrot.slane %v442, 1
      %v479 = vrot.slane %v443, 1
      %v480 = vsel %vm468, %v478, %v479
      %v481 = vrot.slane %v444, 1
      %v482 = vrot.slane %v445, 1
      %v483 = vsel %vm468, %v481, %v482
      %v484 = vrot.slane %v446, 1
      %v485 = vrot.slane %v447, 1
      %v486 = vsel %vm468, %v484, %v485
      %v487 = vrot.slane %v448, 1
      %v488 = vrot.slane %v449, 1
      %v489 = vsel %vm468, %v487, %v488
      %v490 = vrot.slane %v450, 1
      %v491 = vrot.slane %v451, 1
      %v492 = vsel %vm468, %v490, %v491
      %v501 = vadd.f32 %v415, %v471
      %v502 = vadd.f32 %v416, %v474
      %v503 = vadd.f32 %v417, %v477
      %v504 = vadd.f32 %v418, %v480
      %v505 = vadd.f32 %v419, %v483
      %v506 = vadd.f32 %v420, %v486
      %v507 = vadd.f32 %v421, %v489
      %v508 = vadd.f32 %v422, %v492
      %s509 = smul.addr %s336, 4
      %s510 = scalar_lea.vmem %s319, %s509
      %v511 = vld [vmem:[%s510] sm:$0xf]
      %v512 = vld [vmem:[%s510 + $0x4] sm:$0x1]
      %v513 = vld [vmem:[%s510 + $0x8] sm:$0xf]
      %v514 = vld [vmem:[%s510 + $0xc] sm:$0x1]
      %v515 = vld [vmem:[%s510 + $0x10] sm:$0xf]
      %v516 = vld [vmem:[%s510 + $0x14] sm:$0x1]
      %v517 = vld [vmem:[%s510 + $0x18] sm:$0xf]
      %v518 = vld [vmem:[%s510 + $0x1c] sm:$0x1]
      %v519 = vld [vmem:[%s510 + $0x20] sm:$0xf]
      %v520 = vld [vmem:[%s510 + $0x24] sm:$0x1]
      %v521 = vld [vmem:[%s510 + $0x28] sm:$0xf]
      %v522 = vld [vmem:[%s510 + $0x2c] sm:$0x1]
      %v523 = vld [vmem:[%s510 + $0x30] sm:$0xf]
      %v524 = vld [vmem:[%s510 + $0x34] sm:$0x1]
      %v525 = vld [vmem:[%s510 + $0x38] sm:$0xf]
      %v526 = vld [vmem:[%s510 + $0x3c] sm:$0x1]
      %s527 = smul.addr %s336, 4
      %s528 = scalar_lea.vmem %s324, %s527
      %v529 = vld [vmem:[%s528] sm:$0xf]
      %v530 = vld [vmem:[%s528 + $0x8] sm:$0xf]
      %v531 = vld [vmem:[%s528 + $0x10] sm:$0xf]
      %v532 = vld [vmem:[%s528 + $0x18] sm:$0xf]
      %v533 = vld [vmem:[%s528 + $0x20] sm:$0xf]
      %v534 = vld [vmem:[%s528 + $0x28] sm:$0xf]
      %v535 = vld [vmem:[%s528 + $0x30] sm:$0xf]
      %v536 = vld [vmem:[%s528 + $0x38] sm:$0xf]
      %v537 = vunpack.c.l.bf16 %v511
      %v538 = vunpack.c.l.bf16 %v513
      %v539 = vunpack.c.l.bf16 %v515
      %v540 = vunpack.c.l.bf16 %v517
      %v541 = vunpack.c.l.bf16 %v519
      %v542 = vunpack.c.l.bf16 %v521
      %v543 = vunpack.c.l.bf16 %v523
      %v544 = vunpack.c.l.bf16 %v525
      %v545 = vld [vmem:[%s4 + $0x3] sm:$0x1]
      %v546 = vlaneseq
      %v547 = vshrl.u32 %v546, 7
      %v548 = vsub.s32 0, %v547
      %v549 = vrot.slane %v545, %v548
      %v550 = vmul.f32 %v537, %v549
      %v551 = vmul.f32 %v538, %v549
      %v552 = vmul.f32 %v539, %v549
      %v553 = vmul.f32 %v540, %v549
      %v554 = vmul.f32 %v541, %v549
      %v555 = vmul.f32 %v542, %v549
      %v556 = vmul.f32 %v543, %v549
      %v557 = vmul.f32 %v544, %v549
      %v558 = vadd.f32 %v501, %v550
      %v559 = vadd.f32 %v502, %v551
      %v560 = vadd.f32 %v503, %v552
      %v561 = vadd.f32 %v504, %v553
      %v562 = vadd.f32 %v505, %v554
      %v563 = vadd.f32 %v506, %v555
      %v564 = vadd.f32 %v507, %v556
      %v565 = vadd.f32 %v508, %v557
      %v566 = vunpack.c.l.bf16 %v529
      %v567 = vunpack.c.l.bf16 %v530
      %v568 = vunpack.c.l.bf16 %v531
      %v569 = vunpack.c.l.bf16 %v532
      %v570 = vunpack.c.l.bf16 %v533
      %v571 = vunpack.c.l.bf16 %v534
      %v572 = vunpack.c.l.bf16 %v535
      %v573 = vunpack.c.l.bf16 %v536
      %v574 = vld [vmem:[%s4 + $0x4] sm:$0x1]
      %v575 = vlaneseq
      %v576 = vshrl.u32 %v575, 7
      %v577 = vsub.s32 0, %v576
      %v578 = vrot.slane %v574, %v577
      %v579 = vmul.f32 %v566, %v578
      %v580 = vmul.f32 %v567, %v578
      %v581 = vmul.f32 %v568, %v578
      %v582 = vmul.f32 %v569, %v578
      %v583 = vmul.f32 %v570, %v578
      %v584 = vmul.f32 %v571, %v578
      %v585 = vmul.f32 %v572, %v578
      %v586 = vmul.f32 %v573, %v578
      %v587 = vadd.f32 %v558, %v579
      %v588 = vadd.f32 %v559, %v580
      %v589 = vadd.f32 %v560, %v581
      %v590 = vadd.f32 %v561, %v582
      %v591 = vadd.f32 %v562, %v583
      %v592 = vadd.f32 %v563, %v584
      %v593 = vadd.f32 %v564, %v585
      %v594 = vadd.f32 %v565, %v586
      %v595 = vunpack.c.l.bf16 %v512
      %v596 = vunpack.c.l.bf16 %v514
      %v597 = vunpack.c.l.bf16 %v516
      %v598 = vunpack.c.l.bf16 %v518
      %v599 = vunpack.c.l.bf16 %v520
      %v600 = vunpack.c.l.bf16 %v522
      %v601 = vunpack.c.l.bf16 %v524
      %v602 = vunpack.c.l.bf16 %v526
      %v603 = vld [vmem:[%s4 + $0x5] sm:$0x1]
      %v604 = vlaneseq
      %v605 = vshrl.u32 %v604, 7
      %v606 = vsub.s32 0, %v605
      %v607 = vrot.slane %v603, %v606
      %v608 = vmul.f32 %v537, %v607
      %v609 = vmul.f32 %v595, %v607
      %v610 = vmul.f32 %v538, %v607
      %v611 = vmul.f32 %v596, %v607
      %v612 = vmul.f32 %v539, %v607
      %v613 = vmul.f32 %v597, %v607
      %v614 = vmul.f32 %v540, %v607
      %v615 = vmul.f32 %v598, %v607
      %v616 = vmul.f32 %v541, %v607
      %v617 = vmul.f32 %v599, %v607
      %v618 = vmul.f32 %v542, %v607
      %v619 = vmul.f32 %v600, %v607
      %v620 = vmul.f32 %v543, %v607
      %v621 = vmul.f32 %v601, %v607
      %v622 = vmul.f32 %v544, %v607
      %v623 = vmul.f32 %v602, %v607
      %v640 = vrot.slane %v608, 1
      %v641 = vrot.slane %v609, 1
      %v642 = vsel %vm468, %v640, %v641
      %v643 = vrot.slane %v610, 1
      %v644 = vrot.slane %v611, 1
      %v645 = vsel %vm468, %v643, %v644
      %v646 = vrot.slane %v612, 1
      %v647 = vrot.slane %v613, 1
      %v648 = vsel %vm468, %v646, %v647
      %v649 = vrot.slane %v614, 1
      %v650 = vrot.slane %v615, 1
      %v651 = vsel %vm468, %v649, %v650
      %v652 = vrot.slane %v616, 1
      %v653 = vrot.slane %v617, 1
      %v654 = vsel %vm468, %v652, %v653
      %v655 = vrot.slane %v618, 1
      %v656 = vrot.slane %v619, 1
      %v657 = vsel %vm468, %v655, %v656
      %v658 = vrot.slane %v620, 1
      %v659 = vrot.slane %v621, 1
      %v660 = vsel %vm468, %v658, %v659
      %v661 = vrot.slane %v622, 1
      %v662 = vrot.slane %v623, 1
      %v663 = vsel %vm468, %v661, %v662
      %v672 = vadd.f32 %v587, %v642
      %v673 = vadd.f32 %v588, %v645
      %v674 = vadd.f32 %v589, %v648
      %v675 = vadd.f32 %v590, %v651
      %v676 = vadd.f32 %v591, %v654
      %v677 = vadd.f32 %v592, %v657
      %v678 = vadd.f32 %v593, %v660
      %v679 = vadd.f32 %v594, %v663
      %s680 = sadd.s32 %s335, 1
      %s681 = smul.u32 %s680, 2
      %s682 = smul.addr %s681, 4
      %s683 = scalar_lea.vmem %s309, %s682
      %v684 = vld [vmem:[%s683] sm:$0xf]
      %v685 = vld [vmem:[%s683 + $0x4] sm:$0x1]
      %v686 = vld [vmem:[%s683 + $0x8] sm:$0xf]
      %v687 = vld [vmem:[%s683 + $0xc] sm:$0x1]
      %v688 = vld [vmem:[%s683 + $0x10] sm:$0xf]
      %v689 = vld [vmem:[%s683 + $0x14] sm:$0x1]
      %v690 = vld [vmem:[%s683 + $0x18] sm:$0xf]
      %v691 = vld [vmem:[%s683 + $0x1c] sm:$0x1]
      %v692 = vld [vmem:[%s683 + $0x20] sm:$0xf]
      %v693 = vld [vmem:[%s683 + $0x24] sm:$0x1]
      %v694 = vld [vmem:[%s683 + $0x28] sm:$0xf]
      %v695 = vld [vmem:[%s683 + $0x2c] sm:$0x1]
      %v696 = vld [vmem:[%s683 + $0x30] sm:$0xf]
      %v697 = vld [vmem:[%s683 + $0x34] sm:$0x1]
      %v698 = vld [vmem:[%s683 + $0x38] sm:$0xf]
      %v699 = vld [vmem:[%s683 + $0x3c] sm:$0x1]
      %s700 = smul.addr %s681, 4
      %s701 = scalar_lea.vmem %s314, %s700
      %v702 = vld [vmem:[%s701] sm:$0xf]
      %v703 = vld [vmem:[%s701 + $0x8] sm:$0xf]
      %v704 = vld [vmem:[%s701 + $0x10] sm:$0xf]
      %v705 = vld [vmem:[%s701 + $0x18] sm:$0xf]
      %v706 = vld [vmem:[%s701 + $0x20] sm:$0xf]
      %v707 = vld [vmem:[%s701 + $0x28] sm:$0xf]
      %v708 = vld [vmem:[%s701 + $0x30] sm:$0xf]
      %v709 = vld [vmem:[%s701 + $0x38] sm:$0xf]
      %v710 = vunpack.c.l.bf16 %v684
      %v711 = vunpack.c.l.bf16 %v686
      %v712 = vunpack.c.l.bf16 %v688
      %v713 = vunpack.c.l.bf16 %v690
      %v714 = vunpack.c.l.bf16 %v692
      %v715 = vunpack.c.l.bf16 %v694
      %v716 = vunpack.c.l.bf16 %v696
      %v717 = vunpack.c.l.bf16 %v698
      %v718 = vld [vmem:[%s4 + $0x6] sm:$0x1]
      %v719 = vlaneseq
      %v720 = vshrl.u32 %v719, 7
      %v721 = vsub.s32 0, %v720
      %v722 = vrot.slane %v718, %v721
      %v723 = vmul.f32 %v710, %v722
      %v724 = vmul.f32 %v711, %v722
      %v725 = vmul.f32 %v712, %v722
      %v726 = vmul.f32 %v713, %v722
      %v727 = vmul.f32 %v714, %v722
      %v728 = vmul.f32 %v715, %v722
      %v729 = vmul.f32 %v716, %v722
      %v730 = vmul.f32 %v717, %v722
      %v731 = vadd.f32 %v672, %v723
      %v732 = vadd.f32 %v673, %v724
      %v733 = vadd.f32 %v674, %v725
      %v734 = vadd.f32 %v675, %v726
      %v735 = vadd.f32 %v676, %v727
      %v736 = vadd.f32 %v677, %v728
      %v737 = vadd.f32 %v678, %v729
      %v738 = vadd.f32 %v679, %v730
      %v739 = vunpack.c.l.bf16 %v702
      %v740 = vunpack.c.l.bf16 %v703
      %v741 = vunpack.c.l.bf16 %v704
      %v742 = vunpack.c.l.bf16 %v705
      %v743 = vunpack.c.l.bf16 %v706
      %v744 = vunpack.c.l.bf16 %v707
      %v745 = vunpack.c.l.bf16 %v708
      %v746 = vunpack.c.l.bf16 %v709
      %v747 = vld [vmem:[%s4 + $0x7] sm:$0x1]
      %v748 = vlaneseq
      %v749 = vshrl.u32 %v748, 7
      %v750 = vsub.s32 0, %v749
      %v751 = vrot.slane %v747, %v750
      %v752 = vmul.f32 %v739, %v751
      %v753 = vmul.f32 %v740, %v751
      %v754 = vmul.f32 %v741, %v751
      %v755 = vmul.f32 %v742, %v751
      %v756 = vmul.f32 %v743, %v751
      %v757 = vmul.f32 %v744, %v751
      %v758 = vmul.f32 %v745, %v751
      %v759 = vmul.f32 %v746, %v751
      %v760 = vadd.f32 %v731, %v752
      %v761 = vadd.f32 %v732, %v753
      %v762 = vadd.f32 %v733, %v754
      %v763 = vadd.f32 %v734, %v755
      %v764 = vadd.f32 %v735, %v756
      %v765 = vadd.f32 %v736, %v757
      %v766 = vadd.f32 %v737, %v758
      %v767 = vadd.f32 %v738, %v759
      %v768 = vunpack.c.l.bf16 %v685
      %v769 = vunpack.c.l.bf16 %v687
      %v770 = vunpack.c.l.bf16 %v689
      %v771 = vunpack.c.l.bf16 %v691
      %v772 = vunpack.c.l.bf16 %v693
      %v773 = vunpack.c.l.bf16 %v695
      %v774 = vunpack.c.l.bf16 %v697
      %v775 = vunpack.c.l.bf16 %v699
      %v776 = vld [vmem:[%s4 + $0x8] sm:$0x1]
      %v777 = vlaneseq
      %v778 = vshrl.u32 %v777, 7
      %v779 = vsub.s32 0, %v778
      %v780 = vrot.slane %v776, %v779
      %v781 = vmul.f32 %v710, %v780
      %v782 = vmul.f32 %v768, %v780
      %v783 = vmul.f32 %v711, %v780
      %v784 = vmul.f32 %v769, %v780
      %v785 = vmul.f32 %v712, %v780
      %v786 = vmul.f32 %v770, %v780
      %v787 = vmul.f32 %v713, %v780
      %v788 = vmul.f32 %v771, %v780
      %v789 = vmul.f32 %v714, %v780
      %v790 = vmul.f32 %v772, %v780
      %v791 = vmul.f32 %v715, %v780
      %v792 = vmul.f32 %v773, %v780
      %v793 = vmul.f32 %v716, %v780
      %v794 = vmul.f32 %v774, %v780
      %v795 = vmul.f32 %v717, %v780
      %v796 = vmul.f32 %v775, %v780
      %v813 = vrot.slane %v781, 1
      %v814 = vrot.slane %v782, 1
      %v815 = vsel %vm468, %v813, %v814
      %v816 = vrot.slane %v783, 1
      %v817 = vrot.slane %v784, 1
      %v818 = vsel %vm468, %v816, %v817
      %v819 = vrot.slane %v785, 1
      %v820 = vrot.slane %v786, 1
      %v821 = vsel %vm468, %v819, %v820
      %v822 = vrot.slane %v787, 1
      %v823 = vrot.slane %v788, 1
      %v824 = vsel %vm468, %v822, %v823
      %v825 = vrot.slane %v789, 1
      %v826 = vrot.slane %v790, 1
      %v827 = vsel %vm468, %v825, %v826
      %v828 = vrot.slane %v791, 1
      %v829 = vrot.slane %v792, 1
      %v830 = vsel %vm468, %v828, %v829
      %v831 = vrot.slane %v793, 1
      %v832 = vrot.slane %v794, 1
      %v833 = vsel %vm468, %v831, %v832
      %v834 = vrot.slane %v795, 1
      %v835 = vrot.slane %v796, 1
      %v836 = vsel %vm468, %v834, %v835
      %v845 = vadd.f32 %v760, %v815
      %v846 = vadd.f32 %v761, %v818
      %v847 = vadd.f32 %v762, %v821
      %v848 = vadd.f32 %v763, %v824
      %v849 = vadd.f32 %v764, %v827
      %v850 = vadd.f32 %v765, %v830
      %v851 = vadd.f32 %v766, %v833
      %v852 = vadd.f32 %v767, %v836
      %v853 = vld [vmem:[%s5] sm:$0x1]
      %v855 = vlaneseq
      %v856 = vshrl.u32 %v855, 7
      %v857 = vsub.s32 0, %v856
      %v858 = vrot.slane %v853, %v857
      %v860 = vadd.f32 %v845, %v858
      %v861 = vadd.f32 %v846, %v858
      %v862 = vadd.f32 %v847, %v858
      %v863 = vadd.f32 %v848, %v858
      %v864 = vadd.f32 %v849, %v858
      %v865 = vadd.f32 %v850, %v858
      %v866 = vadd.f32 %v851, %v858
      %v867 = vadd.f32 %v852, %v858
      %v868 = vmax.f32 %v860, 0.0
      %v869 = vmax.f32 %v861, 0.0
      %v870 = vmax.f32 %v862, 0.0
      %v871 = vmax.f32 %v863, 0.0
      %v872 = vmax.f32 %v864, 0.0
      %v873 = vmax.f32 %v865, 0.0
      %v874 = vmax.f32 %v866, 0.0
      %v875 = vmax.f32 %v867, 0.0
      %v876 = vmin.f32 %v868, 6.0
      %v877 = vmin.f32 %v869, 6.0
      %v878 = vmin.f32 %v870, 6.0
      %v879 = vmin.f32 %v871, 6.0
      %v880 = vmin.f32 %v872, 6.0
      %v881 = vmin.f32 %v873, 6.0
      %v882 = vmin.f32 %v874, 6.0
      %v883 = vmin.f32 %v875, 6.0
      %v884 = vpack.c.bf16 %v876, %v876
      %v885 = vpack.c.bf16 %v877, %v877
      %v886 = vpack.c.bf16 %v878, %v878
      %v887 = vpack.c.bf16 %v879, %v879
      %v888 = vpack.c.bf16 %v880, %v880
      %v889 = vpack.c.bf16 %v881, %v881
      %v890 = vpack.c.bf16 %v882, %v882
      %v891 = vpack.c.bf16 %v883, %v883
      %vm892 = vcmask 257024
      %893 = vst.msk [vmem:[%s333] sm:$0xf] %vm892, %v884
      %894 = vst.msk [vmem:[%s333 + $0x4] sm:$0xf] %vm892, %v885
      %895 = vst.msk [vmem:[%s333 + $0x8] sm:$0xf] %vm892, %v886
      %896 = vst.msk [vmem:[%s333 + $0xc] sm:$0xf] %vm892, %v887
      %897 = vst.msk [vmem:[%s333 + $0x10] sm:$0xf] %vm892, %v888
      %898 = vst.msk [vmem:[%s333 + $0x14] sm:$0xf] %vm892, %v889
      %899 = vst.msk [vmem:[%s333 + $0x18] sm:$0xf] %vm892, %v890
      %900 = vst.msk [vmem:[%s333 + $0x1c] sm:$0xf] %vm892, %v891
      %s901 = smul.u32 8, %s22
      %p902 = scmp.lt.s32.totalorder %s21, 1
      %s903 = scalar_select %p902, %s21, 1
      %p904 = scmp.lt.s32.totalorder %s901, 7
      %s905 = scalar_select %p904, %s901, 7
      %s906 = smul.addr %s903, 8
      %s907 = sadd.s32 %s905, %s906
      %s908 = smul.addr %s907, 4
      %s909 = scalar_lea.vmem %s6, %s908
      // Predicated region
      $region45: #{mobilenet_v2_forward.20} parent=43 // pred_check
        %p910 = pneg %p195
      $region46: #{mobilenet_v2_forward.20} parent=43 // pred_check_branch
        %912 = sbr.rel (%p910) target = $region48
      $region47: #{mobilenet_v2_forward.20} parent=43 // pred_region
        %s913 = smul.u32 8, %s22
      $region48: #{mobilenet_v2_forward.20} parent=43 // pred_fallthru
        _
    $region44: #{mobilenet_v2_forward.20} parent=5 // pred_fallthru
      _
    %p914 = scmp.le.s32.totalorder 2, %s12
    // Predicated region
    $region49: #{mobilenet_v2_forward.20} parent=5 // pred_check
      %p915 = pneg %p914
    $region50: #{mobilenet_v2_forward.20} parent=5 // pred_check_branch
      %917 = sbr.rel (%p915) target = $region52
    $region51: #{mobilenet_v2_forward.20} parent=5 // pred_region
      %s918 = ssub.s32 %s12, 2
      // Predicated region
      $region53: #{mobilenet_v2_forward.20} parent=51 // pred_check
        %p919 = pneg %p201
      $region54: #{mobilenet_v2_forward.20} parent=51 // pred_check_branch
        %921 = sbr.rel (%p919) target = $region56
      $region55: #{mobilenet_v2_forward.20} parent=51 // pred_region
        %s922 = smul.u32 8, %s24
        %p923 = scmp.lt.s32.totalorder %s23, 1
        %s924 = scalar_select %p923, %s23, 1
        %p925 = scmp.lt.s32.totalorder %s922, 7
        %s926 = scalar_select %p925, %s922, 7
        %s927 = smul.addr %s924, 8
        %s928 = sadd.s32 %s926, %s927
        %s929 = smul.addr %s928, 4
        %s930 = scalar_lea.vmem %s6, %s929
      $region56: #{mobilenet_v2_forward.20} parent=51 // pred_fallthru
        _
    $region52: #{mobilenet_v2_forward.20} parent=5 // pred_fallthru
      _
  $region6: #{mobilenet_v2_forward.20} parent=0 // loop_footer
    %s16 = sadd.s32 1, %s12
  $region7: #{mobilenet_v2_forward.20} parent=0 // loop_footer_branch
    %11 = sbr.rel target = $region3
  $region8: #{mobilenet_v2_forward.20} parent=0 // loop_exit
    _

// kernel: mobilenet_v2_forward.22
$region0: #{mobilenet_v2_forward.22}
  #allocation0 [shape = 'u32[]', space=smem, size = 0x4, offset = 0x4, fixed_abs, tag = 'smem constant byte address 0x4 - core index']
  #allocation1 [shape = 'u32[144,128]{1,0:T(1,128)}', space=vmem, size = 0x12000, scoped, tag = 'internal scratch']
  %s0 = inlined_call_operand.vmem [shape: bf16[128,16], index: 0, kind: input, shape index: {}]
  %s1 = inlined_call_operand.vmem [shape: bf16[16,64], index: 1, kind: input, shape index: {}]
  %s2 = inlined_call_operand.vmem [shape: f32[1,64], index: 2, kind: input, shape index: {}]
  %s3 = inlined_call_operand.vmem [shape: bf16[128,64], index: 3, kind: output, shape index: {}]
  %s4 = sld [smem:[#allocation0]]
  $region22: #{mobilenet_v2_forward.22} parent=0
    _
  %s6 = ssub.s32 1, %s4
  %s7 = scalar_select 0, %s6, %s4
  // Predicated region
  $region2: #{mobilenet_v2_forward.22} parent=0 // pred_check
    _
  $region3: #{mobilenet_v2_forward.22} parent=0 // pred_check_branch
    %9 = sbr.rel (0) target = $region5
  $region4: #{mobilenet_v2_forward.22} parent=0 // pred_region
    _
  $region5: #{mobilenet_v2_forward.22} parent=0 // pred_fallthru
    _
  // Predicated region
  $region6: #{mobilenet_v2_forward.22} parent=0 // pred_check
    _
  $region7: #{mobilenet_v2_forward.22} parent=0 // pred_check_branch
    %11 = sbr.rel (0) target = $region9
  $region8: #{mobilenet_v2_forward.22} parent=0 // pred_region
    _
  $region9: #{mobilenet_v2_forward.22} parent=0 // pred_fallthru
    _
  // Predicated region
  $region10: #{mobilenet_v2_forward.22} parent=0 // pred_check
    _
  $region11: #{mobilenet_v2_forward.22} parent=0 // pred_check_branch
    %13 = sbr.rel (0) target = $region13
  $region12: #{mobilenet_v2_forward.22} parent=0 // pred_region
    _
  $region13: #{mobilenet_v2_forward.22} parent=0 // pred_fallthru
    _
  %v15 = vld [vmem:[%s0] sm:$0xf]
  %v16 = vld [vmem:[%s0 + $0x4] sm:$0xf]
  %v17 = vld [vmem:[%s0 + $0x8] sm:$0xf]
  %v18 = vld [vmem:[%s0 + $0xc] sm:$0xf]
  %v19 = vld [vmem:[%s0 + $0x10] sm:$0xf]
  %v20 = vld [vmem:[%s0 + $0x14] sm:$0xf]
  %v21 = vld [vmem:[%s0 + $0x18] sm:$0xf]
  %v22 = vld [vmem:[%s0 + $0x1c] sm:$0xf]
  %v23 = vld [vmem:[%s0 + $0x20] sm:$0xf]
  %v24 = vld [vmem:[%s0 + $0x24] sm:$0xf]
  %v25 = vld [vmem:[%s0 + $0x28] sm:$0xf]
  %v26 = vld [vmem:[%s0 + $0x2c] sm:$0xf]
  %v27 = vld [vmem:[%s0 + $0x30] sm:$0xf]
  %v28 = vld [vmem:[%s0 + $0x34] sm:$0xf]
  %v29 = vld [vmem:[%s0 + $0x38] sm:$0xf]
  %v30 = vld [vmem:[%s0 + $0x3c] sm:$0xf]
  %v31 = vld [vmem:[%s1] sm:$0xf]
  %v32 = vld [vmem:[%s1 + $0x4] sm:$0xf]
  %v33 = vld [vmem:[%s2] sm:$0x1]
  %v35 = vlaneseq
  %v36 = vshrl.u32 %v35, 7
  %v37 = vsub.s32 0, %v36
  %v38 = vrot.slane %v33, %v37
  %v56 = vunpack.c.l.b16 %v15
  %v57 = vunpack.c.l.b16 %v16
  %v58 = vunpack.c.l.b16 %v17
  %v59 = vunpack.c.l.b16 %v18
  %v60 = vunpack.c.l.b16 %v19
  %v61 = vunpack.c.l.b16 %v20
  %v62 = vunpack.c.l.b16 %v21
  %v63 = vunpack.c.l.b16 %v22
  %v64 = vunpack.c.l.b16 %v23
  %v65 = vunpack.c.l.b16 %v24
  %v66 = vunpack.c.l.b16 %v25
  %v67 = vunpack.c.l.b16 %v26
  %v68 = vunpack.c.l.b16 %v27
  %v69 = vunpack.c.l.b16 %v28
  %v70 = vunpack.c.l.b16 %v29
  %v71 = vunpack.c.l.b16 %v30
  %v72 = vpack.c.b16 %v57, %v56
  %v73 = vpack.c.b16 %v59, %v58
  %v74 = vpack.c.b16 %v61, %v60
  %v75 = vpack.c.b16 %v63, %v62
  %v76 = vpack.c.b16 %v65, %v64
  %v77 = vpack.c.b16 %v67, %v66
  %v78 = vpack.c.b16 %v69, %v68
  %v79 = vpack.c.b16 %v71, %v70
  %v82 = vunpack.c.l.b16 %v31
  %v83 = vunpack.c.l.b16 %v32
  %v84 = vpack.c.b16 %v83, %v82
  %vm86 = vcmask 130048
  %v88 = vsel %vm86, %v72, 0
  %v91 = vsel %vm86, %v73, 0
  %v94 = vsel %vm86, %v74, 0
  %v97 = vsel %vm86, %v75, 0
  %v100 = vsel %vm86, %v76, 0
  %v103 = vsel %vm86, %v77, 0
  %v106 = vsel %vm86, %v78, 0
  %v109 = vsel %vm86, %v79, 0
  %111 = vmatprep.subr.bf16.mxu0 0
  %112 = vmatpush1.bf16.msra.mxu0 %v84
  %113 = vmatprep.subr.bf16.mxu0 0
  %114 = vmatpush1.bf16.msra.mxu0 0
  %115 = vmatprep.subr.bf16.mxu0 0
  %116 = vmatpush1.bf16.msra.mxu0 0
  %117 = vmatprep.subr.bf16.mxu0 0
  %118 = vmatpush1.bf16.msra.mxu0 0
  %119 = vmatprep.subr.bf16.mxu0 0
  %120 = vmatpush1.bf16.msra.mxu0 0
  %121 = vmatprep.subr.bf16.mxu0 0
  %122 = vmatpush1.bf16.msra.mxu0 0
  %123 = vmatprep.subr.bf16.mxu0 0
  %124 = vmatpush1.bf16.msra.mxu0 0
  %125 = vmatprep.subr.bf16.mxu0 0
  %126 = vmatpush1.bf16.msra.mxu0 0
  %127 = vmatprep.subr.bf16.mxu0 0
  %128 = vmatpush1.bf16.msra.mxu0 0
  %129 = vmatprep.subr.bf16.mxu0 0
  %130 = vmatpush1.bf16.msra.mxu0 0
  %131 = vmatprep.subr.bf16.mxu0 0
  %132 = vmatpush1.bf16.msra.mxu0 0
  %133 = vmatprep.subr.bf16.mxu0 0
  %134 = vmatpush1.bf16.msra.mxu0 0
  %135 = vmatprep.subr.bf16.mxu0 0
  %136 = vmatpush1.bf16.msra.mxu0 0
  %137 = vmatprep.subr.bf16.mxu0 0
  %138 = vmatpush1.bf16.msra.mxu0 0
  %139 = vmatprep.subr.bf16.mxu0 0
  %140 = vmatpush1.bf16.msra.mxu0 0
  %141 = vmatprep.subr.bf16.mxu0 0
  %142 = vmatpush1.bf16.msra.mxu0 0
  %143 = vmatprep.mubr.bf16.mxu0 0
  %144 = vmatmul.mubr.bf16.gmra.mrb[0].mxu0 %v88
  %v145 = vpop.f32.mrb[0].mxu0
  %v146 = vadd.f32 %v38, %v145
  %v147 = vpop.f32.mrb[0].mxu0
  %v148 = vpop.f32.mrb[0].mxu0
  %v149 = vadd.f32 %v38, %v148
  %v150 = vpop.f32.mrb[0].mxu0
  %151 = vmatprep.mubr.bf16.mxu0 0
  %152 = vmatmul.mubr.bf16.gmra.mrb[0].mxu0 %v91
  %v153 = vpop.f32.mrb[0].mxu0
  %v154 = vadd.f32 %v38, %v153
  %v155 = vpop.f32.mrb[0].mxu0
  %v156 = vpop.f32.mrb[0].mxu0
  %v157 = vadd.f32 %v38, %v156
  %v158 = vpop.f32.mrb[0].mxu0
  %159 = vmatprep.mubr.bf16.mxu0 0
  %160 = vmatmul.mubr.bf16.gmra.mrb[0].mxu0 %v94
  %v161 = vpop.f32.mrb[0].mxu0
  %v162 = vadd.f32 %v38, %v161
  %v163 = vpop.f32.mrb[0].mxu0
  %v164 = vpop.f32.mrb[0].mxu0
  %v165 = vadd.f32 %v38, %v164
  %v166 = vpop.f32.mrb[0].mxu0
  %167 = vmatprep.mubr.bf16.mxu0 0
  %168 = vmatmul.mubr.bf16.gmra.mrb[0].mxu0 %v97
  %v169 = vpop.f32.mrb[0].mxu0
  %v170 = vadd.f32 %v38, %v169
  %v171 = vpop.f32.mrb[0].mxu0
  %v172 = vpop.f32.mrb[0].mxu0
  %v173 = vadd.f32 %v38, %v172
  %v174 = vpop.f32.mrb[0].mxu0
  %175 = vmatprep.mubr.bf16.mxu0 0
  %176 = vmatmul.mubr.bf16.gmra.mrb[0].mxu0 %v100
  %v177 = vpop.f32.mrb[0].mxu0
  %v178 = vadd.f32 %v38, %v177
  %v179 = vpop.f32.mrb[0].mxu0
  %v180 = vpop.f32.mrb[0].mxu0
  %v181 = vadd.f32 %v38, %v180
  %v182 = vpop.f32.mrb[0].mxu0
  %183 = vmatprep.mubr.bf16.mxu0 0
  %184 = vmatmul.mubr.bf16.gmra.mrb[0].mxu0 %v103
  %v185 = vpop.f32.mrb[0].mxu0
  %v186 = vadd.f32 %v38, %v185
  %v187 = vpop.f32.mrb[0].mxu0
  %v188 = vpop.f32.mrb[0].mxu0
  %v189 = vadd.f32 %v38, %v188
  %v190 = vpop.f32.mrb[0].mxu0
  %191 = vmatprep.mubr.bf16.mxu0 0
  %192 = vmatmul.mubr.bf16.gmra.mrb[0].mxu0 %v106
  %v193 = vpop.f32.mrb[0].mxu0
  %v194 = vadd.f32 %v38, %v193
  %v195 = vpop.f32.mrb[0].mxu0
  %v196 = vpop.f32.mrb[0].mxu0
  %v197 = vadd.f32 %v38, %v196
  %v198 = vpop.f32.mrb[0].mxu0
  %199 = vmatprep.mubr.bf16.mxu0 0
  %200 = vmatmul.mubr.bf16.gmra.mrb[0].mxu0 %v109
  %v201 = vpop.f32.mrb[0].mxu0
  %v202 = vadd.f32 %v38, %v201
  %v203 = vpop.f32.mrb[0].mxu0
  %v204 = vpop.f32.mrb[0].mxu0
  %v205 = vadd.f32 %v38, %v204
  %v206 = vpop.f32.mrb[0].mxu0
  %207 = vdwg.mxu0
  %v208 = vmax.f32 %v146, 0.0
  %v209 = vmax.f32 %v149, 0.0
  %v210 = vmax.f32 %v154, 0.0
  %v211 = vmax.f32 %v157, 0.0
  %v212 = vmax.f32 %v162, 0.0
  %v213 = vmax.f32 %v165, 0.0
  %v214 = vmax.f32 %v170, 0.0
  %v215 = vmax.f32 %v173, 0.0
  %v216 = vmax.f32 %v178, 0.0
  %v217 = vmax.f32 %v181, 0.0
  %v218 = vmax.f32 %v186, 0.0
  %v219 = vmax.f32 %v189, 0.0
  %v220 = vmax.f32 %v194, 0.0
  %v221 = vmax.f32 %v197, 0.0
  %v222 = vmax.f32 %v202, 0.0
  %v223 = vmax.f32 %v205, 0.0
  %v224 = vmin.f32 %v208, 6.0
  %v225 = vmin.f32 %v209, 6.0
  %v226 = vmin.f32 %v210, 6.0
  %v227 = vmin.f32 %v211, 6.0
  %v228 = vmin.f32 %v212, 6.0
  %v229 = vmin.f32 %v213, 6.0
  %v230 = vmin.f32 %v214, 6.0
  %v231 = vmin.f32 %v215, 6.0
  %v232 = vmin.f32 %v216, 6.0
  %v233 = vmin.f32 %v217, 6.0
  %v234 = vmin.f32 %v218, 6.0
  %v235 = vmin.f32 %v219, 6.0
  %v236 = vmin.f32 %v220, 6.0
  %v237 = vmin.f32 %v221, 6.0
  %v238 = vmin.f32 %v222, 6.0
  %v239 = vmin.f32 %v223, 6.0
  %v240 = vpack.c.bf16 %v225, %v224
  %v241 = vpack.c.bf16 %v227, %v226
  %v242 = vpack.c.bf16 %v229, %v228
  %v243 = vpack.c.bf16 %v231, %v230
  %v244 = vpack.c.bf16 %v233, %v232
  %v245 = vpack.c.bf16 %v235, %v234
  %v246 = vpack.c.bf16 %v237, %v236
  %v247 = vpack.c.bf16 %v239, %v238
  %v256 = vunpack.c.l.b16 %v240
  %v257 = vunpack.c.h.b16 %v240
  %v258 = vunpack.c.l.b16 %v241
  %v259 = vunpack.c.h.b16 %v241
  %v260 = vunpack.c.l.b16 %v242
  %v261 = vunpack.c.h.b16 %v242
  %v262 = vunpack.c.l.b16 %v243
  %v263 = vunpack.c.h.b16 %v243
  %v264 = vunpack.c.l.b16 %v244
  %v265 = vunpack.c.h.b16 %v244
  %v266 = vunpack.c.l.b16 %v245
  %v267 = vunpack.c.h.b16 %v245
  %v268 = vunpack.c.l.b16 %v246
  %v269 = vunpack.c.h.b16 %v246
  %v270 = vunpack.c.l.b16 %v247
  %v271 = vunpack.c.h.b16 %v247
  %v272 = vpack.c.b16 %v256, %v256
  %v273 = vpack.c.b16 %v257, %v257
  %v274 = vpack.c.b16 %v258, %v258
  %v275 = vpack.c.b16 %v259, %v259
  %v276 = vpack.c.b16 %v260, %v260
  %v277 = vpack.c.b16 %v261, %v261
  %v278 = vpack.c.b16 %v262, %v262
  %v279 = vpack.c.b16 %v263, %v263
  %v280 = vpack.c.b16 %v264, %v264
  %v281 = vpack.c.b16 %v265, %v265
  %v282 = vpack.c.b16 %v266, %v266
  %v283 = vpack.c.b16 %v267, %v267
  %v284 = vpack.c.b16 %v268, %v268
  %v285 = vpack.c.b16 %v269, %v269
  %v286 = vpack.c.b16 %v270, %v270
  %v287 = vpack.c.b16 %v271, %v271
  %vm304 = vcmask 519168
  %305 = vst.msk [vmem:[%s3] sm:$0xf] %vm304, %v272
  %306 = vst.msk [vmem:[%s3 + $0x4] sm:$0xf] %vm304, %v273
  %307 = vst.msk [vmem:[%s3 + $0x8] sm:$0xf] %vm304, %v274
  %308 = vst.msk [vmem:[%s3 + $0xc] sm:$0xf] %vm304, %v275
  %309 = vst.msk [vmem:[%s3 + $0x10] sm:$0xf] %vm304, %v276
  %310 = vst.msk [vmem:[%s3 + $0x14] sm:$0xf] %vm304, %v277
  %311 = vst.msk [vmem:[%s3 + $0x18] sm:$0xf] %vm304, %v278
  %312 = vst.msk [vmem:[%s3 + $0x1c] sm:$0xf] %vm304, %v279
  %313 = vst.msk [vmem:[%s3 + $0x20] sm:$0xf] %vm304, %v280
  %314 = vst.msk [vmem:[%s3 + $0x24] sm:$0xf] %vm304, %v281
  %315 = vst.msk [vmem:[%s3 + $0x28] sm:$0xf] %vm304, %v282
  %316 = vst.msk [vmem:[%s3 + $0x2c] sm:$0xf] %vm304, %v283
  %317 = vst.msk [vmem:[%s3 + $0x30] sm:$0xf] %vm304, %v284
  %318 = vst.msk [vmem:[%s3 + $0x34] sm:$0xf] %vm304, %v285
  %319 = vst.msk [vmem:[%s3 + $0x38] sm:$0xf] %vm304, %v286
  %320 = vst.msk [vmem:[%s3 + $0x3c] sm:$0xf] %vm304, %v287
  // Predicated region
  $region14: #{mobilenet_v2_forward.22} parent=0 // pred_check
    _
  $region15: #{mobilenet_v2_forward.22} parent=0 // pred_check_branch
    %322 = sbr.rel (0) target = $region17
  $region16: #{mobilenet_v2_forward.22} parent=0 // pred_region
    _
  $region17: #{mobilenet_v2_forward.22} parent=0 // pred_fallthru
    _
  // Predicated region
  $region18: #{mobilenet_v2_forward.22} parent=0 // pred_check
    _
  $region19: #{mobilenet_v2_forward.22} parent=0 // pred_check_branch
    %324 = sbr.rel (0) target = $region21
  $region20: #{mobilenet_v2_forward.22} parent=0 // pred_region
    _
  $region21: #{mobilenet_v2_forward.22} parent=0 // pred_fallthru
    _

// kernel: mobilenet_v2_forward.23
$region0: #{mobilenet_v2_forward.23}
  #allocation0 [shape = 'u32[]', space=smem, size = 0x4, offset = 0x4, fixed_abs, tag = 'smem constant byte address 0x4 - core index']
  #allocation1 [shape = 'u32[144,128]{1,0:T(1,128)}', space=vmem, size = 0x12000, scoped, tag = 'internal scratch']
  %s0 = inlined_call_operand.vmem [shape: bf16[2,10,10,64], index: 0, kind: input, shape index: {}]
  %s1 = inlined_call_operand.vmem [shape: f32[9,64], index: 1, kind: input, shape index: {}]
  %s2 = inlined_call_operand.vmem [shape: f32[1,64], index: 2, kind: input, shape index: {}]
  %s3 = inlined_call_operand.vmem [shape: bf16[2,8,8,64], index: 3, kind: output, shape index: {}]
  %s4 = sld [smem:[#allocation0]]
  $region45: #{mobilenet_v2_forward.23} parent=0
    _
  %s6 = ssub.s32 1, %s4
  %s7 = scalar_select 0, %s6, %s4
  loop: start=0, step=1, limit=4
  $region2: #{mobilenet_v2_forward.23} parent=0 // loop_pre_header
    _
  $region3: #{mobilenet_v2_forward.23} parent=0 // loop_header
    %s9 = sphi 0, %s13
    %p10 = scmp.ge.s32.totalorder %s9, 4
    %s16 = sphi 0, %s28
    %s17 = sphi 0, %s24
    %s18 = sphi 0, %s16
    %s19 = sphi 0, %s17
    %s20 = sphi 0, %s18
    %s21 = sphi 0, %s19
    %s31 = sphi 0, %s33
    %s34 = sphi 0, %s31
    %s35 = sphi 0, %s34
    %s51 = sphi 0, %s35
    %s55 = sphi 0, %s55
    %s57 = sphi 0, %s55
    %s58 = sphi 0, %s57
    %s72 = sphi 0, %s58
    %s76 = sphi 0, %s76
    %s78 = sphi 0, %s76
    %s79 = sphi 0, %s78
    %s93 = sphi 0, %s79
    %s101 = sphi 0, %s103
    %s104 = sphi 0, %s101
    %s105 = sphi 0, %s104
    %s121 = sphi 0, %s105
  $region4: #{mobilenet_v2_forward.23} parent=0 // loop_header_branch
    %12 = sbr.rel (%p10) target = $region8
  $region5: #{mobilenet_v2_forward.23} parent=0 // loop_body
    %s14 = ssub.s32 %s9, 1
    %s15 = ssub.s32 %s9, 2
    %s22 = sadd.s32 1, %s17
    %p23 = scmp.ge.s32.totalorder %s22, 1
    %s24 = scalar_select %p23, 0, %s22
    %s25 = sadd.s32 1, %s16
    %s26 = scalar_select %p23, %s25, %s16
    %p27 = scmp.ge.s32.totalorder %s26, 2
    %s28 = scalar_select %p27, 0, %s26
    %s29 = ssub.s32 %s16, %s28
    %p30 = scmp.eq.s32.totalorder %s29, 0
    %s32 = sadd.s32 %s31, 1
    %s33 = scalar_select %p30, %s31, %s32
    %p36 = pneg %p30
    %p37 = scmp.eq.s32.totalorder %s9, 1
    %p38 = por %p36, %p37
    %p39 = scmp.ne.s32.totalorder %s31, %s34
    %p40 = scmp.eq.s32.totalorder %s9, 0
    %p41 = por %p39, %p40
    %p42 = scmp.ne.s32.totalorder %s31, %s34
    %p43 = scmp.eq.s32.totalorder %s14, 1
    %p44 = por %p42, %p43
    %p45 = scmp.ne.s32.totalorder %s34, %s35
    %p46 = scmp.eq.s32.totalorder %s14, 0
    %p47 = por %p45, %p46
    %p48 = scmp.ne.s32.totalorder %s34, %s35
    %p49 = scmp.eq.s32.totalorder %s15, 1
    %p50 = por %p48, %p49
    %p52 = scmp.ne.s32.totalorder %s35, %s51
    %p53 = scmp.eq.s32.totalorder %s15, 0
    %p54 = por %p52, %p53
    %s56 = sadd.s32 %s55, 1
    %p59 = scmp.eq.s32.totalorder %s9, 1
    %p60 = scmp.ne.s32.totalorder %s55, %s57
    %p61 = scmp.eq.s32.totalorder %s9, 0
    %p62 = por %p60, %p61
    %p63 = scmp.ne.s32.totalorder %s55, %s57
    %p64 = scmp.eq.s32.totalorder %s14, 1
    %p65 = por %p63, %p64
    %p66 = scmp.ne.s32.totalorder %s57, %s58
    %p67 = scmp.eq.s32.totalorder %s14, 0
    %p68 = por %p66, %p67
    %p69 = scmp.ne.s32.totalorder %s57, %s58
    %p70 = scmp.eq.s32.totalorder %s15, 1
    %p71 = por %p69, %p70
    %p73 = scmp.ne.s32.totalorder %s58, %s72
    %p74 = scmp.eq.s32.totalorder %s15, 0
    %p75 = por %p73, %p74
    %s77 = sadd.s32 %s76, 1
    %p80 = scmp.eq.s32.totalorder %s9, 1
    %p81 = scmp.ne.s32.totalorder %s76, %s78
    %p82 = scmp.eq.s32.totalorder %s9, 0
    %p83 = por %p81, %p82
    %p84 = scmp.ne.s32.totalorder %s76, %s78
    %p85 = scmp.eq.s32.totalorder %s14, 1
    %p86 = por %p84, %p85
    %p87 = scmp.ne.s32.totalorder %s78, %s79
    %p88 = scmp.eq.s32.totalorder %s14, 0
    %p89 = por %p87, %p88
    %p90 = scmp.ne.s32.totalorder %s78, %s79
    %p91 = scmp.eq.s32.totalorder %s15, 1
    %p92 = por %p90, %p91
    %p94 = scmp.ne.s32.totalorder %s79, %s93
    %p95 = scmp.eq.s32.totalorder %s15, 0
    %p96 = por %p94, %p95
    %s97 = ssub.s32 %s16, %s28
    %s98 = ssub.s32 %s17, %s24
    %s99 = sor.u32 %s97, %s98
    %p100 = scmp.eq.s32.totalorder %s99, 0
    %s102 = sadd.s32 %s101, 1
    %s103 = scalar_select %p100, %s101, %s102
    %p106 = pneg %p100
    %p107 = scmp.eq.s32.totalorder %s9, 1
    %p108 = por %p106, %p107
    %p109 = scmp.ne.s32.totalorder %s101, %s104
    %p110 = scmp.eq.s32.totalorder %s9, 0
    %p111 = por %p109, %p110
    %p112 = scmp.ne.s32.totalorder %s101, %s104
    %p113 = scmp.eq.s32.totalorder %s14, 1
    %p114 = por %p112, %p113
    %p115 = scmp.ne.s32.totalorder %s104, %s105
    %p116 = scmp.eq.s32.totalorder %s14, 0
    %p117 = por %p115, %p116
    %p118 = scmp.ne.s32.totalorder %s104, %s105
    %p119 = scmp.eq.s32.totalorder %s15, 1
    %p120 = por %p118, %p119
    %p122 = scmp.ne.s32.totalorder %s105, %s121
    %p123 = scmp.eq.s32.totalorder %s15, 0
    %p124 = por %p122, %p123
    %p125 = scmp.le.s32.totalorder 1, %s9
    %p126 = scmp.lt.s32.totalorder %s9, 3
    %p127 = pnand %p125, %p126
    %p128 = pneg %p127
    // Predicated region
    $region9: #{mobilenet_v2_forward.23} parent=5 // pred_check
      _
    $region10: #{mobilenet_v2_forward.23} parent=5 // pred_check_branch
      %130 = sbr.rel (%p127) target = $region12
    $region11: #{mobilenet_v2_forward.23} parent=5 // pred_region
      %s131 = ssub.s32 %s9, 1
      // Predicated region
      $region13: #{mobilenet_v2_forward.23} parent=11 // pred_check
        %p132 = pneg %p68
      $region14: #{mobilenet_v2_forward.23} parent=11 // pred_check_branch
        %134 = sbr.rel (%p132) target = $region16
      $region15: #{mobilenet_v2_forward.23} parent=11 // pred_region
        _
      $region16: #{mobilenet_v2_forward.23} parent=11 // pred_fallthru
        _
      // Predicated region
      $region17: #{mobilenet_v2_forward.23} parent=11 // pred_check
        %p135 = pneg %p89
      $region18: #{mobilenet_v2_forward.23} parent=11 // pred_check_branch
        %137 = sbr.rel (%p135) target = $region20
      $region19: #{mobilenet_v2_forward.23} parent=11 // pred_region
        _
      $region20: #{mobilenet_v2_forward.23} parent=11 // pred_fallthru
        _
    $region12: #{mobilenet_v2_forward.23} parent=5 // pred_fallthru
      _
    %p138 = scmp.lt.s32.totalorder %s9, 2
    // Predicated region
    $region21: #{mobilenet_v2_forward.23} parent=5 // pred_check
      %p139 = pneg %p138
    $region22: #{mobilenet_v2_forward.23} parent=5 // pred_check_branch
      %141 = sbr.rel (%p139) target = $region24
    $region23: #{mobilenet_v2_forward.23} parent=5 // pred_region
      // Predicated region
      $region25: #{mobilenet_v2_forward.23} parent=23 // pred_check
        %p142 = pneg %p41
      $region26: #{mobilenet_v2_forward.23} parent=23 // pred_check_branch
        %144 = sbr.rel (%p142) target = $region28
      $region27: #{mobilenet_v2_forward.23} parent=23 // pred_region
        %p145 = scmp.lt.s32.totalorder %s16, 1
        %s146 = scalar_select %p145, %s16, 1
        %s147 = smul.addr %s146, 20
        %s148 = smul.addr %s147, 4
        %s149 = scalar_lea.vmem %s0, %s148
      $region28: #{mobilenet_v2_forward.23} parent=23 // pred_fallthru
        _
    $region24: #{mobilenet_v2_forward.23} parent=5 // pred_fallthru
      _
    %p150 = scmp.le.s32.totalorder 1, %s9
    %p151 = scmp.lt.s32.totalorder %s9, 3
    %p152 = pnand %p150, %p151
    %p153 = pneg %p152
    // Predicated region
    $region29: #{mobilenet_v2_forward.23} parent=5 // pred_check
      _
    $region30: #{mobilenet_v2_forward.23} parent=5 // pred_check_branch
      %155 = sbr.rel (%p152) target = $region32
    $region31: #{mobilenet_v2_forward.23} parent=5 // pred_region
      %s156 = ssub.s32 %s9, 1
      %p157 = scmp.lt.s32.totalorder %s18, 1
      %s158 = scalar_select %p157, %s18, 1
      %s159 = smul.addr %s158, 20
      %s160 = smul.addr %s159, 4
      %s161 = scalar_lea.vmem %s0, %s160
      %p162 = pneg %p47
      %p163 = pneg %p44
      %p164 = pneg %p68
      %p165 = pneg %p65
      %p166 = pneg %p89
      %p167 = pneg %p86
      %p168 = pneg %p117
      %p169 = pneg %p114
      %s170 = smul.u32 8, %s19
      %p171 = scmp.lt.s32.totalorder %s18, 1
      %s172 = scalar_select %p171, %s18, 1
      %p173 = scmp.lt.s32.totalorder %s170, 7
      %s174 = scalar_select %p173, %s170, 7
      %s175 = smul.addr %s172, 8
      %s176 = sadd.s32 %s174, %s175
      %s177 = smul.addr %s176, 4
      %s178 = scalar_lea.vmem %s3, %s177
      %p179 = scmp.lt.s32.totalorder %s18, 1
      %s180 = scalar_select %p179, %s18, 1
      %s181 = smul.addr %s180, 20
      %s182 = smul.addr %s181, 4
      %s183 = scalar_lea.vmem %s0, %s182
      %s184 = smul.u32 8, %s19
      %p185 = scmp.lt.s32.totalorder %s18, 1
      %s186 = scalar_select %p185, %s18, 1
      %p187 = scmp.lt.s32.totalorder %s184, 7
      %s188 = scalar_select %p187, %s184, 7
      %s189 = smul.addr %s186, 8
      %s190 = sadd.s32 %s188, %s189
      %s191 = smul.addr %s190, 4
      %s192 = scalar_lea.vmem %s3, %s191
      %s193 = smul.u32 8, %s19
      %s194 = smul.u32 %s19, 8
      %s195 = smul.u32 %s194, 2
      %s196 = smul.addr %s195, 4
      %s197 = scalar_lea.vmem %s183, %s196
      %v198 = vld [vmem:[%s197] sm:$0xf]
      %v199 = vld [vmem:[%s197 + $0x4] sm:$0x1]
      %v200 = vld [vmem:[%s197 + $0x8] sm:$0xf]
      %v201 = vld [vmem:[%s197 + $0xc] sm:$0x1]
      %v202 = vld [vmem:[%s197 + $0x10] sm:$0xf]
      %v203 = vld [vmem:[%s197 + $0x14] sm:$0x1]
      %v204 = vld [vmem:[%s197 + $0x18] sm:$0xf]
      %v205 = vld [vmem:[%s197 + $0x1c] sm:$0x1]
      %v206 = vld [vmem:[%s197 + $0x20] sm:$0xf]
      %v207 = vld [vmem:[%s197 + $0x24] sm:$0x1]
      %v208 = vld [vmem:[%s197 + $0x28] sm:$0xf]
      %v209 = vld [vmem:[%s197 + $0x2c] sm:$0x1]
      %v210 = vld [vmem:[%s197 + $0x30] sm:$0xf]
      %v211 = vld [vmem:[%s197 + $0x34] sm:$0x1]
      %v212 = vld [vmem:[%s197 + $0x38] sm:$0xf]
      %v213 = vld [vmem:[%s197 + $0x3c] sm:$0x1]
      %v214 = vunpack.c.l.bf16 %v198
      %v215 = vunpack.c.l.bf16 %v200
      %v216 = vunpack.c.l.bf16 %v202
      %v217 = vunpack.c.l.bf16 %v204
      %v218 = vunpack.c.l.bf16 %v206
      %v219 = vunpack.c.l.bf16 %v208
      %v220 = vunpack.c.l.bf16 %v210
      %v221 = vunpack.c.l.bf16 %v212
      %v222 = vld [vmem:[%s1] sm:$0x1]
      %v223 = vlaneseq
      %v224 = vshrl.u32 %v223, 7
      %v225 = vsub.s32 0, %v224
      %v226 = vrot.slane %v222, %v225
      %v227 = vmul.f32 %v214, %v226
      %v228 = vmul.f32 %v215, %v226
      %v229 = vmul.f32 %v216, %v226
      %v230 = vmul.f32 %v217, %v226
      %v231 = vmul.f32 %v218, %v226
      %v232 = vmul.f32 %v219, %v226
      %v233 = vmul.f32 %v220, %v226
      %v234 = vmul.f32 %v221, %v226
      %v235 = vadd.f32 %v227, 0.0
      %v236 = vadd.f32 %v228, 0.0
      %v237 = vadd.f32 %v229, 0.0
      %v238 = vadd.f32 %v230, 0.0
      %v239 = vadd.f32 %v231, 0.0
      %v240 = vadd.f32 %v232, 0.0
      %v241 = vadd.f32 %v233, 0.0
      %v242 = vadd.f32 %v234, 0.0
      %v243 = vunpack.c.l.bf16 %v199
      %v244 = vunpack.c.l.bf16 %v201
      %v245 = vunpack.c.l.bf16 %v203
      %v246 = vunpack.c.l.bf16 %v205
      %v247 = vunpack.c.l.bf16 %v207
      %v248 = vunpack.c.l.bf16 %v209
      %v249 = vunpack.c.l.bf16 %v211
      %v250 = vunpack.c.l.bf16 %v213
      %v251 = vld [vmem:[%s1 + $0x1] sm:$0x1]
      %v252 = vlaneseq
      %v253 = vshrl.u32 %v252, 7
      %v254 = vsub.s32 0, %v253
      %v255 = vrot.slane %v251, %v254
      %v256 = vmul.f32 %v214, %v255
      %v257 = vmul.f32 %v243, %v255
      %v258 = vmul.f32 %v215, %v255
      %v259 = vmul.f32 %v244, %v255
      %v260 = vmul.f32 %v216, %v255
      %v261 = vmul.f32 %v245, %v255
      %v262 = vmul.f32 %v217, %v255
      %v263 = vmul.f32 %v246, %v255
      %v264 = vmul.f32 %v218, %v255
      %v265 = vmul.f32 %v247, %v255
      %v266 = vmul.f32 %v219, %v255
      %v267 = vmul.f32 %v248, %v255
      %v268 = vmul.f32 %v220, %v255
      %v269 = vmul.f32 %v249, %v255
      %v270 = vmul.f32 %v221, %v255
      %v271 = vmul.f32 %v250, %v255
      %vm288 = vcmask 1046528
      %v289 = vrot.slane %v256, 1
      %v290 = vrot.slane %v257, 1
      %v291 = vsel %vm288, %v289, %v290
      %v292 = vrot.slane %v258, 1
      %v293 = vrot.slane %v259, 1
      %v294 = vsel %vm288, %v292, %v293
      %v295 = vrot.slane %v260, 1
      %v296 = vrot.slane %v261, 1
      %v297 = vsel %vm288, %v295, %v296
      %v298 = vrot.slane %v262, 1
      %v299 = vrot.slane %v263, 1
      %v300 = vsel %vm288, %v298, %v299
      %v301 = vrot.slane %v264, 1
      %v302 = vrot.slane %v265, 1
      %v303 = vsel %vm288, %v301, %v302
      %v304 = vrot.slane %v266, 1
      %v305 = vrot.slane %v267, 1
      %v306 = vsel %vm288, %v304, %v305
      %v307 = vrot.slane %v268, 1
      %v308 = vrot.slane %v269, 1
      %v309 = vsel %vm288, %v307, %v308
      %v310 = vrot.slane %v270, 1
      %v311 = vrot.slane %v271, 1
      %v312 = vsel %vm288, %v310, %v311
      %v321 = vadd.f32 %v235, %v291
      %v322 = vadd.f32 %v236, %v294
      %v323 = vadd.f32 %v237, %v297
      %v324 = vadd.f32 %v238, %v300
      %v325 = vadd.f32 %v239, %v303
      %v326 = vadd.f32 %v240, %v306
      %v327 = vadd.f32 %v241, %v309
      %v328 = vadd.f32 %v242, %v312
      %v329 = vld [vmem:[%s1 + $0x2] sm:$0x1]
      %v330 = vlaneseq
      %v331 = vshrl.u32 %v330, 7
      %v332 = vsub.s32 0, %v331
      %v333 = vrot.slane %v329, %v332
      %v334 = vmul.f32 %v214, %v333
      %v335 = vmul.f32 %v243, %v333
      %v336 = vmul.f32 %v215, %v333
      %v337 = vmul.f32 %v244, %v333
      %v338 = vmul.f32 %v216, %v333
      %v339 = vmul.f32 %v245, %v333
      %v340 = vmul.f32 %v217, %v333
      %v341 = vmul.f32 %v246, %v333
      %v342 = vmul.f32 %v218, %v333
      %v343 = vmul.f32 %v247, %v333
      %v344 = vmul.f32 %v219, %v333
      %v345 = vmul.f32 %v248, %v333
      %v346 = vmul.f32 %v220, %v333
      %v347 = vmul.f32 %v249, %v333
      %v348 = vmul.f32 %v221, %v333
      %v349 = vmul.f32 %v250, %v333
      %vm366 = vcmask 1045504
      %v367 = vrot.slane %v334, 2
      %v368 = vrot.slane %v335, 2
      %v369 = vsel %vm366, %v367, %v368
      %v370 = vrot.slane %v336, 2
      %v371 = vrot.slane %v337, 2
      %v372 = vsel %vm366, %v370, %v371
      %v373 = vrot.slane %v338, 2
      %v374 = vrot.slane %v339, 2
      %v375 = vsel %vm366, %v373, %v374
      %v376 = vrot.slane %v340, 2
      %v377 = vrot.slane %v341, 2
      %v378 = vsel %vm366, %v376, %v377
      %v379 = vrot.slane %v342, 2
      %v380 = vrot.slane %v343, 2
      %v381 = vsel %vm366, %v379, %v380
      %v382 = vrot.slane %v344, 2
      %v383 = vrot.slane %v345, 2
      %v384 = vsel %vm366, %v382, %v383
      %v385 = vrot.slane %v346, 2
      %v386 = vrot.slane %v347, 2
      %v387 = vsel %vm366, %v385, %v386
      %v388 = vrot.slane %v348, 2
      %v389 = vrot.slane %v349, 2
      %v390 = vsel %vm366, %v388, %v389
      %v399 = vadd.f32 %v321, %v369
      %v400 = vadd.f32 %v322, %v372
      %v401 = vadd.f32 %v323, %v375
      %v402 = vadd.f32 %v324, %v378
      %v403 = vadd.f32 %v325, %v381
      %v404 = vadd.f32 %v326, %v384
      %v405 = vadd.f32 %v327, %v387
      %v406 = vadd.f32 %v328, %v390
      %s407 = sadd.s32 %s194, 1
      %s408 = smul.u32 %s407, 2
      %s409 = smul.addr %s408, 4
      %s410 = scalar_lea.vmem %s183, %s409
      %v411 = vld [vmem:[%s410] sm:$0xf]
      %v412 = vld [vmem:[%s410 + $0x4] sm:$0x1]
      %v413 = vld [vmem:[%s410 + $0x8] sm:$0xf]
      %v414 = vld [vmem:[%s410 + $0xc] sm:$0x1]
      %v415 = vld [vmem:[%s410 + $0x10] sm:$0xf]
      %v416 = vld [vmem:[%s410 + $0x14] sm:$0x1]
      %v417 = vld [vmem:[%s410 + $0x18] sm:$0xf]
      %v418 = vld [vmem:[%s410 + $0x1c] sm:$0x1]
      %v419 = vld [vmem:[%s410 + $0x20] sm:$0xf]
      %v420 = vld [vmem:[%s410 + $0x24] sm:$0x1]
      %v421 = vld [vmem:[%s410 + $0x28] sm:$0xf]
      %v422 = vld [vmem:[%s410 + $0x2c] sm:$0x1]
      %v423 = vld [vmem:[%s410 + $0x30] sm:$0xf]
      %v424 = vld [vmem:[%s410 + $0x34] sm:$0x1]
      %v425 = vld [vmem:[%s410 + $0x38] sm:$0xf]
      %v426 = vld [vmem:[%s410 + $0x3c] sm:$0x1]
      %v427 = vunpack.c.l.bf16 %v411
      %v428 = vunpack.c.l.bf16 %v413
      %v429 = vunpack.c.l.bf16 %v415
      %v430 = vunpack.c.l.bf16 %v417
      %v431 = vunpack.c.l.bf16 %v419
      %v432 = vunpack.c.l.bf16 %v421
      %v433 = vunpack.c.l.bf16 %v423
      %v434 = vunpack.c.l.bf16 %v425
      %v435 = vld [vmem:[%s1 + $0x3] sm:$0x1]
      %v436 = vlaneseq
      %v437 = vshrl.u32 %v436, 7
      %v438 = vsub.s32 0, %v437
      %v439 = vrot.slane %v435, %v438
      %v440 = vmul.f32 %v427, %v439
      %v441 = vmul.f32 %v428, %v439
      %v442 = vmul.f32 %v429, %v439
      %v443 = vmul.f32 %v430, %v439
      %v444 = vmul.f32 %v431, %v439
      %v445 = vmul.f32 %v432, %v439
      %v446 = vmul.f32 %v433, %v439
      %v447 = vmul.f32 %v434, %v439
      %v448 = vadd.f32 %v399, %v440
      %v449 = vadd.f32 %v400, %v441
      %v450 = vadd.f32 %v401, %v442
      %v451 = vadd.f32 %v402, %v443
      %v452 = vadd.f32 %v403, %v444
      %v453 = vadd.f32 %v404, %v445
      %v454 = vadd.f32 %v405, %v446
      %v455 = vadd.f32 %v406, %v447
      %v456 = vunpack.c.l.bf16 %v412
      %v457 = vunpack.c.l.bf16 %v414
      %v458 = vunpack.c.l.bf16 %v416
      %v459 = vunpack.c.l.bf16 %v418
      %v460 = vunpack.c.l.bf16 %v420
      %v461 = vunpack.c.l.bf16 %v422
      %v462 = vunpack.c.l.bf16 %v424
      %v463 = vunpack.c.l.bf16 %v426
      %v464 = vld [vmem:[%s1 + $0x4] sm:$0x1]
      %v465 = vlaneseq
      %v466 = vshrl.u32 %v465, 7
      %v467 = vsub.s32 0, %v466
      %v468 = vrot.slane %v464, %v467
      %v469 = vmul.f32 %v427, %v468
      %v470 = vmul.f32 %v456, %v468
      %v471 = vmul.f32 %v428, %v468
      %v472 = vmul.f32 %v457, %v468
      %v473 = vmul.f32 %v429, %v468
      %v474 = vmul.f32 %v458, %v468
      %v475 = vmul.f32 %v430, %v468
      %v476 = vmul.f32 %v459, %v468
      %v477 = vmul.f32 %v431, %v468
      %v478 = vmul.f32 %v460, %v468
      %v479 = vmul.f32 %v432, %v468
      %v480 = vmul.f32 %v461, %v468
      %v481 = vmul.f32 %v433, %v468
      %v482 = vmul.f32 %v462, %v468
      %v483 = vmul.f32 %v434, %v468
      %v484 = vmul.f32 %v463, %v468
      %v501 = vrot.slane %v469, 1
      %v502 = vrot.slane %v470, 1
      %v503 = vsel %vm288, %v501, %v502
      %v504 = vrot.slane %v471, 1
      %v505 = vrot.slane %v472, 1
      %v506 = vsel %vm288, %v504, %v505
      %v507 = vrot.slane %v473, 1
      %v508 = vrot.slane %v474, 1
      %v509 = vsel %vm288, %v507, %v508
      %v510 = vrot.slane %v475, 1
      %v511 = vrot.slane %v476, 1
      %v512 = vsel %vm288, %v510, %v511
      %v513 = vrot.slane %v477, 1
      %v514 = vrot.slane %v478, 1
      %v515 = vsel %vm288, %v513, %v514
      %v516 = vrot.slane %v479, 1
      %v517 = vrot.slane %v480, 1
      %v518 = vsel %vm288, %v516, %v517
      %v519 = vrot.slane %v481, 1
      %v520 = vrot.slane %v482, 1
      %v521 = vsel %vm288, %v519, %v520
      %v522 = vrot.slane %v483, 1
      %v523 = vrot.slane %v484, 1
      %v524 = vsel %vm288, %v522, %v523
      %v533 = vadd.f32 %v448, %v503
      %v534 = vadd.f32 %v449, %v506
      %v535 = vadd.f32 %v450, %v509
      %v536 = vadd.f32 %v451, %v512
      %v537 = vadd.f32 %v452, %v515
      %v538 = vadd.f32 %v453, %v518
      %v539 = vadd.f32 %v454, %v521
      %v540 = vadd.f32 %v455, %v524
      %v541 = vld [vmem:[%s1 + $0x5] sm:$0x1]
      %v542 = vlaneseq
      %v543 = vshrl.u32 %v542, 7
      %v544 = vsub.s32 0, %v543
      %v545 = vrot.slane %v541, %v544
      %v546 = vmul.f32 %v427, %v545
      %v547 = vmul.f32 %v456, %v545
      %v548 = vmul.f32 %v428, %v545
      %v549 = vmul.f32 %v457, %v545
      %v550 = vmul.f32 %v429, %v545
      %v551 = vmul.f32 %v458, %v545
      %v552 = vmul.f32 %v430, %v545
      %v553 = vmul.f32 %v459, %v545
      %v554 = vmul.f32 %v431, %v545
      %v555 = vmul.f32 %v460, %v545
      %v556 = vmul.f32 %v432, %v545
      %v557 = vmul.f32 %v461, %v545
      %v558 = vmul.f32 %v433, %v545
      %v559 = vmul.f32 %v462, %v545
      %v560 = vmul.f32 %v434, %v545
      %v561 = vmul.f32 %v463, %v545
      %v578 = vrot.slane %v546, 2
      %v579 = vrot.slane %v547, 2
      %v580 = vsel %vm366, %v578, %v579
      %v581 = vrot.slane %v548, 2
      %v582 = vrot.slane %v549, 2
      %v583 = vsel %vm366, %v581, %v582
      %v584 = vrot.slane %v550, 2
      %v585 = vrot.slane %v551, 2
      %v586 = vsel %vm366, %v584, %v585
      %v587 = vrot.slane %v552, 2
      %v588 = vrot.slane %v553, 2
      %v589 = vsel %vm366, %v587, %v588
      %v590 = vrot.slane %v554, 2
      %v591 = vrot.slane %v555, 2
      %v592 = vsel %vm366, %v590, %v591
      %v593 = vrot.slane %v556, 2
      %v594 = vrot.slane %v557, 2
      %v595 = vsel %vm366, %v593, %v594
      %v596 = vrot.slane %v558, 2
      %v597 = vrot.slane %v559, 2
      %v598 = vsel %vm366, %v596, %v597
      %v599 = vrot.slane %v560, 2
      %v600 = vrot.slane %v561, 2
      %v601 = vsel %vm366, %v599, %v600
      %v610 = vadd.f32 %v533, %v580
      %v611 = vadd.f32 %v534, %v583
      %v612 = vadd.f32 %v535, %v586
      %v613 = vadd.f32 %v536, %v589
      %v614 = vadd.f32 %v537, %v592
      %v615 = vadd.f32 %v538, %v595
      %v616 = vadd.f32 %v539, %v598
      %v617 = vadd.f32 %v540, %v601
      %s618 = sadd.s32 %s194, 2
      %s619 = smul.u32 %s618, 2
      %s620 = smul.addr %s619, 4
      %s621 = scalar_lea.vmem %s183, %s620
      %v622 = vld [vmem:[%s621] sm:$0xf]
      %v623 = vld [vmem:[%s621 + $0x4] sm:$0x1]
      %v624 = vld [vmem:[%s621 + $0x8] sm:$0xf]
      %v625 = vld [vmem:[%s621 + $0xc] sm:$0x1]
      %v626 = vld [vmem:[%s621 + $0x10] sm:$0xf]
      %v627 = vld [vmem:[%s621 + $0x14] sm:$0x1]
      %v628 = vld [vmem:[%s621 + $0x18] sm:$0xf]
      %v629 = vld [vmem:[%s621 + $0x1c] sm:$0x1]
      %v630 = vld [vmem:[%s621 + $0x20] sm:$0xf]
      %v631 = vld [vmem:[%s621 + $0x24] sm:$0x1]
      %v632 = vld [vmem:[%s621 + $0x28] sm:$0xf]
      %v633 = vld [vmem:[%s621 + $0x2c] sm:$0x1]
      %v634 = vld [vmem:[%s621 + $0x30] sm:$0xf]
      %v635 = vld [vmem:[%s621 + $0x34] sm:$0x1]
      %v636 = vld [vmem:[%s621 + $0x38] sm:$0xf]
      %v637 = vld [vmem:[%s621 + $0x3c] sm:$0x1]
      %v638 = vunpack.c.l.bf16 %v622
      %v639 = vunpack.c.l.bf16 %v624
      %v640 = vunpack.c.l.bf16 %v626
      %v641 = vunpack.c.l.bf16 %v628
      %v642 = vunpack.c.l.bf16 %v630
      %v643 = vunpack.c.l.bf16 %v632
      %v644 = vunpack.c.l.bf16 %v634
      %v645 = vunpack.c.l.bf16 %v636
      %v646 = vld [vmem:[%s1 + $0x6] sm:$0x1]
      %v647 = vlaneseq
      %v648 = vshrl.u32 %v647, 7
      %v649 = vsub.s32 0, %v648
      %v650 = vrot.slane %v646, %v649
      %v651 = vmul.f32 %v638, %v650
      %v652 = vmul.f32 %v639, %v650
      %v653 = vmul.f32 %v640, %v650
      %v654 = vmul.f32 %v641, %v650
      %v655 = vmul.f32 %v642, %v650
      %v656 = vmul.f32 %v643, %v650
      %v657 = vmul.f32 %v644, %v650
      %v658 = vmul.f32 %v645, %v650
      %v659 = vadd.f32 %v610, %v651
      %v660 = vadd.f32 %v611, %v652
      %v661 = vadd.f32 %v612, %v653
      %v662 = vadd.f32 %v613, %v654
      %v663 = vadd.f32 %v614, %v655
      %v664 = vadd.f32 %v615, %v656
      %v665 = vadd.f32 %v616, %v657
      %v666 = vadd.f32 %v617, %v658
      %v667 = vunpack.c.l.bf16 %v623
      %v668 = vunpack.c.l.bf16 %v625
      %v669 = vunpack.c.l.bf16 %v627
      %v670 = vunpack.c.l.bf16 %v629
      %v671 = vunpack.c.l.bf16 %v631
      %v672 = vunpack.c.l.bf16 %v633
      %v673 = vunpack.c.l.bf16 %v635
      %v674 = vunpack.c.l.bf16 %v637
      %v675 = vld [vmem:[%s1 + $0x7] sm:$0x1]
      %v676 = vlaneseq
      %v677 = vshrl.u32 %v676, 7
      %v678 = vsub.s32 0, %v677
      %v679 = vrot.slane %v675, %v678
      %v680 = vmul.f32 %v638, %v679
      %v681 = vmul.f32 %v667, %v679
      %v682 = vmul.f32 %v639, %v679
      %v683 = vmul.f32 %v668, %v679
      %v684 = vmul.f32 %v640, %v679
      %v685 = vmul.f32 %v669, %v679
      %v686 = vmul.f32 %v641, %v679
      %v687 = vmul.f32 %v670, %v679
      %v688 = vmul.f32 %v642, %v679
      %v689 = vmul.f32 %v671, %v679
      %v690 = vmul.f32 %v643, %v679
      %v691 = vmul.f32 %v672, %v679
      %v692 = vmul.f32 %v644, %v679
      %v693 = vmul.f32 %v673, %v679
      %v694 = vmul.f32 %v645, %v679
      %v695 = vmul.f32 %v674, %v679
      %v712 = vrot.slane %v680, 1
      %v713 = vrot.slane %v681, 1
      %v714 = vsel %vm288, %v712, %v713
      %v715 = vrot.slane %v682, 1
      %v716 = vrot.slane %v683, 1
      %v717 = vsel %vm288, %v715, %v716
      %v718 = vrot.slane %v684, 1
      %v719 = vrot.slane %v685, 1
      %v720 = vsel %vm288, %v718, %v719
      %v721 = vrot.slane %v686, 1
      %v722 = vrot.slane %v687, 1
      %v723 = vsel %vm288, %v721, %v722
      %v724 = vrot.slane %v688, 1
      %v725 = vrot.slane %v689, 1
      %v726 = vsel %vm288, %v724, %v725
      %v727 = vrot.slane %v690, 1
      %v728 = vrot.slane %v691, 1
      %v729 = vsel %vm288, %v727, %v728
      %v730 = vrot.slane %v692, 1
      %v731 = vrot.slane %v693, 1
      %v732 = vsel %vm288, %v730, %v731
      %v733 = vrot.slane %v694, 1
      %v734 = vrot.slane %v695, 1
      %v735 = vsel %vm288, %v733, %v734
      %v744 = vadd.f32 %v659, %v714
      %v745 = vadd.f32 %v660, %v717
      %v746 = vadd.f32 %v661, %v720
      %v747 = vadd.f32 %v662, %v723
      %v748 = vadd.f32 %v663, %v726
      %v749 = vadd.f32 %v664, %v729
      %v750 = vadd.f32 %v665, %v732
      %v751 = vadd.f32 %v666, %v735
      %v752 = vld [vmem:[%s1 + $0x8] sm:$0x1]
      %v753 = vlaneseq
      %v754 = vshrl.u32 %v753, 7
      %v755 = vsub.s32 0, %v754
      %v756 = vrot.slane %v752, %v755
      %v757 = vmul.f32 %v638, %v756
      %v758 = vmul.f32 %v667, %v756
      %v759 = vmul.f32 %v639, %v756
      %v760 = vmul.f32 %v668, %v756
      %v761 = vmul.f32 %v640, %v756
      %v762 = vmul.f32 %v669, %v756
      %v763 = vmul.f32 %v641, %v756
      %v764 = vmul.f32 %v670, %v756
      %v765 = vmul.f32 %v642, %v756
      %v766 = vmul.f32 %v671, %v756
      %v767 = vmul.f32 %v643, %v756
      %v768 = vmul.f32 %v672, %v756
      %v769 = vmul.f32 %v644, %v756
      %v770 = vmul.f32 %v673, %v756
      %v771 = vmul.f32 %v645, %v756
      %v772 = vmul.f32 %v674, %v756
      %v789 = vrot.slane %v757, 2
      %v790 = vrot.slane %v758, 2
      %v791 = vsel %vm366, %v789, %v790
      %v792 = vrot.slane %v759, 2
      %v793 = vrot.slane %v760, 2
      %v794 = vsel %vm366, %v792, %v793
      %v795 = vrot.slane %v761, 2
      %v796 = vrot.slane %v762, 2
      %v797 = vsel %vm366, %v795, %v796
      %v798 = vrot.slane %v763, 2
      %v799 = vrot.slane %v764, 2
      %v800 = vsel %vm366, %v798, %v799
      %v801 = vrot.slane %v765, 2
      %v802 = vrot.slane %v766, 2
      %v803 = vsel %vm366, %v801, %v802
      %v804 = vrot.slane %v767, 2
      %v805 = vrot.slane %v768, 2
      %v806 = vsel %vm366, %v804, %v805
      %v807 = vrot.slane %v769, 2
      %v808 = vrot.slane %v770, 2
      %v809 = vsel %vm366, %v807, %v808
      %v810 = vrot.slane %v771, 2
      %v811 = vrot.slane %v772, 2
      %v812 = vsel %vm366, %v810, %v811
      %v821 = vadd.f32 %v744, %v791
      %v822 = vadd.f32 %v745, %v794
      %v823 = vadd.f32 %v746, %v797
      %v824 = vadd.f32 %v747, %v800
      %v825 = vadd.f32 %v748, %v803
      %v826 = vadd.f32 %v749, %v806
      %v827 = vadd.f32 %v750, %v809
      %v828 = vadd.f32 %v751, %v812
      %v829 = vld [vmem:[%s2] sm:$0x1]
      %v831 = vlaneseq
      %v832 = vshrl.u32 %v831, 7
      %v833 = vsub.s32 0, %v832
      %v834 = vrot.slane %v829, %v833
      %v836 = vadd.f32 %v821, %v834
      %v837 = vadd.f32 %v822, %v834
      %v838 = vadd.f32 %v823, %v834
      %v839 = vadd.f32 %v824, %v834
      %v840 = vadd.f32 %v825, %v834
      %v841 = vadd.f32 %v826, %v834
      %v842 = vadd.f32 %v827, %v834
      %v843 = vadd.f32 %v828, %v834
      %v844 = vmax.f32 %v836, 0.0
      %v845 = vmax.f32 %v837, 0.0
      %v846 = vmax.f32 %v838, 0.0
      %v847 = vmax.f32 %v839, 0.0
      %v848 = vmax.f32 %v840, 0.0
      %v849 = vmax.f32 %v841, 0.0
      %v850 = vmax.f32 %v842, 0.0
      %v851 = vmax.f32 %v843, 0.0
      %v852 = vmin.f32 %v844, 6.0
      %v853 = vmin.f32 %v845, 6.0
      %v854 = vmin.f32 %v846, 6.0
      %v855 = vmin.f32 %v847, 6.0
      %v856 = vmin.f32 %v848, 6.0
      %v857 = vmin.f32 %v849, 6.0
      %v858 = vmin.f32 %v850, 6.0
      %v859 = vmin.f32 %v851, 6.0
      %v860 = vpack.c.bf16 %v852, %v852
      %v861 = vpack.c.bf16 %v853, %v853
      %v862 = vpack.c.bf16 %v854, %v854
      %v863 = vpack.c.bf16 %v855, %v855
      %v864 = vpack.c.bf16 %v856, %v856
      %v865 = vpack.c.bf16 %v857, %v857
      %v866 = vpack.c.bf16 %v858, %v858
      %v867 = vpack.c.bf16 %v859, %v859
      %vm868 = vcmask 519168
      %869 = vst.msk [vmem:[%s192] sm:$0xf] %vm868, %v860
      %870 = vst.msk [vmem:[%s192 + $0x4] sm:$0xf] %vm868, %v861
      %871 = vst.msk [vmem:[%s192 + $0x8] sm:$0xf] %vm868, %v862
      %872 = vst.msk [vmem:[%s192 + $0xc] sm:$0xf] %vm868, %v863
      %873 = vst.msk [vmem:[%s192 + $0x10] sm:$0xf] %vm868, %v864
      %874 = vst.msk [vmem:[%s192 + $0x14] sm:$0xf] %vm868, %v865
      %875 = vst.msk [vmem:[%s192 + $0x18] sm:$0xf] %vm868, %v866
      %876 = vst.msk [vmem:[%s192 + $0x1c] sm:$0xf] %vm868, %v867
      %s877 = smul.u32 8, %s19
      %p878 = scmp.lt.s32.totalorder %s18, 1
      %s879 = scalar_select %p878, %s18, 1
      %p880 = scmp.lt.s32.totalorder %s877, 7
      %s881 = scalar_select %p880, %s877, 7
      %s882 = smul.addr %s879, 8
      %s883 = sadd.s32 %s881, %s882
      %s884 = smul.addr %s883, 4
      %s885 = scalar_lea.vmem %s3, %s884
      // Predicated region
      $region33: #{mobilenet_v2_forward.23} parent=31 // pred_check
        %p886 = pneg %p114
      $region34: #{mobilenet_v2_forward.23} parent=31 // pred_check_branch
        %888 = sbr.rel (%p886) target = $region36
      $region35: #{mobilenet_v2_forward.23} parent=31 // pred_region
        %s889 = smul.u32 8, %s19
      $region36: #{mobilenet_v2_forward.23} parent=31 // pred_fallthru
        _
    $region32: #{mobilenet_v2_forward.23} parent=5 // pred_fallthru
      _
    %p890 = scmp.le.s32.totalorder 2, %s9
    // Predicated region
    $region37: #{mobilenet_v2_forward.23} parent=5 // pred_check
      %p891 = pneg %p890
    $region38: #{mobilenet_v2_forward.23} parent=5 // pred_check_branch
      %893 = sbr.rel (%p891) target = $region40
    $region39: #{mobilenet_v2_forward.23} parent=5 // pred_region
      %s894 = ssub.s32 %s9, 2
      // Predicated region
      $region41: #{mobilenet_v2_forward.23} parent=39 // pred_check
        %p895 = pneg %p120
      $region42: #{mobilenet_v2_forward.23} parent=39 // pred_check_branch
        %897 = sbr.rel (%p895) target = $region44
      $region43: #{mobilenet_v2_forward.23} parent=39 // pred_region
        %s898 = smul.u32 8, %s21
        %p899 = scmp.lt.s32.totalorder %s20, 1
        %s900 = scalar_select %p899, %s20, 1
        %p901 = scmp.lt.s32.totalorder %s898, 7
        %s902 = scalar_select %p901, %s898, 7
        %s903 = smul.addr %s900, 8
        %s904 = sadd.s32 %s902, %s903
        %s905 = smul.addr %s904, 4
        %s906 = scalar_lea.vmem %s3, %s905
      $region44: #{mobilenet_v2_forward.23} parent=39 // pred_fallthru
        _
    $region40: #{mobilenet_v2_forward.23} parent=5 // pred_fallthru
      _
  $region6: #{mobilenet_v2_forward.23} parent=0 // loop_footer
    %s13 = sadd.s32 1, %s9
  $region7: #{mobilenet_v2_forward.23} parent=0 // loop_footer_branch
    %8 = sbr.rel target = $region3
  $region8: #{mobilenet_v2_forward.23} parent=0 // loop_exit
    _

// kernel: mobilenet_v2_forward.24
$region0: #{mobilenet_v2_forward.24}
  #allocation0 [shape = 'u32[]', space=smem, size = 0x4, offset = 0x4, fixed_abs, tag = 'smem constant byte address 0x4 - core index']
  #allocation1 [shape = 'u32[144,128]{1,0:T(1,128)}', space=vmem, size = 0x12000, scoped, tag = 'internal scratch']
  %s0 = inlined_call_operand.vmem [shape: bf16[128,64], index: 0, kind: input, shape index: {}]
  %s1 = inlined_call_operand.vmem [shape: bf16[64,16], index: 1, kind: input, shape index: {}]
  %s2 = inlined_call_operand.vmem [shape: f32[1,16], index: 2, kind: input, shape index: {}]
  %s3 = inlined_call_operand.vmem [shape: bf16[128,16], index: 3, kind: input, shape index: {}]
  %s4 = inlined_call_operand.vmem [shape: bf16[128,16], index: 4, kind: output, shape index: {}]
  %s5 = sld [smem:[#allocation0]]
  $region26: #{mobilenet_v2_forward.24} parent=0
    _
  %s7 = ssub.s32 1, %s5
  %s8 = scalar_select 0, %s7, %s5
  // Predicated region
  $region2: #{mobilenet_v2_forward.24} parent=0 // pred_check
    _
  $region3: #{mobilenet_v2_forward.24} parent=0 // pred_check_branch
    %10 = sbr.rel (0) target = $region5
  $region4: #{mobilenet_v2_forward.24} parent=0 // pred_region
    _
  $region5: #{mobilenet_v2_forward.24} parent=0 // pred_fallthru
    _
  // Predicated region
  $region6: #{mobilenet_v2_forward.24} parent=0 // pred_check
    _
  $region7: #{mobilenet_v2_forward.24} parent=0 // pred_check_branch
    %12 = sbr.rel (0) target = $region9
  $region8: #{mobilenet_v2_forward.24} parent=0 // pred_region
    _
  $region9: #{mobilenet_v2_forward.24} parent=0 // pred_fallthru
    _
  // Predicated region
  $region10: #{mobilenet_v2_forward.24} parent=0 // pred_check
    _
  $region11: #{mobilenet_v2_forward.24} parent=0 // pred_check_branch
    %14 = sbr.rel (0) target = $region13
  $region12: #{mobilenet_v2_forward.24} parent=0 // pred_region
    _
  $region13: #{mobilenet_v2_forward.24} parent=0 // pred_fallthru
    _
  // Predicated region
  $region14: #{mobilenet_v2_forward.24} parent=0 // pred_check
    _
  $region15: #{mobilenet_v2_forward.24} parent=0 // pred_check_branch
    %16 = sbr.rel (0) target = $region17
  $region16: #{mobilenet_v2_forward.24} parent=0 // pred_region
    _
  $region17: #{mobilenet_v2_forward.24} parent=0 // pred_fallthru
    _
  %v18 = vld [vmem:[%s0] sm:$0xf]
  %v19 = vld [vmem:[%s0 + $0x4] sm:$0xf]
  %v20 = vld [vmem:[%s0 + $0x8] sm:$0xf]
  %v21 = vld [vmem:[%s0 + $0xc] sm:$0xf]
  %v22 = vld [vmem:[%s0 + $0x10] sm:$0xf]
  %v23 = vld [vmem:[%s0 + $0x14] sm:$0xf]
  %v24 = vld [vmem:[%s0 + $0x18] sm:$0xf]
  %v25 = vld [vmem:[%s0 + $0x1c] sm:$0xf]
  %v26 = vld [vmem:[%s0 + $0x20] sm:$0xf]
  %v27 = vld [vmem:[%s0 + $0x24] sm:$0xf]
  %v28 = vld [vmem:[%s0 + $0x28] sm:$0xf]
  %v29 = vld [vmem:[%s0 + $0x2c] sm:$0xf]
  %v30 = vld [vmem:[%s0 + $0x30] sm:$0xf]
  %v31 = vld [vmem:[%s0 + $0x34] sm:$0xf]
  %v32 = vld [vmem:[%s0 + $0x38] sm:$0xf]
  %v33 = vld [vmem:[%s0 + $0x3c] sm:$0xf]
  %v34 = vld [vmem:[%s1] sm:$0xf]
  %v35 = vld [vmem:[%s1 + $0x4] sm:$0xf]
  %v36 = vld [vmem:[%s1 + $0x8] sm:$0xf]
  %v37 = vld [vmem:[%s1 + $0xc] sm:$0xf]
  %v38 = vld [vmem:[%s1 + $0x10] sm:$0xf]
  %v39 = vld [vmem:[%s1 + $0x14] sm:$0xf]
  %v40 = vld [vmem:[%s1 + $0x18] sm:$0xf]
  %v41 = vld [vmem:[%s1 + $0x1c] sm:$0xf]
  %v42 = vld [vmem:[%s2] sm:$0x1]
  %v44 = vlaneseq
  %v45 = vshrl.u32 %v44, 7
  %v46 = vsub.s32 0, %v45
  %v47 = vrot.slane %v42, %v46
  %v65 = vunpack.c.l.b16 %v18
  %v66 = vunpack.c.l.b16 %v19
  %v67 = vunpack.c.l.b16 %v20
  %v68 = vunpack.c.l.b16 %v21
  %v69 = vunpack.c.l.b16 %v22
  %v70 = vunpack.c.l.b16 %v23
  %v71 = vunpack.c.l.b16 %v24
  %v72 = vunpack.c.l.b16 %v25
  %v73 = vunpack.c.l.b16 %v26
  %v74 = vunpack.c.l.b16 %v27
  %v75 = vunpack.c.l.b16 %v28
  %v76 = vunpack.c.l.b16 %v29
  %v77 = vunpack.c.l.b16 %v30
  %v78 = vunpack.c.l.b16 %v31
  %v79 = vunpack.c.l.b16 %v32
  %v80 = vunpack.c.l.b16 %v33
  %v81 = vpack.c.b16 %v66, %v65
  %v82 = vpack.c.b16 %v68, %v67
  %v83 = vpack.c.b16 %v70, %v69
  %v84 = vpack.c.b16 %v72, %v71
  %v85 = vpack.c.b16 %v74, %v73
  %v86 = vpack.c.b16 %v76, %v75
  %v87 = vpack.c.b16 %v78, %v77
  %v88 = vpack.c.b16 %v80, %v79
  %v97 = vunpack.c.l.b16 %v34
  %v98 = vunpack.c.l.b16 %v35
  %v99 = vunpack.c.l.b16 %v36
  %v100 = vunpack.c.l.b16 %v37
  %v101 = vunpack.c.l.b16 %v38
  %v102 = vunpack.c.l.b16 %v39
  %v103 = vunpack.c.l.b16 %v40
  %v104 = vunpack.c.l.b16 %v41
  %v105 = vpack.c.b16 %v98, %v97
  %v106 = vpack.c.b16 %v100, %v99
  %v107 = vpack.c.b16 %v102, %v101
  %v108 = vpack.c.b16 %v104, %v103
  %vm113 = vcmask 523264
  %v115 = vsel %vm113, %v81, 0
  %v118 = vsel %vm113, %v82, 0
  %v121 = vsel %vm113, %v83, 0
  %v124 = vsel %vm113, %v84, 0
  %v127 = vsel %vm113, %v85, 0
  %v130 = vsel %vm113, %v86, 0
  %v133 = vsel %vm113, %v87, 0
  %v136 = vsel %vm113, %v88, 0
  %138 = vmatprep.subr.bf16.mxu0 0
  %139 = vmatpush1.bf16.msra.mxu0 %v105
  %140 = vmatprep.subr.bf16.mxu0 0
  %141 = vmatpush1.bf16.msra.mxu0 %v106
  %142 = vmatprep.subr.bf16.mxu0 0
  %143 = vmatpush1.bf16.msra.mxu0 %v107
  %144 = vmatprep.subr.bf16.mxu0 0
  %145 = vmatpush1.bf16.msra.mxu0 %v108
  %146 = vmatprep.subr.bf16.mxu0 0
  %147 = vmatpush1.bf16.msra.mxu0 0
  %148 = vmatprep.subr.bf16.mxu0 0
  %149 = vmatpush1.bf16.msra.mxu0 0
  %150 = vmatprep.subr.bf16.mxu0 0
  %151 = vmatpush1.bf16.msra.mxu0 0
  %152 = vmatprep.subr.bf16.mxu0 0
  %153 = vmatpush1.bf16.msra.mxu0 0
  %154 = vmatprep.subr.bf16.mxu0 0
  %155 = vmatpush1.bf16.msra.mxu0 0
  %156 = vmatprep.subr.bf16.mxu0 0
  %157 = vmatpush1.bf16.msra.mxu0 0
  %158 = vmatprep.subr.bf16.mxu0 0
  %159 = vmatpush1.bf16.msra.mxu0 0
  %160 = vmatprep.subr.bf16.mxu0 0
  %161 = vmatpush1.bf16.msra.mxu0 0
  %162 = vmatprep.subr.bf16.mxu0 0
  %163 = vmatpush1.bf16.msra.mxu0 0
  %164 = vmatprep.subr.bf16.mxu0 0
  %165 = vmatpush1.bf16.msra.mxu0 0
  %166 = vmatprep.subr.bf16.mxu0 0
  %167 = vmatpush1.bf16.msra.mxu0 0
  %168 = vmatprep.subr.bf16.mxu0 0
  %169 = vmatpush1.bf16.msra.mxu0 0
  %170 = vmatprep.mubr.bf16.mxu0 0
  %171 = vmatmul.mubr.bf16.gmra.mrb[0].mxu0 %v115
  %v172 = vpop.f32.mrb[0].mxu0
  %v173 = vadd.f32 %v47, %v172
  %v174 = vpop.f32.mrb[0].mxu0
  %v175 = vpop.f32.mrb[0].mxu0
  %v176 = vadd.f32 %v47, %v175
  %v177 = vpop.f32.mrb[0].mxu0
  %178 = vmatprep.mubr.bf16.mxu0 0
  %179 = vmatmul.mubr.bf16.gmra.mrb[0].mxu0 %v118
  %v180 = vpop.f32.mrb[0].mxu0
  %v181 = vadd.f32 %v47, %v180
  %v182 = vpop.f32.mrb[0].mxu0
  %v183 = vpop.f32.mrb[0].mxu0
  %v184 = vadd.f32 %v47, %v183
  %v185 = vpop.f32.mrb[0].mxu0
  %186 = vmatprep.mubr.bf16.mxu0 0
  %187 = vmatmul.mubr.bf16.gmra.mrb[0].mxu0 %v121
  %v188 = vpop.f32.mrb[0].mxu0
  %v189 = vadd.f32 %v47, %v188
  %v190 = vpop.f32.mrb[0].mxu0
  %v191 = vpop.f32.mrb[0].mxu0
  %v192 = vadd.f32 %v47, %v191
  %v193 = vpop.f32.mrb[0].mxu0
  %194 = vmatprep.mubr.bf16.mxu0 0
  %195 = vmatmul.mubr.bf16.gmra.mrb[0].mxu0 %v124
  %v196 = vpop.f32.mrb[0].mxu0
  %v197 = vadd.f32 %v47, %v196
  %v198 = vpop.f32.mrb[0].mxu0
  %v199 = vpop.f32.mrb[0].mxu0
  %v200 = vadd.f32 %v47, %v199
  %v201 = vpop.f32.mrb[0].mxu0
  %202 = vmatprep.mubr.bf16.mxu0 0
  %203 = vmatmul.mubr.bf16.gmra.mrb[0].mxu0 %v127
  %v204 = vpop.f32.mrb[0].mxu0
  %v205 = vadd.f32 %v47, %v204
  %v206 = vpop.f32.mrb[0].mxu0
  %v207 = vpop.f32.mrb[0].mxu0
  %v208 = vadd.f32 %v47, %v207
  %v209 = vpop.f32.mrb[0].mxu0
  %210 = vmatprep.mubr.bf16.mxu0 0
  %211 = vmatmul.mubr.bf16.gmra.mrb[0].mxu0 %v130
  %v212 = vpop.f32.mrb[0].mxu0
  %v213 = vadd.f32 %v47, %v212
  %v214 = vpop.f32.mrb[0].mxu0
  %v215 = vpop.f32.mrb[0].mxu0
  %v216 = vadd.f32 %v47, %v215
  %v217 = vpop.f32.mrb[0].mxu0
  %218 = vmatprep.mubr.bf16.mxu0 0
  %219 = vmatmul.mubr.bf16.gmra.mrb[0].mxu0 %v133
  %v220 = vpop.f32.mrb[0].mxu0
  %v221 = vadd.f32 %v47, %v220
  %v222 = vpop.f32.mrb[0].mxu0
  %v223 = vpop.f32.mrb[0].mxu0
  %v224 = vadd.f32 %v47, %v223
  %v225 = vpop.f32.mrb[0].mxu0
  %226 = vmatprep.mubr.bf16.mxu0 0
  %227 = vmatmul.mubr.bf16.gmra.mrb[0].mxu0 %v136
  %v228 = vpop.f32.mrb[0].mxu0
  %v229 = vadd.f32 %v47, %v228
  %v230 = vpop.f32.mrb[0].mxu0
  %v231 = vpop.f32.mrb[0].mxu0
  %v232 = vadd.f32 %v47, %v231
  %v233 = vpop.f32.mrb[0].mxu0
  %234 = vdwg.mxu0
  %v235 = vld [vmem:[%s3] sm:$0xf]
  %v236 = vld [vmem:[%s3 + $0x4] sm:$0xf]
  %v237 = vld [vmem:[%s3 + $0x8] sm:$0xf]
  %v238 = vld [vmem:[%s3 + $0xc] sm:$0xf]
  %v239 = vld [vmem:[%s3 + $0x10] sm:$0xf]
  %v240 = vld [vmem:[%s3 + $0x14] sm:$0xf]
  %v241 = vld [vmem:[%s3 + $0x18] sm:$0xf]
  %v242 = vld [vmem:[%s3 + $0x1c] sm:$0xf]
  %v243 = vld [vmem:[%s3 + $0x20] sm:$0xf]
  %v244 = vld [vmem:[%s3 + $0x24] sm:$0xf]
  %v245 = vld [vmem:[%s3 + $0x28] sm:$0xf]
  %v246 = vld [vmem:[%s3 + $0x2c] sm:$0xf]
  %v247 = vld [vmem:[%s3 + $0x30] sm:$0xf]
  %v248 = vld [vmem:[%s3 + $0x34] sm:$0xf]
  %v249 = vld [vmem:[%s3 + $0x38] sm:$0xf]
  %v250 = vld [vmem:[%s3 + $0x3c] sm:$0xf]
  %v251 = vunpack.c.l.bf16 %v235
  %v252 = vunpack.c.l.bf16 %v236
  %v253 = vunpack.c.l.bf16 %v237
  %v254 = vunpack.c.l.bf16 %v238
  %v255 = vunpack.c.l.bf16 %v239
  %v256 = vunpack.c.l.bf16 %v240
  %v257 = vunpack.c.l.bf16 %v241
  %v258 = vunpack.c.l.bf16 %v242
  %v259 = vunpack.c.l.bf16 %v243
  %v260 = vunpack.c.l.bf16 %v244
  %v261 = vunpack.c.l.bf16 %v245
  %v262 = vunpack.c.l.bf16 %v246
  %v263 = vunpack.c.l.bf16 %v247
  %v264 = vunpack.c.l.bf16 %v248
  %v265 = vunpack.c.l.bf16 %v249
  %v266 = vunpack.c.l.bf16 %v250
  %v267 = vadd.f32 %v173, %v251
  %v268 = vadd.f32 %v176, %v252
  %v269 = vadd.f32 %v181, %v253
  %v270 = vadd.f32 %v184, %v254
  %v271 = vadd.f32 %v189, %v255
  %v272 = vadd.f32 %v192, %v256
  %v273 = vadd.f32 %v197, %v257
  %v274 = vadd.f32 %v200, %v258
  %v275 = vadd.f32 %v205, %v259
  %v276 = vadd.f32 %v208, %v260
  %v277 = vadd.f32 %v213, %v261
  %v278 = vadd.f32 %v216, %v262
  %v279 = vadd.f32 %v221, %v263
  %v280 = vadd.f32 %v224, %v264
  %v281 = vadd.f32 %v229, %v265
  %v282 = vadd.f32 %v232, %v266
  %v283 = vpack.c.bf16 %v268, %v267
  %v284 = vpack.c.bf16 %v270, %v269
  %v285 = vpack.c.bf16 %v272, %v271
  %v286 = vpack.c.bf16 %v274, %v273
  %v287 = vpack.c.bf16 %v276, %v275
  %v288 = vpack.c.bf16 %v278, %v277
  %v289 = vpack.c.bf16 %v280, %v279
  %v290 = vpack.c.bf16 %v282, %v281
  %v299 = vunpack.c.l.b16 %v283
  %v300 = vunpack.c.h.b16 %v283
  %v301 = vunpack.c.l.b16 %v284
  %v302 = vunpack.c.h.b16 %v284
  %v303 = vunpack.c.l.b16 %v285
  %v304 = vunpack.c.h.b16 %v285
  %v305 = vunpack.c.l.b16 %v286
  %v306 = vunpack.c.h.b16 %v286
  %v307 = vunpack.c.l.b16 %v287
  %v308 = vunpack.c.h.b16 %v287
  %v309 = vunpack.c.l.b16 %v288
  %v310 = vunpack.c.h.b16 %v288
  %v311 = vunpack.c.l.b16 %v289
  %v312 = vunpack.c.h.b16 %v289
  %v313 = vunpack.c.l.b16 %v290
  %v314 = vunpack.c.h.b16 %v290
  %v315 = vpack.c.b16 %v299, %v299
  %v316 = vpack.c.b16 %v300, %v300
  %v317 = vpack.c.b16 %v301, %v301
  %v318 = vpack.c.b16 %v302, %v302
  %v319 = vpack.c.b16 %v303, %v303
  %v320 = vpack.c.b16 %v304, %v304
  %v321 = vpack.c.b16 %v305, %v305
  %v322 = vpack.c.b16 %v306, %v306
  %v323 = vpack.c.b16 %v307, %v307
  %v324 = vpack.c.b16 %v308, %v308
  %v325 = vpack.c.b16 %v309, %v309
  %v326 = vpack.c.b16 %v310, %v310
  %v327 = vpack.c.b16 %v311, %v311
  %v328 = vpack.c.b16 %v312, %v312
  %v329 = vpack.c.b16 %v313, %v313
  %v330 = vpack.c.b16 %v314, %v314
  %vm347 = vcmask 125952
  %348 = vst.msk [vmem:[%s4] sm:$0xf] %vm347, %v315
  %349 = vst.msk [vmem:[%s4 + $0x4] sm:$0xf] %vm347, %v316
  %350 = vst.msk [vmem:[%s4 + $0x8] sm:$0xf] %vm347, %v317
  %351 = vst.msk [vmem:[%s4 + $0xc] sm:$0xf] %vm347, %v318
  %352 = vst.msk [vmem:[%s4 + $0x10] sm:$0xf] %vm347, %v319
  %353 = vst.msk [vmem:[%s4 + $0x14] sm:$0xf] %vm347, %v320
  %354 = vst.msk [vmem:[%s4 + $0x18] sm:$0xf] %vm347, %v321
  %355 = vst.msk [vmem:[%s4 + $0x1c] sm:$0xf] %vm347, %v322
  %356 = vst.msk [vmem:[%s4 + $0x20] sm:$0xf] %vm347, %v323
  %357 = vst.msk [vmem:[%s4 + $0x24] sm:$0xf] %vm347, %v324
  %358 = vst.msk [vmem:[%s4 + $0x28] sm:$0xf] %vm347, %v325
  %359 = vst.msk [vmem:[%s4 + $0x2c] sm:$0xf] %vm347, %v326
  %360 = vst.msk [vmem:[%s4 + $0x30] sm:$0xf] %vm347, %v327
  %361 = vst.msk [vmem:[%s4 + $0x34] sm:$0xf] %vm347, %v328
  %362 = vst.msk [vmem:[%s4 + $0x38] sm:$0xf] %vm347, %v329
  %363 = vst.msk [vmem:[%s4 + $0x3c] sm:$0xf] %vm347, %v330
  // Predicated region
  $region18: #{mobilenet_v2_forward.24} parent=0 // pred_check
    _
  $region19: #{mobilenet_v2_forward.24} parent=0 // pred_check_branch
    %365 = sbr.rel (0) target = $region21
  $region20: #{mobilenet_v2_forward.24} parent=0 // pred_region
    _
  $region21: #{mobilenet_v2_forward.24} parent=0 // pred_fallthru
    _
  // Predicated region
  $region22: #{mobilenet_v2_forward.24} parent=0 // pred_check
    _
  $region23: #{mobilenet_v2_forward.24} parent=0 // pred_check_branch
    %367 = sbr.rel (0) target = $region25
  $region24: #{mobilenet_v2_forward.24} parent=0 // pred_region
    _
  $region25: #{mobilenet_v2_forward.24} parent=0 // pred_fallthru
    _

// kernel: mobilenet_v2_forward.27
$region0: #{mobilenet_v2_forward.27}
  #allocation0 [shape = 'u32[]', space=smem, size = 0x4, offset = 0x4, fixed_abs, tag = 'smem constant byte address 0x4 - core index']
  #allocation1 [shape = 'u32[144,128]{1,0:T(1,128)}', space=vmem, size = 0x12000, scoped, tag = 'internal scratch']
  %s0 = inlined_call_operand.vmem [shape: bf16[32,64], index: 0, kind: input, shape index: {}]
  %s1 = inlined_call_operand.vmem [shape: bf16[64,24], index: 1, kind: input, shape index: {}]
  %s2 = inlined_call_operand.vmem [shape: f32[1,24], index: 2, kind: input, shape index: {}]
  %s3 = inlined_call_operand.vmem [shape: bf16[32,24], index: 3, kind: output, shape index: {}]
  %s4 = sld [smem:[#allocation0]]
  $region22: #{mobilenet_v2_forward.27} parent=0
    _
  %s6 = ssub.s32 1, %s4
  %s7 = scalar_select 0, %s6, %s4
  // Predicated region
  $region2: #{mobilenet_v2_forward.27} parent=0 // pred_check
    _
  $region3: #{mobilenet_v2_forward.27} parent=0 // pred_check_branch
    %9 = sbr.rel (0) target = $region5
  $region4: #{mobilenet_v2_forward.27} parent=0 // pred_region
    _
  $region5: #{mobilenet_v2_forward.27} parent=0 // pred_fallthru
    _
  // Predicated region
  $region6: #{mobilenet_v2_forward.27} parent=0 // pred_check
    _
  $region7: #{mobilenet_v2_forward.27} parent=0 // pred_check_branch
    %11 = sbr.rel (0) target = $region9
  $region8: #{mobilenet_v2_forward.27} parent=0 // pred_region
    _
  $region9: #{mobilenet_v2_forward.27} parent=0 // pred_fallthru
    _
  // Predicated region
  $region10: #{mobilenet_v2_forward.27} parent=0 // pred_check
    _
  $region11: #{mobilenet_v2_forward.27} parent=0 // pred_check_branch
    %13 = sbr.rel (0) target = $region13
  $region12: #{mobilenet_v2_forward.27} parent=0 // pred_region
    _
  $region13: #{mobilenet_v2_forward.27} parent=0 // pred_fallthru
    _
  %v15 = vld [vmem:[%s0] sm:$0xf]
  %v16 = vld [vmem:[%s0 + $0x4] sm:$0xf]
  %v17 = vld [vmem:[%s0 + $0x8] sm:$0xf]
  %v18 = vld [vmem:[%s0 + $0xc] sm:$0xf]
  %v19 = vld [vmem:[%s1] sm:$0xf]
  %v20 = vld [vmem:[%s1 + $0x4] sm:$0xf]
  %v21 = vld [vmem:[%s1 + $0x8] sm:$0xf]
  %v22 = vld [vmem:[%s1 + $0xc] sm:$0xf]
  %v23 = vld [vmem:[%s1 + $0x10] sm:$0xf]
  %v24 = vld [vmem:[%s1 + $0x14] sm:$0xf]
  %v25 = vld [vmem:[%s1 + $0x18] sm:$0xf]
  %v26 = vld [vmem:[%s1 + $0x1c] sm:$0xf]
  %v27 = vld [vmem:[%s2] sm:$0x1]
  %v29 = vlaneseq
  %v30 = vshrl.u32 %v29, 7
  %v31 = vsub.s32 0, %v30
  %v32 = vrot.slane %v27, %v31
  %v38 = vunpack.c.l.b16 %v15
  %v39 = vunpack.c.l.b16 %v16
  %v40 = vunpack.c.l.b16 %v17
  %v41 = vunpack.c.l.b16 %v18
  %v42 = vpack.c.b16 %v39, %v38
  %v43 = vpack.c.b16 %v41, %v40
  %v52 = vunpack.c.l.b16 %v19
  %v53 = vunpack.c.l.b16 %v20
  %v54 = vunpack.c.l.b16 %v21
  %v55 = vunpack.c.l.b16 %v22
  %v56 = vunpack.c.l.b16 %v23
  %v57 = vunpack.c.l.b16 %v24
  %v58 = vunpack.c.l.b16 %v25
  %v59 = vunpack.c.l.b16 %v26
  %v60 = vpack.c.b16 %v53, %v52
  %v61 = vpack.c.b16 %v55, %v54
  %v62 = vpack.c.b16 %v57, %v56
  %v63 = vpack.c.b16 %v59, %v58
  %vm68 = vcmask 523264
  %v70 = vsel %vm68, %v42, 0
  %v73 = vsel %vm68, %v43, 0
  %75 = vmatprep.subr.bf16.mxu0 0
  %76 = vmatpush1.bf16.msra.mxu0 %v60
  %77 = vmatprep.subr.bf16.mxu0 0
  %78 = vmatpush1.bf16.msra.mxu0 %v61
  %79 = vmatprep.subr.bf16.mxu0 0
  %80 = vmatpush1.bf16.msra.mxu0 %v62
  %81 = vmatprep.subr.bf16.mxu0 0
  %82 = vmatpush1.bf16.msra.mxu0 %v63
  %83 = vmatprep.subr.bf16.mxu0 0
  %84 = vmatpush1.bf16.msra.mxu0 0
  %85 = vmatprep.subr.bf16.mxu0 0
  %86 = vmatpush1.bf16.msra.mxu0 0
  %87 = vmatprep.subr.bf16.mxu0 0
  %88 = vmatpush1.bf16.msra.mxu0 0
  %89 = vmatprep.subr.bf16.mxu0 0
  %90 = vmatpush1.bf16.msra.mxu0 0
  %91 = vmatprep.subr.bf16.mxu0 0
  %92 = vmatpush1.bf16.msra.mxu0 0
  %93 = vmatprep.subr.bf16.mxu0 0
  %94 = vmatpush1.bf16.msra.mxu0 0
  %95 = vmatprep.subr.bf16.mxu0 0
  %96 = vmatpush1.bf16.msra.mxu0 0
  %97 = vmatprep.subr.bf16.mxu0 0
  %98 = vmatpush1.bf16.msra.mxu0 0
  %99 = vmatprep.subr.bf16.mxu0 0
  %100 = vmatpush1.bf16.msra.mxu0 0
  %101 = vmatprep.subr.bf16.mxu0 0
  %102 = vmatpush1.bf16.msra.mxu0 0
  %103 = vmatprep.subr.bf16.mxu0 0
  %104 = vmatpush1.bf16.msra.mxu0 0
  %105 = vmatprep.subr.bf16.mxu0 0
  %106 = vmatpush1.bf16.msra.mxu0 0
  %107 = vmatprep.mubr.bf16.mxu0 0
  %108 = vmatmul.mubr.bf16.gmra.mrb[0].mxu0 %v70
  %v109 = vpop.f32.mrb[0].mxu0
  %v110 = vadd.f32 %v32, %v109
  %v111 = vpop.f32.mrb[0].mxu0
  %v112 = vpop.f32.mrb[0].mxu0
  %v113 = vadd.f32 %v32, %v112
  %v114 = vpop.f32.mrb[0].mxu0
  %115 = vmatprep.mubr.bf16.mxu0 0
  %116 = vmatmul.mubr.bf16.gmra.mrb[0].mxu0 %v73
  %v117 = vpop.f32.mrb[0].mxu0
  %v118 = vadd.f32 %v32, %v117
  %v119 = vpop.f32.mrb[0].mxu0
  %v120 = vpop.f32.mrb[0].mxu0
  %v121 = vadd.f32 %v32, %v120
  %v122 = vpop.f32.mrb[0].mxu0
  %123 = vdwg.mxu0
  %v124 = vpack.c.bf16 %v113, %v110
  %v125 = vpack.c.bf16 %v121, %v118
  %v128 = vunpack.c.l.b16 %v124
  %v129 = vunpack.c.h.b16 %v124
  %v130 = vunpack.c.l.b16 %v125
  %v131 = vunpack.c.h.b16 %v125
  %v132 = vpack.c.b16 %v128, %v128
  %v133 = vpack.c.b16 %v129, %v129
  %v134 = vpack.c.b16 %v130, %v130
  %v135 = vpack.c.b16 %v131, %v131
  %vm140 = vcmask 191488
  %141 = vst.msk [vmem:[%s3] sm:$0xf] %vm140, %v132
  %142 = vst.msk [vmem:[%s3 + $0x4] sm:$0xf] %vm140, %v133
  %143 = vst.msk [vmem:[%s3 + $0x8] sm:$0xf] %vm140, %v134
  %144 = vst.msk [vmem:[%s3 + $0xc] sm:$0xf] %vm140, %v135
  // Predicated region
  $region14: #{mobilenet_v2_forward.27} parent=0 // pred_check
    _
  $region15: #{mobilenet_v2_forward.27} parent=0 // pred_check_branch
    %146 = sbr.rel (0) target = $region17
  $region16: #{mobilenet_v2_forward.27} parent=0 // pred_region
    _
  $region17: #{mobilenet_v2_forward.27} parent=0 // pred_fallthru
    _
  // Predicated region
  $region18: #{mobilenet_v2_forward.27} parent=0 // pred_check
    _
  $region19: #{mobilenet_v2_forward.27} parent=0 // pred_check_branch
    %148 = sbr.rel (0) target = $region21
  $region20: #{mobilenet_v2_forward.27} parent=0 // pred_region
    _
  $region21: #{mobilenet_v2_forward.27} parent=0 // pred_fallthru
    _

// kernel: mobilenet_v2_forward.26
$region0: #{mobilenet_v2_forward.26}
  #allocation0 [shape = 'u32[]', space=smem, size = 0x4, offset = 0x4, fixed_abs, tag = 'smem constant byte address 0x4 - core index']
  #allocation1 [shape = 'u32[144,128]{1,0:T(1,128)}', space=vmem, size = 0x12000, scoped, tag = 'internal scratch']
  %s0 = inlined_call_operand.vmem [shape: bf16[2,5,5,64], index: 0, kind: input, shape index: {}]
  %s1 = inlined_call_operand.vmem [shape: bf16[2,5,5,64], index: 1, kind: input, shape index: {}]
  %s2 = inlined_call_operand.vmem [shape: bf16[2,5,5,64], index: 2, kind: input, shape index: {}]
  %s3 = inlined_call_operand.vmem [shape: bf16[2,5,5,64], index: 3, kind: input, shape index: {}]
  %s4 = inlined_call_operand.vmem [shape: f32[9,64], index: 4, kind: input, shape index: {}]
  %s5 = inlined_call_operand.vmem [shape: f32[1,64], index: 5, kind: input, shape index: {}]
  %s6 = inlined_call_operand.vmem [shape: bf16[2,4,4,64], index: 6, kind: output, shape index: {}]
  %s7 = sld [smem:[#allocation0]]
  $region57: #{mobilenet_v2_forward.26} parent=0
    _
  %s9 = ssub.s32 1, %s7
  %s10 = scalar_select 0, %s9, %s7
  loop: start=0, step=1, limit=4
  $region2: #{mobilenet_v2_forward.26} parent=0 // loop_pre_header
    _
  $region3: #{mobilenet_v2_forward.26} parent=0 // loop_header
    %s12 = sphi 0, %s16
    %p13 = scmp.ge.s32.totalorder %s12, 4
    %s19 = sphi 0, %s31
    %s20 = sphi 0, %s27
    %s21 = sphi 0, %s19
    %s22 = sphi 0, %s20
    %s23 = sphi 0, %s21
    %s24 = sphi 0, %s22
    %s34 = sphi 0, %s36
    %s37 = sphi 0, %s34
    %s38 = sphi 0, %s37
    %s54 = sphi 0, %s38
    %s60 = sphi 0, %s62
    %s63 = sphi 0, %s60
    %s64 = sphi 0, %s63
    %s80 = sphi 0, %s64
    %s86 = sphi 0, %s88
    %s89 = sphi 0, %s86
    %s90 = sphi 0, %s89
    %s106 = sphi 0, %s90
    %s112 = sphi 0, %s114
    %s115 = sphi 0, %s112
    %s116 = sphi 0, %s115
    %s132 = sphi 0, %s116
    %s136 = sphi 0, %s136
    %s138 = sphi 0, %s136
    %s139 = sphi 0, %s138
    %s153 = sphi 0, %s139
    %s157 = sphi 0, %s157
    %s159 = sphi 0, %s157
    %s160 = sphi 0, %s159
    %s174 = sphi 0, %s160
    %s182 = sphi 0, %s184
    %s185 = sphi 0, %s182
    %s186 = sphi 0, %s185
    %s202 = sphi 0, %s186
  $region4: #{mobilenet_v2_forward.26} parent=0 // loop_header_branch
    %15 = sbr.rel (%p13) target = $region8
  $region5: #{mobilenet_v2_forward.26} parent=0 // loop_body
    %s17 = ssub.s32 %s12, 1
    %s18 = ssub.s32 %s12, 2
    %s25 = sadd.s32 1, %s20
    %p26 = scmp.ge.s32.totalorder %s25, 1
    %s27 = scalar_select %p26, 0, %s25
    %s28 = sadd.s32 1, %s19
    %s29 = scalar_select %p26, %s28, %s19
    %p30 = scmp.ge.s32.totalorder %s29, 2
    %s31 = scalar_select %p30, 0, %s29
    %s32 = ssub.s32 %s19, %s31
    %p33 = scmp.eq.s32.totalorder %s32, 0
    %s35 = sadd.s32 %s34, 1
    %s36 = scalar_select %p33, %s34, %s35
    %p39 = pneg %p33
    %p40 = scmp.eq.s32.totalorder %s12, 1
    %p41 = por %p39, %p40
    %p42 = scmp.ne.s32.totalorder %s34, %s37
    %p43 = scmp.eq.s32.totalorder %s12, 0
    %p44 = por %p42, %p43
    %p45 = scmp.ne.s32.totalorder %s34, %s37
    %p46 = scmp.eq.s32.totalorder %s17, 1
    %p47 = por %p45, %p46
    %p48 = scmp.ne.s32.totalorder %s37, %s38
    %p49 = scmp.eq.s32.totalorder %s17, 0
    %p50 = por %p48, %p49
    %p51 = scmp.ne.s32.totalorder %s37, %s38
    %p52 = scmp.eq.s32.totalorder %s18, 1
    %p53 = por %p51, %p52
    %p55 = scmp.ne.s32.totalorder %s38, %s54
    %p56 = scmp.eq.s32.totalorder %s18, 0
    %p57 = por %p55, %p56
    %s58 = ssub.s32 %s19, %s31
    %p59 = scmp.eq.s32.totalorder %s58, 0
    %s61 = sadd.s32 %s60, 1
    %s62 = scalar_select %p59, %s60, %s61
    %p65 = pneg %p59
    %p66 = scmp.eq.s32.totalorder %s12, 1
    %p67 = por %p65, %p66
    %p68 = scmp.ne.s32.totalorder %s60, %s63
    %p69 = scmp.eq.s32.totalorder %s12, 0
    %p70 = por %p68, %p69
    %p71 = scmp.ne.s32.totalorder %s60, %s63
    %p72 = scmp.eq.s32.totalorder %s17, 1
    %p73 = por %p71, %p72
    %p74 = scmp.ne.s32.totalorder %s63, %s64
    %p75 = scmp.eq.s32.totalorder %s17, 0
    %p76 = por %p74, %p75
    %p77 = scmp.ne.s32.totalorder %s63, %s64
    %p78 = scmp.eq.s32.totalorder %s18, 1
    %p79 = por %p77, %p78
    %p81 = scmp.ne.s32.totalorder %s64, %s80
    %p82 = scmp.eq.s32.totalorder %s18, 0
    %p83 = por %p81, %p82
    %s84 = ssub.s32 %s19, %s31
    %p85 = scmp.eq.s32.totalorder %s84, 0
    %s87 = sadd.s32 %s86, 1
    %s88 = scalar_select %p85, %s86, %s87
    %p91 = pneg %p85
    %p92 = scmp.eq.s32.totalorder %s12, 1
    %p93 = por %p91, %p92
    %p94 = scmp.ne.s32.totalorder %s86, %s89
    %p95 = scmp.eq.s32.totalorder %s12, 0
    %p96 = por %p94, %p95
    %p97 = scmp.ne.s32.totalorder %s86, %s89
    %p98 = scmp.eq.s32.totalorder %s17, 1
    %p99 = por %p97, %p98
    %p100 = scmp.ne.s32.totalorder %s89, %s90
    %p101 = scmp.eq.s32.totalorder %s17, 0
    %p102 = por %p100, %p101
    %p103 = scmp.ne.s32.totalorder %s89, %s90
    %p104 = scmp.eq.s32.totalorder %s18, 1
    %p105 = por %p103, %p104
    %p107 = scmp.ne.s32.totalorder %s90, %s106
    %p108 = scmp.eq.s32.totalorder %s18, 0
    %p109 = por %p107, %p108
    %s110 = ssub.s32 %s19, %s31
    %p111 = scmp.eq.s32.totalorder %s110, 0
    %s113 = sadd.s32 %s112, 1
    %s114 = scalar_select %p111, %s112, %s113
    %p117 = pneg %p111
    %p118 = scmp.eq.s32.totalorder %s12, 1
    %p119 = por %p117, %p118
    %p120 = scmp.ne.s32.totalorder %s112, %s115
    %p121 = scmp.eq.s32.totalorder %s12, 0
    %p122 = por %p120, %p121
    %p123 = scmp.ne.s32.totalorder %s112, %s115
    %p124 = scmp.eq.s32.totalorder %s17, 1
    %p125 = por %p123, %p124
    %p126 = scmp.ne.s32.totalorder %s115, %s116
    %p127 = scmp.eq.s32.totalorder %s17, 0
    %p128 = por %p126, %p127
    %p129 = scmp.ne.s32.totalorder %s115, %s116
    %p130 = scmp.eq.s32.totalorder %s18, 1
    %p131 = por %p129, %p130
    %p133 = scmp.ne.s32.totalorder %s116, %s132
    %p134 = scmp.eq.s32.totalorder %s18, 0
    %p135 = por %p133, %p134
    %s137 = sadd.s32 %s136, 1
    %p140 = scmp.eq.s32.totalorder %s12, 1
    %p141 = scmp.ne.s32.totalorder %s136, %s138
    %p142 = scmp.eq.s32.totalorder %s12, 0
    %p143 = por %p141, %p142
    %p144 = scmp.ne.s32.totalorder %s136, %s138
    %p145 = scmp.eq.s32.totalorder %s17, 1
    %p146 = por %p144, %p145
    %p147 = scmp.ne.s32.totalorder %s138, %s139
    %p148 = scmp.eq.s32.totalorder %s17, 0
    %p149 = por %p147, %p148
    %p150 = scmp.ne.s32.totalorder %s138, %s139
    %p151 = scmp.eq.s32.totalorder %s18, 1
    %p152 = por %p150, %p151
    %p154 = scmp.ne.s32.totalorder %s139, %s153
    %p155 = scmp.eq.s32.totalorder %s18, 0
    %p156 = por %p154, %p155
    %s158 = sadd.s32 %s157, 1
    %p161 = scmp.eq.s32.totalorder %s12, 1
    %p162 = scmp.ne.s32.totalorder %s157, %s159
    %p163 = scmp.eq.s32.totalorder %s12, 0
    %p164 = por %p162, %p163
    %p165 = scmp.ne.s32.totalorder %s157, %s159
    %p166 = scmp.eq.s32.totalorder %s17, 1
    %p167 = por %p165, %p166
    %p168 = scmp.ne.s32.totalorder %s159, %s160
    %p169 = scmp.eq.s32.totalorder %s17, 0
    %p170 = por %p168, %p169
    %p171 = scmp.ne.s32.totalorder %s159, %s160
    %p172 = scmp.eq.s32.totalorder %s18, 1
    %p173 = por %p171, %p172
    %p175 = scmp.ne.s32.totalorder %s160, %s174
    %p176 = scmp.eq.s32.totalorder %s18, 0
    %p177 = por %p175, %p176
    %s178 = ssub.s32 %s19, %s31
    %s179 = ssub.s32 %s20, %s27
    %s180 = sor.u32 %s178, %s179
    %p181 = scmp.eq.s32.totalorder %s180, 0
    %s183 = sadd.s32 %s182, 1
    %s184 = scalar_select %p181, %s182, %s183
    %p187 = pneg %p181
    %p188 = scmp.eq.s32.totalorder %s12, 1
    %p189 = por %p187, %p188
    %p190 = scmp.ne.s32.totalorder %s182, %s185
    %p191 = scmp.eq.s32.totalorder %s12, 0
    %p192 = por %p190, %p191
    %p193 = scmp.ne.s32.totalorder %s182, %s185
    %p194 = scmp.eq.s32.totalorder %s17, 1
    %p195 = por %p193, %p194
    %p196 = scmp.ne.s32.totalorder %s185, %s186
    %p197 = scmp.eq.s32.totalorder %s17, 0
    %p198 = por %p196, %p197
    %p199 = scmp.ne.s32.totalorder %s185, %s186
    %p200 = scmp.eq.s32.totalorder %s18, 1
    %p201 = por %p199, %p200
    %p203 = scmp.ne.s32.totalorder %s186, %s202
    %p204 = scmp.eq.s32.totalorder %s18, 0
    %p205 = por %p203, %p204
    %p206 = scmp.le.s32.totalorder 1, %s12
    %p207 = scmp.lt.s32.totalorder %s12, 3
    %p208 = pnand %p206, %p207
    %p209 = pneg %p208
    // Predicated region
    $region9: #{mobilenet_v2_forward.26} parent=5 // pred_check
      _
    $region10: #{mobilenet_v2_forward.26} parent=5 // pred_check_branch
      %211 = sbr.rel (%p208) target = $region12
    $region11: #{mobilenet_v2_forward.26} parent=5 // pred_region
      %s212 = ssub.s32 %s12, 1
      // Predicated region
      $region13: #{mobilenet_v2_forward.26} parent=11 // pred_check
        %p213 = pneg %p149
      $region14: #{mobilenet_v2_forward.26} parent=11 // pred_check_branch
        %215 = sbr.rel (%p213) target = $region16
      $region15: #{mobilenet_v2_forward.26} parent=11 // pred_region
        _
      $region16: #{mobilenet_v2_forward.26} parent=11 // pred_fallthru
        _
      // Predicated region
      $region17: #{mobilenet_v2_forward.26} parent=11 // pred_check
        %p216 = pneg %p170
      $region18: #{mobilenet_v2_forward.26} parent=11 // pred_check_branch
        %218 = sbr.rel (%p216) target = $region20
      $region19: #{mobilenet_v2_forward.26} parent=11 // pred_region
        _
      $region20: #{mobilenet_v2_forward.26} parent=11 // pred_fallthru
        _
    $region12: #{mobilenet_v2_forward.26} parent=5 // pred_fallthru
      _
    %p219 = scmp.lt.s32.totalorder %s12, 2
    // Predicated region
    $region21: #{mobilenet_v2_forward.26} parent=5 // pred_check
      %p220 = pneg %p219
    $region22: #{mobilenet_v2_forward.26} parent=5 // pred_check_branch
      %222 = sbr.rel (%p220) target = $region24
    $region23: #{mobilenet_v2_forward.26} parent=5 // pred_region
      // Predicated region
      $region25: #{mobilenet_v2_forward.26} parent=23 // pred_check
        %p223 = pneg %p44
      $region26: #{mobilenet_v2_forward.26} parent=23 // pred_check_branch
        %225 = sbr.rel (%p223) target = $region28
      $region27: #{mobilenet_v2_forward.26} parent=23 // pred_region
        %p226 = scmp.lt.s32.totalorder %s19, 1
        %s227 = scalar_select %p226, %s19, 1
        %s228 = smul.addr %s227, 5
        %s229 = smul.addr %s228, 4
        %s230 = scalar_lea.vmem %s0, %s229
      $region28: #{mobilenet_v2_forward.26} parent=23 // pred_fallthru
        _
      // Predicated region
      $region29: #{mobilenet_v2_forward.26} parent=23 // pred_check
        %p231 = pneg %p70
      $region30: #{mobilenet_v2_forward.26} parent=23 // pred_check_branch
        %233 = sbr.rel (%p231) target = $region32
      $region31: #{mobilenet_v2_forward.26} parent=23 // pred_region
        %p234 = scmp.lt.s32.totalorder %s19, 1
        %s235 = scalar_select %p234, %s19, 1
        %s236 = smul.addr %s235, 5
        %s237 = smul.addr %s236, 4
        %s238 = scalar_lea.vmem %s1, %s237
      $region32: #{mobilenet_v2_forward.26} parent=23 // pred_fallthru
        _
      // Predicated region
      $region33: #{mobilenet_v2_forward.26} parent=23 // pred_check
        %p239 = pneg %p96
      $region34: #{mobilenet_v2_forward.26} parent=23 // pred_check_branch
        %241 = sbr.rel (%p239) target = $region36
      $region35: #{mobilenet_v2_forward.26} parent=23 // pred_region
        %p242 = scmp.lt.s32.totalorder %s19, 1
        %s243 = scalar_select %p242, %s19, 1
        %s244 = smul.addr %s243, 5
        %s245 = smul.addr %s244, 4
        %s246 = scalar_lea.vmem %s2, %s245
      $region36: #{mobilenet_v2_forward.26} parent=23 // pred_fallthru
        _
      // Predicated region
      $region37: #{mobilenet_v2_forward.26} parent=23 // pred_check
        %p247 = pneg %p122
      $region38: #{mobilenet_v2_forward.26} parent=23 // pred_check_branch
        %249 = sbr.rel (%p247) target = $region40
      $region39: #{mobilenet_v2_forward.26} parent=23 // pred_region
        %p250 = scmp.lt.s32.totalorder %s19, 1
        %s251 = scalar_select %p250, %s19, 1
        %s252 = smul.addr %s251, 5
        %s253 = smul.addr %s252, 4
        %s254 = scalar_lea.vmem %s3, %s253
      $region40: #{mobilenet_v2_forward.26} parent=23 // pred_fallthru
        _
    $region24: #{mobilenet_v2_forward.26} parent=5 // pred_fallthru
      _
    %p255 = scmp.le.s32.totalorder 1, %s12
    %p256 = scmp.lt.s32.totalorder %s12, 3
    %p257 = pnand %p255, %p256
    %p258 = pneg %p257
    // Predicated region
    $region41: #{mobilenet_v2_forward.26} parent=5 // pred_check
      _
    $region42: #{mobilenet_v2_forward.26} parent=5 // pred_check_branch
      %260 = sbr.rel (%p257) target = $region44
    $region43: #{mobilenet_v2_forward.26} parent=5 // pred_region
      %s261 = ssub.s32 %s12, 1
      %p262 = scmp.lt.s32.totalorder %s21, 1
      %s263 = scalar_select %p262, %s21, 1
      %s264 = smul.addr %s263, 5
      %s265 = smul.addr %s264, 4
      %s266 = scalar_lea.vmem %s0, %s265
      %p267 = pneg %p50
      %p268 = pneg %p47
      %p269 = scmp.lt.s32.totalorder %s21, 1
      %s270 = scalar_select %p269, %s21, 1
      %s271 = smul.addr %s270, 5
      %s272 = smul.addr %s271, 4
      %s273 = scalar_lea.vmem %s1, %s272
      %p274 = pneg %p76
      %p275 = pneg %p73
      %p276 = scmp.lt.s32.totalorder %s21, 1
      %s277 = scalar_select %p276, %s21, 1
      %s278 = smul.addr %s277, 5
      %s279 = smul.addr %s278, 4
      %s280 = scalar_lea.vmem %s2, %s279
      %p281 = pneg %p102
      %p282 = pneg %p99
      %p283 = scmp.lt.s32.totalorder %s21, 1
      %s284 = scalar_select %p283, %s21, 1
      %s285 = smul.addr %s284, 5
      %s286 = smul.addr %s285, 4
      %s287 = scalar_lea.vmem %s3, %s286
      %p288 = pneg %p128
      %p289 = pneg %p125
      %p290 = pneg %p149
      %p291 = pneg %p146
      %p292 = pneg %p170
      %p293 = pneg %p167
      %p294 = pneg %p198
      %p295 = pneg %p195
      %s296 = smul.u32 4, %s22
      %p297 = scmp.lt.s32.totalorder %s21, 1
      %s298 = scalar_select %p297, %s21, 1
      %p299 = scmp.lt.s32.totalorder %s296, 3
      %s300 = scalar_select %p299, %s296, 3
      %s301 = smul.addr %s298, 4
      %s302 = sadd.s32 %s300, %s301
      %s303 = smul.addr %s302, 2
      %s304 = scalar_lea.vmem %s6, %s303
      %p305 = scmp.lt.s32.totalorder %s21, 1
      %s306 = scalar_select %p305, %s21, 1
      %s307 = smul.addr %s306, 5
      %s308 = smul.addr %s307, 4
      %s309 = scalar_lea.vmem %s0, %s308
      %p310 = scmp.lt.s32.totalorder %s21, 1
      %s311 = scalar_select %p310, %s21, 1
      %s312 = smul.addr %s311, 5
      %s313 = smul.addr %s312, 4
      %s314 = scalar_lea.vmem %s1, %s313
      %p315 = scmp.lt.s32.totalorder %s21, 1
      %s316 = scalar_select %p315, %s21, 1
      %s317 = smul.addr %s316, 5
      %s318 = smul.addr %s317, 4
      %s319 = scalar_lea.vmem %s2, %s318
      %p320 = scmp.lt.s32.totalorder %s21, 1
      %s321 = scalar_select %p320, %s21, 1
      %s322 = smul.addr %s321, 5
      %s323 = smul.addr %s322, 4
      %s324 = scalar_lea.vmem %s3, %s323
      %s325 = smul.u32 4, %s22
      %p326 = scmp.lt.s32.totalorder %s21, 1
      %s327 = scalar_select %p326, %s21, 1
      %p328 = scmp.lt.s32.totalorder %s325, 3
      %s329 = scalar_select %p328, %s325, 3
      %s330 = smul.addr %s327, 4
      %s331 = sadd.s32 %s329, %s330
      %s332 = smul.addr %s331, 2
      %s333 = scalar_lea.vmem %s6, %s332
      %s334 = smul.u32 4, %s22
      %s335 = smul.u32 %s22, 4
      %s336 = smul.addr %s335, 4
      %s337 = scalar_lea.vmem %s309, %s336
      %v338 = vld [vmem:[%s337] sm:$0x7]
      %v339 = vld [vmem:[%s337 + $0x4] sm:$0x7]
      %v340 = vld [vmem:[%s337 + $0x8] sm:$0x7]
      %v341 = vld [vmem:[%s337 + $0xc] sm:$0x7]
      %s342 = smul.addr %s335, 4
      %s343 = scalar_lea.vmem %s314, %s342
      %v344 = vld [vmem:[%s343] sm:$0x7]
      %v345 = vld [vmem:[%s343 + $0x4] sm:$0x7]
      %v346 = vld [vmem:[%s343 + $0x8] sm:$0x7]
      %v347 = vld [vmem:[%s343 + $0xc] sm:$0x7]
      %v348 = vunpack.c.l.bf16 %v338
      %v349 = vunpack.c.l.bf16 %v339
      %v350 = vunpack.c.l.bf16 %v340
      %v351 = vunpack.c.l.bf16 %v341
      %v352 = vld [vmem:[%s4] sm:$0x1]
      %v353 = vlaneseq
      %v354 = vshrl.u32 %v353, 7
      %v355 = vsub.s32 0, %v354
      %v356 = vrot.slane %v352, %v355
      %v357 = vmul.f32 %v348, %v356
      %v358 = vmul.f32 %v349, %v356
      %v359 = vmul.f32 %v350, %v356
      %v360 = vmul.f32 %v351, %v356
      %v361 = vadd.f32 %v357, 0.0
      %v362 = vadd.f32 %v358, 0.0
      %v363 = vadd.f32 %v359, 0.0
      %v364 = vadd.f32 %v360, 0.0
      %v365 = vunpack.c.l.bf16 %v344
      %v366 = vunpack.c.l.bf16 %v345
      %v367 = vunpack.c.l.bf16 %v346
      %v368 = vunpack.c.l.bf16 %v347
      %v369 = vld [vmem:[%s4 + $0x1] sm:$0x1]
      %v370 = vlaneseq
      %v371 = vshrl.u32 %v370, 7
      %v372 = vsub.s32 0, %v371
      %v373 = vrot.slane %v369, %v372
      %v374 = vmul.f32 %v365, %v373
      %v375 = vmul.f32 %v366, %v373
      %v376 = vmul.f32 %v367, %v373
      %v377 = vmul.f32 %v368, %v373
      %v378 = vadd.f32 %v361, %v374
      %v379 = vadd.f32 %v362, %v375
      %v380 = vadd.f32 %v363, %v376
      %v381 = vadd.f32 %v364, %v377
      %v382 = vld [vmem:[%s4 + $0x2] sm:$0x1]
      %v383 = vlaneseq
      %v384 = vshrl.u32 %v383, 7
      %v385 = vsub.s32 0, %v384
      %v386 = vrot.slane %v382, %v385
      %v387 = vmul.f32 %v348, %v386
      %v388 = vmul.f32 %v349, %v386
      %v389 = vmul.f32 %v350, %v386
      %v390 = vmul.f32 %v351, %v386
      %v395 = vrot.slane %v387, 1
      %v396 = vrot.slane %v388, 1
      %v397 = vrot.slane %v389, 1
      %v398 = vrot.slane %v390, 1
      %v403 = vadd.f32 %v378, %v395
      %v404 = vadd.f32 %v379, %v396
      %v405 = vadd.f32 %v380, %v397
      %v406 = vadd.f32 %v381, %v398
      %s407 = smul.addr %s335, 4
      %s408 = scalar_lea.vmem %s319, %s407
      %v409 = vld [vmem:[%s408] sm:$0x7]
      %v410 = vld [vmem:[%s408 + $0x4] sm:$0x7]
      %v411 = vld [vmem:[%s408 + $0x8] sm:$0x7]
      %v412 = vld [vmem:[%s408 + $0xc] sm:$0x7]
      %s413 = smul.addr %s335, 4
      %s414 = scalar_lea.vmem %s324, %s413
      %v415 = vld [vmem:[%s414] sm:$0x7]
      %v416 = vld [vmem:[%s414 + $0x4] sm:$0x7]
      %v417 = vld [vmem:[%s414 + $0x8] sm:$0x7]
      %v418 = vld [vmem:[%s414 + $0xc] sm:$0x7]
      %v419 = vunpack.c.l.bf16 %v409
      %v420 = vunpack.c.l.bf16 %v410
      %v421 = vunpack.c.l.bf16 %v411
      %v422 = vunpack.c.l.bf16 %v412
      %v423 = vld [vmem:[%s4 + $0x3] sm:$0x1]
      %v424 = vlaneseq
      %v425 = vshrl.u32 %v424, 7
      %v426 = vsub.s32 0, %v425
      %v427 = vrot.slane %v423, %v426
      %v428 = vmul.f32 %v419, %v427
      %v429 = vmul.f32 %v420, %v427
      %v430 = vmul.f32 %v421, %v427
      %v431 = vmul.f32 %v422, %v427
      %v432 = vadd.f32 %v403, %v428
      %v433 = vadd.f32 %v404, %v429
      %v434 = vadd.f32 %v405, %v430
      %v435 = vadd.f32 %v406, %v431
      %v436 = vunpack.c.l.bf16 %v415
      %v437 = vunpack.c.l.bf16 %v416
      %v438 = vunpack.c.l.bf16 %v417
      %v439 = vunpack.c.l.bf16 %v418
      %v440 = vld [vmem:[%s4 + $0x4] sm:$0x1]
      %v441 = vlaneseq
      %v442 = vshrl.u32 %v441, 7
      %v443 = vsub.s32 0, %v442
      %v444 = vrot.slane %v440, %v443
      %v445 = vmul.f32 %v436, %v444
      %v446 = vmul.f32 %v437, %v444
      %v447 = vmul.f32 %v438, %v444
      %v448 = vmul.f32 %v439, %v444
      %v449 = vadd.f32 %v432, %v445
      %v450 = vadd.f32 %v433, %v446
      %v451 = vadd.f32 %v434, %v447
      %v452 = vadd.f32 %v435, %v448
      %v453 = vld [vmem:[%s4 + $0x5] sm:$0x1]
      %v454 = vlaneseq
      %v455 = vshrl.u32 %v454, 7
      %v456 = vsub.s32 0, %v455
      %v457 = vrot.slane %v453, %v456
      %v458 = vmul.f32 %v419, %v457
      %v459 = vmul.f32 %v420, %v457
      %v460 = vmul.f32 %v421, %v457
      %v461 = vmul.f32 %v422, %v457
      %v466 = vrot.slane %v458, 1
      %v467 = vrot.slane %v459, 1
      %v468 = vrot.slane %v460, 1
      %v469 = vrot.slane %v461, 1
      %v474 = vadd.f32 %v449, %v466
      %v475 = vadd.f32 %v450, %v467
      %v476 = vadd.f32 %v451, %v468
      %v477 = vadd.f32 %v452, %v469
      %s478 = sadd.s32 %s335, 1
      %s479 = smul.addr %s478, 4
      %s480 = scalar_lea.vmem %s309, %s479
      %v481 = vld [vmem:[%s480] sm:$0x7]
      %v482 = vld [vmem:[%s480 + $0x4] sm:$0x7]
      %v483 = vld [vmem:[%s480 + $0x8] sm:$0x7]
      %v484 = vld [vmem:[%s480 + $0xc] sm:$0x7]
      %s485 = smul.addr %s478, 4
      %s486 = scalar_lea.vmem %s314, %s485
      %v487 = vld [vmem:[%s486] sm:$0x7]
      %v488 = vld [vmem:[%s486 + $0x4] sm:$0x7]
      %v489 = vld [vmem:[%s486 + $0x8] sm:$0x7]
      %v490 = vld [vmem:[%s486 + $0xc] sm:$0x7]
      %v491 = vunpack.c.l.bf16 %v481
      %v492 = vunpack.c.l.bf16 %v482
      %v493 = vunpack.c.l.bf16 %v483
      %v494 = vunpack.c.l.bf16 %v484
      %v495 = vld [vmem:[%s4 + $0x6] sm:$0x1]
      %v496 = vlaneseq
      %v497 = vshrl.u32 %v496, 7
      %v498 = vsub.s32 0, %v497
      %v499 = vrot.slane %v495, %v498
      %v500 = vmul.f32 %v491, %v499
      %v501 = vmul.f32 %v492, %v499
      %v502 = vmul.f32 %v493, %v499
      %v503 = vmul.f32 %v494, %v499
      %v504 = vadd.f32 %v474, %v500
      %v505 = vadd.f32 %v475, %v501
      %v506 = vadd.f32 %v476, %v502
      %v507 = vadd.f32 %v477, %v503
      %v508 = vunpack.c.l.bf16 %v487
      %v509 = vunpack.c.l.bf16 %v488
      %v510 = vunpack.c.l.bf16 %v489
      %v511 = vunpack.c.l.bf16 %v490
      %v512 = vld [vmem:[%s4 + $0x7] sm:$0x1]
      %v513 = vlaneseq
      %v514 = vshrl.u32 %v513, 7
      %v515 = vsub.s32 0, %v514
      %v516 = vrot.slane %v512, %v515
      %v517 = vmul.f32 %v508, %v516
      %v518 = vmul.f32 %v509, %v516
      %v519 = vmul.f32 %v510, %v516
      %v520 = vmul.f32 %v511, %v516
      %v521 = vadd.f32 %v504, %v517
      %v522 = vadd.f32 %v505, %v518
      %v523 = vadd.f32 %v506, %v519
      %v524 = vadd.f32 %v507, %v520
      %v525 = vld [vmem:[%s4 + $0x8] sm:$0x1]
      %v526 = vlaneseq
      %v527 = vshrl.u32 %v526, 7
      %v528 = vsub.s32 0, %v527
      %v529 = vrot.slane %v525, %v528
      %v530 = vmul.f32 %v491, %v529
      %v531 = vmul.f32 %v492, %v529
      %v532 = vmul.f32 %v493, %v529
      %v533 = vmul.f32 %v494, %v529
      %v538 = vrot.slane %v530, 1
      %v539 = vrot.slane %v531, 1
      %v540 = vrot.slane %v532, 1
      %v541 = vrot.slane %v533, 1
      %v546 = vadd.f32 %v521, %v538
      %v547 = vadd.f32 %v522, %v539
      %v548 = vadd.f32 %v523, %v540
      %v549 = vadd.f32 %v524, %v541
      %v550 = vld [vmem:[%s5] sm:$0x1]
      %v552 = vlaneseq
      %v553 = vshrl.u32 %v552, 7
      %v554 = vsub.s32 0, %v553
      %v555 = vrot.slane %v550, %v554
      %v557 = vadd.f32 %v546, %v555
      %v558 = vadd.f32 %v547, %v555
      %v559 = vadd.f32 %v548, %v555
      %v560 = vadd.f32 %v549, %v555
      %v561 = vmax.f32 %v557, 0.0
      %v562 = vmax.f32 %v558, 0.0
      %v563 = vmax.f32 %v559, 0.0
      %v564 = vmax.f32 %v560, 0.0
      %v565 = vmin.f32 %v561, 6.0
      %v566 = vmin.f32 %v562, 6.0
      %v567 = vmin.f32 %v563, 6.0
      %v568 = vmin.f32 %v564, 6.0
      %v569 = vpack.c.bf16 %v565, %v565
      %v570 = vpack.c.bf16 %v566, %v566
      %v571 = vpack.c.bf16 %v567, %v567
      %v572 = vpack.c.bf16 %v568, %v568
      %vm573 = vcmask 517120
      %574 = vst.msk [vmem:[%s333] sm:$0x3] %vm573, %v569
      %575 = vst.msk [vmem:[%s333 + $0x2] sm:$0x3] %vm573, %v570
      %576 = vst.msk [vmem:[%s333 + $0x4] sm:$0x3] %vm573, %v571
      %577 = vst.msk [vmem:[%s333 + $0x6] sm:$0x3] %vm573, %v572
      %s578 = smul.u32 4, %s22
      %p579 = scmp.lt.s32.totalorder %s21, 1
      %s580 = scalar_select %p579, %s21, 1
      %p581 = scmp.lt.s32.totalorder %s578, 3
      %s582 = scalar_select %p581, %s578, 3
      %s583 = smul.addr %s580, 4
      %s584 = sadd.s32 %s582, %s583
      %s585 = smul.addr %s584, 2
      %s586 = scalar_lea.vmem %s6, %s585
      // Predicated region
      $region45: #{mobilenet_v2_forward.26} parent=43 // pred_check
        %p587 = pneg %p195
      $region46: #{mobilenet_v2_forward.26} parent=43 // pred_check_branch
        %589 = sbr.rel (%p587) target = $region48
      $region47: #{mobilenet_v2_forward.26} parent=43 // pred_region
        %s590 = smul.u32 4, %s22
      $region48: #{mobilenet_v2_forward.26} parent=43 // pred_fallthru
        _
    $region44: #{mobilenet_v2_forward.26} parent=5 // pred_fallthru
      _
    %p591 = scmp.le.s32.totalorder 2, %s12
    // Predicated region
    $region49: #{mobilenet_v2_forward.26} parent=5 // pred_check
      %p592 = pneg %p591
    $region50: #{mobilenet_v2_forward.26} parent=5 // pred_check_branch
      %594 = sbr.rel (%p592) target = $region52
    $region51: #{mobilenet_v2_forward.26} parent=5 // pred_region
      %s595 = ssub.s32 %s12, 2
      // Predicated region
      $region53: #{mobilenet_v2_forward.26} parent=51 // pred_check
        %p596 = pneg %p201
      $region54: #{mobilenet_v2_forward.26} parent=51 // pred_check_branch
        %598 = sbr.rel (%p596) target = $region56
      $region55: #{mobilenet_v2_forward.26} parent=51 // pred_region
        %s599 = smul.u32 4, %s24
        %p600 = scmp.lt.s32.totalorder %s23, 1
        %s601 = scalar_select %p600, %s23, 1
        %p602 = scmp.lt.s32.totalorder %s599, 3
        %s603 = scalar_select %p602, %s599, 3
        %s604 = smul.addr %s601, 4
        %s605 = sadd.s32 %s603, %s604
        %s606 = smul.addr %s605, 2
        %s607 = scalar_lea.vmem %s6, %s606
      $region56: #{mobilenet_v2_forward.26} parent=51 // pred_fallthru
        _
    $region52: #{mobilenet_v2_forward.26} parent=5 // pred_fallthru
      _
  $region6: #{mobilenet_v2_forward.26} parent=0 // loop_footer
    %s16 = sadd.s32 1, %s12
  $region7: #{mobilenet_v2_forward.26} parent=0 // loop_footer_branch
    %11 = sbr.rel target = $region3
  $region8: #{mobilenet_v2_forward.26} parent=0 // loop_exit
    _

// kernel: mobilenet_v2_forward.28
$region0: #{mobilenet_v2_forward.28}
  #allocation0 [shape = 'u32[]', space=smem, size = 0x4, offset = 0x4, fixed_abs, tag = 'smem constant byte address 0x4 - core index']
  #allocation1 [shape = 'u32[144,128]{1,0:T(1,128)}', space=vmem, size = 0x12000, scoped, tag = 'internal scratch']
  %s0 = inlined_call_operand.vmem [shape: bf16[32,24], index: 0, kind: input, shape index: {}]
  %s1 = inlined_call_operand.vmem [shape: bf16[24,96], index: 1, kind: input, shape index: {}]
  %s2 = inlined_call_operand.vmem [shape: f32[1,96], index: 2, kind: input, shape index: {}]
  %s3 = inlined_call_operand.vmem [shape: bf16[32,96], index: 3, kind: output, shape index: {}]
  %s4 = sld [smem:[#allocation0]]
  $region22: #{mobilenet_v2_forward.28} parent=0
    _
  %s6 = ssub.s32 1, %s4
  %s7 = scalar_select 0, %s6, %s4
  // Predicated region
  $region2: #{mobilenet_v2_forward.28} parent=0 // pred_check
    _
  $region3: #{mobilenet_v2_forward.28} parent=0 // pred_check_branch
    %9 = sbr.rel (0) target = $region5
  $region4: #{mobilenet_v2_forward.28} parent=0 // pred_region
    _
  $region5: #{mobilenet_v2_forward.28} parent=0 // pred_fallthru
    _
  // Predicated region
  $region6: #{mobilenet_v2_forward.28} parent=0 // pred_check
    _
  $region7: #{mobilenet_v2_forward.28} parent=0 // pred_check_branch
    %11 = sbr.rel (0) target = $region9
  $region8: #{mobilenet_v2_forward.28} parent=0 // pred_region
    _
  $region9: #{mobilenet_v2_forward.28} parent=0 // pred_fallthru
    _
  // Predicated region
  $region10: #{mobilenet_v2_forward.28} parent=0 // pred_check
    _
  $region11: #{mobilenet_v2_forward.28} parent=0 // pred_check_branch
    %13 = sbr.rel (0) target = $region13
  $region12: #{mobilenet_v2_forward.28} parent=0 // pred_region
    _
  $region13: #{mobilenet_v2_forward.28} parent=0 // pred_fallthru
    _
  %v15 = vld [vmem:[%s0] sm:$0xf]
  %v16 = vld [vmem:[%s0 + $0x4] sm:$0xf]
  %v17 = vld [vmem:[%s0 + $0x8] sm:$0xf]
  %v18 = vld [vmem:[%s0 + $0xc] sm:$0xf]
  %v19 = vld [vmem:[%s1] sm:$0xf]
  %v20 = vld [vmem:[%s1 + $0x4] sm:$0xf]
  %v21 = vld [vmem:[%s1 + $0x8] sm:$0xf]
  %v22 = vld [vmem:[%s2] sm:$0x1]
  %v24 = vlaneseq
  %v25 = vshrl.u32 %v24, 7
  %v26 = vsub.s32 0, %v25
  %v27 = vrot.slane %v22, %v26
  %v33 = vunpack.c.l.b16 %v15
  %v34 = vunpack.c.l.b16 %v16
  %v35 = vunpack.c.l.b16 %v17
  %v36 = vunpack.c.l.b16 %v18
  %v37 = vpack.c.b16 %v34, %v33
  %v38 = vpack.c.b16 %v36, %v35
  %v42 = vunpack.c.l.b16 %v19
  %v43 = vunpack.c.l.b16 %v20
  %v44 = vunpack.c.l.b16 %v21
  %v45 = vpack.c.b16 %v43, %v42
  %v46 = vpack.c.b16 %v44, %v44
  %vm48 = vcmask 195584
  %v50 = vsel %vm48, %v37, 0
  %v53 = vsel %vm48, %v38, 0
  %vm55 = vcmask 1043456
  %v57 = vsel %vm55, %v46, 0
  %59 = vmatprep.subr.bf16.mxu0 0
  %60 = vmatpush1.bf16.msra.mxu0 %v45
  %61 = vmatprep.subr.bf16.mxu0 0
  %62 = vmatpush1.bf16.msra.mxu0 %v57
  %63 = vmatprep.subr.bf16.mxu0 0
  %64 = vmatpush1.bf16.msra.mxu0 0
  %65 = vmatprep.subr.bf16.mxu0 0
  %66 = vmatpush1.bf16.msra.mxu0 0
  %67 = vmatprep.subr.bf16.mxu0 0
  %68 = vmatpush1.bf16.msra.mxu0 0
  %69 = vmatprep.subr.bf16.mxu0 0
  %70 = vmatpush1.bf16.msra.mxu0 0
  %71 = vmatprep.subr.bf16.mxu0 0
  %72 = vmatpush1.bf16.msra.mxu0 0
  %73 = vmatprep.subr.bf16.mxu0 0
  %74 = vmatpush1.bf16.msra.mxu0 0
  %75 = vmatprep.subr.bf16.mxu0 0
  %76 = vmatpush1.bf16.msra.mxu0 0
  %77 = vmatprep.subr.bf16.mxu0 0
  %78 = vmatpush1.bf16.msra.mxu0 0
  %79 = vmatprep.subr.bf16.mxu0 0
  %80 = vmatpush1.bf16.msra.mxu0 0
  %81 = vmatprep.subr.bf16.mxu0 0
  %82 = vmatpush1.bf16.msra.mxu0 0
  %83 = vmatprep.subr.bf16.mxu0 0
  %84 = vmatpush1.bf16.msra.mxu0 0
  %85 = vmatprep.subr.bf16.mxu0 0
  %86 = vmatpush1.bf16.msra.mxu0 0
  %87 = vmatprep.subr.bf16.mxu0 0
  %88 = vmatpush1.bf16.msra.mxu0 0
  %89 = vmatprep.subr.bf16.mxu0 0
  %90 = vmatpush1.bf16.msra.mxu0 0
  %91 = vmatprep.mubr.bf16.mxu0 0
  %92 = vmatmul.mubr.bf16.gmra.mrb[0].mxu0 %v50
  %v93 = vpop.f32.mrb[0].mxu0
  %v94 = vadd.f32 %v27, %v93
  %v95 = vpop.f32.mrb[0].mxu0
  %v96 = vpop.f32.mrb[0].mxu0
  %v97 = vadd.f32 %v27, %v96
  %v98 = vpop.f32.mrb[0].mxu0
  %99 = vmatprep.mubr.bf16.mxu0 0
  %100 = vmatmul.mubr.bf16.gmra.mrb[0].mxu0 %v53
  %v101 = vpop.f32.mrb[0].mxu0
  %v102 = vadd.f32 %v27, %v101
  %v103 = vpop.f32.mrb[0].mxu0
  %v104 = vpop.f32.mrb[0].mxu0
  %v105 = vadd.f32 %v27, %v104
  %v106 = vpop.f32.mrb[0].mxu0
  %107 = vdwg.mxu0
  %v108 = vmax.f32 %v94, 0.0
  %v109 = vmax.f32 %v97, 0.0
  %v110 = vmax.f32 %v102, 0.0
  %v111 = vmax.f32 %v105, 0.0
  %v112 = vmin.f32 %v108, 6.0
  %v113 = vmin.f32 %v109, 6.0
  %v114 = vmin.f32 %v110, 6.0
  %v115 = vmin.f32 %v111, 6.0
  %v116 = vpack.c.bf16 %v113, %v112
  %v117 = vpack.c.bf16 %v115, %v114
  %v120 = vunpack.c.l.b16 %v116
  %v121 = vunpack.c.h.b16 %v116
  %v122 = vunpack.c.l.b16 %v117
  %v123 = vunpack.c.h.b16 %v117
  %v124 = vpack.c.b16 %v120, %v120
  %v125 = vpack.c.b16 %v121, %v121
  %v126 = vpack.c.b16 %v122, %v122
  %v127 = vpack.c.b16 %v123, %v123
  %vm132 = vcmask 781312
  %133 = vst.msk [vmem:[%s3] sm:$0xf] %vm132, %v124
  %134 = vst.msk [vmem:[%s3 + $0x4] sm:$0xf] %vm132, %v125
  %135 = vst.msk [vmem:[%s3 + $0x8] sm:$0xf] %vm132, %v126
  %136 = vst.msk [vmem:[%s3 + $0xc] sm:$0xf] %vm132, %v127
  // Predicated region
  $region14: #{mobilenet_v2_forward.28} parent=0 // pred_check
    _
  $region15: #{mobilenet_v2_forward.28} parent=0 // pred_check_branch
    %138 = sbr.rel (0) target = $region17
  $region16: #{mobilenet_v2_forward.28} parent=0 // pred_region
    _
  $region17: #{mobilenet_v2_forward.28} parent=0 // pred_fallthru
    _
  // Predicated region
  $region18: #{mobilenet_v2_forward.28} parent=0 // pred_check
    _
  $region19: #{mobilenet_v2_forward.28} parent=0 // pred_check_branch
    %140 = sbr.rel (0) target = $region21
  $region20: #{mobilenet_v2_forward.28} parent=0 // pred_region
    _
  $region21: #{mobilenet_v2_forward.28} parent=0 // pred_fallthru
    _

// kernel: mobilenet_v2_forward.29
$region0: #{mobilenet_v2_forward.29}
  #allocation0 [shape = 'u32[]', space=smem, size = 0x4, offset = 0x4, fixed_abs, tag = 'smem constant byte address 0x4 - core index']
  #allocation1 [shape = 'u32[144,128]{1,0:T(1,128)}', space=vmem, size = 0x12000, scoped, tag = 'internal scratch']
  %s0 = inlined_call_operand.vmem [shape: bf16[2,6,6,96], index: 0, kind: input, shape index: {}]
  %s1 = inlined_call_operand.vmem [shape: f32[9,96], index: 1, kind: input, shape index: {}]
  %s2 = inlined_call_operand.vmem [shape: f32[1,96], index: 2, kind: input, shape index: {}]
  %s3 = inlined_call_operand.vmem [shape: bf16[2,4,4,96], index: 3, kind: output, shape index: {}]
  %s4 = sld [smem:[#allocation0]]
  $region45: #{mobilenet_v2_forward.29} parent=0
    _
  %s6 = ssub.s32 1, %s4
  %s7 = scalar_select 0, %s6, %s4
  loop: start=0, step=1, limit=4
  $region2: #{mobilenet_v2_forward.29} parent=0 // loop_pre_header
    _
  $region3: #{mobilenet_v2_forward.29} parent=0 // loop_header
    %s9 = sphi 0, %s13
    %p10 = scmp.ge.s32.totalorder %s9, 4
    %s16 = sphi 0, %s28
    %s17 = sphi 0, %s24
    %s18 = sphi 0, %s16
    %s19 = sphi 0, %s17
    %s20 = sphi 0, %s18
    %s21 = sphi 0, %s19
    %s31 = sphi 0, %s33
    %s34 = sphi 0, %s31
    %s35 = sphi 0, %s34
    %s51 = sphi 0, %s35
    %s55 = sphi 0, %s55
    %s57 = sphi 0, %s55
    %s58 = sphi 0, %s57
    %s72 = sphi 0, %s58
    %s76 = sphi 0, %s76
    %s78 = sphi 0, %s76
    %s79 = sphi 0, %s78
    %s93 = sphi 0, %s79
    %s101 = sphi 0, %s103
    %s104 = sphi 0, %s101
    %s105 = sphi 0, %s104
    %s121 = sphi 0, %s105
  $region4: #{mobilenet_v2_forward.29} parent=0 // loop_header_branch
    %12 = sbr.rel (%p10) target = $region8
  $region5: #{mobilenet_v2_forward.29} parent=0 // loop_body
    %s14 = ssub.s32 %s9, 1
    %s15 = ssub.s32 %s9, 2
    %s22 = sadd.s32 1, %s17
    %p23 = scmp.ge.s32.totalorder %s22, 1
    %s24 = scalar_select %p23, 0, %s22
    %s25 = sadd.s32 1, %s16
    %s26 = scalar_select %p23, %s25, %s16
    %p27 = scmp.ge.s32.totalorder %s26, 2
    %s28 = scalar_select %p27, 0, %s26
    %s29 = ssub.s32 %s16, %s28
    %p30 = scmp.eq.s32.totalorder %s29, 0
    %s32 = sadd.s32 %s31, 1
    %s33 = scalar_select %p30, %s31, %s32
    %p36 = pneg %p30
    %p37 = scmp.eq.s32.totalorder %s9, 1
    %p38 = por %p36, %p37
    %p39 = scmp.ne.s32.totalorder %s31, %s34
    %p40 = scmp.eq.s32.totalorder %s9, 0
    %p41 = por %p39, %p40
    %p42 = scmp.ne.s32.totalorder %s31, %s34
    %p43 = scmp.eq.s32.totalorder %s14, 1
    %p44 = por %p42, %p43
    %p45 = scmp.ne.s32.totalorder %s34, %s35
    %p46 = scmp.eq.s32.totalorder %s14, 0
    %p47 = por %p45, %p46
    %p48 = scmp.ne.s32.totalorder %s34, %s35
    %p49 = scmp.eq.s32.totalorder %s15, 1
    %p50 = por %p48, %p49
    %p52 = scmp.ne.s32.totalorder %s35, %s51
    %p53 = scmp.eq.s32.totalorder %s15, 0
    %p54 = por %p52, %p53
    %s56 = sadd.s32 %s55, 1
    %p59 = scmp.eq.s32.totalorder %s9, 1
    %p60 = scmp.ne.s32.totalorder %s55, %s57
    %p61 = scmp.eq.s32.totalorder %s9, 0
    %p62 = por %p60, %p61
    %p63 = scmp.ne.s32.totalorder %s55, %s57
    %p64 = scmp.eq.s32.totalorder %s14, 1
    %p65 = por %p63, %p64
    %p66 = scmp.ne.s32.totalorder %s57, %s58
    %p67 = scmp.eq.s32.totalorder %s14, 0
    %p68 = por %p66, %p67
    %p69 = scmp.ne.s32.totalorder %s57, %s58
    %p70 = scmp.eq.s32.totalorder %s15, 1
    %p71 = por %p69, %p70
    %p73 = scmp.ne.s32.totalorder %s58, %s72
    %p74 = scmp.eq.s32.totalorder %s15, 0
    %p75 = por %p73, %p74
    %s77 = sadd.s32 %s76, 1
    %p80 = scmp.eq.s32.totalorder %s9, 1
    %p81 = scmp.ne.s32.totalorder %s76, %s78
    %p82 = scmp.eq.s32.totalorder %s9, 0
    %p83 = por %p81, %p82
    %p84 = scmp.ne.s32.totalorder %s76, %s78
    %p85 = scmp.eq.s32.totalorder %s14, 1
    %p86 = por %p84, %p85
    %p87 = scmp.ne.s32.totalorder %s78, %s79
    %p88 = scmp.eq.s32.totalorder %s14, 0
    %p89 = por %p87, %p88
    %p90 = scmp.ne.s32.totalorder %s78, %s79
    %p91 = scmp.eq.s32.totalorder %s15, 1
    %p92 = por %p90, %p91
    %p94 = scmp.ne.s32.totalorder %s79, %s93
    %p95 = scmp.eq.s32.totalorder %s15, 0
    %p96 = por %p94, %p95
    %s97 = ssub.s32 %s16, %s28
    %s98 = ssub.s32 %s17, %s24
    %s99 = sor.u32 %s97, %s98
    %p100 = scmp.eq.s32.totalorder %s99, 0
    %s102 = sadd.s32 %s101, 1
    %s103 = scalar_select %p100, %s101, %s102
    %p106 = pneg %p100
    %p107 = scmp.eq.s32.totalorder %s9, 1
    %p108 = por %p106, %p107
    %p109 = scmp.ne.s32.totalorder %s101, %s104
    %p110 = scmp.eq.s32.totalorder %s9, 0
    %p111 = por %p109, %p110
    %p112 = scmp.ne.s32.totalorder %s101, %s104
    %p113 = scmp.eq.s32.totalorder %s14, 1
    %p114 = por %p112, %p113
    %p115 = scmp.ne.s32.totalorder %s104, %s105
    %p116 = scmp.eq.s32.totalorder %s14, 0
    %p117 = por %p115, %p116
    %p118 = scmp.ne.s32.totalorder %s104, %s105
    %p119 = scmp.eq.s32.totalorder %s15, 1
    %p120 = por %p118, %p119
    %p122 = scmp.ne.s32.totalorder %s105, %s121
    %p123 = scmp.eq.s32.totalorder %s15, 0
    %p124 = por %p122, %p123
    %p125 = scmp.le.s32.totalorder 1, %s9
    %p126 = scmp.lt.s32.totalorder %s9, 3
    %p127 = pnand %p125, %p126
    %p128 = pneg %p127
    // Predicated region
    $region9: #{mobilenet_v2_forward.29} parent=5 // pred_check
      _
    $region10: #{mobilenet_v2_forward.29} parent=5 // pred_check_branch
      %130 = sbr.rel (%p127) target = $region12
    $region11: #{mobilenet_v2_forward.29} parent=5 // pred_region
      %s131 = ssub.s32 %s9, 1
      // Predicated region
      $region13: #{mobilenet_v2_forward.29} parent=11 // pred_check
        %p132 = pneg %p68
      $region14: #{mobilenet_v2_forward.29} parent=11 // pred_check_branch
        %134 = sbr.rel (%p132) target = $region16
      $region15: #{mobilenet_v2_forward.29} parent=11 // pred_region
        _
      $region16: #{mobilenet_v2_forward.29} parent=11 // pred_fallthru
        _
      // Predicated region
      $region17: #{mobilenet_v2_forward.29} parent=11 // pred_check
        %p135 = pneg %p89
      $region18: #{mobilenet_v2_forward.29} parent=11 // pred_check_branch
        %137 = sbr.rel (%p135) target = $region20
      $region19: #{mobilenet_v2_forward.29} parent=11 // pred_region
        _
      $region20: #{mobilenet_v2_forward.29} parent=11 // pred_fallthru
        _
    $region12: #{mobilenet_v2_forward.29} parent=5 // pred_fallthru
      _
    %p138 = scmp.lt.s32.totalorder %s9, 2
    // Predicated region
    $region21: #{mobilenet_v2_forward.29} parent=5 // pred_check
      %p139 = pneg %p138
    $region22: #{mobilenet_v2_forward.29} parent=5 // pred_check_branch
      %141 = sbr.rel (%p139) target = $region24
    $region23: #{mobilenet_v2_forward.29} parent=5 // pred_region
      // Predicated region
      $region25: #{mobilenet_v2_forward.29} parent=23 // pred_check
        %p142 = pneg %p41
      $region26: #{mobilenet_v2_forward.29} parent=23 // pred_check_branch
        %144 = sbr.rel (%p142) target = $region28
      $region27: #{mobilenet_v2_forward.29} parent=23 // pred_region
        %p145 = scmp.lt.s32.totalorder %s16, 1
        %s146 = scalar_select %p145, %s16, 1
        %s147 = smul.addr %s146, 6
        %s148 = smul.addr %s147, 4
        %s149 = scalar_lea.vmem %s0, %s148
      $region28: #{mobilenet_v2_forward.29} parent=23 // pred_fallthru
        _
    $region24: #{mobilenet_v2_forward.29} parent=5 // pred_fallthru
      _
    %p150 = scmp.le.s32.totalorder 1, %s9
    %p151 = scmp.lt.s32.totalorder %s9, 3
    %p152 = pnand %p150, %p151
    %p153 = pneg %p152
    // Predicated region
    $region29: #{mobilenet_v2_forward.29} parent=5 // pred_check
      _
    $region30: #{mobilenet_v2_forward.29} parent=5 // pred_check_branch
      %155 = sbr.rel (%p152) target = $region32
    $region31: #{mobilenet_v2_forward.29} parent=5 // pred_region
      %s156 = ssub.s32 %s9, 1
      %p157 = scmp.lt.s32.totalorder %s18, 1
      %s158 = scalar_select %p157, %s18, 1
      %s159 = smul.addr %s158, 6
      %s160 = smul.addr %s159, 4
      %s161 = scalar_lea.vmem %s0, %s160
      %p162 = pneg %p47
      %p163 = pneg %p44
      %p164 = pneg %p68
      %p165 = pneg %p65
      %p166 = pneg %p89
      %p167 = pneg %p86
      %p168 = pneg %p117
      %p169 = pneg %p114
      %s170 = smul.u32 4, %s19
      %p171 = scmp.lt.s32.totalorder %s18, 1
      %s172 = scalar_select %p171, %s18, 1
      %p173 = scmp.lt.s32.totalorder %s170, 3
      %s174 = scalar_select %p173, %s170, 3
      %s175 = smul.addr %s172, 4
      %s176 = sadd.s32 %s174, %s175
      %s177 = smul.addr %s176, 2
      %s178 = scalar_lea.vmem %s3, %s177
      %p179 = scmp.lt.s32.totalorder %s18, 1
      %s180 = scalar_select %p179, %s18, 1
      %s181 = smul.addr %s180, 6
      %s182 = smul.addr %s181, 4
      %s183 = scalar_lea.vmem %s0, %s182
      %s184 = smul.u32 4, %s19
      %p185 = scmp.lt.s32.totalorder %s18, 1
      %s186 = scalar_select %p185, %s18, 1
      %p187 = scmp.lt.s32.totalorder %s184, 3
      %s188 = scalar_select %p187, %s184, 3
      %s189 = smul.addr %s186, 4
      %s190 = sadd.s32 %s188, %s189
      %s191 = smul.addr %s190, 2
      %s192 = scalar_lea.vmem %s3, %s191
      %s193 = smul.u32 4, %s19
      %s194 = smul.u32 %s19, 4
      %s195 = smul.addr %s194, 4
      %s196 = scalar_lea.vmem %s183, %s195
      %v197 = vld [vmem:[%s196] sm:$0x7]
      %v198 = vld [vmem:[%s196 + $0x4] sm:$0x7]
      %v199 = vld [vmem:[%s196 + $0x8] sm:$0x7]
      %v200 = vld [vmem:[%s196 + $0xc] sm:$0x7]
      %v201 = vunpack.c.l.bf16 %v197
      %v202 = vunpack.c.l.bf16 %v198
      %v203 = vunpack.c.l.bf16 %v199
      %v204 = vunpack.c.l.bf16 %v200
      %v205 = vld [vmem:[%s1] sm:$0x1]
      %v206 = vlaneseq
      %v207 = vshrl.u32 %v206, 7
      %v208 = vsub.s32 0, %v207
      %v209 = vrot.slane %v205, %v208
      %v210 = vmul.f32 %v201, %v209
      %v211 = vmul.f32 %v202, %v209
      %v212 = vmul.f32 %v203, %v209
      %v213 = vmul.f32 %v204, %v209
      %v214 = vadd.f32 %v210, 0.0
      %v215 = vadd.f32 %v211, 0.0
      %v216 = vadd.f32 %v212, 0.0
      %v217 = vadd.f32 %v213, 0.0
      %v218 = vld [vmem:[%s1 + $0x1] sm:$0x1]
      %v219 = vlaneseq
      %v220 = vshrl.u32 %v219, 7
      %v221 = vsub.s32 0, %v220
      %v222 = vrot.slane %v218, %v221
      %v223 = vmul.f32 %v201, %v222
      %v224 = vmul.f32 %v202, %v222
      %v225 = vmul.f32 %v203, %v222
      %v226 = vmul.f32 %v204, %v222
      %v231 = vrot.slane %v223, 1
      %v232 = vrot.slane %v224, 1
      %v233 = vrot.slane %v225, 1
      %v234 = vrot.slane %v226, 1
      %v239 = vadd.f32 %v214, %v231
      %v240 = vadd.f32 %v215, %v232
      %v241 = vadd.f32 %v216, %v233
      %v242 = vadd.f32 %v217, %v234
      %v243 = vld [vmem:[%s1 + $0x2] sm:$0x1]
      %v244 = vlaneseq
      %v245 = vshrl.u32 %v244, 7
      %v246 = vsub.s32 0, %v245
      %v247 = vrot.slane %v243, %v246
      %v248 = vmul.f32 %v201, %v247
      %v249 = vmul.f32 %v202, %v247
      %v250 = vmul.f32 %v203, %v247
      %v251 = vmul.f32 %v204, %v247
      %v256 = vrot.slane %v248, 2
      %v257 = vrot.slane %v249, 2
      %v258 = vrot.slane %v250, 2
      %v259 = vrot.slane %v251, 2
      %v264 = vadd.f32 %v239, %v256
      %v265 = vadd.f32 %v240, %v257
      %v266 = vadd.f32 %v241, %v258
      %v267 = vadd.f32 %v242, %v259
      %s268 = sadd.s32 %s194, 1
      %s269 = smul.addr %s268, 4
      %s270 = scalar_lea.vmem %s183, %s269
      %v271 = vld [vmem:[%s270] sm:$0x7]
      %v272 = vld [vmem:[%s270 + $0x4] sm:$0x7]
      %v273 = vld [vmem:[%s270 + $0x8] sm:$0x7]
      %v274 = vld [vmem:[%s270 + $0xc] sm:$0x7]
      %v275 = vunpack.c.l.bf16 %v271
      %v276 = vunpack.c.l.bf16 %v272
      %v277 = vunpack.c.l.bf16 %v273
      %v278 = vunpack.c.l.bf16 %v274
      %v279 = vld [vmem:[%s1 + $0x3] sm:$0x1]
      %v280 = vlaneseq
      %v281 = vshrl.u32 %v280, 7
      %v282 = vsub.s32 0, %v281
      %v283 = vrot.slane %v279, %v282
      %v284 = vmul.f32 %v275, %v283
      %v285 = vmul.f32 %v276, %v283
      %v286 = vmul.f32 %v277, %v283
      %v287 = vmul.f32 %v278, %v283
      %v288 = vadd.f32 %v264, %v284
      %v289 = vadd.f32 %v265, %v285
      %v290 = vadd.f32 %v266, %v286
      %v291 = vadd.f32 %v267, %v287
      %v292 = vld [vmem:[%s1 + $0x4] sm:$0x1]
      %v293 = vlaneseq
      %v294 = vshrl.u32 %v293, 7
      %v295 = vsub.s32 0, %v294
      %v296 = vrot.slane %v292, %v295
      %v297 = vmul.f32 %v275, %v296
      %v298 = vmul.f32 %v276, %v296
      %v299 = vmul.f32 %v277, %v296
      %v300 = vmul.f32 %v278, %v296
      %v305 = vrot.slane %v297, 1
      %v306 = vrot.slane %v298, 1
      %v307 = vrot.slane %v299, 1
      %v308 = vrot.slane %v300, 1
      %v313 = vadd.f32 %v288, %v305
      %v314 = vadd.f32 %v289, %v306
      %v315 = vadd.f32 %v290, %v307
      %v316 = vadd.f32 %v291, %v308
      %v317 = vld [vmem:[%s1 + $0x5] sm:$0x1]
      %v318 = vlaneseq
      %v319 = vshrl.u32 %v318, 7
      %v320 = vsub.s32 0, %v319
      %v321 = vrot.slane %v317, %v320
      %v322 = vmul.f32 %v275, %v321
      %v323 = vmul.f32 %v276, %v321
      %v324 = vmul.f32 %v277, %v321
      %v325 = vmul.f32 %v278, %v321
      %v330 = vrot.slane %v322, 2
      %v331 = vrot.slane %v323, 2
      %v332 = vrot.slane %v324, 2
      %v333 = vrot.slane %v325, 2
      %v338 = vadd.f32 %v313, %v330
      %v339 = vadd.f32 %v314, %v331
      %v340 = vadd.f32 %v315, %v332
      %v341 = vadd.f32 %v316, %v333
      %s342 = sadd.s32 %s194, 2
      %s343 = smul.addr %s342, 4
      %s344 = scalar_lea.vmem %s183, %s343
      %v345 = vld [vmem:[%s344] sm:$0x7]
      %v346 = vld [vmem:[%s344 + $0x4] sm:$0x7]
      %v347 = vld [vmem:[%s344 + $0x8] sm:$0x7]
      %v348 = vld [vmem:[%s344 + $0xc] sm:$0x7]
      %v349 = vunpack.c.l.bf16 %v345
      %v350 = vunpack.c.l.bf16 %v346
      %v351 = vunpack.c.l.bf16 %v347
      %v352 = vunpack.c.l.bf16 %v348
      %v353 = vld [vmem:[%s1 + $0x6] sm:$0x1]
      %v354 = vlaneseq
      %v355 = vshrl.u32 %v354, 7
      %v356 = vsub.s32 0, %v355
      %v357 = vrot.slane %v353, %v356
      %v358 = vmul.f32 %v349, %v357
      %v359 = vmul.f32 %v350, %v357
      %v360 = vmul.f32 %v351, %v357
      %v361 = vmul.f32 %v352, %v357
      %v362 = vadd.f32 %v338, %v358
      %v363 = vadd.f32 %v339, %v359
      %v364 = vadd.f32 %v340, %v360
      %v365 = vadd.f32 %v341, %v361
      %v366 = vld [vmem:[%s1 + $0x7] sm:$0x1]
      %v367 = vlaneseq
      %v368 = vshrl.u32 %v367, 7
      %v369 = vsub.s32 0, %v368
      %v370 = vrot.slane %v366, %v369
      %v371 = vmul.f32 %v349, %v370
      %v372 = vmul.f32 %v350, %v370
      %v373 = vmul.f32 %v351, %v370
      %v374 = vmul.f32 %v352, %v370
      %v379 = vrot.slane %v371, 1
      %v380 = vrot.slane %v372, 1
      %v381 = vrot.slane %v373, 1
      %v382 = vrot.slane %v374, 1
      %v387 = vadd.f32 %v362, %v379
      %v388 = vadd.f32 %v363, %v380
      %v389 = vadd.f32 %v364, %v381
      %v390 = vadd.f32 %v365, %v382
      %v391 = vld [vmem:[%s1 + $0x8] sm:$0x1]
      %v392 = vlaneseq
      %v393 = vshrl.u32 %v392, 7
      %v394 = vsub.s32 0, %v393
      %v395 = vrot.slane %v391, %v394
      %v396 = vmul.f32 %v349, %v395
      %v397 = vmul.f32 %v350, %v395
      %v398 = vmul.f32 %v351, %v395
      %v399 = vmul.f32 %v352, %v395
      %v404 = vrot.slane %v396, 2
      %v405 = vrot.slane %v397, 2
      %v406 = vrot.slane %v398, 2
      %v407 = vrot.slane %v399, 2
      %v412 = vadd.f32 %v387, %v404
      %v413 = vadd.f32 %v388, %v405
      %v414 = vadd.f32 %v389, %v406
      %v415 = vadd.f32 %v390, %v407
      %v416 = vld [vmem:[%s2] sm:$0x1]
      %v418 = vlaneseq
      %v419 = vshrl.u32 %v418, 7
      %v420 = vsub.s32 0, %v419
      %v421 = vrot.slane %v416, %v420
      %v423 = vadd.f32 %v412, %v421
      %v424 = vadd.f32 %v413, %v421
      %v425 = vadd.f32 %v414, %v421
      %v426 = vadd.f32 %v415, %v421
      %v427 = vmax.f32 %v423, 0.0
      %v428 = vmax.f32 %v424, 0.0
      %v429 = vmax.f32 %v425, 0.0
      %v430 = vmax.f32 %v426, 0.0
      %v431 = vmin.f32 %v427, 6.0
      %v432 = vmin.f32 %v428, 6.0
      %v433 = vmin.f32 %v429, 6.0
      %v434 = vmin.f32 %v430, 6.0
      %v435 = vpack.c.bf16 %v431, %v431
      %v436 = vpack.c.bf16 %v432, %v432
      %v437 = vpack.c.bf16 %v433, %v433
      %v438 = vpack.c.bf16 %v434, %v434
      %vm439 = vcmask 779264
      %440 = vst.msk [vmem:[%s192] sm:$0x3] %vm439, %v435
      %441 = vst.msk [vmem:[%s192 + $0x2] sm:$0x3] %vm439, %v436
      %442 = vst.msk [vmem:[%s192 + $0x4] sm:$0x3] %vm439, %v437
      %443 = vst.msk [vmem:[%s192 + $0x6] sm:$0x3] %vm439, %v438
      %s444 = smul.u32 4, %s19
      %p445 = scmp.lt.s32.totalorder %s18, 1
      %s446 = scalar_select %p445, %s18, 1
      %p447 = scmp.lt.s32.totalorder %s444, 3
      %s448 = scalar_select %p447, %s444, 3
      %s449 = smul.addr %s446, 4
      %s450 = sadd.s32 %s448, %s449
      %s451 = smul.addr %s450, 2
      %s452 = scalar_lea.vmem %s3, %s451
      // Predicated region
      $region33: #{mobilenet_v2_forward.29} parent=31 // pred_check
        %p453 = pneg %p114
      $region34: #{mobilenet_v2_forward.29} parent=31 // pred_check_branch
        %455 = sbr.rel (%p453) target = $region36
      $region35: #{mobilenet_v2_forward.29} parent=31 // pred_region
        %s456 = smul.u32 4, %s19
      $region36: #{mobilenet_v2_forward.29} parent=31 // pred_fallthru
        _
    $region32: #{mobilenet_v2_forward.29} parent=5 // pred_fallthru
      _
    %p457 = scmp.le.s32.totalorder 2, %s9
    // Predicated region
    $region37: #{mobilenet_v2_forward.29} parent=5 // pred_check
      %p458 = pneg %p457
    $region38: #{mobilenet_v2_forward.29} parent=5 // pred_check_branch
      %460 = sbr.rel (%p458) target = $region40
    $region39: #{mobilenet_v2_forward.29} parent=5 // pred_region
      %s461 = ssub.s32 %s9, 2
      // Predicated region
      $region41: #{mobilenet_v2_forward.29} parent=39 // pred_check
        %p462 = pneg %p120
      $region42: #{mobilenet_v2_forward.29} parent=39 // pred_check_branch
        %464 = sbr.rel (%p462) target = $region44
      $region43: #{mobilenet_v2_forward.29} parent=39 // pred_region
        %s465 = smul.u32 4, %s21
        %p466 = scmp.lt.s32.totalorder %s20, 1
        %s467 = scalar_select %p466, %s20, 1
        %p468 = scmp.lt.s32.totalorder %s465, 3
        %s469 = scalar_select %p468, %s465, 3
        %s470 = smul.addr %s467, 4
        %s471 = sadd.s32 %s469, %s470
        %s472 = smul.addr %s471, 2
        %s473 = scalar_lea.vmem %s3, %s472
      $region44: #{mobilenet_v2_forward.29} parent=39 // pred_fallthru
        _
    $region40: #{mobilenet_v2_forward.29} parent=5 // pred_fallthru
      _
  $region6: #{mobilenet_v2_forward.29} parent=0 // loop_footer
    %s13 = sadd.s32 1, %s9
  $region7: #{mobilenet_v2_forward.29} parent=0 // loop_footer_branch
    %8 = sbr.rel target = $region3
  $region8: #{mobilenet_v2_forward.29} parent=0 // loop_exit
    _

// kernel: mobilenet_v2_forward.30
$region0: #{mobilenet_v2_forward.30}
  #allocation0 [shape = 'u32[]', space=smem, size = 0x4, offset = 0x4, fixed_abs, tag = 'smem constant byte address 0x4 - core index']
  #allocation1 [shape = 'u32[144,128]{1,0:T(1,128)}', space=vmem, size = 0x12000, scoped, tag = 'internal scratch']
  %s0 = inlined_call_operand.vmem [shape: bf16[32,96], index: 0, kind: input, shape index: {}]
  %s1 = inlined_call_operand.vmem [shape: bf16[96,24], index: 1, kind: input, shape index: {}]
  %s2 = inlined_call_operand.vmem [shape: f32[1,24], index: 2, kind: input, shape index: {}]
  %s3 = inlined_call_operand.vmem [shape: bf16[32,24], index: 3, kind: input, shape index: {}]
  %s4 = inlined_call_operand.vmem [shape: bf16[32,24], index: 4, kind: output, shape index: {}]
  %s5 = sld [smem:[#allocation0]]
  $region26: #{mobilenet_v2_forward.30} parent=0
    _
  %s7 = ssub.s32 1, %s5
  %s8 = scalar_select 0, %s7, %s5
  // Predicated region
  $region2: #{mobilenet_v2_forward.30} parent=0 // pred_check
    _
  $region3: #{mobilenet_v2_forward.30} parent=0 // pred_check_branch
    %10 = sbr.rel (0) target = $region5
  $region4: #{mobilenet_v2_forward.30} parent=0 // pred_region
    _
  $region5: #{mobilenet_v2_forward.30} parent=0 // pred_fallthru
    _
  // Predicated region
  $region6: #{mobilenet_v2_forward.30} parent=0 // pred_check
    _
  $region7: #{mobilenet_v2_forward.30} parent=0 // pred_check_branch
    %12 = sbr.rel (0) target = $region9
  $region8: #{mobilenet_v2_forward.30} parent=0 // pred_region
    _
  $region9: #{mobilenet_v2_forward.30} parent=0 // pred_fallthru
    _
  // Predicated region
  $region10: #{mobilenet_v2_forward.30} parent=0 // pred_check
    _
  $region11: #{mobilenet_v2_forward.30} parent=0 // pred_check_branch
    %14 = sbr.rel (0) target = $region13
  $region12: #{mobilenet_v2_forward.30} parent=0 // pred_region
    _
  $region13: #{mobilenet_v2_forward.30} parent=0 // pred_fallthru
    _
  // Predicated region
  $region14: #{mobilenet_v2_forward.30} parent=0 // pred_check
    _
  $region15: #{mobilenet_v2_forward.30} parent=0 // pred_check_branch
    %16 = sbr.rel (0) target = $region17
  $region16: #{mobilenet_v2_forward.30} parent=0 // pred_region
    _
  $region17: #{mobilenet_v2_forward.30} parent=0 // pred_fallthru
    _
  %v18 = vld [vmem:[%s0] sm:$0xf]
  %v19 = vld [vmem:[%s0 + $0x4] sm:$0xf]
  %v20 = vld [vmem:[%s0 + $0x8] sm:$0xf]
  %v21 = vld [vmem:[%s0 + $0xc] sm:$0xf]
  %v22 = vld [vmem:[%s1] sm:$0xf]
  %v23 = vld [vmem:[%s1 + $0x4] sm:$0xf]
  %v24 = vld [vmem:[%s1 + $0x8] sm:$0xf]
  %v25 = vld [vmem:[%s1 + $0xc] sm:$0xf]
  %v26 = vld [vmem:[%s1 + $0x10] sm:$0xf]
  %v27 = vld [vmem:[%s1 + $0x14] sm:$0xf]
  %v28 = vld [vmem:[%s1 + $0x18] sm:$0xf]
  %v29 = vld [vmem:[%s1 + $0x1c] sm:$0xf]
  %v30 = vld [vmem:[%s1 + $0x20] sm:$0xf]
  %v31 = vld [vmem:[%s1 + $0x24] sm:$0xf]
  %v32 = vld [vmem:[%s1 + $0x28] sm:$0xf]
  %v33 = vld [vmem:[%s1 + $0x2c] sm:$0xf]
  %v34 = vld [vmem:[%s2] sm:$0x1]
  %v36 = vlaneseq
  %v37 = vshrl.u32 %v36, 7
  %v38 = vsub.s32 0, %v37
  %v39 = vrot.slane %v34, %v38
  %v45 = vunpack.c.l.b16 %v18
  %v46 = vunpack.c.l.b16 %v19
  %v47 = vunpack.c.l.b16 %v20
  %v48 = vunpack.c.l.b16 %v21
  %v49 = vpack.c.b16 %v46, %v45
  %v50 = vpack.c.b16 %v48, %v47
  %v63 = vunpack.c.l.b16 %v22
  %v64 = vunpack.c.l.b16 %v23
  %v65 = vunpack.c.l.b16 %v24
  %v66 = vunpack.c.l.b16 %v25
  %v67 = vunpack.c.l.b16 %v26
  %v68 = vunpack.c.l.b16 %v27
  %v69 = vunpack.c.l.b16 %v28
  %v70 = vunpack.c.l.b16 %v29
  %v71 = vunpack.c.l.b16 %v30
  %v72 = vunpack.c.l.b16 %v31
  %v73 = vunpack.c.l.b16 %v32
  %v74 = vunpack.c.l.b16 %v33
  %v75 = vpack.c.b16 %v64, %v63
  %v76 = vpack.c.b16 %v66, %v65
  %v77 = vpack.c.b16 %v68, %v67
  %v78 = vpack.c.b16 %v70, %v69
  %v79 = vpack.c.b16 %v72, %v71
  %v80 = vpack.c.b16 %v74, %v73
  %vm87 = vcmask 785408
  %v89 = vsel %vm87, %v49, 0
  %v92 = vsel %vm87, %v50, 0
  %94 = vmatprep.subr.bf16.mxu0 0
  %95 = vmatpush1.bf16.msra.mxu0 %v75
  %96 = vmatprep.subr.bf16.mxu0 0
  %97 = vmatpush1.bf16.msra.mxu0 %v76
  %98 = vmatprep.subr.bf16.mxu0 0
  %99 = vmatpush1.bf16.msra.mxu0 %v77
  %100 = vmatprep.subr.bf16.mxu0 0
  %101 = vmatpush1.bf16.msra.mxu0 %v78
  %102 = vmatprep.subr.bf16.mxu0 0
  %103 = vmatpush1.bf16.msra.mxu0 %v79
  %104 = vmatprep.subr.bf16.mxu0 0
  %105 = vmatpush1.bf16.msra.mxu0 %v80
  %106 = vmatprep.subr.bf16.mxu0 0
  %107 = vmatpush1.bf16.msra.mxu0 0
  %108 = vmatprep.subr.bf16.mxu0 0
  %109 = vmatpush1.bf16.msra.mxu0 0
  %110 = vmatprep.subr.bf16.mxu0 0
  %111 = vmatpush1.bf16.msra.mxu0 0
  %112 = vmatprep.subr.bf16.mxu0 0
  %113 = vmatpush1.bf16.msra.mxu0 0
  %114 = vmatprep.subr.bf16.mxu0 0
  %115 = vmatpush1.bf16.msra.mxu0 0
  %116 = vmatprep.subr.bf16.mxu0 0
  %117 = vmatpush1.bf16.msra.mxu0 0
  %118 = vmatprep.subr.bf16.mxu0 0
  %119 = vmatpush1.bf16.msra.mxu0 0
  %120 = vmatprep.subr.bf16.mxu0 0
  %121 = vmatpush1.bf16.msra.mxu0 0
  %122 = vmatprep.subr.bf16.mxu0 0
  %123 = vmatpush1.bf16.msra.mxu0 0
  %124 = vmatprep.subr.bf16.mxu0 0
  %125 = vmatpush1.bf16.msra.mxu0 0
  %126 = vmatprep.mubr.bf16.mxu0 0
  %127 = vmatmul.mubr.bf16.gmra.mrb[0].mxu0 %v89
  %v128 = vpop.f32.mrb[0].mxu0
  %v129 = vadd.f32 %v39, %v128
  %v130 = vpop.f32.mrb[0].mxu0
  %v131 = vpop.f32.mrb[0].mxu0
  %v132 = vadd.f32 %v39, %v131
  %v133 = vpop.f32.mrb[0].mxu0
  %134 = vmatprep.mubr.bf16.mxu0 0
  %135 = vmatmul.mubr.bf16.gmra.mrb[0].mxu0 %v92
  %v136 = vpop.f32.mrb[0].mxu0
  %v137 = vadd.f32 %v39, %v136
  %v138 = vpop.f32.mrb[0].mxu0
  %v139 = vpop.f32.mrb[0].mxu0
  %v140 = vadd.f32 %v39, %v139
  %v141 = vpop.f32.mrb[0].mxu0
  %142 = vdwg.mxu0
  %v143 = vld [vmem:[%s3] sm:$0xf]
  %v144 = vld [vmem:[%s3 + $0x4] sm:$0xf]
  %v145 = vld [vmem:[%s3 + $0x8] sm:$0xf]
  %v146 = vld [vmem:[%s3 + $0xc] sm:$0xf]
  %v147 = vunpack.c.l.bf16 %v143
  %v148 = vunpack.c.l.bf16 %v144
  %v149 = vunpack.c.l.bf16 %v145
  %v150 = vunpack.c.l.bf16 %v146
  %v151 = vadd.f32 %v129, %v147
  %v152 = vadd.f32 %v132, %v148
  %v153 = vadd.f32 %v137, %v149
  %v154 = vadd.f32 %v140, %v150
  %v155 = vpack.c.bf16 %v152, %v151
  %v156 = vpack.c.bf16 %v154, %v153
  %v159 = vunpack.c.l.b16 %v155
  %v160 = vunpack.c.h.b16 %v155
  %v161 = vunpack.c.l.b16 %v156
  %v162 = vunpack.c.h.b16 %v156
  %v163 = vpack.c.b16 %v159, %v159
  %v164 = vpack.c.b16 %v160, %v160
  %v165 = vpack.c.b16 %v161, %v161
  %v166 = vpack.c.b16 %v162, %v162
  %vm171 = vcmask 191488
  %172 = vst.msk [vmem:[%s4] sm:$0xf] %vm171, %v163
  %173 = vst.msk [vmem:[%s4 + $0x4] sm:$0xf] %vm171, %v164
  %174 = vst.msk [vmem:[%s4 + $0x8] sm:$0xf] %vm171, %v165
  %175 = vst.msk [vmem:[%s4 + $0xc] sm:$0xf] %vm171, %v166
  // Predicated region
  $region18: #{mobilenet_v2_forward.30} parent=0 // pred_check
    _
  $region19: #{mobilenet_v2_forward.30} parent=0 // pred_check_branch
    %177 = sbr.rel (0) target = $region21
  $region20: #{mobilenet_v2_forward.30} parent=0 // pred_region
    _
  $region21: #{mobilenet_v2_forward.30} parent=0 // pred_fallthru
    _
  // Predicated region
  $region22: #{mobilenet_v2_forward.30} parent=0 // pred_check
    _
  $region23: #{mobilenet_v2_forward.30} parent=0 // pred_check_branch
    %179 = sbr.rel (0) target = $region25
  $region24: #{mobilenet_v2_forward.30} parent=0 // pred_region
    _
  $region25: #{mobilenet_v2_forward.30} parent=0 // pred_fallthru
    _

// kernel: mobilenet_v2_forward.31
$region0: #{mobilenet_v2_forward.31}
  #allocation0 [shape = 'u32[]', space=smem, size = 0x4, offset = 0x4, fixed_abs, tag = 'smem constant byte address 0x4 - core index']
  #allocation1 [shape = 'u32[144,128]{1,0:T(1,128)}', space=vmem, size = 0x12000, scoped, tag = 'internal scratch']
  #allocation2 [shape = 'f32[1,1,96]{2,1,0:T(1,128)}', space=vmem, size = 0x200, scoped, tag = 'scratch operand']
  %s0 = inlined_call_operand.vmem [shape: bf16[2,16,24], index: 0, kind: input, shape index: {}]
  %s1 = inlined_call_operand.vmem [shape: bf16[24,96], index: 1, kind: input, shape index: {}]
  %s2 = inlined_call_operand.vmem [shape: f32[1,96], index: 2, kind: input, shape index: {}]
  %s3 = inlined_call_operand.hbm [shape: f32[2,1,96], index: 3, kind: output, shape index: {}]
  %s4 = sld [smem:[#allocation0]]
  $region53: #{mobilenet_v2_forward.31} parent=0
    _
  %s6 = ssub.s32 1, %s4
  %s7 = scalar_select 0, %s6, %s4
  $region1: #{mobilenet_v2_forward.31} parent=0
    #allocation3 [shape = 'u8[1024]{0}', space=vmem, size = 0x400, scoped, tag = 'output window, operand 0']
    #allocation4 [shape = 's32[2]{0}', space=sflag, size = 0x8, scoped, tag = 'scoped memory for mobilenet_v2_forward.31']
    %8 = vsyncpa [#allocation4], 0
    %s9 = scalar_lea.sflag [#allocation4], 1
    %10 = vsyncpa %s9, 0
    loop: start=0, step=1, limit=4
    $region2: #{mobilenet_v2_forward.31} parent=1 // loop_pre_header
      _
    $region3: #{mobilenet_v2_forward.31} parent=1 // loop_header
      %s12 = sphi 0, %s16
      %p13 = scmp.ge.s32.totalorder %s12, 4
      %s19 = sphi 0, %s31
      %s20 = sphi 0, %s27
      %s21 = sphi 0, %s19
      %s22 = sphi 0, %s20
      %s23 = sphi 0, %s21
      %s24 = sphi 0, %s22
      %s36 = sphi 0, %s38
      %s39 = sphi 0, %s36
      %s40 = sphi 0, %s39
      %s56 = sphi 0, %s40
      %s60 = sphi 0, %s60
      %s62 = sphi 0, %s60
      %s63 = sphi 0, %s62
      %s77 = sphi 0, %s63
      %s81 = sphi 0, %s81
      %s83 = sphi 0, %s81
      %s84 = sphi 0, %s83
      %s98 = sphi 0, %s84
      %s104 = sphi 0, %s106
      %s107 = sphi 0, %s104
      %s108 = sphi 0, %s107
      %s124 = sphi 0, %s108
    $region4: #{mobilenet_v2_forward.31} parent=1 // loop_header_branch
      %15 = sbr.rel (%p13) target = $region8
    $region5: #{mobilenet_v2_forward.31} parent=1 // loop_body
      %s17 = ssub.s32 %s12, 1
      %s18 = ssub.s32 %s12, 2
      %s25 = sadd.s32 1, %s20
      %p26 = scmp.ge.s32.totalorder %s25, 1
      %s27 = scalar_select %p26, 0, %s25
      %s28 = sadd.s32 1, %s19
      %s29 = scalar_select %p26, %s28, %s19
      %p30 = scmp.ge.s32.totalorder %s29, 2
      %s31 = scalar_select %p30, 0, %s29
      %s32 = ssub.s32 %s19, %s31
      %s33 = ssub.s32 %s20, %s27
      %s34 = sor.u32 %s32, %s33
      %p35 = scmp.eq.s32.totalorder %s34, 0
      %s37 = sadd.s32 %s36, 1
      %s38 = scalar_select %p35, %s36, %s37
      %p41 = pneg %p35
      %p42 = scmp.eq.s32.totalorder %s12, 1
      %p43 = por %p41, %p42
      %p44 = scmp.ne.s32.totalorder %s36, %s39
      %p45 = scmp.eq.s32.totalorder %s12, 0
      %p46 = por %p44, %p45
      %p47 = scmp.ne.s32.totalorder %s36, %s39
      %p48 = scmp.eq.s32.totalorder %s17, 1
      %p49 = por %p47, %p48
      %p50 = scmp.ne.s32.totalorder %s39, %s40
      %p51 = scmp.eq.s32.totalorder %s17, 0
      %p52 = por %p50, %p51
      %p53 = scmp.ne.s32.totalorder %s39, %s40
      %p54 = scmp.eq.s32.totalorder %s18, 1
      %p55 = por %p53, %p54
      %p57 = scmp.ne.s32.totalorder %s40, %s56
      %p58 = scmp.eq.s32.totalorder %s18, 0
      %p59 = por %p57, %p58
      %s61 = sadd.s32 %s60, 1
      %p64 = scmp.eq.s32.totalorder %s12, 1
      %p65 = scmp.ne.s32.totalorder %s60, %s62
      %p66 = scmp.eq.s32.totalorder %s12, 0
      %p67 = por %p65, %p66
      %p68 = scmp.ne.s32.totalorder %s60, %s62
      %p69 = scmp.eq.s32.totalorder %s17, 1
      %p70 = por %p68, %p69
      %p71 = scmp.ne.s32.totalorder %s62, %s63
      %p72 = scmp.eq.s32.totalorder %s17, 0
      %p73 = por %p71, %p72
      %p74 = scmp.ne.s32.totalorder %s62, %s63
      %p75 = scmp.eq.s32.totalorder %s18, 1
      %p76 = por %p74, %p75
      %p78 = scmp.ne.s32.totalorder %s63, %s77
      %p79 = scmp.eq.s32.totalorder %s18, 0
      %p80 = por %p78, %p79
      %s82 = sadd.s32 %s81, 1
      %p85 = scmp.eq.s32.totalorder %s12, 1
      %p86 = scmp.ne.s32.totalorder %s81, %s83
      %p87 = scmp.eq.s32.totalorder %s12, 0
      %p88 = por %p86, %p87
      %p89 = scmp.ne.s32.totalorder %s81, %s83
      %p90 = scmp.eq.s32.totalorder %s17, 1
      %p91 = por %p89, %p90
      %p92 = scmp.ne.s32.totalorder %s83, %s84
      %p93 = scmp.eq.s32.totalorder %s17, 0
      %p94 = por %p92, %p93
      %p95 = scmp.ne.s32.totalorder %s83, %s84
      %p96 = scmp.eq.s32.totalorder %s18, 1
      %p97 = por %p95, %p96
      %p99 = scmp.ne.s32.totalorder %s84, %s98
      %p100 = scmp.eq.s32.totalorder %s18, 0
      %p101 = por %p99, %p100
      %s102 = ssub.s32 %s19, %s31
      %p103 = scmp.eq.s32.totalorder %s102, 0
      %s105 = sadd.s32 %s104, 1
      %s106 = scalar_select %p103, %s104, %s105
      %p109 = pneg %p103
      %p110 = scmp.eq.s32.totalorder %s12, 1
      %p111 = por %p109, %p110
      %p112 = scmp.ne.s32.totalorder %s104, %s107
      %p113 = scmp.eq.s32.totalorder %s12, 0
      %p114 = por %p112, %p113
      %p115 = scmp.ne.s32.totalorder %s104, %s107
      %p116 = scmp.eq.s32.totalorder %s17, 1
      %p117 = por %p115, %p116
      %p118 = scmp.ne.s32.totalorder %s107, %s108
      %p119 = scmp.eq.s32.totalorder %s17, 0
      %p120 = por %p118, %p119
      %p121 = scmp.ne.s32.totalorder %s107, %s108
      %p122 = scmp.eq.s32.totalorder %s18, 1
      %p123 = por %p121, %p122
      %p125 = scmp.ne.s32.totalorder %s108, %s124
      %p126 = scmp.eq.s32.totalorder %s18, 0
      %p127 = por %p125, %p126
      %p128 = scmp.le.s32.totalorder 1, %s12
      %p129 = scmp.lt.s32.totalorder %s12, 3
      %p130 = pnand %p128, %p129
      %p131 = pneg %p130
      // Predicated region
      $region9: #{mobilenet_v2_forward.31} parent=5 // pred_check
        _
      $region10: #{mobilenet_v2_forward.31} parent=5 // pred_check_branch
        %133 = sbr.rel (%p130) target = $region12
      $region11: #{mobilenet_v2_forward.31} parent=5 // pred_region
        %s134 = ssub.s32 %s12, 1
        // Predicated region
        $region13: #{mobilenet_v2_forward.31} parent=11 // pred_check
          %p135 = pneg %p73
        $region14: #{mobilenet_v2_forward.31} parent=11 // pred_check_branch
          %137 = sbr.rel (%p135) target = $region16
        $region15: #{mobilenet_v2_forward.31} parent=11 // pred_region
          _
        $region16: #{mobilenet_v2_forward.31} parent=11 // pred_fallthru
          _
        // Predicated region
        $region17: #{mobilenet_v2_forward.31} parent=11 // pred_check
          %p138 = pneg %p94
        $region18: #{mobilenet_v2_forward.31} parent=11 // pred_check_branch
          %140 = sbr.rel (%p138) target = $region20
        $region19: #{mobilenet_v2_forward.31} parent=11 // pred_region
          _
        $region20: #{mobilenet_v2_forward.31} parent=11 // pred_fallthru
          _
      $region12: #{mobilenet_v2_forward.31} parent=5 // pred_fallthru
        _
      %p141 = scmp.lt.s32.totalorder %s12, 2
      // Predicated region
      $region21: #{mobilenet_v2_forward.31} parent=5 // pred_check
        %p142 = pneg %p141
      $region22: #{mobilenet_v2_forward.31} parent=5 // pred_check_branch
        %144 = sbr.rel (%p142) target = $region24
      $region23: #{mobilenet_v2_forward.31} parent=5 // pred_region
        // Predicated region
        $region25: #{mobilenet_v2_forward.31} parent=23 // pred_check
          %p145 = pneg %p46
        $region26: #{mobilenet_v2_forward.31} parent=23 // pred_check_branch
          %147 = sbr.rel (%p145) target = $region28
        $region27: #{mobilenet_v2_forward.31} parent=23 // pred_region
          %s148 = smul.u32 2, %s20
          %p149 = scmp.lt.s32.totalorder %s19, 1
          %s150 = scalar_select %p149, %s19, 1
          %p151 = scmp.lt.s32.totalorder %s148, 1
          %s152 = scalar_select %p151, %s148, 1
          %s153 = smul.addr %s150, 2
          %s154 = sadd.s32 %s152, %s153
          %s155 = smul.addr %s154, 4
          %s156 = scalar_lea.vmem %s0, %s155
          %s157 = smul.u32 2, %s20
        $region28: #{mobilenet_v2_forward.31} parent=23 // pred_fallthru
          _
      $region24: #{mobilenet_v2_forward.31} parent=5 // pred_fallthru
        _
      %p158 = scmp.le.s32.totalorder 1, %s12
      %p159 = scmp.lt.s32.totalorder %s12, 3
      %p160 = pnand %p158, %p159
      %p161 = pneg %p160
      // Predicated region
      $region29: #{mobilenet_v2_forward.31} parent=5 // pred_check
        _
      $region30: #{mobilenet_v2_forward.31} parent=5 // pred_check_branch
        %163 = sbr.rel (%p160) target = $region32
      $region31: #{mobilenet_v2_forward.31} parent=5 // pred_region
        %s164 = ssub.s32 %s12, 1
        %s165 = smul.u32 2, %s22
        %p166 = scmp.lt.s32.totalorder %s21, 1
        %s167 = scalar_select %p166, %s21, 1
        %p168 = scmp.lt.s32.totalorder %s165, 1
        %s169 = scalar_select %p168, %s165, 1
        %s170 = smul.addr %s167, 2
        %s171 = sadd.s32 %s169, %s170
        %s172 = smul.addr %s171, 4
        %s173 = scalar_lea.vmem %s0, %s172
        %p174 = pneg %p52
        %p175 = pneg %p49
        %p176 = pneg %p73
        %p177 = pneg %p70
        %p178 = pneg %p94
        %p179 = pneg %p91
        %p180 = pneg %p120
        %p181 = pneg %p117
        %s182 = sand.u32 %s107, 1
        %s183 = scalar_lea.sflag [#allocation4], %s182
        %s184 = sand.u32 %s107, 1
        %s185 = scalar_lea.vmem [#allocation3], %s184
        %s186 = smul.u32 2, %s22
        %p187 = scmp.lt.s32.totalorder %s21, 1
        %s188 = scalar_select %p187, %s21, 1
        %p189 = scmp.lt.s32.totalorder %s186, 1
        %s190 = scalar_select %p189, %s186, 1
        %s191 = smul.addr %s188, 2
        %s192 = sadd.s32 %s190, %s191
        %s193 = smul.addr %s192, 4
        %s194 = scalar_lea.vmem %s0, %s193
        %s195 = smul.u32 2, %s22
        %p197 = scmp.eq.s32.totalorder %s22, 0
        // Predicated region
        $region33: #{mobilenet_v2_forward.31} parent=31 // pred_check
          %p198 = pneg %p197
        $region34: #{mobilenet_v2_forward.31} parent=31 // pred_check_branch
          %200 = sbr.rel (%p198) target = $region36
        $region35: #{mobilenet_v2_forward.31} parent=31 // pred_region
          %vm201 = vcmask 778240
          %202 = vst.msk [vmem:[#allocation2] sm:$0x1] %vm201, 0.0
        $region36: #{mobilenet_v2_forward.31} parent=31 // pred_fallthru
          _
        %v203 = vld [vmem:[%s194] sm:$0xf]
        %v204 = vld [vmem:[%s194 + $0x4] sm:$0xf]
        %v205 = vld [vmem:[%s1] sm:$0xf]
        %v206 = vld [vmem:[%s1 + $0x4] sm:$0xf]
        %v207 = vld [vmem:[%s1 + $0x8] sm:$0xf]
        %v208 = vld [vmem:[%s2] sm:$0x1]
        %v210 = vlaneseq
        %v211 = vshrl.u32 %v210, 7
        %v212 = vsub.s32 0, %v211
        %v213 = vrot.slane %v208, %v212
        %v217 = vunpack.c.l.b16 %v203
        %v218 = vunpack.c.l.b16 %v204
        %v219 = vpack.c.b16 %v218, %v217
        %v223 = vunpack.c.l.b16 %v205
        %v224 = vunpack.c.l.b16 %v206
        %v225 = vunpack.c.l.b16 %v207
        %v226 = vpack.c.b16 %v224, %v223
        %v227 = vpack.c.b16 %v225, %v225
        %vm229 = vcmask 195584
        %v231 = vsel %vm229, %v219, 0
        %vm233 = vcmask 1043456
        %v235 = vsel %vm233, %v227, 0
        %237 = vmatprep.subr.bf16.mxu0 0
        %238 = vmatpush1.bf16.msra.mxu0 %v226
        %239 = vmatprep.subr.bf16.mxu0 0
        %240 = vmatpush1.bf16.msra.mxu0 %v235
        %241 = vmatprep.subr.bf16.mxu0 0
        %242 = vmatpush1.bf16.msra.mxu0 0
        %243 = vmatprep.subr.bf16.mxu0 0
        %244 = vmatpush1.bf16.msra.mxu0 0
        %245 = vmatprep.subr.bf16.mxu0 0
        %246 = vmatpush1.bf16.msra.mxu0 0
        %247 = vmatprep.subr.bf16.mxu0 0
        %248 = vmatpush1.bf16.msra.mxu0 0
        %249 = vmatprep.subr.bf16.mxu0 0
        %250 = vmatpush1.bf16.msra.mxu0 0
        %251 = vmatprep.subr.bf16.mxu0 0
        %252 = vmatpush1.bf16.msra.mxu0 0
        %253 = vmatprep.subr.bf16.mxu0 0
        %254 = vmatpush1.bf16.msra.mxu0 0
        %255 = vmatprep.subr.bf16.mxu0 0
        %256 = vmatpush1.bf16.msra.mxu0 0
        %257 = vmatprep.subr.bf16.mxu0 0
        %258 = vmatpush1.bf16.msra.mxu0 0
        %259 = vmatprep.subr.bf16.mxu0 0
        %260 = vmatpush1.bf16.msra.mxu0 0
        %261 = vmatprep.subr.bf16.mxu0 0
        %262 = vmatpush1.bf16.msra.mxu0 0
        %263 = vmatprep.subr.bf16.mxu0 0
        %264 = vmatpush1.bf16.msra.mxu0 0
        %265 = vmatprep.subr.bf16.mxu0 0
        %266 = vmatpush1.bf16.msra.mxu0 0
        %267 = vmatprep.subr.bf16.mxu0 0
        %268 = vmatpush1.bf16.msra.mxu0 0
        %269 = vmatprep.mubr.bf16.mxu0 0
        %270 = vmatmul.mubr.bf16.gmra.mrb[0].mxu0 %v231
        %v271 = vpop.f32.mrb[0].mxu0
        %v272 = vadd.f32 %v213, %v271
        %v273 = vpop.f32.mrb[0].mxu0
        %v274 = vpop.f32.mrb[0].mxu0
        %v275 = vadd.f32 %v213, %v274
        %v276 = vpop.f32.mrb[0].mxu0
        %277 = vdwg.mxu0
        %v278 = vmax.f32 %v272, 0.0
        %v279 = vmax.f32 %v275, 0.0
        %v280 = vmin.f32 %v278, 6.0
        %v281 = vmin.f32 %v279, 6.0
        %v282 = vld [vmem:[#allocation2] sm:$0x1]
        %vm283 = vcmask 785408
        %v284 = vsel %vm283, %v280, 0.0
        %v285 = vsel %vm283, %v281, 0.0
        %v286 = vadd.f32 %v284, %v285
        %v287 = vrot.slane %v286, 4
        %v288 = vadd.f32 %v286, %v287
        %v289 = vrot.slane %v288, 2
        %v290 = vadd.f32 %v288, %v289
        %v291 = vrot.slane %v290, 1
        %v292 = vadd.f32 %v290, %v291
        %v293 = vadd.f32 %v282, %v292
        %vm294 = vcmask 778240
        %295 = vst.msk [vmem:[#allocation2] sm:$0x1] %vm294, %v293
        // Predicated region
        $region37: #{mobilenet_v2_forward.31} parent=31 // pred_check
          %p296 = pneg %p197
        $region38: #{mobilenet_v2_forward.31} parent=31 // pred_check_branch
          %298 = sbr.rel (%p296) target = $region40
        $region39: #{mobilenet_v2_forward.31} parent=31 // pred_region
          %v299 = vld [vmem:[#allocation2] sm:$0x1]
          %v300 = vmul.f32 %v299, 0.0625
          %301 = vst.msk [vmem:[%s185] sm:$0x1] %vm294, %v300
        $region40: #{mobilenet_v2_forward.31} parent=31 // pred_fallthru
          _
        %s302 = sand.u32 %s107, 1
        %s303 = scalar_lea.sflag [#allocation4], %s302
        %s304 = sand.u32 %s107, 1
        %s305 = scalar_lea.vmem [#allocation3], %s304
        // Predicated region
        $region41: #{mobilenet_v2_forward.31} parent=31 // pred_check
          %p306 = pneg %p117
        $region42: #{mobilenet_v2_forward.31} parent=31 // pred_check_branch
          %308 = sbr.rel (%p306) target = $region44
        $region43: #{mobilenet_v2_forward.31} parent=31 // pred_region
          %s310 = ssub.s32 16, 16
          %311 = vsyncadd %s303, %s310
          %s312 = smul.addr %s21, 16
          %s313 = scalar_lea.hbm %s3, %s312
          %s315 = sshll.u32 %s305, 4
          %s316 = int_to_ptr.vmem [resolvable:$true] %s315
          %318 = dma.vmem_to_hbm [thread:$0]  %s316, 16, %s313, %s303
        $region44: #{mobilenet_v2_forward.31} parent=31 // pred_fallthru
          _
      $region32: #{mobilenet_v2_forward.31} parent=5 // pred_fallthru
        _
      %p319 = scmp.le.s32.totalorder 2, %s12
      // Predicated region
      $region45: #{mobilenet_v2_forward.31} parent=5 // pred_check
        %p320 = pneg %p319
      $region46: #{mobilenet_v2_forward.31} parent=5 // pred_check_branch
        %322 = sbr.rel (%p320) target = $region48
      $region47: #{mobilenet_v2_forward.31} parent=5 // pred_region
        %s323 = ssub.s32 %s12, 2
        // Predicated region
        $region49: #{mobilenet_v2_forward.31} parent=47 // pred_check
          %p324 = pneg %p123
        $region50: #{mobilenet_v2_forward.31} parent=47 // pred_check_branch
          %326 = sbr.rel (%p324) target = $region52
        $region51: #{mobilenet_v2_forward.31} parent=47 // pred_region
          %s327 = sand.u32 %s108, 1
          %s328 = scalar_lea.sflag [#allocation4], %s327
          %s329 = sand.u32 %s108, 1
          %s330 = scalar_lea.vmem [#allocation3], %s329
          %331 = dma.done %s328, 16
        $region52: #{mobilenet_v2_forward.31} parent=47 // pred_fallthru
          _
      $region48: #{mobilenet_v2_forward.31} parent=5 // pred_fallthru
        _
    $region6: #{mobilenet_v2_forward.31} parent=1 // loop_footer
      %s16 = sadd.s32 1, %s12
    $region7: #{mobilenet_v2_forward.31} parent=1 // loop_footer_branch
      %11 = sbr.rel target = $region3
    $region8: #{mobilenet_v2_forward.31} parent=1 // loop_exit
      _
    %332 = vsyncpa [#allocation4], 1
    %s333 = scalar_lea.sflag [#allocation4], 1
    %334 = vsyncpa %s333, 1

</llo_original>
